<compile_context>
chip_gen: v5e
topology: v5e:2x2
jax: 0.10.0
libtpu: 0.0.40
codegen_flags: <defaults>
</compile_context>

<pallas_src>
import functools
import math

import numpy as np
import jax
import jax.numpy as jnp
from jax.experimental import pallas as pl
from jax.experimental.pallas import tpu as pltpu


def _rup(x, m):
    return ((x + m - 1) // m) * m


def _cdiv(a, b):
    return -(-a // b)


# ---------------------------------------------------------------------------
# Tile selection: minimal padding, single N tile when possible, 128-aligned.
# ---------------------------------------------------------------------------
def _pick_k(K):
    Kp = _rup(K, 128)
    if Kp <= 3072:                       # whole reduction in one K tile
        return Kp, Kp
    for tk in range(2304, 511, -128):    # prefer an exactly-dividing K tile (zero waste)
        if Kp % tk == 0:
            return tk, Kp
    nk = _cdiv(Kp, 2048)
    tk = _rup(_cdiv(Kp, nk), 128)
    return tk, tk * nk


def _pick_n(N):
    Np = _rup(N, 128)
    if Np <= 2048:                       # cols / x tile is then read exactly once per M tile
        return Np, Np
    return 1024, _rup(N, 1024)


def _pick_m(M):
    Mp = _rup(M, 128)
    if Mp <= 512:
        return Mp, Mp
    nm = _cdiv(Mp, 512)
    tm = _rup(_cdiv(Mp, nm), 128)
    return tm, tm * nm


# ---------------------------------------------------------------------------
# Pallas kernel: out = maybe_relu((x @ w) * scale + shift)
#   x, w in bf16 (MXU native rate), accumulation + epilogue in f32.
# ---------------------------------------------------------------------------
def _matmul_kernel(x_ref, w_ref, scale_ref, shift_ref, o_ref, acc_ref, *, relu):
    k = pl.program_id(2)

    @pl.when(k == 0)
    def _():
        acc_ref[...] = jnp.zeros_like(acc_ref)

    acc_ref[...] += jnp.dot(x_ref[...], w_ref[...],
                            preferred_element_type=jnp.float32)

    @pl.when(k == pl.num_programs(2) - 1)
    def _():
        y = acc_ref[...] * scale_ref[...] + shift_ref[...]
        if relu:
            y = jnp.maximum(y, 0.0)
        o_ref[...] = y.astype(o_ref.dtype)


@functools.lru_cache(maxsize=None)
def _matmul_call(Mp, Kp, Np, tm, tk, tn, relu):
    return pl.pallas_call(
        functools.partial(_matmul_kernel, relu=relu),
        out_shape=jax.ShapeDtypeStruct((Mp, Np), jnp.float32),
        grid_spec=pltpu.PrefetchScalarGridSpec(
            num_scalar_prefetch=0,
            grid=(Mp // tm, Np // tn, Kp // tk),
            in_specs=[
                pl.BlockSpec((tm, tk), lambda i, j, k: (i, k)),
                pl.BlockSpec((tk, tn), lambda i, j, k: (k, j)),
                pl.BlockSpec((1, tn), lambda i, j, k: (0, j)),
                pl.BlockSpec((1, tn), lambda i, j, k: (0, j)),
            ],
            out_specs=pl.BlockSpec((tm, tn), lambda i, j, k: (i, j)),
            scratch_shapes=[pltpu.VMEM((tm, tn), jnp.float32)],
        ),
        compiler_params=pltpu.CompilerParams(
            dimension_semantics=("parallel", "parallel", "arbitrary"),
            vmem_limit_bytes=64 * 1024 * 1024),
    )


def fused_matmul_bn(x2d, wp, scale, shift, K, N, relu=False):
    """x2d: (M, K) f32/bf16; wp: pre-padded bf16 (Kp, Np); scale/shift: f32 (1, Np)."""
    M = x2d.shape[0]
    tk, Kp = _pick_k(K)
    tn, Np = _pick_n(N)
    assert wp.shape == (Kp, Np), (wp.shape, (Kp, Np))
    tm, Mp = _pick_m(M)
    xb = x2d.astype(jnp.bfloat16)
    if (Mp - M) or (Kp - K):
        xb = jnp.pad(xb, ((0, Mp - M), (0, Kp - K)))
    out = _matmul_call(Mp, Kp, Np, tm, tk, tn, bool(relu))(xb, wp, scale, shift)
    return out[:M, :N]


# ---------------------------------------------------------------------------
# Parameter construction: fold BN, transpose / pad / bf16-cast weights ONCE.
# ---------------------------------------------------------------------------
def _init_bn(c):
    return {'gamma': jnp.ones((c,), jnp.float32), 'beta': jnp.zeros((c,), jnp.float32),
            'mean': jnp.zeros((c,), jnp.float32), 'var': jnp.ones((c,), jnp.float32)}


def _prep_conv(w_oihw, bn, eps=1e-5):
    """PyTorch OIHW conv weight (bias=False) + BN running stats -> matmul-ready params."""
    cout, cin, kh, kw = w_oihw.shape
    wmat = jnp.transpose(w_oihw, (2, 3, 1, 0)).reshape(kh * kw * cin, cout)
    K, N = wmat.shape
    _, Kp = _pick_k(K)
    _, Np = _pick_n(N)
    inv = bn['gamma'] / jnp.sqrt(bn['var'] + eps)
    scale = inv
    shift = bn['beta'] - bn['mean'] * inv
    return {
        'w': jnp.pad(wmat, ((0, Kp - K), (0, Np - N))).astype(jnp.bfloat16),
        'scale': jnp.pad(scale.reshape(1, N), ((0, 0), (0, Np - N))),
        'shift': jnp.pad(shift.reshape(1, N), ((0, 0), (0, Np - N))),
    }


# ---------------------------------------------------------------------------
# Trace-time (static-shape) interpolation matrices for pool / bilinear upsample.
# ---------------------------------------------------------------------------
def _adaptive_pool_matrix(in_size, out_size):
    P = np.zeros((out_size, in_size), np.float32)
    for i in range(out_size):
        a = (i * in_size) // out_size
        b = _cdiv((i + 1) * in_size, out_size)
        P[i, a:b] = 1.0 / (b - a)
    return P


def _bilinear_matrix(out_size, in_size):
    # F.upsample(mode='bilinear', align_corners=True)
    U = np.zeros((out_size, in_size), np.float32)
    if in_size == 1:
        U[:, 0] = 1.0
        return U
    if out_size == 1:
        U[0, 0] = 1.0
        return U
    scale = (in_size - 1) / (out_size - 1)
    for y in range(out_size):
        src = y * scale
        i0 = min(int(math.floor(src)), in_size - 1)
        i1 = min(i0 + 1, in_size - 1)
        f = src - i0
        U[y, i0] += 1.0 - f
        U[y, i1] += f
    return U


def _im2col_3x3_p1(x):
    B, H, W, C = x.shape
    xp = jnp.pad(x, ((0, 0), (1, 1), (1, 1), (0, 0)))
    slabs = [xp[:, ky:ky + H, kx:kx + W, :] for ky in range(3) for kx in range(3)]
    return jnp.concatenate(slabs, axis=-1).reshape(B * H * W, 9 * C)


# ---------------------------------------------------------------------------
# PSPModule
# ---------------------------------------------------------------------------
def make_psp(key, features, out_features=512, sizes=(1, 2, 3, 6)):
    keys = jax.random.split(key, len(sizes) + 1)
    stages = []
    for i in range(len(sizes)):
        w = jax.random.normal(keys[i], (out_features, features, 1, 1),
                              jnp.float32) / math.sqrt(features)
        stages.append(_prep_conv(w, _init_bn(out_features)))
    cin_tot = features + len(sizes) * out_features
    wb = jax.random.normal(keys[-1], (out_features, cin_tot, 3, 3),
                           jnp.float32) / math.sqrt(cin_tot * 9)
    params = {'stages': stages, 'bottleneck': _prep_conv(wb, _init_bn(out_features))}

    hp = jax.lax.Precision.HIGHEST

    @jax.jit
    def forward(params, feats_nchw):
        x = jnp.transpose(feats_nchw, (0, 2, 3, 1)).astype(jnp.float32)   # NCHW -> NHWC
        B, H, W, C = x.shape
        priors = []
        for s, sp in zip(sizes, params['stages']):
            # AdaptiveAvgPool2d(s) as tiny interpolation-matrix contractions (glue).
            Ph = jnp.asarray(_adaptive_pool_matrix(H, s))
            Pw = jnp.asarray(_adaptive_pool_matrix(W, s))
            pooled = jnp.einsum('ih,jw,bhwc->bijc', Ph, Pw, x, precision=hp)
            # 1x1 conv + folded BN on the pooled tensor (Pallas fused matmul).
            y = fused_matmul_bn(pooled.reshape(B * s * s, C),
                                sp['w'], sp['scale'], sp['shift'],
                                K=C, N=out_features)
            y = y.reshape(B, s, s, out_features)
            # Bilinear upsample, align_corners=True (glue).
            Uh = jnp.asarray(_bilinear_matrix(H, s))
            Uw = jnp.asarray(_bilinear_matrix(W, s))
            priors.append(jnp.einsum('yi,xj,bijc->byxc', Uh, Uw, y, precision=hp))
        priors.append(x)
        cat = jnp.concatenate(priors, axis=-1).astype(jnp.bfloat16)       # bf16 before im2col
        cols = _im2col_3x3_p1(cat)                                        # (B*H*W, 9*(C+4*out))
        bp = params['bottleneck']
        out = fused_matmul_bn(cols, bp['w'], bp['scale'], bp['shift'],
                              K=9 * cat.shape[-1], N=out_features)
        # Dropout2d(0.1): identity in eval mode.
        out = out.reshape(B, H, W, out_features)
        return jnp.transpose(out, (0, 3, 1, 2))                           # NHWC -> NCHW

    return params, forward


if __name__ == "__main__":
    key = jax.random.PRNGKey(0)
    pkey, xkey = jax.random.split(key)
    B, C, H, W = 2, 256, 16, 16
    OUT = 128
    params, forward = make_psp(pkey, features=C, out_features=OUT, sizes=(1, 2, 3, 6))
    x = jax.random.normal(xkey, (B, C, H, W), dtype=jnp.float32)
    out = jax.block_until_ready(forward(params, x))
    assert out.shape == (B, OUT, H, W), out.shape
    assert bool(jnp.all(jnp.isfinite(out)))
    print("KERNEL_OK")
</pallas_src>

<mosaic_0001>
module attributes {stable_mosaic.version = 11 : i64} {
  func.func @_matmul_kernel(%arg0: i32, %arg1: i32, %arg2: i32, %arg3: memref<128x256xbf16, #tpu.memory_space<vmem>>, %arg4: memref<256x128xbf16, #tpu.memory_space<vmem>>, %arg5: memref<1x128xf32, #tpu.memory_space<vmem>>, %arg6: memref<1x128xf32, #tpu.memory_space<vmem>>, %arg7: memref<128x128xf32, #tpu.memory_space<vmem>>, %arg8: memref<128x128xf32, #tpu.memory_space<vmem>>) attributes {dimension_semantics = [#tpu.dimension_semantics<parallel>, #tpu.dimension_semantics<parallel>, #tpu.dimension_semantics<arbitrary>], iteration_bounds = array<i64: 1, 1, 1>, scalar_prefetch = 0 : i64, scratch_operands = 1 : i64, tpu.core_type = #tpu.core_type<tc>, window_params = [{transform_indices = @transform_0, window_bounds = array<i64: 128, 256>}, {transform_indices = @transform_1, window_bounds = array<i64: 256, 128>}, {transform_indices = @transform_2, window_bounds = array<i64: 1, 128>}, {transform_indices = @transform_3, window_bounds = array<i64: 1, 128>}, {transform_indices = @transform_4, window_bounds = array<i64: 128, 128>}]} {
    %c0_i32 = arith.constant 0 : i32
    %0 = arith.cmpi eq, %arg2, %c0_i32 : i32
    %1 = arith.extui %0 : i1 to i32
    %c0_i32_0 = arith.constant 0 : i32
    %2 = arith.cmpi ne, %1, %c0_i32_0 : i32
    scf.if %2 {
      %cst_10 = arith.constant 0.000000e+00 : f32
      %12 = vector.broadcast %cst_10 : f32 to vector<128x128xf32>
      %c0_11 = arith.constant 0 : index
      %c0_12 = arith.constant 0 : index
      %13 = vector.load %arg8[%c0_11, %c0_12] : memref<128x128xf32, #tpu.memory_space<vmem>>, vector<128x128xf32>
      tpu.vector_store %arg8[%c0_11, %c0_12], %12 {strides = array<i32>} : memref<128x128xf32, #tpu.memory_space<vmem>>, vector<128x128xf32>,
    } else {
    }
    %c0 = arith.constant 0 : index
    %c0_1 = arith.constant 0 : index
    %3 = vector.load %arg8[%c0, %c0_1] : memref<128x128xf32, #tpu.memory_space<vmem>>, vector<128x128xf32>
    %c0_2 = arith.constant 0 : index
    %c0_3 = arith.constant 0 : index
    %4 = vector.load %arg3[%c0_2, %c0_3] : memref<128x256xbf16, #tpu.memory_space<vmem>>, vector<128x256xbf16>
    %c0_4 = arith.constant 0 : index
    %c0_5 = arith.constant 0 : index
    %5 = vector.load %arg4[%c0_4, %c0_5] : memref<256x128xbf16, #tpu.memory_space<vmem>>, vector<256x128xbf16>
    %cst = arith.constant dense<0.000000e+00> : vector<128x128xf32>
    %6 = tpu.matmul %4, %5, %cst {dimension_numbers = #tpu.dot_dimension_numbers<[1], [0], [0], [1], [0, 0, 1, 1], [], []>} : vector<128x256xbf16>, vector<256x128xbf16>, vector<128x128xf32> -> vector<128x128xf32>
    %7 = arith.addf %3, %6 : vector<128x128xf32>
    %c0_6 = arith.constant 0 : index
    %c0_7 = arith.constant 0 : index
    %8 = vector.load %arg8[%c0_6, %c0_7] : memref<128x128xf32, #tpu.memory_space<vmem>>, vector<128x128xf32>
    tpu.vector_store %arg8[%c0_6, %c0_7], %7 {strides = array<i32>} : memref<128x128xf32, #tpu.memory_space<vmem>>, vector<128x128xf32>,
    %c0_i32_8 = arith.constant 0 : i32
    %9 = arith.cmpi eq, %arg2, %c0_i32_8 : i32
    %10 = arith.extui %9 : i1 to i32
    %c0_i32_9 = arith.constant 0 : i32
    %11 = arith.cmpi ne, %10, %c0_i32_9 : i32
    scf.if %11 {
      %c0_10 = arith.constant 0 : index
      %c0_11 = arith.constant 0 : index
      %12 = vector.load %arg8[%c0_10, %c0_11] : memref<128x128xf32, #tpu.memory_space<vmem>>, vector<128x128xf32>
      %c0_12 = arith.constant 0 : index
      %c0_13 = arith.constant 0 : index
      %13 = vector.load %arg5[%c0_12, %c0_13] : memref<1x128xf32, #tpu.memory_space<vmem>>, vector<1x128xf32>
      %14 = vector.broadcast %13 : vector<1x128xf32> to vector<128x128xf32>
      %15 = arith.mulf %12, %14 : vector<128x128xf32>
      %c0_14 = arith.constant 0 : index
      %c0_15 = arith.constant 0 : index
      %16 = vector.load %arg6[%c0_14, %c0_15] : memref<1x128xf32, #tpu.memory_space<vmem>>, vector<1x128xf32>
      %17 = vector.broadcast %16 : vector<1x128xf32> to vector<128x128xf32>
      %18 = arith.addf %15, %17 : vector<128x128xf32>
      %c0_16 = arith.constant 0 : index
      %c0_17 = arith.constant 0 : index
      %19 = vector.load %arg7[%c0_16, %c0_17] : memref<128x128xf32, #tpu.memory_space<vmem>>, vector<128x128xf32>
      tpu.vector_store %arg7[%c0_16, %c0_17], %18 {strides = array<i32>} : memref<128x128xf32, #tpu.memory_space<vmem>>, vector<128x128xf32>,
    } else {
    }
    return
  }
  func.func @transform_0(%arg0: i32, %arg1: i32, %arg2: i32) -> (i32, i32) {
    %c0_i32 = arith.constant 0 : i32
    return %arg0, %arg2 : i32, i32
  }
  func.func @transform_1(%arg0: i32, %arg1: i32, %arg2: i32) -> (i32, i32) {
    %c0_i32 = arith.constant 0 : i32
    return %arg2, %arg1 : i32, i32
  }
  func.func @transform_2(%arg0: i32, %arg1: i32, %arg2: i32) -> (i32, i32) {
    %c0_i32 = arith.constant 0 : i32
    %c0_i32_0 = arith.constant 0 : i32
    return %c0_i32, %arg1 : i32, i32
  }
  func.func @transform_3(%arg0: i32, %arg1: i32, %arg2: i32) -> (i32, i32) {
    %c0_i32 = arith.constant 0 : i32
    %c0_i32_0 = arith.constant 0 : i32
    return %c0_i32, %arg1 : i32, i32
  }
  func.func @transform_4(%arg0: i32, %arg1: i32, %arg2: i32) -> (i32, i32) {
    %c0_i32 = arith.constant 0 : i32
    return %arg0, %arg1 : i32, i32
  }
}

module attributes {stable_mosaic.version = 11 : i64} {
  func.func @_matmul_kernel(%arg0: i32, %arg1: i32, %arg2: i32, %arg3: memref<512x2304xbf16, #tpu.memory_space<vmem>>, %arg4: memref<2304x128xbf16, #tpu.memory_space<vmem>>, %arg5: memref<1x128xf32, #tpu.memory_space<vmem>>, %arg6: memref<1x128xf32, #tpu.memory_space<vmem>>, %arg7: memref<512x128xf32, #tpu.memory_space<vmem>>, %arg8: memref<512x128xf32, #tpu.memory_space<vmem>>) attributes {dimension_semantics = [#tpu.dimension_semantics<parallel>, #tpu.dimension_semantics<parallel>, #tpu.dimension_semantics<arbitrary>], iteration_bounds = array<i64: 1, 1, 3>, scalar_prefetch = 0 : i64, scratch_operands = 1 : i64, tpu.core_type = #tpu.core_type<tc>, window_params = [{transform_indices = @transform_0, window_bounds = array<i64: 512, 2304>}, {transform_indices = @transform_1, window_bounds = array<i64: 2304, 128>}, {transform_indices = @transform_2, window_bounds = array<i64: 1, 128>}, {transform_indices = @transform_3, window_bounds = array<i64: 1, 128>}, {transform_indices = @transform_4, window_bounds = array<i64: 512, 128>}]} {
    %c0_i32 = arith.constant 0 : i32
    %0 = arith.cmpi eq, %arg2, %c0_i32 : i32
    %1 = arith.extui %0 : i1 to i32
    %c0_i32_0 = arith.constant 0 : i32
    %2 = arith.cmpi ne, %1, %c0_i32_0 : i32
    scf.if %2 {
      %cst_9 = arith.constant 0.000000e+00 : f32
      %12 = vector.broadcast %cst_9 : f32 to vector<512x128xf32>
      %c0_10 = arith.constant 0 : index
      %c0_11 = arith.constant 0 : index
      %13 = vector.load %arg8[%c0_10, %c0_11] : memref<512x128xf32, #tpu.memory_space<vmem>>, vector<512x128xf32>
      tpu.vector_store %arg8[%c0_10, %c0_11], %12 {strides = array<i32>} : memref<512x128xf32, #tpu.memory_space<vmem>>, vector<512x128xf32>,
    } else {
    }
    %c0 = arith.constant 0 : index
    %c0_1 = arith.constant 0 : index
    %3 = vector.load %arg8[%c0, %c0_1] : memref<512x128xf32, #tpu.memory_space<vmem>>, vector<512x128xf32>
    %c0_2 = arith.constant 0 : index
    %c0_3 = arith.constant 0 : index
    %4 = vector.load %arg3[%c0_2, %c0_3] : memref<512x2304xbf16, #tpu.memory_space<vmem>>, vector<512x2304xbf16>
    %c0_4 = arith.constant 0 : index
    %c0_5 = arith.constant 0 : index
    %5 = vector.load %arg4[%c0_4, %c0_5] : memref<2304x128xbf16, #tpu.memory_space<vmem>>, vector<2304x128xbf16>
    %cst = arith.constant dense<0.000000e+00> : vector<512x128xf32>
    %6 = tpu.matmul %4, %5, %cst {dimension_numbers = #tpu.dot_dimension_numbers<[1], [0], [0], [1], [0, 0, 1, 1], [], []>} : vector<512x2304xbf16>, vector<2304x128xbf16>, vector<512x128xf32> -> vector<512x128xf32>
    %7 = arith.addf %3, %6 : vector<512x128xf32>
    %c0_6 = arith.constant 0 : index
    %c0_7 = arith.constant 0 : index
    %8 = vector.load %arg8[%c0_6, %c0_7] : memref<512x128xf32, #tpu.memory_space<vmem>>, vector<512x128xf32>
    tpu.vector_store %arg8[%c0_6, %c0_7], %7 {strides = array<i32>} : memref<512x128xf32, #tpu.memory_space<vmem>>, vector<512x128xf32>,
    %c2_i32 = arith.constant 2 : i32
    %9 = arith.cmpi eq, %arg2, %c2_i32 : i32
    %10 = arith.extui %9 : i1 to i32
    %c0_i32_8 = arith.constant 0 : i32
    %11 = arith.cmpi ne, %10, %c0_i32_8 : i32
    scf.if %11 {
      %c0_9 = arith.constant 0 : index
      %c0_10 = arith.constant 0 : index
      %12 = vector.load %arg8[%c0_9, %c0_10] : memref<512x128xf32, #tpu.memory_space<vmem>>, vector<512x128xf32>
      %c0_11 = arith.constant 0 : index
      %c0_12 = arith.constant 0 : index
      %13 = vector.load %arg5[%c0_11, %c0_12] : memref<1x128xf32, #tpu.memory_space<vmem>>, vector<1x128xf32>
      %14 = vector.broadcast %13 : vector<1x128xf32> to vector<512x128xf32>
      %15 = arith.mulf %12, %14 : vector<512x128xf32>
      %c0_13 = arith.constant 0 : index
      %c0_14 = arith.constant 0 : index
      %16 = vector.load %arg6[%c0_13, %c0_14] : memref<1x128xf32, #tpu.memory_space<vmem>>, vector<1x128xf32>
      %17 = vector.broadcast %16 : vector<1x128xf32> to vector<512x128xf32>
      %18 = arith.addf %15, %17 : vector<512x128xf32>
      %c0_15 = arith.constant 0 : index
      %c0_16 = arith.constant 0 : index
      %19 = vector.load %arg7[%c0_15, %c0_16] : memref<512x128xf32, #tpu.memory_space<vmem>>, vector<512x128xf32>
      tpu.vector_store %arg7[%c0_15, %c0_16], %18 {strides = array<i32>} : memref<512x128xf32, #tpu.memory_space<vmem>>, vector<512x128xf32>,
    } else {
    }
    return
  }
  func.func @transform_0(%arg0: i32, %arg1: i32, %arg2: i32) -> (i32, i32) {
    %c0_i32 = arith.constant 0 : i32
    return %arg0, %arg2 : i32, i32
  }
  func.func @transform_1(%arg0: i32, %arg1: i32, %arg2: i32) -> (i32, i32) {
    %c0_i32 = arith.constant 0 : i32
    return %arg2, %arg1 : i32, i32
  }
  func.func @transform_2(%arg0: i32, %arg1: i32, %arg2: i32) -> (i32, i32) {
    %c0_i32 = arith.constant 0 : i32
    %c0_i32_0 = arith.constant 0 : i32
    return %c0_i32, %arg1 : i32, i32
  }
  func.func @transform_3(%arg0: i32, %arg1: i32, %arg2: i32) -> (i32, i32) {
    %c0_i32 = arith.constant 0 : i32
    %c0_i32_0 = arith.constant 0 : i32
    return %c0_i32, %arg1 : i32, i32
  }
  func.func @transform_4(%arg0: i32, %arg1: i32, %arg2: i32) -> (i32, i32) {
    %c0_i32 = arith.constant 0 : i32
    return %arg0, %arg1 : i32, i32
  }
}

</mosaic_0001>

<llo_original>
// kernel: forward.5
$region0: #{forward.5}
  #allocation0 [shape = 'u32[]', space=smem, size = 0x4, offset = 0x4, fixed_abs, tag = 'smem constant byte address 0x4 - core index']
  #allocation1 [shape = 'u32[72,128]{1,0:T(1,128)}', space=vmem, size = 0x9000, scoped, tag = 'internal scratch']
  #allocation2 [shape = 'f32[128,128]{1,0:T(8,128)}', space=vmem, size = 0x10000, scoped, tag = 'scratch operand']
  %s0 = inlined_call_operand.vmem [shape: bf16[128,256], index: 0, kind: input, shape index: {}]
  %s1 = inlined_call_operand.hbm [shape: bf16[256,128], index: 1, kind: input, shape index: {}]
  %s2 = inlined_call_operand.hbm [shape: f32[1,128], index: 2, kind: input, shape index: {}]
  %s3 = inlined_call_operand.hbm [shape: f32[1,128], index: 3, kind: input, shape index: {}]
  %s4 = inlined_call_operand.vmem [shape: f32[128,128], index: 4, kind: output, shape index: {}]
  %s5 = sld [smem:[#allocation0]]
  $region46: #{forward.5} parent=0
    _
  %s7 = ssub.s32 1, %s5
  %s8 = scalar_select 0, %s7, %s5
  $region1: #{forward.5} parent=0
    #allocation3 [shape = 'u8[65536]{0}', space=vmem, size = 0x10000, scoped, tag = 'input window, operand 1, single buffered']
    #allocation4 [shape = 's32[1]{0}', space=sflag, size = 0x4, scoped, tag = 'scoped memory for forward.5']
    #allocation5 [shape = 'u8[512]{0}', space=vmem, size = 0x400, scoped, tag = 'input window, operand 2, single buffered']
    #allocation6 [shape = 's32[1]{0}', space=sflag, size = 0x4, scoped, tag = 'scoped memory for forward.5']
    #allocation7 [shape = 'u8[512]{0}', space=vmem, size = 0x400, scoped, tag = 'input window, operand 3, single buffered']
    %9 = vsyncpa [#allocation4], 0
    %10 = vsyncpa [#allocation6], 0
    // Predicated region
    $region2: #{forward.5} parent=1 // pred_check
      _
    $region3: #{forward.5} parent=1 // pred_check_branch
      %12 = sbr.rel (0) target = $region5
    $region4: #{forward.5} parent=1 // pred_region
      _
    $region5: #{forward.5} parent=1 // pred_fallthru
      _
    // Predicated region
    $region6: #{forward.5} parent=1 // pred_check
      _
    $region7: #{forward.5} parent=1 // pred_check_branch
      %14 = sbr.rel (0) target = $region9
    $region8: #{forward.5} parent=1 // pred_region
      %16 = vsyncadd [#allocation4], 0
      %s17 = sshll.u32 %s1, 4
      %s18 = int_to_ptr.hbm [resolvable:$true] %s17
      %s19 = sshll.u32 [#allocation3], 4
      %s20 = int_to_ptr.vmem [resolvable:$true] %s19
      %25 = dma.hbm_to_vmem [thread:$0]  %s18, 2048, %s20, [#allocation4], 64, 64, 4
    $region9: #{forward.5} parent=1 // pred_fallthru
      _
    // Predicated region
    $region10: #{forward.5} parent=1 // pred_check
      _
    $region11: #{forward.5} parent=1 // pred_check_branch
      %27 = sbr.rel (0) target = $region13
    $region12: #{forward.5} parent=1 // pred_region
      %29 = vsyncadd [#allocation6], 0
      %s31 = sshll.u32 %s2, 4
      %s32 = int_to_ptr.hbm [resolvable:$true] %s31
      %s33 = sshll.u32 [#allocation5], 4
      %s34 = int_to_ptr.vmem [resolvable:$true] %s33
      %36 = dma.hbm_to_vmem [thread:$0]  %s32, 16, %s34, [#allocation6]
    $region13: #{forward.5} parent=1 // pred_fallthru
      _
    // Predicated region
    $region14: #{forward.5} parent=1 // pred_check
      _
    $region15: #{forward.5} parent=1 // pred_check_branch
      %38 = sbr.rel (0) target = $region17
    $region16: #{forward.5} parent=1 // pred_region
      %40 = vsyncadd [#allocation6], 0
      %s42 = sshll.u32 %s3, 4
      %s43 = int_to_ptr.hbm [resolvable:$true] %s42
      %s44 = sshll.u32 [#allocation7], 4
      %s45 = int_to_ptr.vmem [resolvable:$true] %s44
      %47 = dma.hbm_to_vmem [thread:$0]  %s43, 16, %s45, [#allocation6]
    $region17: #{forward.5} parent=1 // pred_fallthru
      _
    // Predicated region
    $region18: #{forward.5} parent=1 // pred_check
      _
    $region19: #{forward.5} parent=1 // pred_check_branch
      %49 = sbr.rel (0) target = $region21
    $region20: #{forward.5} parent=1 // pred_region
      %51 = dma.done [#allocation4], 2048
    $region21: #{forward.5} parent=1 // pred_fallthru
      _
    // Predicated region
    $region22: #{forward.5} parent=1 // pred_check
      _
    $region23: #{forward.5} parent=1 // pred_check_branch
      %53 = sbr.rel (0) target = $region25
    $region24: #{forward.5} parent=1 // pred_region
      %55 = dma.done [#allocation6], 16
    $region25: #{forward.5} parent=1 // pred_fallthru
      _
    // Predicated region
    $region26: #{forward.5} parent=1 // pred_check
      _
    $region27: #{forward.5} parent=1 // pred_check_branch
      %57 = sbr.rel (0) target = $region29
    $region28: #{forward.5} parent=1 // pred_region
      %59 = dma.done [#allocation6], 16
    $region29: #{forward.5} parent=1 // pred_fallthru
      _
    %p60 = scmp.eq.s32.totalorder 0, 0
    // Predicated region
    $region30: #{forward.5} parent=1 // pred_check
      %p61 = pneg %p60
    $region31: #{forward.5} parent=1 // pred_check_branch
      %63 = sbr.rel (%p61) target = $region33
    $region32: #{forward.5} parent=1 // pred_region
      %64 = vst [vmem:[#allocation2] sm:$0xff] 0.0
      %65 = vst [vmem:[#allocation2 + $0x8] sm:$0xff] 0.0
      %66 = vst [vmem:[#allocation2 + $0x10] sm:$0xff] 0.0
      %67 = vst [vmem:[#allocation2 + $0x18] sm:$0xff] 0.0
      %68 = vst [vmem:[#allocation2 + $0x20] sm:$0xff] 0.0
      %69 = vst [vmem:[#allocation2 + $0x28] sm:$0xff] 0.0
      %70 = vst [vmem:[#allocation2 + $0x30] sm:$0xff] 0.0
      %71 = vst [vmem:[#allocation2 + $0x38] sm:$0xff] 0.0
      %72 = vst [vmem:[#allocation2 + $0x40] sm:$0xff] 0.0
      %73 = vst [vmem:[#allocation2 + $0x48] sm:$0xff] 0.0
      %74 = vst [vmem:[#allocation2 + $0x50] sm:$0xff] 0.0
      %75 = vst [vmem:[#allocation2 + $0x58] sm:$0xff] 0.0
      %76 = vst [vmem:[#allocation2 + $0x60] sm:$0xff] 0.0
      %77 = vst [vmem:[#allocation2 + $0x68] sm:$0xff] 0.0
      %78 = vst [vmem:[#allocation2 + $0x70] sm:$0xff] 0.0
      %79 = vst [vmem:[#allocation2 + $0x78] sm:$0xff] 0.0
    $region33: #{forward.5} parent=1 // pred_fallthru
      _
    %v80 = vld [vmem:[#allocation2] sm:$0xff]
    %v81 = vld [vmem:[#allocation2 + $0x8] sm:$0xff]
    %v82 = vld [vmem:[#allocation2 + $0x10] sm:$0xff]
    %v83 = vld [vmem:[#allocation2 + $0x18] sm:$0xff]
    %v84 = vld [vmem:[#allocation2 + $0x20] sm:$0xff]
    %v85 = vld [vmem:[#allocation2 + $0x28] sm:$0xff]
    %v86 = vld [vmem:[#allocation2 + $0x30] sm:$0xff]
    %v87 = vld [vmem:[#allocation2 + $0x38] sm:$0xff]
    %v88 = vld [vmem:[#allocation2 + $0x40] sm:$0xff]
    %v89 = vld [vmem:[#allocation2 + $0x48] sm:$0xff]
    %v90 = vld [vmem:[#allocation2 + $0x50] sm:$0xff]
    %v91 = vld [vmem:[#allocation2 + $0x58] sm:$0xff]
    %v92 = vld [vmem:[#allocation2 + $0x60] sm:$0xff]
    %v93 = vld [vmem:[#allocation2 + $0x68] sm:$0xff]
    %v94 = vld [vmem:[#allocation2 + $0x70] sm:$0xff]
    %v95 = vld [vmem:[#allocation2 + $0x78] sm:$0xff]
    %v96 = vld [vmem:[%s0] sm:$0xff]
    %v97 = vld [vmem:[%s0 + $0x8] sm:$0xff]
    %v98 = vld [vmem:[%s0 + $0x10] sm:$0xff]
    %v99 = vld [vmem:[%s0 + $0x18] sm:$0xff]
    %v100 = vld [vmem:[%s0 + $0x20] sm:$0xff]
    %v101 = vld [vmem:[%s0 + $0x28] sm:$0xff]
    %v102 = vld [vmem:[%s0 + $0x30] sm:$0xff]
    %v103 = vld [vmem:[%s0 + $0x38] sm:$0xff]
    %v104 = vld [vmem:[%s0 + $0x40] sm:$0xff]
    %v105 = vld [vmem:[%s0 + $0x48] sm:$0xff]
    %v106 = vld [vmem:[%s0 + $0x50] sm:$0xff]
    %v107 = vld [vmem:[%s0 + $0x58] sm:$0xff]
    %v108 = vld [vmem:[%s0 + $0x60] sm:$0xff]
    %v109 = vld [vmem:[%s0 + $0x68] sm:$0xff]
    %v110 = vld [vmem:[%s0 + $0x70] sm:$0xff]
    %v111 = vld [vmem:[%s0 + $0x78] sm:$0xff]
    %v112 = vld [vmem:[#allocation3] sm:$0xf]
    %v113 = vld [vmem:[#allocation3 + $0x4] sm:$0xf]
    %v114 = vld [vmem:[#allocation3 + $0x8] sm:$0xf]
    %v115 = vld [vmem:[#allocation3 + $0xc] sm:$0xf]
    %v116 = vld [vmem:[#allocation3 + $0x10] sm:$0xf]
    %v117 = vld [vmem:[#allocation3 + $0x14] sm:$0xf]
    %v118 = vld [vmem:[#allocation3 + $0x18] sm:$0xf]
    %v119 = vld [vmem:[#allocation3 + $0x1c] sm:$0xf]
    %v120 = vld [vmem:[#allocation3 + $0x20] sm:$0xf]
    %v121 = vld [vmem:[#allocation3 + $0x24] sm:$0xf]
    %v122 = vld [vmem:[#allocation3 + $0x28] sm:$0xf]
    %v123 = vld [vmem:[#allocation3 + $0x2c] sm:$0xf]
    %v124 = vld [vmem:[#allocation3 + $0x30] sm:$0xf]
    %v125 = vld [vmem:[#allocation3 + $0x34] sm:$0xf]
    %v126 = vld [vmem:[#allocation3 + $0x38] sm:$0xf]
    %v127 = vld [vmem:[#allocation3 + $0x3c] sm:$0xf]
    %v128 = vld [vmem:[#allocation3 + $0x40] sm:$0xf]
    %v129 = vld [vmem:[#allocation3 + $0x44] sm:$0xf]
    %v130 = vld [vmem:[#allocation3 + $0x48] sm:$0xf]
    %v131 = vld [vmem:[#allocation3 + $0x4c] sm:$0xf]
    %v132 = vld [vmem:[#allocation3 + $0x50] sm:$0xf]
    %v133 = vld [vmem:[#allocation3 + $0x54] sm:$0xf]
    %v134 = vld [vmem:[#allocation3 + $0x58] sm:$0xf]
    %v135 = vld [vmem:[#allocation3 + $0x5c] sm:$0xf]
    %v136 = vld [vmem:[#allocation3 + $0x60] sm:$0xf]
    %v137 = vld [vmem:[#allocation3 + $0x64] sm:$0xf]
    %v138 = vld [vmem:[#allocation3 + $0x68] sm:$0xf]
    %v139 = vld [vmem:[#allocation3 + $0x6c] sm:$0xf]
    %v140 = vld [vmem:[#allocation3 + $0x70] sm:$0xf]
    %v141 = vld [vmem:[#allocation3 + $0x74] sm:$0xf]
    %v142 = vld [vmem:[#allocation3 + $0x78] sm:$0xf]
    %v143 = vld [vmem:[#allocation3 + $0x7c] sm:$0xf]
    %v160 = vunpack.c.l.b16 %v96
    %v161 = vunpack.c.h.b16 %v96
    %v162 = vunpack.c.l.b16 %v97
    %v163 = vunpack.c.h.b16 %v97
    %v164 = vunpack.c.l.b16 %v98
    %v165 = vunpack.c.h.b16 %v98
    %v166 = vunpack.c.l.b16 %v99
    %v167 = vunpack.c.h.b16 %v99
    %v168 = vunpack.c.l.b16 %v100
    %v169 = vunpack.c.h.b16 %v100
    %v170 = vunpack.c.l.b16 %v101
    %v171 = vunpack.c.h.b16 %v101
    %v172 = vunpack.c.l.b16 %v102
    %v173 = vunpack.c.h.b16 %v102
    %v174 = vunpack.c.l.b16 %v103
    %v175 = vunpack.c.h.b16 %v103
    %v176 = vunpack.c.l.b16 %v104
    %v177 = vunpack.c.h.b16 %v104
    %v178 = vunpack.c.l.b16 %v105
    %v179 = vunpack.c.h.b16 %v105
    %v180 = vunpack.c.l.b16 %v106
    %v181 = vunpack.c.h.b16 %v106
    %v182 = vunpack.c.l.b16 %v107
    %v183 = vunpack.c.h.b16 %v107
    %v184 = vunpack.c.l.b16 %v108
    %v185 = vunpack.c.h.b16 %v108
    %v186 = vunpack.c.l.b16 %v109
    %v187 = vunpack.c.h.b16 %v109
    %v188 = vunpack.c.l.b16 %v110
    %v189 = vunpack.c.h.b16 %v110
    %v190 = vunpack.c.l.b16 %v111
    %v191 = vunpack.c.h.b16 %v111
    %v192 = vpack.c.b16 %v162, %v160
    %v193 = vpack.c.b16 %v163, %v161
    %v194 = vpack.c.b16 %v166, %v164
    %v195 = vpack.c.b16 %v167, %v165
    %v196 = vpack.c.b16 %v170, %v168
    %v197 = vpack.c.b16 %v171, %v169
    %v198 = vpack.c.b16 %v174, %v172
    %v199 = vpack.c.b16 %v175, %v173
    %v200 = vpack.c.b16 %v178, %v176
    %v201 = vpack.c.b16 %v179, %v177
    %v202 = vpack.c.b16 %v182, %v180
    %v203 = vpack.c.b16 %v183, %v181
    %v204 = vpack.c.b16 %v186, %v184
    %v205 = vpack.c.b16 %v187, %v185
    %v206 = vpack.c.b16 %v190, %v188
    %v207 = vpack.c.b16 %v191, %v189
    %v256 = vunpack.c.l.b16 %v112
    %v257 = vunpack.c.l.b16 %v113
    %v258 = vunpack.c.l.b16 %v114
    %v259 = vunpack.c.l.b16 %v115
    %v260 = vunpack.c.l.b16 %v116
    %v261 = vunpack.c.l.b16 %v117
    %v262 = vunpack.c.l.b16 %v118
    %v263 = vunpack.c.l.b16 %v119
    %v264 = vunpack.c.l.b16 %v120
    %v265 = vunpack.c.l.b16 %v121
    %v266 = vunpack.c.l.b16 %v122
    %v267 = vunpack.c.l.b16 %v123
    %v268 = vunpack.c.l.b16 %v124
    %v269 = vunpack.c.l.b16 %v125
    %v270 = vunpack.c.l.b16 %v126
    %v271 = vunpack.c.l.b16 %v127
    %v272 = vunpack.c.l.b16 %v128
    %v273 = vunpack.c.l.b16 %v129
    %v274 = vunpack.c.l.b16 %v130
    %v275 = vunpack.c.l.b16 %v131
    %v276 = vunpack.c.l.b16 %v132
    %v277 = vunpack.c.l.b16 %v133
    %v278 = vunpack.c.l.b16 %v134
    %v279 = vunpack.c.l.b16 %v135
    %v280 = vunpack.c.l.b16 %v136
    %v281 = vunpack.c.l.b16 %v137
    %v282 = vunpack.c.l.b16 %v138
    %v283 = vunpack.c.l.b16 %v139
    %v284 = vunpack.c.l.b16 %v140
    %v285 = vunpack.c.l.b16 %v141
    %v286 = vunpack.c.l.b16 %v142
    %v287 = vunpack.c.l.b16 %v143
    %v288 = vpack.c.b16 %v257, %v256
    %v289 = vpack.c.b16 %v259, %v258
    %v290 = vpack.c.b16 %v261, %v260
    %v291 = vpack.c.b16 %v263, %v262
    %v292 = vpack.c.b16 %v265, %v264
    %v293 = vpack.c.b16 %v267, %v266
    %v294 = vpack.c.b16 %v269, %v268
    %v295 = vpack.c.b16 %v271, %v270
    %v296 = vpack.c.b16 %v273, %v272
    %v297 = vpack.c.b16 %v275, %v274
    %v298 = vpack.c.b16 %v277, %v276
    %v299 = vpack.c.b16 %v279, %v278
    %v300 = vpack.c.b16 %v281, %v280
    %v301 = vpack.c.b16 %v283, %v282
    %v302 = vpack.c.b16 %v285, %v284
    %v303 = vpack.c.b16 %v287, %v286
    %320 = vmatpush.bf16.msra.mxu0 %v295
    %321 = vmatpush.bf16.msra.mxu0 %v294
    %322 = vmatpush.bf16.msra.mxu0 %v293
    %323 = vmatpush.bf16.msra.mxu0 %v292
    %324 = vmatpush.bf16.msra.mxu0 %v291
    %325 = vmatpush.bf16.msra.mxu0 %v290
    %326 = vmatpush.bf16.msra.mxu0 %v289
    %327 = vmatpush.bf16.msra.mxu0 %v288
    %328 = vmatmul.bf16.gmra.mxu0 %v192
    %v329 = vpop.f32.mrf.mxu0
    %v330 = vadd.f32 0.0, %v329
    %v331 = vpop.f32.mrf.mxu0
    %v332 = vadd.f32 0.0, %v331
    %333 = vmatmul.bf16.gmra.mxu0 %v194
    %v334 = vpop.f32.mrf.mxu0
    %v335 = vadd.f32 0.0, %v334
    %v336 = vpop.f32.mrf.mxu0
    %v337 = vadd.f32 0.0, %v336
    %338 = vmatmul.bf16.gmra.mxu0 %v196
    %v339 = vpop.f32.mrf.mxu0
    %v340 = vadd.f32 0.0, %v339
    %v341 = vpop.f32.mrf.mxu0
    %v342 = vadd.f32 0.0, %v341
    %343 = vmatmul.bf16.gmra.mxu0 %v198
    %v344 = vpop.f32.mrf.mxu0
    %v345 = vadd.f32 0.0, %v344
    %v346 = vpop.f32.mrf.mxu0
    %v347 = vadd.f32 0.0, %v346
    %348 = vmatmul.bf16.gmra.mxu0 %v200
    %v349 = vpop.f32.mrf.mxu0
    %v350 = vadd.f32 0.0, %v349
    %v351 = vpop.f32.mrf.mxu0
    %v352 = vadd.f32 0.0, %v351
    %353 = vmatmul.bf16.gmra.mxu0 %v202
    %v354 = vpop.f32.mrf.mxu0
    %v355 = vadd.f32 0.0, %v354
    %v356 = vpop.f32.mrf.mxu0
    %v357 = vadd.f32 0.0, %v356
    %358 = vmatmul.bf16.gmra.mxu0 %v204
    %v359 = vpop.f32.mrf.mxu0
    %v360 = vadd.f32 0.0, %v359
    %v361 = vpop.f32.mrf.mxu0
    %v362 = vadd.f32 0.0, %v361
    %363 = vmatmul.bf16.gmra.mxu0 %v206
    %v364 = vpop.f32.mrf.mxu0
    %v365 = vadd.f32 0.0, %v364
    %v366 = vpop.f32.mrf.mxu0
    %v367 = vadd.f32 0.0, %v366
    %368 = vdwg.mxu0
    %369 = vmatpush.bf16.msra.mxu0 %v303
    %370 = vmatpush.bf16.msra.mxu0 %v302
    %371 = vmatpush.bf16.msra.mxu0 %v301
    %372 = vmatpush.bf16.msra.mxu0 %v300
    %373 = vmatpush.bf16.msra.mxu0 %v299
    %374 = vmatpush.bf16.msra.mxu0 %v298
    %375 = vmatpush.bf16.msra.mxu0 %v297
    %376 = vmatpush.bf16.msra.mxu0 %v296
    %377 = vmatmul.bf16.gmra.mxu0 %v193
    %v378 = vpop.f32.mrf.mxu0
    %v379 = vadd.f32 %v330, %v378
    %v380 = vpop.f32.mrf.mxu0
    %v381 = vadd.f32 %v332, %v380
    %382 = vmatmul.bf16.gmra.mxu0 %v195
    %v383 = vpop.f32.mrf.mxu0
    %v384 = vadd.f32 %v335, %v383
    %v385 = vpop.f32.mrf.mxu0
    %v386 = vadd.f32 %v337, %v385
    %387 = vmatmul.bf16.gmra.mxu0 %v197
    %v388 = vpop.f32.mrf.mxu0
    %v389 = vadd.f32 %v340, %v388
    %v390 = vpop.f32.mrf.mxu0
    %v391 = vadd.f32 %v342, %v390
    %392 = vmatmul.bf16.gmra.mxu0 %v199
    %v393 = vpop.f32.mrf.mxu0
    %v394 = vadd.f32 %v345, %v393
    %v395 = vpop.f32.mrf.mxu0
    %v396 = vadd.f32 %v347, %v395
    %397 = vmatmul.bf16.gmra.mxu0 %v201
    %v398 = vpop.f32.mrf.mxu0
    %v399 = vadd.f32 %v350, %v398
    %v400 = vpop.f32.mrf.mxu0
    %v401 = vadd.f32 %v352, %v400
    %402 = vmatmul.bf16.gmra.mxu0 %v203
    %v403 = vpop.f32.mrf.mxu0
    %v404 = vadd.f32 %v355, %v403
    %v405 = vpop.f32.mrf.mxu0
    %v406 = vadd.f32 %v357, %v405
    %407 = vmatmul.bf16.gmra.mxu0 %v205
    %v408 = vpop.f32.mrf.mxu0
    %v409 = vadd.f32 %v360, %v408
    %v410 = vpop.f32.mrf.mxu0
    %v411 = vadd.f32 %v362, %v410
    %412 = vmatmul.bf16.gmra.mxu0 %v207
    %v413 = vpop.f32.mrf.mxu0
    %v414 = vadd.f32 %v365, %v413
    %v415 = vpop.f32.mrf.mxu0
    %v416 = vadd.f32 %v367, %v415
    %417 = vdwg.mxu0
    %v418 = vadd.f32 %v80, %v379
    %v419 = vadd.f32 %v81, %v381
    %v420 = vadd.f32 %v82, %v384
    %v421 = vadd.f32 %v83, %v386
    %v422 = vadd.f32 %v84, %v389
    %v423 = vadd.f32 %v85, %v391
    %v424 = vadd.f32 %v86, %v394
    %v425 = vadd.f32 %v87, %v396
    %v426 = vadd.f32 %v88, %v399
    %v427 = vadd.f32 %v89, %v401
    %v428 = vadd.f32 %v90, %v404
    %v429 = vadd.f32 %v91, %v406
    %v430 = vadd.f32 %v92, %v409
    %v431 = vadd.f32 %v93, %v411
    %v432 = vadd.f32 %v94, %v414
    %v433 = vadd.f32 %v95, %v416
    %434 = vst [vmem:[#allocation2] sm:$0xff] %v418
    %435 = vst [vmem:[#allocation2 + $0x8] sm:$0xff] %v419
    %436 = vst [vmem:[#allocation2 + $0x10] sm:$0xff] %v420
    %437 = vst [vmem:[#allocation2 + $0x18] sm:$0xff] %v421
    %438 = vst [vmem:[#allocation2 + $0x20] sm:$0xff] %v422
    %439 = vst [vmem:[#allocation2 + $0x28] sm:$0xff] %v423
    %440 = vst [vmem:[#allocation2 + $0x30] sm:$0xff] %v424
    %441 = vst [vmem:[#allocation2 + $0x38] sm:$0xff] %v425
    %442 = vst [vmem:[#allocation2 + $0x40] sm:$0xff] %v426
    %443 = vst [vmem:[#allocation2 + $0x48] sm:$0xff] %v427
    %444 = vst [vmem:[#allocation2 + $0x50] sm:$0xff] %v428
    %445 = vst [vmem:[#allocation2 + $0x58] sm:$0xff] %v429
    %446 = vst [vmem:[#allocation2 + $0x60] sm:$0xff] %v430
    %447 = vst [vmem:[#allocation2 + $0x68] sm:$0xff] %v431
    %448 = vst [vmem:[#allocation2 + $0x70] sm:$0xff] %v432
    %449 = vst [vmem:[#allocation2 + $0x78] sm:$0xff] %v433
    // Predicated region
    $region34: #{forward.5} parent=1 // pred_check
      %p450 = pneg %p60
    $region35: #{forward.5} parent=1 // pred_check_branch
      %452 = sbr.rel (%p450) target = $region37
    $region36: #{forward.5} parent=1 // pred_region
      %v453 = vld [vmem:[#allocation2] sm:$0xff]
      %v454 = vld [vmem:[#allocation2 + $0x8] sm:$0xff]
      %v455 = vld [vmem:[#allocation2 + $0x10] sm:$0xff]
      %v456 = vld [vmem:[#allocation2 + $0x18] sm:$0xff]
      %v457 = vld [vmem:[#allocation2 + $0x20] sm:$0xff]
      %v458 = vld [vmem:[#allocation2 + $0x28] sm:$0xff]
      %v459 = vld [vmem:[#allocation2 + $0x30] sm:$0xff]
      %v460 = vld [vmem:[#allocation2 + $0x38] sm:$0xff]
      %v461 = vld [vmem:[#allocation2 + $0x40] sm:$0xff]
      %v462 = vld [vmem:[#allocation2 + $0x48] sm:$0xff]
      %v463 = vld [vmem:[#allocation2 + $0x50] sm:$0xff]
      %v464 = vld [vmem:[#allocation2 + $0x58] sm:$0xff]
      %v465 = vld [vmem:[#allocation2 + $0x60] sm:$0xff]
      %v466 = vld [vmem:[#allocation2 + $0x68] sm:$0xff]
      %v467 = vld [vmem:[#allocation2 + $0x70] sm:$0xff]
      %v468 = vld [vmem:[#allocation2 + $0x78] sm:$0xff]
      %v469 = vld [vmem:[#allocation5] sm:$0x1]
      %v471 = vperm.slane %v469, 0
      %v473 = vmul.f32 %v453, %v471
      %v474 = vmul.f32 %v454, %v471
      %v475 = vmul.f32 %v455, %v471
      %v476 = vmul.f32 %v456, %v471
      %v477 = vmul.f32 %v457, %v471
      %v478 = vmul.f32 %v458, %v471
      %v479 = vmul.f32 %v459, %v471
      %v480 = vmul.f32 %v460, %v471
      %v481 = vmul.f32 %v461, %v471
      %v482 = vmul.f32 %v462, %v471
      %v483 = vmul.f32 %v463, %v471
      %v484 = vmul.f32 %v464, %v471
      %v485 = vmul.f32 %v465, %v471
      %v486 = vmul.f32 %v466, %v471
      %v487 = vmul.f32 %v467, %v471
      %v488 = vmul.f32 %v468, %v471
      %v489 = vld [vmem:[#allocation7] sm:$0x1]
      %v491 = vperm.slane %v489, 0
      %v493 = vadd.f32 %v473, %v491
      %v494 = vadd.f32 %v474, %v491
      %v495 = vadd.f32 %v475, %v491
      %v496 = vadd.f32 %v476, %v491
      %v497 = vadd.f32 %v477, %v491
      %v498 = vadd.f32 %v478, %v491
      %v499 = vadd.f32 %v479, %v491
      %v500 = vadd.f32 %v480, %v491
      %v501 = vadd.f32 %v481, %v491
      %v502 = vadd.f32 %v482, %v491
      %v503 = vadd.f32 %v483, %v491
      %v504 = vadd.f32 %v484, %v491
      %v505 = vadd.f32 %v485, %v491
      %v506 = vadd.f32 %v486, %v491
      %v507 = vadd.f32 %v487, %v491
      %v508 = vadd.f32 %v488, %v491
      %509 = vst [vmem:[%s4] sm:$0xff] %v493
      %510 = vst [vmem:[%s4 + $0x8] sm:$0xff] %v494
      %511 = vst [vmem:[%s4 + $0x10] sm:$0xff] %v495
      %512 = vst [vmem:[%s4 + $0x18] sm:$0xff] %v496
      %513 = vst [vmem:[%s4 + $0x20] sm:$0xff] %v497
      %514 = vst [vmem:[%s4 + $0x28] sm:$0xff] %v498
      %515 = vst [vmem:[%s4 + $0x30] sm:$0xff] %v499
      %516 = vst [vmem:[%s4 + $0x38] sm:$0xff] %v500
      %517 = vst [vmem:[%s4 + $0x40] sm:$0xff] %v501
      %518 = vst [vmem:[%s4 + $0x48] sm:$0xff] %v502
      %519 = vst [vmem:[%s4 + $0x50] sm:$0xff] %v503
      %520 = vst [vmem:[%s4 + $0x58] sm:$0xff] %v504
      %521 = vst [vmem:[%s4 + $0x60] sm:$0xff] %v505
      %522 = vst [vmem:[%s4 + $0x68] sm:$0xff] %v506
      %523 = vst [vmem:[%s4 + $0x70] sm:$0xff] %v507
      %524 = vst [vmem:[%s4 + $0x78] sm:$0xff] %v508
    $region37: #{forward.5} parent=1 // pred_fallthru
      _
    // Predicated region
    $region38: #{forward.5} parent=1 // pred_check
      _
    $region39: #{forward.5} parent=1 // pred_check_branch
      %526 = sbr.rel (0) target = $region41
    $region40: #{forward.5} parent=1 // pred_region
      _
    $region41: #{forward.5} parent=1 // pred_fallthru
      _
    // Predicated region
    $region42: #{forward.5} parent=1 // pred_check
      _
    $region43: #{forward.5} parent=1 // pred_check_branch
      %528 = sbr.rel (0) target = $region45
    $region44: #{forward.5} parent=1 // pred_region
      _
    $region45: #{forward.5} parent=1 // pred_fallthru
      _
    %529 = vsyncpa [#allocation4], 1
    %530 = vsyncpa [#allocation6], 1

// kernel: forward.9
$region0: #{forward.9}
  #allocation0 [shape = 'u32[]', space=smem, size = 0x4, offset = 0x4, fixed_abs, tag = 'smem constant byte address 0x4 - core index']
  #allocation1 [shape = 'u32[72,128]{1,0:T(1,128)}', space=vmem, size = 0x9000, scoped, tag = 'internal scratch']
  #allocation2 [shape = 'f32[512,128]{1,0:T(8,128)}', space=vmem, size = 0x40000, scoped, tag = 'scratch operand']
  %s0 = inlined_call_operand.vmem [shape: bf16[512,6912], index: 0, kind: input, shape index: {}]
  %s1 = inlined_call_operand.vmem [shape: bf16[6912,128], index: 1, kind: input, shape index: {}]
  %s2 = inlined_call_operand.vmem [shape: f32[1,128], index: 2, kind: input, shape index: {}]
  %s3 = inlined_call_operand.vmem [shape: f32[1,128], index: 3, kind: input, shape index: {}]
  %s4 = inlined_call_operand.hbm [shape: f32[512,128], index: 4, kind: output, shape index: {}]
  %s5 = sld [smem:[#allocation0]]
  $region80: #{forward.9} parent=0
    _
  %s7 = ssub.s32 1, %s5
  %s8 = scalar_select 0, %s7, %s5
  $region1: #{forward.9} parent=0
    #allocation3 [shape = 'u8[4718592]{0}', space=vmem, size = 0x480000, scoped, tag = 'input window, operand 0']
    #allocation4 [shape = 'u8[262144]{0}', space=vmem, size = 0x40000, scoped, tag = 'output window, operand 0, single buffered']
    #allocation5 [shape = 's32[2]{0}', space=sflag, size = 0x8, scoped, tag = 'scoped memory for forward.9']
    %9 = vsyncpa [#allocation5], 0
    loop: start=0, step=1, limit=5
    $region2: #{forward.9} parent=1 // loop_pre_header
      _
    $region3: #{forward.9} parent=1 // loop_header
      %s11 = sphi 0, %s15
      %p12 = scmp.ge.s32.totalorder %s11, 5
      %s18 = sphi 0, %s37
      %s19 = sphi 0, %s33
      %s20 = sphi 0, %s29
      %s21 = sphi 0, %s18
      %s22 = sphi 0, %s19
      %s23 = sphi 0, %s20
      %s24 = sphi 0, %s21
      %s25 = sphi 0, %s22
      %s26 = sphi 0, %s23
      %s42 = sphi 0, %s44
      %s45 = sphi 0, %s42
      %s46 = sphi 0, %s45
      %s62 = sphi 0, %s46
      %s70 = sphi 0, %s72
      %s73 = sphi 0, %s70
      %s74 = sphi 0, %s73
      %s90 = sphi 0, %s74
      %s96 = sphi 0, %s98
      %s99 = sphi 0, %s96
      %s100 = sphi 0, %s99
      %s116 = sphi 0, %s100
      %s122 = sphi 0, %s124
      %s125 = sphi 0, %s122
      %s126 = sphi 0, %s125
      %s142 = sphi 0, %s126
      %s150 = sphi 0, %s152
      %s153 = sphi 0, %s150
      %s154 = sphi 0, %s153
      %s170 = sphi 0, %s154
    $region4: #{forward.9} parent=1 // loop_header_branch
      %14 = sbr.rel (%p12) target = $region8
    $region5: #{forward.9} parent=1 // loop_body
      %s16 = ssub.s32 %s11, 1
      %s17 = ssub.s32 %s11, 2
      %s27 = sadd.s32 1, %s20
      %p28 = scmp.ge.s32.totalorder %s27, 3
      %s29 = scalar_select %p28, 0, %s27
      %s30 = sadd.s32 1, %s19
      %s31 = scalar_select %p28, %s30, %s19
      %p32 = scmp.ge.s32.totalorder %s31, 1
      %s33 = scalar_select %p32, 0, %s31
      %s34 = sadd.s32 1, %s18
      %s35 = scalar_select %p32, %s34, %s18
      %p36 = scmp.ge.s32.totalorder %s35, 1
      %s37 = scalar_select %p36, 0, %s35
      %s38 = ssub.s32 %s18, %s37
      %s39 = ssub.s32 %s20, %s29
      %s40 = sor.u32 %s38, %s39
      %p41 = scmp.eq.s32.totalorder %s40, 0
      %s43 = sadd.s32 %s42, 1
      %s44 = scalar_select %p41, %s42, %s43
      %p47 = pneg %p41
      %p48 = scmp.eq.s32.totalorder %s11, 2
      %p49 = por %p47, %p48
      %p50 = scmp.ne.s32.totalorder %s42, %s45
      %p51 = scmp.eq.s32.totalorder %s11, 0
      %p52 = por %p50, %p51
      %p53 = scmp.ne.s32.totalorder %s42, %s45
      %p54 = scmp.eq.s32.totalorder %s16, 2
      %p55 = por %p53, %p54
      %p56 = scmp.ne.s32.totalorder %s45, %s46
      %p57 = scmp.eq.s32.totalorder %s16, 0
      %p58 = por %p56, %p57
      %p59 = scmp.ne.s32.totalorder %s45, %s46
      %p60 = scmp.eq.s32.totalorder %s17, 2
      %p61 = por %p59, %p60
      %p63 = scmp.ne.s32.totalorder %s46, %s62
      %p64 = scmp.eq.s32.totalorder %s17, 0
      %p65 = por %p63, %p64
      %s66 = ssub.s32 %s20, %s29
      %s67 = ssub.s32 %s19, %s33
      %s68 = sor.u32 %s66, %s67
      %p69 = scmp.eq.s32.totalorder %s68, 0
      %s71 = sadd.s32 %s70, 1
      %s72 = scalar_select %p69, %s70, %s71
      %p75 = pneg %p69
      %p76 = scmp.eq.s32.totalorder %s11, 2
      %p77 = por %p75, %p76
      %p78 = scmp.ne.s32.totalorder %s70, %s73
      %p79 = scmp.eq.s32.totalorder %s11, 0
      %p80 = por %p78, %p79
      %p81 = scmp.ne.s32.totalorder %s70, %s73
      %p82 = scmp.eq.s32.totalorder %s16, 2
      %p83 = por %p81, %p82
      %p84 = scmp.ne.s32.totalorder %s73, %s74
      %p85 = scmp.eq.s32.totalorder %s16, 0
      %p86 = por %p84, %p85
      %p87 = scmp.ne.s32.totalorder %s73, %s74
      %p88 = scmp.eq.s32.totalorder %s17, 2
      %p89 = por %p87, %p88
      %p91 = scmp.ne.s32.totalorder %s74, %s90
      %p92 = scmp.eq.s32.totalorder %s17, 0
      %p93 = por %p91, %p92
      %s94 = ssub.s32 %s19, %s33
      %p95 = scmp.eq.s32.totalorder %s94, 0
      %s97 = sadd.s32 %s96, 1
      %s98 = scalar_select %p95, %s96, %s97
      %p101 = pneg %p95
      %p102 = scmp.eq.s32.totalorder %s11, 2
      %p103 = por %p101, %p102
      %p104 = scmp.ne.s32.totalorder %s96, %s99
      %p105 = scmp.eq.s32.totalorder %s11, 0
      %p106 = por %p104, %p105
      %p107 = scmp.ne.s32.totalorder %s96, %s99
      %p108 = scmp.eq.s32.totalorder %s16, 2
      %p109 = por %p107, %p108
      %p110 = scmp.ne.s32.totalorder %s99, %s100
      %p111 = scmp.eq.s32.totalorder %s16, 0
      %p112 = por %p110, %p111
      %p113 = scmp.ne.s32.totalorder %s99, %s100
      %p114 = scmp.eq.s32.totalorder %s17, 2
      %p115 = por %p113, %p114
      %p117 = scmp.ne.s32.totalorder %s100, %s116
      %p118 = scmp.eq.s32.totalorder %s17, 0
      %p119 = por %p117, %p118
      %s120 = ssub.s32 %s19, %s33
      %p121 = scmp.eq.s32.totalorder %s120, 0
      %s123 = sadd.s32 %s122, 1
      %s124 = scalar_select %p121, %s122, %s123
      %p127 = pneg %p121
      %p128 = scmp.eq.s32.totalorder %s11, 2
      %p129 = por %p127, %p128
      %p130 = scmp.ne.s32.totalorder %s122, %s125
      %p131 = scmp.eq.s32.totalorder %s11, 0
      %p132 = por %p130, %p131
      %p133 = scmp.ne.s32.totalorder %s122, %s125
      %p134 = scmp.eq.s32.totalorder %s16, 2
      %p135 = por %p133, %p134
      %p136 = scmp.ne.s32.totalorder %s125, %s126
      %p137 = scmp.eq.s32.totalorder %s16, 0
      %p138 = por %p136, %p137
      %p139 = scmp.ne.s32.totalorder %s125, %s126
      %p140 = scmp.eq.s32.totalorder %s17, 2
      %p141 = por %p139, %p140
      %p143 = scmp.ne.s32.totalorder %s126, %s142
      %p144 = scmp.eq.s32.totalorder %s17, 0
      %p145 = por %p143, %p144
      %s146 = ssub.s32 %s18, %s37
      %s147 = ssub.s32 %s19, %s33
      %s148 = sor.u32 %s146, %s147
      %p149 = scmp.eq.s32.totalorder %s148, 0
      %s151 = sadd.s32 %s150, 1
      %s152 = scalar_select %p149, %s150, %s151
      %p155 = pneg %p149
      %p156 = scmp.eq.s32.totalorder %s11, 2
      %p157 = por %p155, %p156
      %p158 = scmp.ne.s32.totalorder %s150, %s153
      %p159 = scmp.eq.s32.totalorder %s11, 0
      %p160 = por %p158, %p159
      %p161 = scmp.ne.s32.totalorder %s150, %s153
      %p162 = scmp.eq.s32.totalorder %s16, 2
      %p163 = por %p161, %p162
      %p164 = scmp.ne.s32.totalorder %s153, %s154
      %p165 = scmp.eq.s32.totalorder %s16, 0
      %p166 = por %p164, %p165
      %p167 = scmp.ne.s32.totalorder %s153, %s154
      %p168 = scmp.eq.s32.totalorder %s17, 2
      %p169 = por %p167, %p168
      %p171 = scmp.ne.s32.totalorder %s154, %s170
      %p172 = scmp.eq.s32.totalorder %s17, 0
      %p173 = por %p171, %p172
      %p174 = scmp.le.s32.totalorder 1, %s11
      %p175 = scmp.lt.s32.totalorder %s11, 4
      %p176 = pnand %p174, %p175
      %p177 = pneg %p176
      // Predicated region
      $region9: #{forward.9} parent=5 // pred_check
        _
      $region10: #{forward.9} parent=5 // pred_check_branch
        %179 = sbr.rel (%p176) target = $region12
      $region11: #{forward.9} parent=5 // pred_region
        %s180 = ssub.s32 %s11, 1
        // Predicated region
        $region13: #{forward.9} parent=11 // pred_check
          %p181 = pneg %p112
        $region14: #{forward.9} parent=11 // pred_check_branch
          %183 = sbr.rel (%p181) target = $region16
        $region15: #{forward.9} parent=11 // pred_region
          %p184 = scmp.lt.s32.totalorder %s22, 0
          %s185 = scalar_select %p184, %s22, 0
          %s186 = scalar_lea.vmem %s2, %s185
        $region16: #{forward.9} parent=11 // pred_fallthru
          _
        // Predicated region
        $region17: #{forward.9} parent=11 // pred_check
          %p187 = pneg %p138
        $region18: #{forward.9} parent=11 // pred_check_branch
          %189 = sbr.rel (%p187) target = $region20
        $region19: #{forward.9} parent=11 // pred_region
          %p190 = scmp.lt.s32.totalorder %s22, 0
          %s191 = scalar_select %p190, %s22, 0
          %s192 = scalar_lea.vmem %s3, %s191
        $region20: #{forward.9} parent=11 // pred_fallthru
          _
      $region12: #{forward.9} parent=5 // pred_fallthru
        _
      %p193 = scmp.lt.s32.totalorder %s11, 3
      // Predicated region
      $region21: #{forward.9} parent=5 // pred_check
        %p194 = pneg %p193
      $region22: #{forward.9} parent=5 // pred_check_branch
        %196 = sbr.rel (%p194) target = $region24
      $region23: #{forward.9} parent=5 // pred_region
        // Predicated region
        $region25: #{forward.9} parent=23 // pred_check
          %p197 = pneg %p52
        $region26: #{forward.9} parent=23 // pred_check_branch
          %199 = sbr.rel (%p197) target = $region28
        $region27: #{forward.9} parent=23 // pred_region
          %s200 = sand.u32 %s42, 1
          %s201 = sand.u32 %s42, 1
          %s202 = smul.addr %s201, 4608
          %s203 = scalar_lea.vmem [#allocation3], %s202
          %s204 = smul.u32 64, %s18
          %s205 = smul.u32 18, %s20
          %s206 = smul.addr %s204, 54
          %s207 = sadd.s32 %s205, %s206
          %s208 = smul.addr %s207, 4
          %s209 = scalar_lea.vmem %s0, %s208
          // Predicated region
          $region29: #{forward.9} parent=27 // pred_check
            _
          $region30: #{forward.9} parent=27 // pred_check_branch
            %211 = sbr.rel (0) target = $region32
          $region31: #{forward.9} parent=27 // pred_region
            // Predicated region
            $region33: #{forward.9} parent=31 // pred_check
              _
            $region34: #{forward.9} parent=31 // pred_check_branch
              %213 = sbr.rel (0) target = $region36
            $region35: #{forward.9} parent=31 // pred_region
              loop: start=0, step=1, limit=1
              $region37: #{forward.9} parent=35 // loop_pre_header
                _
              $region38: #{forward.9} parent=35 // loop_header
                %s215 = sphi 0, %s219
                %p216 = scmp.ge.s32.totalorder %s215, 1
                %s220 = sphi %s209, %s209
                %s221 = sphi %s203, %s203
              $region39: #{forward.9} parent=35 // loop_header_branch
                %218 = sbr.rel (%p216) target = $region43
              $region40: #{forward.9} parent=35 // loop_body
                %v222 = vld [vmem:[%s220] sm:$0xff]
                %223 = vst [vmem:[%s221] sm:$0xff] %v222
                %v224 = vld [vmem:[%s220 + $0x8] sm:$0xff]
                %225 = vst [vmem:[%s221 + $0x8] sm:$0xff] %v224
                %v226 = vld [vmem:[%s220 + $0x10] sm:$0xff]
                %227 = vst [vmem:[%s221 + $0x10] sm:$0xff] %v226
                %v228 = vld [vmem:[%s220 + $0x18] sm:$0xff]
                %229 = vst [vmem:[%s221 + $0x18] sm:$0xff] %v228
                %v230 = vld [vmem:[%s220 + $0x20] sm:$0xff]
                %231 = vst [vmem:[%s221 + $0x20] sm:$0xff] %v230
                %v232 = vld [vmem:[%s220 + $0x28] sm:$0xff]
                %233 = vst [vmem:[%s221 + $0x28] sm:$0xff] %v232
                %v234 = vld [vmem:[%s220 + $0x30] sm:$0xff]
                %235 = vst [vmem:[%s221 + $0x30] sm:$0xff] %v234
                %v236 = vld [vmem:[%s220 + $0x38] sm:$0xff]
                %237 = vst [vmem:[%s221 + $0x38] sm:$0xff] %v236
                %v238 = vld [vmem:[%s220 + $0x40] sm:$0xff]
                %239 = vst [vmem:[%s221 + $0x40] sm:$0xff] %v238
                %v240 = vld [vmem:[%s220 + $0xd8] sm:$0xff]
                %241 = vst [vmem:[%s221 + $0x48] sm:$0xff] %v240
                %v242 = vld [vmem:[%s220 + $0xe0] sm:$0xff]
                %243 = vst [vmem:[%s221 + $0x50] sm:$0xff] %v242
                %v244 = vld [vmem:[%s220 + $0xe8] sm:$0xff]
                %245 = vst [vmem:[%s221 + $0x58] sm:$0xff] %v244
                %v246 = vld [vmem:[%s220 + $0xf0] sm:$0xff]
                %247 = vst [vmem:[%s221 + $0x60] sm:$0xff] %v246
                %v248 = vld [vmem:[%s220 + $0xf8] sm:$0xff]
                %249 = vst [vmem:[%s221 + $0x68] sm:$0xff] %v248
                %v250 = vld [vmem:[%s220 + $0x100] sm:$0xff]
                %251 = vst [vmem:[%s221 + $0x70] sm:$0xff] %v250
                %v252 = vld [vmem:[%s220 + $0x108] sm:$0xff]
                %253 = vst [vmem:[%s221 + $0x78] sm:$0xff] %v252
                %v254 = vld [vmem:[%s220 + $0x110] sm:$0xff]
                %255 = vst [vmem:[%s221 + $0x80] sm:$0xff] %v254
                %v256 = vld [vmem:[%s220 + $0x118] sm:$0xff]
                %257 = vst [vmem:[%s221 + $0x88] sm:$0xff] %v256
                %v258 = vld [vmem:[%s220 + $0x1b0] sm:$0xff]
                %259 = vst [vmem:[%s221 + $0x90] sm:$0xff] %v258
                %v260 = vld [vmem:[%s220 + $0x1b8] sm:$0xff]
                %261 = vst [vmem:[%s221 + $0x98] sm:$0xff] %v260
                %v262 = vld [vmem:[%s220 + $0x1c0] sm:$0xff]
                %263 = vst [vmem:[%s221 + $0xa0] sm:$0xff] %v262
                %v264 = vld [vmem:[%s220 + $0x1c8] sm:$0xff]
                %265 = vst [vmem:[%s221 + $0xa8] sm:$0xff] %v264
                %v266 = vld [vmem:[%s220 + $0x1d0] sm:$0xff]
                %267 = vst [vmem:[%s221 + $0xb0] sm:$0xff] %v266
                %v268 = vld [vmem:[%s220 + $0x1d8] sm:$0xff]
                %269 = vst [vmem:[%s221 + $0xb8] sm:$0xff] %v268
                %v270 = vld [vmem:[%s220 + $0x1e0] sm:$0xff]
                %271 = vst [vmem:[%s221 + $0xc0] sm:$0xff] %v270
                %v272 = vld [vmem:[%s220 + $0x1e8] sm:$0xff]
                %273 = vst [vmem:[%s221 + $0xc8] sm:$0xff] %v272
                %v274 = vld [vmem:[%s220 + $0x1f0] sm:$0xff]
                %275 = vst [vmem:[%s221 + $0xd0] sm:$0xff] %v274
                %v276 = vld [vmem:[%s220 + $0x288] sm:$0xff]
                %277 = vst [vmem:[%s221 + $0xd8] sm:$0xff] %v276
                %v278 = vld [vmem:[%s220 + $0x290] sm:$0xff]
                %279 = vst [vmem:[%s221 + $0xe0] sm:$0xff] %v278
                %v280 = vld [vmem:[%s220 + $0x298] sm:$0xff]
                %281 = vst [vmem:[%s221 + $0xe8] sm:$0xff] %v280
                %v282 = vld [vmem:[%s220 + $0x2a0] sm:$0xff]
                %283 = vst [vmem:[%s221 + $0xf0] sm:$0xff] %v282
                %v284 = vld [vmem:[%s220 + $0x2a8] sm:$0xff]
                %285 = vst [vmem:[%s221 + $0xf8] sm:$0xff] %v284
                %v286 = vld [vmem:[%s220 + $0x2b0] sm:$0xff]
                %287 = vst [vmem:[%s221 + $0x100] sm:$0xff] %v286
                %v288 = vld [vmem:[%s220 + $0x2b8] sm:$0xff]
                %289 = vst [vmem:[%s221 + $0x108] sm:$0xff] %v288
                %v290 = vld [vmem:[%s220 + $0x2c0] sm:$0xff]
                %291 = vst [vmem:[%s221 + $0x110] sm:$0xff] %v290
                %v292 = vld [vmem:[%s220 + $0x2c8] sm:$0xff]
                %293 = vst [vmem:[%s221 + $0x118] sm:$0xff] %v292
                %v294 = vld [vmem:[%s220 + $0x360] sm:$0xff]
                %295 = vst [vmem:[%s221 + $0x120] sm:$0xff] %v294
                %v296 = vld [vmem:[%s220 + $0x368] sm:$0xff]
                %297 = vst [vmem:[%s221 + $0x128] sm:$0xff] %v296
                %v298 = vld [vmem:[%s220 + $0x370] sm:$0xff]
                %299 = vst [vmem:[%s221 + $0x130] sm:$0xff] %v298
                %v300 = vld [vmem:[%s220 + $0x378] sm:$0xff]
                %301 = vst [vmem:[%s221 + $0x138] sm:$0xff] %v300
                %v302 = vld [vmem:[%s220 + $0x380] sm:$0xff]
                %303 = vst [vmem:[%s221 + $0x140] sm:$0xff] %v302
                %v304 = vld [vmem:[%s220 + $0x388] sm:$0xff]
                %305 = vst [vmem:[%s221 + $0x148] sm:$0xff] %v304
                %v306 = vld [vmem:[%s220 + $0x390] sm:$0xff]
                %307 = vst [vmem:[%s221 + $0x150] sm:$0xff] %v306
                %v308 = vld [vmem:[%s220 + $0x398] sm:$0xff]
                %309 = vst [vmem:[%s221 + $0x158] sm:$0xff] %v308
                %v310 = vld [vmem:[%s220 + $0x3a0] sm:$0xff]
                %311 = vst [vmem:[%s221 + $0x160] sm:$0xff] %v310
                %v312 = vld [vmem:[%s220 + $0x438] sm:$0xff]
                %313 = vst [vmem:[%s221 + $0x168] sm:$0xff] %v312
                %v314 = vld [vmem:[%s220 + $0x440] sm:$0xff]
                %315 = vst [vmem:[%s221 + $0x170] sm:$0xff] %v314
                %v316 = vld [vmem:[%s220 + $0x448] sm:$0xff]
                %317 = vst [vmem:[%s221 + $0x178] sm:$0xff] %v316
                %v318 = vld [vmem:[%s220 + $0x450] sm:$0xff]
                %319 = vst [vmem:[%s221 + $0x180] sm:$0xff] %v318
                %v320 = vld [vmem:[%s220 + $0x458] sm:$0xff]
                %321 = vst [vmem:[%s221 + $0x188] sm:$0xff] %v320
                %v322 = vld [vmem:[%s220 + $0x460] sm:$0xff]
                %323 = vst [vmem:[%s221 + $0x190] sm:$0xff] %v322
                %v324 = vld [vmem:[%s220 + $0x468] sm:$0xff]
                %325 = vst [vmem:[%s221 + $0x198] sm:$0xff] %v324
                %v326 = vld [vmem:[%s220 + $0x470] sm:$0xff]
                %327 = vst [vmem:[%s221 + $0x1a0] sm:$0xff] %v326
                %v328 = vld [vmem:[%s220 + $0x478] sm:$0xff]
                %329 = vst [vmem:[%s221 + $0x1a8] sm:$0xff] %v328
                %v330 = vld [vmem:[%s220 + $0x510] sm:$0xff]
                %331 = vst [vmem:[%s221 + $0x1b0] sm:$0xff] %v330
                %v332 = vld [vmem:[%s220 + $0x518] sm:$0xff]
                %333 = vst [vmem:[%s221 + $0x1b8] sm:$0xff] %v332
                %v334 = vld [vmem:[%s220 + $0x520] sm:$0xff]
                %335 = vst [vmem:[%s221 + $0x1c0] sm:$0xff] %v334
                %v336 = vld [vmem:[%s220 + $0x528] sm:$0xff]
                %337 = vst [vmem:[%s221 + $0x1c8] sm:$0xff] %v336
                %v338 = vld [vmem:[%s220 + $0x530] sm:$0xff]
                %339 = vst [vmem:[%s221 + $0x1d0] sm:$0xff] %v338
                %v340 = vld [vmem:[%s220 + $0x538] sm:$0xff]
                %341 = vst [vmem:[%s221 + $0x1d8] sm:$0xff] %v340
                %v342 = vld [vmem:[%s220 + $0x540] sm:$0xff]
                %343 = vst [vmem:[%s221 + $0x1e0] sm:$0xff] %v342
                %v344 = vld [vmem:[%s220 + $0x548] sm:$0xff]
                %345 = vst [vmem:[%s221 + $0x1e8] sm:$0xff] %v344
                %v346 = vld [vmem:[%s220 + $0x550] sm:$0xff]
                %347 = vst [vmem:[%s221 + $0x1f0] sm:$0xff] %v346
                %v348 = vld [vmem:[%s220 + $0x5e8] sm:$0xff]
                %349 = vst [vmem:[%s221 + $0x1f8] sm:$0xff] %v348
                %v350 = vld [vmem:[%s220 + $0x5f0] sm:$0xff]
                %351 = vst [vmem:[%s221 + $0x200] sm:$0xff] %v350
                %v352 = vld [vmem:[%s220 + $0x5f8] sm:$0xff]
                %353 = vst [vmem:[%s221 + $0x208] sm:$0xff] %v352
                %v354 = vld [vmem:[%s220 + $0x600] sm:$0xff]
                %355 = vst [vmem:[%s221 + $0x210] sm:$0xff] %v354
                %v356 = vld [vmem:[%s220 + $0x608] sm:$0xff]
                %357 = vst [vmem:[%s221 + $0x218] sm:$0xff] %v356
                %v358 = vld [vmem:[%s220 + $0x610] sm:$0xff]
                %359 = vst [vmem:[%s221 + $0x220] sm:$0xff] %v358
                %v360 = vld [vmem:[%s220 + $0x618] sm:$0xff]
                %361 = vst [vmem:[%s221 + $0x228] sm:$0xff] %v360
                %v362 = vld [vmem:[%s220 + $0x620] sm:$0xff]
                %363 = vst [vmem:[%s221 + $0x230] sm:$0xff] %v362
                %v364 = vld [vmem:[%s220 + $0x628] sm:$0xff]
                %365 = vst [vmem:[%s221 + $0x238] sm:$0xff] %v364
                %v366 = vld [vmem:[%s220 + $0x6c0] sm:$0xff]
                %367 = vst [vmem:[%s221 + $0x240] sm:$0xff] %v366
                %v368 = vld [vmem:[%s220 + $0x6c8] sm:$0xff]
                %369 = vst [vmem:[%s221 + $0x248] sm:$0xff] %v368
                %v370 = vld [vmem:[%s220 + $0x6d0] sm:$0xff]
                %371 = vst [vmem:[%s221 + $0x250] sm:$0xff] %v370
                %v372 = vld [vmem:[%s220 + $0x6d8] sm:$0xff]
                %373 = vst [vmem:[%s221 + $0x258] sm:$0xff] %v372
                %v374 = vld [vmem:[%s220 + $0x6e0] sm:$0xff]
                %375 = vst [vmem:[%s221 + $0x260] sm:$0xff] %v374
                %v376 = vld [vmem:[%s220 + $0x6e8] sm:$0xff]
                %377 = vst [vmem:[%s221 + $0x268] sm:$0xff] %v376
                %v378 = vld [vmem:[%s220 + $0x6f0] sm:$0xff]
                %379 = vst [vmem:[%s221 + $0x270] sm:$0xff] %v378
                %v380 = vld [vmem:[%s220 + $0x6f8] sm:$0xff]
                %381 = vst [vmem:[%s221 + $0x278] sm:$0xff] %v380
                %v382 = vld [vmem:[%s220 + $0x700] sm:$0xff]
                %383 = vst [vmem:[%s221 + $0x280] sm:$0xff] %v382
                %v384 = vld [vmem:[%s220 + $0x798] sm:$0xff]
                %385 = vst [vmem:[%s221 + $0x288] sm:$0xff] %v384
                %v386 = vld [vmem:[%s220 + $0x7a0] sm:$0xff]
                %387 = vst [vmem:[%s221 + $0x290] sm:$0xff] %v386
                %v388 = vld [vmem:[%s220 + $0x7a8] sm:$0xff]
                %389 = vst [vmem:[%s221 + $0x298] sm:$0xff] %v388
                %v390 = vld [vmem:[%s220 + $0x7b0] sm:$0xff]
                %391 = vst [vmem:[%s221 + $0x2a0] sm:$0xff] %v390
                %v392 = vld [vmem:[%s220 + $0x7b8] sm:$0xff]
                %393 = vst [vmem:[%s221 + $0x2a8] sm:$0xff] %v392
                %v394 = vld [vmem:[%s220 + $0x7c0] sm:$0xff]
                %395 = vst [vmem:[%s221 + $0x2b0] sm:$0xff] %v394
                %v396 = vld [vmem:[%s220 + $0x7c8] sm:$0xff]
                %397 = vst [vmem:[%s221 + $0x2b8] sm:$0xff] %v396
                %v398 = vld [vmem:[%s220 + $0x7d0] sm:$0xff]
                %399 = vst [vmem:[%s221 + $0x2c0] sm:$0xff] %v398
                %v400 = vld [vmem:[%s220 + $0x7d8] sm:$0xff]
                %401 = vst [vmem:[%s221 + $0x2c8] sm:$0xff] %v400
                %v402 = vld [vmem:[%s220 + $0x870] sm:$0xff]
                %403 = vst [vmem:[%s221 + $0x2d0] sm:$0xff] %v402
                %v404 = vld [vmem:[%s220 + $0x878] sm:$0xff]
                %405 = vst [vmem:[%s221 + $0x2d8] sm:$0xff] %v404
                %v406 = vld [vmem:[%s220 + $0x880] sm:$0xff]
                %407 = vst [vmem:[%s221 + $0x2e0] sm:$0xff] %v406
                %v408 = vld [vmem:[%s220 + $0x888] sm:$0xff]
                %409 = vst [vmem:[%s221 + $0x2e8] sm:$0xff] %v408
                %v410 = vld [vmem:[%s220 + $0x890] sm:$0xff]
                %411 = vst [vmem:[%s221 + $0x2f0] sm:$0xff] %v410
                %v412 = vld [vmem:[%s220 + $0x898] sm:$0xff]
                %413 = vst [vmem:[%s221 + $0x2f8] sm:$0xff] %v412
                %v414 = vld [vmem:[%s220 + $0x8a0] sm:$0xff]
                %415 = vst [vmem:[%s221 + $0x300] sm:$0xff] %v414
                %v416 = vld [vmem:[%s220 + $0x8a8] sm:$0xff]
                %417 = vst [vmem:[%s221 + $0x308] sm:$0xff] %v416
                %v418 = vld [vmem:[%s220 + $0x8b0] sm:$0xff]
                %419 = vst [vmem:[%s221 + $0x310] sm:$0xff] %v418
                %v420 = vld [vmem:[%s220 + $0x948] sm:$0xff]
                %421 = vst [vmem:[%s221 + $0x318] sm:$0xff] %v420
                %v422 = vld [vmem:[%s220 + $0x950] sm:$0xff]
                %423 = vst [vmem:[%s221 + $0x320] sm:$0xff] %v422
                %v424 = vld [vmem:[%s220 + $0x958] sm:$0xff]
                %425 = vst [vmem:[%s221 + $0x328] sm:$0xff] %v424
                %v426 = vld [vmem:[%s220 + $0x960] sm:$0xff]
                %427 = vst [vmem:[%s221 + $0x330] sm:$0xff] %v426
                %v428 = vld [vmem:[%s220 + $0x968] sm:$0xff]
                %429 = vst [vmem:[%s221 + $0x338] sm:$0xff] %v428
                %v430 = vld [vmem:[%s220 + $0x970] sm:$0xff]
                %431 = vst [vmem:[%s221 + $0x340] sm:$0xff] %v430
                %v432 = vld [vmem:[%s220 + $0x978] sm:$0xff]
                %433 = vst [vmem:[%s221 + $0x348] sm:$0xff] %v432
                %v434 = vld [vmem:[%s220 + $0x980] sm:$0xff]
                %435 = vst [vmem:[%s221 + $0x350] sm:$0xff] %v434
                %v436 = vld [vmem:[%s220 + $0x988] sm:$0xff]
                %437 = vst [vmem:[%s221 + $0x358] sm:$0xff] %v436
                %v438 = vld [vmem:[%s220 + $0xa20] sm:$0xff]
                %439 = vst [vmem:[%s221 + $0x360] sm:$0xff] %v438
                %v440 = vld [vmem:[%s220 + $0xa28] sm:$0xff]
                %441 = vst [vmem:[%s221 + $0x368] sm:$0xff] %v440
                %v442 = vld [vmem:[%s220 + $0xa30] sm:$0xff]
                %443 = vst [vmem:[%s221 + $0x370] sm:$0xff] %v442
                %v444 = vld [vmem:[%s220 + $0xa38] sm:$0xff]
                %445 = vst [vmem:[%s221 + $0x378] sm:$0xff] %v444
                %v446 = vld [vmem:[%s220 + $0xa40] sm:$0xff]
                %447 = vst [vmem:[%s221 + $0x380] sm:$0xff] %v446
                %v448 = vld [vmem:[%s220 + $0xa48] sm:$0xff]
                %449 = vst [vmem:[%s221 + $0x388] sm:$0xff] %v448
                %v450 = vld [vmem:[%s220 + $0xa50] sm:$0xff]
                %451 = vst [vmem:[%s221 + $0x390] sm:$0xff] %v450
                %v452 = vld [vmem:[%s220 + $0xa58] sm:$0xff]
                %453 = vst [vmem:[%s221 + $0x398] sm:$0xff] %v452
                %v454 = vld [vmem:[%s220 + $0xa60] sm:$0xff]
                %455 = vst [vmem:[%s221 + $0x3a0] sm:$0xff] %v454
                %v456 = vld [vmem:[%s220 + $0xaf8] sm:$0xff]
                %457 = vst [vmem:[%s221 + $0x3a8] sm:$0xff] %v456
                %v458 = vld [vmem:[%s220 + $0xb00] sm:$0xff]
                %459 = vst [vmem:[%s221 + $0x3b0] sm:$0xff] %v458
                %v460 = vld [vmem:[%s220 + $0xb08] sm:$0xff]
                %461 = vst [vmem:[%s221 + $0x3b8] sm:$0xff] %v460
                %v462 = vld [vmem:[%s220 + $0xb10] sm:$0xff]
                %463 = vst [vmem:[%s221 + $0x3c0] sm:$0xff] %v462
                %v464 = vld [vmem:[%s220 + $0xb18] sm:$0xff]
                %465 = vst [vmem:[%s221 + $0x3c8] sm:$0xff] %v464
                %v466 = vld [vmem:[%s220 + $0xb20] sm:$0xff]
                %467 = vst [vmem:[%s221 + $0x3d0] sm:$0xff] %v466
                %v468 = vld [vmem:[%s220 + $0xb28] sm:$0xff]
                %469 = vst [vmem:[%s221 + $0x3d8] sm:$0xff] %v468
                %v470 = vld [vmem:[%s220 + $0xb30] sm:$0xff]
                %471 = vst [vmem:[%s221 + $0x3e0] sm:$0xff] %v470
                %v472 = vld [vmem:[%s220 + $0xb38] sm:$0xff]
                %473 = vst [vmem:[%s221 + $0x3e8] sm:$0xff] %v472
                %v474 = vld [vmem:[%s220 + $0xbd0] sm:$0xff]
                %475 = vst [vmem:[%s221 + $0x3f0] sm:$0xff] %v474
                %v476 = vld [vmem:[%s220 + $0xbd8] sm:$0xff]
                %477 = vst [vmem:[%s221 + $0x3f8] sm:$0xff] %v476
                %v478 = vld [vmem:[%s220 + $0xbe0] sm:$0xff]
                %479 = vst [vmem:[%s221 + $0x400] sm:$0xff] %v478
                %v480 = vld [vmem:[%s220 + $0xbe8] sm:$0xff]
                %481 = vst [vmem:[%s221 + $0x408] sm:$0xff] %v480
                %v482 = vld [vmem:[%s220 + $0xbf0] sm:$0xff]
                %483 = vst [vmem:[%s221 + $0x410] sm:$0xff] %v482
                %v484 = vld [vmem:[%s220 + $0xbf8] sm:$0xff]
                %485 = vst [vmem:[%s221 + $0x418] sm:$0xff] %v484
                %v486 = vld [vmem:[%s220 + $0xc00] sm:$0xff]
                %487 = vst [vmem:[%s221 + $0x420] sm:$0xff] %v486
                %v488 = vld [vmem:[%s220 + $0xc08] sm:$0xff]
                %489 = vst [vmem:[%s221 + $0x428] sm:$0xff] %v488
                %v490 = vld [vmem:[%s220 + $0xc10] sm:$0xff]
                %491 = vst [vmem:[%s221 + $0x430] sm:$0xff] %v490
                %v492 = vld [vmem:[%s220 + $0xca8] sm:$0xff]
                %493 = vst [vmem:[%s221 + $0x438] sm:$0xff] %v492
                %v494 = vld [vmem:[%s220 + $0xcb0] sm:$0xff]
                %495 = vst [vmem:[%s221 + $0x440] sm:$0xff] %v494
                %v496 = vld [vmem:[%s220 + $0xcb8] sm:$0xff]
                %497 = vst [vmem:[%s221 + $0x448] sm:$0xff] %v496
                %v498 = vld [vmem:[%s220 + $0xcc0] sm:$0xff]
                %499 = vst [vmem:[%s221 + $0x450] sm:$0xff] %v498
                %v500 = vld [vmem:[%s220 + $0xcc8] sm:$0xff]
                %501 = vst [vmem:[%s221 + $0x458] sm:$0xff] %v500
                %v502 = vld [vmem:[%s220 + $0xcd0] sm:$0xff]
                %503 = vst [vmem:[%s221 + $0x460] sm:$0xff] %v502
                %v504 = vld [vmem:[%s220 + $0xcd8] sm:$0xff]
                %505 = vst [vmem:[%s221 + $0x468] sm:$0xff] %v504
                %v506 = vld [vmem:[%s220 + $0xce0] sm:$0xff]
                %507 = vst [vmem:[%s221 + $0x470] sm:$0xff] %v506
                %v508 = vld [vmem:[%s220 + $0xce8] sm:$0xff]
                %509 = vst [vmem:[%s221 + $0x478] sm:$0xff] %v508
                %v510 = vld [vmem:[%s220 + $0xd80] sm:$0xff]
                %511 = vst [vmem:[%s221 + $0x480] sm:$0xff] %v510
                %v512 = vld [vmem:[%s220 + $0xd88] sm:$0xff]
                %513 = vst [vmem:[%s221 + $0x488] sm:$0xff] %v512
                %v514 = vld [vmem:[%s220 + $0xd90] sm:$0xff]
                %515 = vst [vmem:[%s221 + $0x490] sm:$0xff] %v514
                %v516 = vld [vmem:[%s220 + $0xd98] sm:$0xff]
                %517 = vst [vmem:[%s221 + $0x498] sm:$0xff] %v516
                %v518 = vld [vmem:[%s220 + $0xda0] sm:$0xff]
                %519 = vst [vmem:[%s221 + $0x4a0] sm:$0xff] %v518
                %v520 = vld [vmem:[%s220 + $0xda8] sm:$0xff]
                %521 = vst [vmem:[%s221 + $0x4a8] sm:$0xff] %v520
                %v522 = vld [vmem:[%s220 + $0xdb0] sm:$0xff]
                %523 = vst [vmem:[%s221 + $0x4b0] sm:$0xff] %v522
                %v524 = vld [vmem:[%s220 + $0xdb8] sm:$0xff]
                %525 = vst [vmem:[%s221 + $0x4b8] sm:$0xff] %v524
                %v526 = vld [vmem:[%s220 + $0xdc0] sm:$0xff]
                %527 = vst [vmem:[%s221 + $0x4c0] sm:$0xff] %v526
                %v528 = vld [vmem:[%s220 + $0xe58] sm:$0xff]
                %529 = vst [vmem:[%s221 + $0x4c8] sm:$0xff] %v528
                %v530 = vld [vmem:[%s220 + $0xe60] sm:$0xff]
                %531 = vst [vmem:[%s221 + $0x4d0] sm:$0xff] %v530
                %v532 = vld [vmem:[%s220 + $0xe68] sm:$0xff]
                %533 = vst [vmem:[%s221 + $0x4d8] sm:$0xff] %v532
                %v534 = vld [vmem:[%s220 + $0xe70] sm:$0xff]
                %535 = vst [vmem:[%s221 + $0x4e0] sm:$0xff] %v534
                %v536 = vld [vmem:[%s220 + $0xe78] sm:$0xff]
                %537 = vst [vmem:[%s221 + $0x4e8] sm:$0xff] %v536
                %v538 = vld [vmem:[%s220 + $0xe80] sm:$0xff]
                %539 = vst [vmem:[%s221 + $0x4f0] sm:$0xff] %v538
                %v540 = vld [vmem:[%s220 + $0xe88] sm:$0xff]
                %541 = vst [vmem:[%s221 + $0x4f8] sm:$0xff] %v540
                %v542 = vld [vmem:[%s220 + $0xe90] sm:$0xff]
                %543 = vst [vmem:[%s221 + $0x500] sm:$0xff] %v542
                %v544 = vld [vmem:[%s220 + $0xe98] sm:$0xff]
                %545 = vst [vmem:[%s221 + $0x508] sm:$0xff] %v544
                %v546 = vld [vmem:[%s220 + $0xf30] sm:$0xff]
                %547 = vst [vmem:[%s221 + $0x510] sm:$0xff] %v546
                %v548 = vld [vmem:[%s220 + $0xf38] sm:$0xff]
                %549 = vst [vmem:[%s221 + $0x518] sm:$0xff] %v548
                %v550 = vld [vmem:[%s220 + $0xf40] sm:$0xff]
                %551 = vst [vmem:[%s221 + $0x520] sm:$0xff] %v550
                %v552 = vld [vmem:[%s220 + $0xf48] sm:$0xff]
                %553 = vst [vmem:[%s221 + $0x528] sm:$0xff] %v552
                %v554 = vld [vmem:[%s220 + $0xf50] sm:$0xff]
                %555 = vst [vmem:[%s221 + $0x530] sm:$0xff] %v554
                %v556 = vld [vmem:[%s220 + $0xf58] sm:$0xff]
                %557 = vst [vmem:[%s221 + $0x538] sm:$0xff] %v556
                %v558 = vld [vmem:[%s220 + $0xf60] sm:$0xff]
                %559 = vst [vmem:[%s221 + $0x540] sm:$0xff] %v558
                %v560 = vld [vmem:[%s220 + $0xf68] sm:$0xff]
                %561 = vst [vmem:[%s221 + $0x548] sm:$0xff] %v560
                %v562 = vld [vmem:[%s220 + $0xf70] sm:$0xff]
                %563 = vst [vmem:[%s221 + $0x550] sm:$0xff] %v562
                %v564 = vld [vmem:[%s220 + $0x1008] sm:$0xff]
                %565 = vst [vmem:[%s221 + $0x558] sm:$0xff] %v564
                %v566 = vld [vmem:[%s220 + $0x1010] sm:$0xff]
                %567 = vst [vmem:[%s221 + $0x560] sm:$0xff] %v566
                %v568 = vld [vmem:[%s220 + $0x1018] sm:$0xff]
                %569 = vst [vmem:[%s221 + $0x568] sm:$0xff] %v568
                %v570 = vld [vmem:[%s220 + $0x1020] sm:$0xff]
                %571 = vst [vmem:[%s221 + $0x570] sm:$0xff] %v570
                %v572 = vld [vmem:[%s220 + $0x1028] sm:$0xff]
                %573 = vst [vmem:[%s221 + $0x578] sm:$0xff] %v572
                %v574 = vld [vmem:[%s220 + $0x1030] sm:$0xff]
                %575 = vst [vmem:[%s221 + $0x580] sm:$0xff] %v574
                %v576 = vld [vmem:[%s220 + $0x1038] sm:$0xff]
                %577 = vst [vmem:[%s221 + $0x588] sm:$0xff] %v576
                %v578 = vld [vmem:[%s220 + $0x1040] sm:$0xff]
                %579 = vst [vmem:[%s221 + $0x590] sm:$0xff] %v578
                %v580 = vld [vmem:[%s220 + $0x1048] sm:$0xff]
                %581 = vst [vmem:[%s221 + $0x598] sm:$0xff] %v580
                %v582 = vld [vmem:[%s220 + $0x10e0] sm:$0xff]
                %583 = vst [vmem:[%s221 + $0x5a0] sm:$0xff] %v582
                %v584 = vld [vmem:[%s220 + $0x10e8] sm:$0xff]
                %585 = vst [vmem:[%s221 + $0x5a8] sm:$0xff] %v584
                %v586 = vld [vmem:[%s220 + $0x10f0] sm:$0xff]
                %587 = vst [vmem:[%s221 + $0x5b0] sm:$0xff] %v586
                %v588 = vld [vmem:[%s220 + $0x10f8] sm:$0xff]
                %589 = vst [vmem:[%s221 + $0x5b8] sm:$0xff] %v588
                %v590 = vld [vmem:[%s220 + $0x1100] sm:$0xff]
                %591 = vst [vmem:[%s221 + $0x5c0] sm:$0xff] %v590
                %v592 = vld [vmem:[%s220 + $0x1108] sm:$0xff]
                %593 = vst [vmem:[%s221 + $0x5c8] sm:$0xff] %v592
                %v594 = vld [vmem:[%s220 + $0x1110] sm:$0xff]
                %595 = vst [vmem:[%s221 + $0x5d0] sm:$0xff] %v594
                %v596 = vld [vmem:[%s220 + $0x1118] sm:$0xff]
                %597 = vst [vmem:[%s221 + $0x5d8] sm:$0xff] %v596
                %v598 = vld [vmem:[%s220 + $0x1120] sm:$0xff]
                %599 = vst [vmem:[%s221 + $0x5e0] sm:$0xff] %v598
                %v600 = vld [vmem:[%s220 + $0x11b8] sm:$0xff]
                %601 = vst [vmem:[%s221 + $0x5e8] sm:$0xff] %v600
                %v602 = vld [vmem:[%s220 + $0x11c0] sm:$0xff]
                %603 = vst [vmem:[%s221 + $0x5f0] sm:$0xff] %v602
                %v604 = vld [vmem:[%s220 + $0x11c8] sm:$0xff]
                %605 = vst [vmem:[%s221 + $0x5f8] sm:$0xff] %v604
                %v606 = vld [vmem:[%s220 + $0x11d0] sm:$0xff]
                %607 = vst [vmem:[%s221 + $0x600] sm:$0xff] %v606
                %v608 = vld [vmem:[%s220 + $0x11d8] sm:$0xff]
                %609 = vst [vmem:[%s221 + $0x608] sm:$0xff] %v608
                %v610 = vld [vmem:[%s220 + $0x11e0] sm:$0xff]
                %611 = vst [vmem:[%s221 + $0x610] sm:$0xff] %v610
                %v612 = vld [vmem:[%s220 + $0x11e8] sm:$0xff]
                %613 = vst [vmem:[%s221 + $0x618] sm:$0xff] %v612
                %v614 = vld [vmem:[%s220 + $0x11f0] sm:$0xff]
                %615 = vst [vmem:[%s221 + $0x620] sm:$0xff] %v614
                %v616 = vld [vmem:[%s220 + $0x11f8] sm:$0xff]
                %617 = vst [vmem:[%s221 + $0x628] sm:$0xff] %v616
                %v618 = vld [vmem:[%s220 + $0x1290] sm:$0xff]
                %619 = vst [vmem:[%s221 + $0x630] sm:$0xff] %v618
                %v620 = vld [vmem:[%s220 + $0x1298] sm:$0xff]
                %621 = vst [vmem:[%s221 + $0x638] sm:$0xff] %v620
                %v622 = vld [vmem:[%s220 + $0x12a0] sm:$0xff]
                %623 = vst [vmem:[%s221 + $0x640] sm:$0xff] %v622
                %v624 = vld [vmem:[%s220 + $0x12a8] sm:$0xff]
                %625 = vst [vmem:[%s221 + $0x648] sm:$0xff] %v624
                %v626 = vld [vmem:[%s220 + $0x12b0] sm:$0xff]
                %627 = vst [vmem:[%s221 + $0x650] sm:$0xff] %v626
                %v628 = vld [vmem:[%s220 + $0x12b8] sm:$0xff]
                %629 = vst [vmem:[%s221 + $0x658] sm:$0xff] %v628
                %v630 = vld [vmem:[%s220 + $0x12c0] sm:$0xff]
                %631 = vst [vmem:[%s221 + $0x660] sm:$0xff] %v630
                %v632 = vld [vmem:[%s220 + $0x12c8] sm:$0xff]
                %633 = vst [vmem:[%s221 + $0x668] sm:$0xff] %v632
                %v634 = vld [vmem:[%s220 + $0x12d0] sm:$0xff]
                %635 = vst [vmem:[%s221 + $0x670] sm:$0xff] %v634
                %v636 = vld [vmem:[%s220 + $0x1368] sm:$0xff]
                %637 = vst [vmem:[%s221 + $0x678] sm:$0xff] %v636
                %v638 = vld [vmem:[%s220 + $0x1370] sm:$0xff]
                %639 = vst [vmem:[%s221 + $0x680] sm:$0xff] %v638
                %v640 = vld [vmem:[%s220 + $0x1378] sm:$0xff]
                %641 = vst [vmem:[%s221 + $0x688] sm:$0xff] %v640
                %v642 = vld [vmem:[%s220 + $0x1380] sm:$0xff]
                %643 = vst [vmem:[%s221 + $0x690] sm:$0xff] %v642
                %v644 = vld [vmem:[%s220 + $0x1388] sm:$0xff]
                %645 = vst [vmem:[%s221 + $0x698] sm:$0xff] %v644
                %v646 = vld [vmem:[%s220 + $0x1390] sm:$0xff]
                %647 = vst [vmem:[%s221 + $0x6a0] sm:$0xff] %v646
                %v648 = vld [vmem:[%s220 + $0x1398] sm:$0xff]
                %649 = vst [vmem:[%s221 + $0x6a8] sm:$0xff] %v648
                %v650 = vld [vmem:[%s220 + $0x13a0] sm:$0xff]
                %651 = vst [vmem:[%s221 + $0x6b0] sm:$0xff] %v650
                %v652 = vld [vmem:[%s220 + $0x13a8] sm:$0xff]
                %653 = vst [vmem:[%s221 + $0x6b8] sm:$0xff] %v652
                %v654 = vld [vmem:[%s220 + $0x1440] sm:$0xff]
                %655 = vst [vmem:[%s221 + $0x6c0] sm:$0xff] %v654
                %v656 = vld [vmem:[%s220 + $0x1448] sm:$0xff]
                %657 = vst [vmem:[%s221 + $0x6c8] sm:$0xff] %v656
                %v658 = vld [vmem:[%s220 + $0x1450] sm:$0xff]
                %659 = vst [vmem:[%s221 + $0x6d0] sm:$0xff] %v658
                %v660 = vld [vmem:[%s220 + $0x1458] sm:$0xff]
                %661 = vst [vmem:[%s221 + $0x6d8] sm:$0xff] %v660
                %v662 = vld [vmem:[%s220 + $0x1460] sm:$0xff]
                %663 = vst [vmem:[%s221 + $0x6e0] sm:$0xff] %v662
                %v664 = vld [vmem:[%s220 + $0x1468] sm:$0xff]
                %665 = vst [vmem:[%s221 + $0x6e8] sm:$0xff] %v664
                %v666 = vld [vmem:[%s220 + $0x1470] sm:$0xff]
                %667 = vst [vmem:[%s221 + $0x6f0] sm:$0xff] %v666
                %v668 = vld [vmem:[%s220 + $0x1478] sm:$0xff]
                %669 = vst [vmem:[%s221 + $0x6f8] sm:$0xff] %v668
                %v670 = vld [vmem:[%s220 + $0x1480] sm:$0xff]
                %671 = vst [vmem:[%s221 + $0x700] sm:$0xff] %v670
                %v672 = vld [vmem:[%s220 + $0x1518] sm:$0xff]
                %673 = vst [vmem:[%s221 + $0x708] sm:$0xff] %v672
                %v674 = vld [vmem:[%s220 + $0x1520] sm:$0xff]
                %675 = vst [vmem:[%s221 + $0x710] sm:$0xff] %v674
                %v676 = vld [vmem:[%s220 + $0x1528] sm:$0xff]
                %677 = vst [vmem:[%s221 + $0x718] sm:$0xff] %v676
                %v678 = vld [vmem:[%s220 + $0x1530] sm:$0xff]
                %679 = vst [vmem:[%s221 + $0x720] sm:$0xff] %v678
                %v680 = vld [vmem:[%s220 + $0x1538] sm:$0xff]
                %681 = vst [vmem:[%s221 + $0x728] sm:$0xff] %v680
                %v682 = vld [vmem:[%s220 + $0x1540] sm:$0xff]
                %683 = vst [vmem:[%s221 + $0x730] sm:$0xff] %v682
                %v684 = vld [vmem:[%s220 + $0x1548] sm:$0xff]
                %685 = vst [vmem:[%s221 + $0x738] sm:$0xff] %v684
                %v686 = vld [vmem:[%s220 + $0x1550] sm:$0xff]
                %687 = vst [vmem:[%s221 + $0x740] sm:$0xff] %v686
                %v688 = vld [vmem:[%s220 + $0x1558] sm:$0xff]
                %689 = vst [vmem:[%s221 + $0x748] sm:$0xff] %v688
                %v690 = vld [vmem:[%s220 + $0x15f0] sm:$0xff]
                %691 = vst [vmem:[%s221 + $0x750] sm:$0xff] %v690
                %v692 = vld [vmem:[%s220 + $0x15f8] sm:$0xff]
                %693 = vst [vmem:[%s221 + $0x758] sm:$0xff] %v692
                %v694 = vld [vmem:[%s220 + $0x1600] sm:$0xff]
                %695 = vst [vmem:[%s221 + $0x760] sm:$0xff] %v694
                %v696 = vld [vmem:[%s220 + $0x1608] sm:$0xff]
                %697 = vst [vmem:[%s221 + $0x768] sm:$0xff] %v696
                %v698 = vld [vmem:[%s220 + $0x1610] sm:$0xff]
                %699 = vst [vmem:[%s221 + $0x770] sm:$0xff] %v698
                %v700 = vld [vmem:[%s220 + $0x1618] sm:$0xff]
                %701 = vst [vmem:[%s221 + $0x778] sm:$0xff] %v700
                %v702 = vld [vmem:[%s220 + $0x1620] sm:$0xff]
                %703 = vst [vmem:[%s221 + $0x780] sm:$0xff] %v702
                %v704 = vld [vmem:[%s220 + $0x1628] sm:$0xff]
                %705 = vst [vmem:[%s221 + $0x788] sm:$0xff] %v704
                %v706 = vld [vmem:[%s220 + $0x1630] sm:$0xff]
                %707 = vst [vmem:[%s221 + $0x790] sm:$0xff] %v706
                %v708 = vld [vmem:[%s220 + $0x16c8] sm:$0xff]
                %709 = vst [vmem:[%s221 + $0x798] sm:$0xff] %v708
                %v710 = vld [vmem:[%s220 + $0x16d0] sm:$0xff]
                %711 = vst [vmem:[%s221 + $0x7a0] sm:$0xff] %v710
                %v712 = vld [vmem:[%s220 + $0x16d8] sm:$0xff]
                %713 = vst [vmem:[%s221 + $0x7a8] sm:$0xff] %v712
                %v714 = vld [vmem:[%s220 + $0x16e0] sm:$0xff]
                %715 = vst [vmem:[%s221 + $0x7b0] sm:$0xff] %v714
                %v716 = vld [vmem:[%s220 + $0x16e8] sm:$0xff]
                %717 = vst [vmem:[%s221 + $0x7b8] sm:$0xff] %v716
                %v718 = vld [vmem:[%s220 + $0x16f0] sm:$0xff]
                %719 = vst [vmem:[%s221 + $0x7c0] sm:$0xff] %v718
                %v720 = vld [vmem:[%s220 + $0x16f8] sm:$0xff]
                %721 = vst [vmem:[%s221 + $0x7c8] sm:$0xff] %v720
                %v722 = vld [vmem:[%s220 + $0x1700] sm:$0xff]
                %723 = vst [vmem:[%s221 + $0x7d0] sm:$0xff] %v722
                %v724 = vld [vmem:[%s220 + $0x1708] sm:$0xff]
                %725 = vst [vmem:[%s221 + $0x7d8] sm:$0xff] %v724
                %v726 = vld [vmem:[%s220 + $0x17a0] sm:$0xff]
                %727 = vst [vmem:[%s221 + $0x7e0] sm:$0xff] %v726
                %v728 = vld [vmem:[%s220 + $0x17a8] sm:$0xff]
                %729 = vst [vmem:[%s221 + $0x7e8] sm:$0xff] %v728
                %v730 = vld [vmem:[%s220 + $0x17b0] sm:$0xff]
                %731 = vst [vmem:[%s221 + $0x7f0] sm:$0xff] %v730
                %v732 = vld [vmem:[%s220 + $0x17b8] sm:$0xff]
                %733 = vst [vmem:[%s221 + $0x7f8] sm:$0xff] %v732
                %v734 = vld [vmem:[%s220 + $0x17c0] sm:$0xff]
                %735 = vst [vmem:[%s221 + $0x800] sm:$0xff] %v734
                %v736 = vld [vmem:[%s220 + $0x17c8] sm:$0xff]
                %737 = vst [vmem:[%s221 + $0x808] sm:$0xff] %v736
                %v738 = vld [vmem:[%s220 + $0x17d0] sm:$0xff]
                %739 = vst [vmem:[%s221 + $0x810] sm:$0xff] %v738
                %v740 = vld [vmem:[%s220 + $0x17d8] sm:$0xff]
                %741 = vst [vmem:[%s221 + $0x818] sm:$0xff] %v740
                %v742 = vld [vmem:[%s220 + $0x17e0] sm:$0xff]
                %743 = vst [vmem:[%s221 + $0x820] sm:$0xff] %v742
                %v744 = vld [vmem:[%s220 + $0x1878] sm:$0xff]
                %745 = vst [vmem:[%s221 + $0x828] sm:$0xff] %v744
                %v746 = vld [vmem:[%s220 + $0x1880] sm:$0xff]
                %747 = vst [vmem:[%s221 + $0x830] sm:$0xff] %v746
                %v748 = vld [vmem:[%s220 + $0x1888] sm:$0xff]
                %749 = vst [vmem:[%s221 + $0x838] sm:$0xff] %v748
                %v750 = vld [vmem:[%s220 + $0x1890] sm:$0xff]
                %751 = vst [vmem:[%s221 + $0x840] sm:$0xff] %v750
                %v752 = vld [vmem:[%s220 + $0x1898] sm:$0xff]
                %753 = vst [vmem:[%s221 + $0x848] sm:$0xff] %v752
                %v754 = vld [vmem:[%s220 + $0x18a0] sm:$0xff]
                %755 = vst [vmem:[%s221 + $0x850] sm:$0xff] %v754
                %v756 = vld [vmem:[%s220 + $0x18a8] sm:$0xff]
                %757 = vst [vmem:[%s221 + $0x858] sm:$0xff] %v756
                %v758 = vld [vmem:[%s220 + $0x18b0] sm:$0xff]
                %759 = vst [vmem:[%s221 + $0x860] sm:$0xff] %v758
                %v760 = vld [vmem:[%s220 + $0x18b8] sm:$0xff]
                %761 = vst [vmem:[%s221 + $0x868] sm:$0xff] %v760
                %v762 = vld [vmem:[%s220 + $0x1950] sm:$0xff]
                %763 = vst [vmem:[%s221 + $0x870] sm:$0xff] %v762
                %v764 = vld [vmem:[%s220 + $0x1958] sm:$0xff]
                %765 = vst [vmem:[%s221 + $0x878] sm:$0xff] %v764
                %v766 = vld [vmem:[%s220 + $0x1960] sm:$0xff]
                %767 = vst [vmem:[%s221 + $0x880] sm:$0xff] %v766
                %v768 = vld [vmem:[%s220 + $0x1968] sm:$0xff]
                %769 = vst [vmem:[%s221 + $0x888] sm:$0xff] %v768
                %v770 = vld [vmem:[%s220 + $0x1970] sm:$0xff]
                %771 = vst [vmem:[%s221 + $0x890] sm:$0xff] %v770
                %v772 = vld [vmem:[%s220 + $0x1978] sm:$0xff]
                %773 = vst [vmem:[%s221 + $0x898] sm:$0xff] %v772
                %v774 = vld [vmem:[%s220 + $0x1980] sm:$0xff]
                %775 = vst [vmem:[%s221 + $0x8a0] sm:$0xff] %v774
                %v776 = vld [vmem:[%s220 + $0x1988] sm:$0xff]
                %777 = vst [vmem:[%s221 + $0x8a8] sm:$0xff] %v776
                %v778 = vld [vmem:[%s220 + $0x1990] sm:$0xff]
                %779 = vst [vmem:[%s221 + $0x8b0] sm:$0xff] %v778
                %v780 = vld [vmem:[%s220 + $0x1a28] sm:$0xff]
                %781 = vst [vmem:[%s221 + $0x8b8] sm:$0xff] %v780
                %v782 = vld [vmem:[%s220 + $0x1a30] sm:$0xff]
                %783 = vst [vmem:[%s221 + $0x8c0] sm:$0xff] %v782
                %v784 = vld [vmem:[%s220 + $0x1a38] sm:$0xff]
                %785 = vst [vmem:[%s221 + $0x8c8] sm:$0xff] %v784
                %v786 = vld [vmem:[%s220 + $0x1a40] sm:$0xff]
                %787 = vst [vmem:[%s221 + $0x8d0] sm:$0xff] %v786
                %v788 = vld [vmem:[%s220 + $0x1a48] sm:$0xff]
                %789 = vst [vmem:[%s221 + $0x8d8] sm:$0xff] %v788
                %v790 = vld [vmem:[%s220 + $0x1a50] sm:$0xff]
                %791 = vst [vmem:[%s221 + $0x8e0] sm:$0xff] %v790
                %v792 = vld [vmem:[%s220 + $0x1a58] sm:$0xff]
                %793 = vst [vmem:[%s221 + $0x8e8] sm:$0xff] %v792
                %v794 = vld [vmem:[%s220 + $0x1a60] sm:$0xff]
                %795 = vst [vmem:[%s221 + $0x8f0] sm:$0xff] %v794
                %v796 = vld [vmem:[%s220 + $0x1a68] sm:$0xff]
                %797 = vst [vmem:[%s221 + $0x8f8] sm:$0xff] %v796
                %v798 = vld [vmem:[%s220 + $0x1b00] sm:$0xff]
                %799 = vst [vmem:[%s221 + $0x900] sm:$0xff] %v798
                %v800 = vld [vmem:[%s220 + $0x1b08] sm:$0xff]
                %801 = vst [vmem:[%s221 + $0x908] sm:$0xff] %v800
                %v802 = vld [vmem:[%s220 + $0x1b10] sm:$0xff]
                %803 = vst [vmem:[%s221 + $0x910] sm:$0xff] %v802
                %v804 = vld [vmem:[%s220 + $0x1b18] sm:$0xff]
                %805 = vst [vmem:[%s221 + $0x918] sm:$0xff] %v804
                %v806 = vld [vmem:[%s220 + $0x1b20] sm:$0xff]
                %807 = vst [vmem:[%s221 + $0x920] sm:$0xff] %v806
                %v808 = vld [vmem:[%s220 + $0x1b28] sm:$0xff]
                %809 = vst [vmem:[%s221 + $0x928] sm:$0xff] %v808
                %v810 = vld [vmem:[%s220 + $0x1b30] sm:$0xff]
                %811 = vst [vmem:[%s221 + $0x930] sm:$0xff] %v810
                %v812 = vld [vmem:[%s220 + $0x1b38] sm:$0xff]
                %813 = vst [vmem:[%s221 + $0x938] sm:$0xff] %v812
                %v814 = vld [vmem:[%s220 + $0x1b40] sm:$0xff]
                %815 = vst [vmem:[%s221 + $0x940] sm:$0xff] %v814
                %v816 = vld [vmem:[%s220 + $0x1bd8] sm:$0xff]
                %817 = vst [vmem:[%s221 + $0x948] sm:$0xff] %v816
                %v818 = vld [vmem:[%s220 + $0x1be0] sm:$0xff]
                %819 = vst [vmem:[%s221 + $0x950] sm:$0xff] %v818
                %v820 = vld [vmem:[%s220 + $0x1be8] sm:$0xff]
                %821 = vst [vmem:[%s221 + $0x958] sm:$0xff] %v820
                %v822 = vld [vmem:[%s220 + $0x1bf0] sm:$0xff]
                %823 = vst [vmem:[%s221 + $0x960] sm:$0xff] %v822
                %v824 = vld [vmem:[%s220 + $0x1bf8] sm:$0xff]
                %825 = vst [vmem:[%s221 + $0x968] sm:$0xff] %v824
                %v826 = vld [vmem:[%s220 + $0x1c00] sm:$0xff]
                %827 = vst [vmem:[%s221 + $0x970] sm:$0xff] %v826
                %v828 = vld [vmem:[%s220 + $0x1c08] sm:$0xff]
                %829 = vst [vmem:[%s221 + $0x978] sm:$0xff] %v828
                %v830 = vld [vmem:[%s220 + $0x1c10] sm:$0xff]
                %831 = vst [vmem:[%s221 + $0x980] sm:$0xff] %v830
                %v832 = vld [vmem:[%s220 + $0x1c18] sm:$0xff]
                %833 = vst [vmem:[%s221 + $0x988] sm:$0xff] %v832
                %v834 = vld [vmem:[%s220 + $0x1cb0] sm:$0xff]
                %835 = vst [vmem:[%s221 + $0x990] sm:$0xff] %v834
                %v836 = vld [vmem:[%s220 + $0x1cb8] sm:$0xff]
                %837 = vst [vmem:[%s221 + $0x998] sm:$0xff] %v836
                %v838 = vld [vmem:[%s220 + $0x1cc0] sm:$0xff]
                %839 = vst [vmem:[%s221 + $0x9a0] sm:$0xff] %v838
                %v840 = vld [vmem:[%s220 + $0x1cc8] sm:$0xff]
                %841 = vst [vmem:[%s221 + $0x9a8] sm:$0xff] %v840
                %v842 = vld [vmem:[%s220 + $0x1cd0] sm:$0xff]
                %843 = vst [vmem:[%s221 + $0x9b0] sm:$0xff] %v842
                %v844 = vld [vmem:[%s220 + $0x1cd8] sm:$0xff]
                %845 = vst [vmem:[%s221 + $0x9b8] sm:$0xff] %v844
                %v846 = vld [vmem:[%s220 + $0x1ce0] sm:$0xff]
                %847 = vst [vmem:[%s221 + $0x9c0] sm:$0xff] %v846
                %v848 = vld [vmem:[%s220 + $0x1ce8] sm:$0xff]
                %849 = vst [vmem:[%s221 + $0x9c8] sm:$0xff] %v848
                %v850 = vld [vmem:[%s220 + $0x1cf0] sm:$0xff]
                %851 = vst [vmem:[%s221 + $0x9d0] sm:$0xff] %v850
                %v852 = vld [vmem:[%s220 + $0x1d88] sm:$0xff]
                %853 = vst [vmem:[%s221 + $0x9d8] sm:$0xff] %v852
                %v854 = vld [vmem:[%s220 + $0x1d90] sm:$0xff]
                %855 = vst [vmem:[%s221 + $0x9e0] sm:$0xff] %v854
                %v856 = vld [vmem:[%s220 + $0x1d98] sm:$0xff]
                %857 = vst [vmem:[%s221 + $0x9e8] sm:$0xff] %v856
                %v858 = vld [vmem:[%s220 + $0x1da0] sm:$0xff]
                %859 = vst [vmem:[%s221 + $0x9f0] sm:$0xff] %v858
                %v860 = vld [vmem:[%s220 + $0x1da8] sm:$0xff]
                %861 = vst [vmem:[%s221 + $0x9f8] sm:$0xff] %v860
                %v862 = vld [vmem:[%s220 + $0x1db0] sm:$0xff]
                %863 = vst [vmem:[%s221 + $0xa00] sm:$0xff] %v862
                %v864 = vld [vmem:[%s220 + $0x1db8] sm:$0xff]
                %865 = vst [vmem:[%s221 + $0xa08] sm:$0xff] %v864
                %v866 = vld [vmem:[%s220 + $0x1dc0] sm:$0xff]
                %867 = vst [vmem:[%s221 + $0xa10] sm:$0xff] %v866
                %v868 = vld [vmem:[%s220 + $0x1dc8] sm:$0xff]
                %869 = vst [vmem:[%s221 + $0xa18] sm:$0xff] %v868
                %v870 = vld [vmem:[%s220 + $0x1e60] sm:$0xff]
                %871 = vst [vmem:[%s221 + $0xa20] sm:$0xff] %v870
                %v872 = vld [vmem:[%s220 + $0x1e68] sm:$0xff]
                %873 = vst [vmem:[%s221 + $0xa28] sm:$0xff] %v872
                %v874 = vld [vmem:[%s220 + $0x1e70] sm:$0xff]
                %875 = vst [vmem:[%s221 + $0xa30] sm:$0xff] %v874
                %v876 = vld [vmem:[%s220 + $0x1e78] sm:$0xff]
                %877 = vst [vmem:[%s221 + $0xa38] sm:$0xff] %v876
                %v878 = vld [vmem:[%s220 + $0x1e80] sm:$0xff]
                %879 = vst [vmem:[%s221 + $0xa40] sm:$0xff] %v878
                %v880 = vld [vmem:[%s220 + $0x1e88] sm:$0xff]
                %881 = vst [vmem:[%s221 + $0xa48] sm:$0xff] %v880
                %v882 = vld [vmem:[%s220 + $0x1e90] sm:$0xff]
                %883 = vst [vmem:[%s221 + $0xa50] sm:$0xff] %v882
                %v884 = vld [vmem:[%s220 + $0x1e98] sm:$0xff]
                %885 = vst [vmem:[%s221 + $0xa58] sm:$0xff] %v884
                %v886 = vld [vmem:[%s220 + $0x1ea0] sm:$0xff]
                %887 = vst [vmem:[%s221 + $0xa60] sm:$0xff] %v886
                %v888 = vld [vmem:[%s220 + $0x1f38] sm:$0xff]
                %889 = vst [vmem:[%s221 + $0xa68] sm:$0xff] %v888
                %v890 = vld [vmem:[%s220 + $0x1f40] sm:$0xff]
                %891 = vst [vmem:[%s221 + $0xa70] sm:$0xff] %v890
                %v892 = vld [vmem:[%s220 + $0x1f48] sm:$0xff]
                %893 = vst [vmem:[%s221 + $0xa78] sm:$0xff] %v892
                %v894 = vld [vmem:[%s220 + $0x1f50] sm:$0xff]
                %895 = vst [vmem:[%s221 + $0xa80] sm:$0xff] %v894
                %v896 = vld [vmem:[%s220 + $0x1f58] sm:$0xff]
                %897 = vst [vmem:[%s221 + $0xa88] sm:$0xff] %v896
                %v898 = vld [vmem:[%s220 + $0x1f60] sm:$0xff]
                %899 = vst [vmem:[%s221 + $0xa90] sm:$0xff] %v898
                %v900 = vld [vmem:[%s220 + $0x1f68] sm:$0xff]
                %901 = vst [vmem:[%s221 + $0xa98] sm:$0xff] %v900
                %v902 = vld [vmem:[%s220 + $0x1f70] sm:$0xff]
                %903 = vst [vmem:[%s221 + $0xaa0] sm:$0xff] %v902
                %v904 = vld [vmem:[%s220 + $0x1f78] sm:$0xff]
                %905 = vst [vmem:[%s221 + $0xaa8] sm:$0xff] %v904
                %v906 = vld [vmem:[%s220 + $0x2010] sm:$0xff]
                %907 = vst [vmem:[%s221 + $0xab0] sm:$0xff] %v906
                %v908 = vld [vmem:[%s220 + $0x2018] sm:$0xff]
                %909 = vst [vmem:[%s221 + $0xab8] sm:$0xff] %v908
                %v910 = vld [vmem:[%s220 + $0x2020] sm:$0xff]
                %911 = vst [vmem:[%s221 + $0xac0] sm:$0xff] %v910
                %v912 = vld [vmem:[%s220 + $0x2028] sm:$0xff]
                %913 = vst [vmem:[%s221 + $0xac8] sm:$0xff] %v912
                %v914 = vld [vmem:[%s220 + $0x2030] sm:$0xff]
                %915 = vst [vmem:[%s221 + $0xad0] sm:$0xff] %v914
                %v916 = vld [vmem:[%s220 + $0x2038] sm:$0xff]
                %917 = vst [vmem:[%s221 + $0xad8] sm:$0xff] %v916
                %v918 = vld [vmem:[%s220 + $0x2040] sm:$0xff]
                %919 = vst [vmem:[%s221 + $0xae0] sm:$0xff] %v918
                %v920 = vld [vmem:[%s220 + $0x2048] sm:$0xff]
                %921 = vst [vmem:[%s221 + $0xae8] sm:$0xff] %v920
                %v922 = vld [vmem:[%s220 + $0x2050] sm:$0xff]
                %923 = vst [vmem:[%s221 + $0xaf0] sm:$0xff] %v922
                %v924 = vld [vmem:[%s220 + $0x20e8] sm:$0xff]
                %925 = vst [vmem:[%s221 + $0xaf8] sm:$0xff] %v924
                %v926 = vld [vmem:[%s220 + $0x20f0] sm:$0xff]
                %927 = vst [vmem:[%s221 + $0xb00] sm:$0xff] %v926
                %v928 = vld [vmem:[%s220 + $0x20f8] sm:$0xff]
                %929 = vst [vmem:[%s221 + $0xb08] sm:$0xff] %v928
                %v930 = vld [vmem:[%s220 + $0x2100] sm:$0xff]
                %931 = vst [vmem:[%s221 + $0xb10] sm:$0xff] %v930
                %v932 = vld [vmem:[%s220 + $0x2108] sm:$0xff]
                %933 = vst [vmem:[%s221 + $0xb18] sm:$0xff] %v932
                %v934 = vld [vmem:[%s220 + $0x2110] sm:$0xff]
                %935 = vst [vmem:[%s221 + $0xb20] sm:$0xff] %v934
                %v936 = vld [vmem:[%s220 + $0x2118] sm:$0xff]
                %937 = vst [vmem:[%s221 + $0xb28] sm:$0xff] %v936
                %v938 = vld [vmem:[%s220 + $0x2120] sm:$0xff]
                %939 = vst [vmem:[%s221 + $0xb30] sm:$0xff] %v938
                %v940 = vld [vmem:[%s220 + $0x2128] sm:$0xff]
                %941 = vst [vmem:[%s221 + $0xb38] sm:$0xff] %v940
                %v942 = vld [vmem:[%s220 + $0x21c0] sm:$0xff]
                %943 = vst [vmem:[%s221 + $0xb40] sm:$0xff] %v942
                %v944 = vld [vmem:[%s220 + $0x21c8] sm:$0xff]
                %945 = vst [vmem:[%s221 + $0xb48] sm:$0xff] %v944
                %v946 = vld [vmem:[%s220 + $0x21d0] sm:$0xff]
                %947 = vst [vmem:[%s221 + $0xb50] sm:$0xff] %v946
                %v948 = vld [vmem:[%s220 + $0x21d8] sm:$0xff]
                %949 = vst [vmem:[%s221 + $0xb58] sm:$0xff] %v948
                %v950 = vld [vmem:[%s220 + $0x21e0] sm:$0xff]
                %951 = vst [vmem:[%s221 + $0xb60] sm:$0xff] %v950
                %v952 = vld [vmem:[%s220 + $0x21e8] sm:$0xff]
                %953 = vst [vmem:[%s221 + $0xb68] sm:$0xff] %v952
                %v954 = vld [vmem:[%s220 + $0x21f0] sm:$0xff]
                %955 = vst [vmem:[%s221 + $0xb70] sm:$0xff] %v954
                %v956 = vld [vmem:[%s220 + $0x21f8] sm:$0xff]
                %957 = vst [vmem:[%s221 + $0xb78] sm:$0xff] %v956
                %v958 = vld [vmem:[%s220 + $0x2200] sm:$0xff]
                %959 = vst [vmem:[%s221 + $0xb80] sm:$0xff] %v958
                %v960 = vld [vmem:[%s220 + $0x2298] sm:$0xff]
                %961 = vst [vmem:[%s221 + $0xb88] sm:$0xff] %v960
                %v962 = vld [vmem:[%s220 + $0x22a0] sm:$0xff]
                %963 = vst [vmem:[%s221 + $0xb90] sm:$0xff] %v962
                %v964 = vld [vmem:[%s220 + $0x22a8] sm:$0xff]
                %965 = vst [vmem:[%s221 + $0xb98] sm:$0xff] %v964
                %v966 = vld [vmem:[%s220 + $0x22b0] sm:$0xff]
                %967 = vst [vmem:[%s221 + $0xba0] sm:$0xff] %v966
                %v968 = vld [vmem:[%s220 + $0x22b8] sm:$0xff]
                %969 = vst [vmem:[%s221 + $0xba8] sm:$0xff] %v968
                %v970 = vld [vmem:[%s220 + $0x22c0] sm:$0xff]
                %971 = vst [vmem:[%s221 + $0xbb0] sm:$0xff] %v970
                %v972 = vld [vmem:[%s220 + $0x22c8] sm:$0xff]
                %973 = vst [vmem:[%s221 + $0xbb8] sm:$0xff] %v972
                %v974 = vld [vmem:[%s220 + $0x22d0] sm:$0xff]
                %975 = vst [vmem:[%s221 + $0xbc0] sm:$0xff] %v974
                %v976 = vld [vmem:[%s220 + $0x22d8] sm:$0xff]
                %977 = vst [vmem:[%s221 + $0xbc8] sm:$0xff] %v976
                %v978 = vld [vmem:[%s220 + $0x2370] sm:$0xff]
                %979 = vst [vmem:[%s221 + $0xbd0] sm:$0xff] %v978
                %v980 = vld [vmem:[%s220 + $0x2378] sm:$0xff]
                %981 = vst [vmem:[%s221 + $0xbd8] sm:$0xff] %v980
                %v982 = vld [vmem:[%s220 + $0x2380] sm:$0xff]
                %983 = vst [vmem:[%s221 + $0xbe0] sm:$0xff] %v982
                %v984 = vld [vmem:[%s220 + $0x2388] sm:$0xff]
                %985 = vst [vmem:[%s221 + $0xbe8] sm:$0xff] %v984
                %v986 = vld [vmem:[%s220 + $0x2390] sm:$0xff]
                %987 = vst [vmem:[%s221 + $0xbf0] sm:$0xff] %v986
                %v988 = vld [vmem:[%s220 + $0x2398] sm:$0xff]
                %989 = vst [vmem:[%s221 + $0xbf8] sm:$0xff] %v988
                %v990 = vld [vmem:[%s220 + $0x23a0] sm:$0xff]
                %991 = vst [vmem:[%s221 + $0xc00] sm:$0xff] %v990
                %v992 = vld [vmem:[%s220 + $0x23a8] sm:$0xff]
                %993 = vst [vmem:[%s221 + $0xc08] sm:$0xff] %v992
                %v994 = vld [vmem:[%s220 + $0x23b0] sm:$0xff]
                %995 = vst [vmem:[%s221 + $0xc10] sm:$0xff] %v994
                %v996 = vld [vmem:[%s220 + $0x2448] sm:$0xff]
                %997 = vst [vmem:[%s221 + $0xc18] sm:$0xff] %v996
                %v998 = vld [vmem:[%s220 + $0x2450] sm:$0xff]
                %999 = vst [vmem:[%s221 + $0xc20] sm:$0xff] %v998
                %v1000 = vld [vmem:[%s220 + $0x2458] sm:$0xff]
                %1001 = vst [vmem:[%s221 + $0xc28] sm:$0xff] %v1000
                %v1002 = vld [vmem:[%s220 + $0x2460] sm:$0xff]
                %1003 = vst [vmem:[%s221 + $0xc30] sm:$0xff] %v1002
                %v1004 = vld [vmem:[%s220 + $0x2468] sm:$0xff]
                %1005 = vst [vmem:[%s221 + $0xc38] sm:$0xff] %v1004
                %v1006 = vld [vmem:[%s220 + $0x2470] sm:$0xff]
                %1007 = vst [vmem:[%s221 + $0xc40] sm:$0xff] %v1006
                %v1008 = vld [vmem:[%s220 + $0x2478] sm:$0xff]
                %1009 = vst [vmem:[%s221 + $0xc48] sm:$0xff] %v1008
                %v1010 = vld [vmem:[%s220 + $0x2480] sm:$0xff]
                %1011 = vst [vmem:[%s221 + $0xc50] sm:$0xff] %v1010
                %v1012 = vld [vmem:[%s220 + $0x2488] sm:$0xff]
                %1013 = vst [vmem:[%s221 + $0xc58] sm:$0xff] %v1012
                %v1014 = vld [vmem:[%s220 + $0x2520] sm:$0xff]
                %1015 = vst [vmem:[%s221 + $0xc60] sm:$0xff] %v1014
                %v1016 = vld [vmem:[%s220 + $0x2528] sm:$0xff]
                %1017 = vst [vmem:[%s221 + $0xc68] sm:$0xff] %v1016
                %v1018 = vld [vmem:[%s220 + $0x2530] sm:$0xff]
                %1019 = vst [vmem:[%s221 + $0xc70] sm:$0xff] %v1018
                %v1020 = vld [vmem:[%s220 + $0x2538] sm:$0xff]
                %1021 = vst [vmem:[%s221 + $0xc78] sm:$0xff] %v1020
                %v1022 = vld [vmem:[%s220 + $0x2540] sm:$0xff]
                %1023 = vst [vmem:[%s221 + $0xc80] sm:$0xff] %v1022
                %v1024 = vld [vmem:[%s220 + $0x2548] sm:$0xff]
                %1025 = vst [vmem:[%s221 + $0xc88] sm:$0xff] %v1024
                %v1026 = vld [vmem:[%s220 + $0x2550] sm:$0xff]
                %1027 = vst [vmem:[%s221 + $0xc90] sm:$0xff] %v1026
                %v1028 = vld [vmem:[%s220 + $0x2558] sm:$0xff]
                %1029 = vst [vmem:[%s221 + $0xc98] sm:$0xff] %v1028
                %v1030 = vld [vmem:[%s220 + $0x2560] sm:$0xff]
                %1031 = vst [vmem:[%s221 + $0xca0] sm:$0xff] %v1030
                %v1032 = vld [vmem:[%s220 + $0x25f8] sm:$0xff]
                %1033 = vst [vmem:[%s221 + $0xca8] sm:$0xff] %v1032
                %v1034 = vld [vmem:[%s220 + $0x2600] sm:$0xff]
                %1035 = vst [vmem:[%s221 + $0xcb0] sm:$0xff] %v1034
                %v1036 = vld [vmem:[%s220 + $0x2608] sm:$0xff]
                %1037 = vst [vmem:[%s221 + $0xcb8] sm:$0xff] %v1036
                %v1038 = vld [vmem:[%s220 + $0x2610] sm:$0xff]
                %1039 = vst [vmem:[%s221 + $0xcc0] sm:$0xff] %v1038
                %v1040 = vld [vmem:[%s220 + $0x2618] sm:$0xff]
                %1041 = vst [vmem:[%s221 + $0xcc8] sm:$0xff] %v1040
                %v1042 = vld [vmem:[%s220 + $0x2620] sm:$0xff]
                %1043 = vst [vmem:[%s221 + $0xcd0] sm:$0xff] %v1042
                %v1044 = vld [vmem:[%s220 + $0x2628] sm:$0xff]
                %1045 = vst [vmem:[%s221 + $0xcd8] sm:$0xff] %v1044
                %v1046 = vld [vmem:[%s220 + $0x2630] sm:$0xff]
                %1047 = vst [vmem:[%s221 + $0xce0] sm:$0xff] %v1046
                %v1048 = vld [vmem:[%s220 + $0x2638] sm:$0xff]
                %1049 = vst [vmem:[%s221 + $0xce8] sm:$0xff] %v1048
                %v1050 = vld [vmem:[%s220 + $0x26d0] sm:$0xff]
                %1051 = vst [vmem:[%s221 + $0xcf0] sm:$0xff] %v1050
                %v1052 = vld [vmem:[%s220 + $0x26d8] sm:$0xff]
                %1053 = vst [vmem:[%s221 + $0xcf8] sm:$0xff] %v1052
                %v1054 = vld [vmem:[%s220 + $0x26e0] sm:$0xff]
                %1055 = vst [vmem:[%s221 + $0xd00] sm:$0xff] %v1054
                %v1056 = vld [vmem:[%s220 + $0x26e8] sm:$0xff]
                %1057 = vst [vmem:[%s221 + $0xd08] sm:$0xff] %v1056
                %v1058 = vld [vmem:[%s220 + $0x26f0] sm:$0xff]
                %1059 = vst [vmem:[%s221 + $0xd10] sm:$0xff] %v1058
                %v1060 = vld [vmem:[%s220 + $0x26f8] sm:$0xff]
                %1061 = vst [vmem:[%s221 + $0xd18] sm:$0xff] %v1060
                %v1062 = vld [vmem:[%s220 + $0x2700] sm:$0xff]
                %1063 = vst [vmem:[%s221 + $0xd20] sm:$0xff] %v1062
                %v1064 = vld [vmem:[%s220 + $0x2708] sm:$0xff]
                %1065 = vst [vmem:[%s221 + $0xd28] sm:$0xff] %v1064
                %v1066 = vld [vmem:[%s220 + $0x2710] sm:$0xff]
                %1067 = vst [vmem:[%s221 + $0xd30] sm:$0xff] %v1066
                %v1068 = vld [vmem:[%s220 + $0x27a8] sm:$0xff]
                %1069 = vst [vmem:[%s221 + $0xd38] sm:$0xff] %v1068
                %v1070 = vld [vmem:[%s220 + $0x27b0] sm:$0xff]
                %1071 = vst [vmem:[%s221 + $0xd40] sm:$0xff] %v1070
                %v1072 = vld [vmem:[%s220 + $0x27b8] sm:$0xff]
                %1073 = vst [vmem:[%s221 + $0xd48] sm:$0xff] %v1072
                %v1074 = vld [vmem:[%s220 + $0x27c0] sm:$0xff]
                %1075 = vst [vmem:[%s221 + $0xd50] sm:$0xff] %v1074
                %v1076 = vld [vmem:[%s220 + $0x27c8] sm:$0xff]
                %1077 = vst [vmem:[%s221 + $0xd58] sm:$0xff] %v1076
                %v1078 = vld [vmem:[%s220 + $0x27d0] sm:$0xff]
                %1079 = vst [vmem:[%s221 + $0xd60] sm:$0xff] %v1078
                %v1080 = vld [vmem:[%s220 + $0x27d8] sm:$0xff]
                %1081 = vst [vmem:[%s221 + $0xd68] sm:$0xff] %v1080
                %v1082 = vld [vmem:[%s220 + $0x27e0] sm:$0xff]
                %1083 = vst [vmem:[%s221 + $0xd70] sm:$0xff] %v1082
                %v1084 = vld [vmem:[%s220 + $0x27e8] sm:$0xff]
                %1085 = vst [vmem:[%s221 + $0xd78] sm:$0xff] %v1084
                %v1086 = vld [vmem:[%s220 + $0x2880] sm:$0xff]
                %1087 = vst [vmem:[%s221 + $0xd80] sm:$0xff] %v1086
                %v1088 = vld [vmem:[%s220 + $0x2888] sm:$0xff]
                %1089 = vst [vmem:[%s221 + $0xd88] sm:$0xff] %v1088
                %v1090 = vld [vmem:[%s220 + $0x2890] sm:$0xff]
                %1091 = vst [vmem:[%s221 + $0xd90] sm:$0xff] %v1090
                %v1092 = vld [vmem:[%s220 + $0x2898] sm:$0xff]
                %1093 = vst [vmem:[%s221 + $0xd98] sm:$0xff] %v1092
                %v1094 = vld [vmem:[%s220 + $0x28a0] sm:$0xff]
                %1095 = vst [vmem:[%s221 + $0xda0] sm:$0xff] %v1094
                %v1096 = vld [vmem:[%s220 + $0x28a8] sm:$0xff]
                %1097 = vst [vmem:[%s221 + $0xda8] sm:$0xff] %v1096
                %v1098 = vld [vmem:[%s220 + $0x28b0] sm:$0xff]
                %1099 = vst [vmem:[%s221 + $0xdb0] sm:$0xff] %v1098
                %v1100 = vld [vmem:[%s220 + $0x28b8] sm:$0xff]
                %1101 = vst [vmem:[%s221 + $0xdb8] sm:$0xff] %v1100
                %v1102 = vld [vmem:[%s220 + $0x28c0] sm:$0xff]
                %1103 = vst [vmem:[%s221 + $0xdc0] sm:$0xff] %v1102
                %v1104 = vld [vmem:[%s220 + $0x2958] sm:$0xff]
                %1105 = vst [vmem:[%s221 + $0xdc8] sm:$0xff] %v1104
                %v1106 = vld [vmem:[%s220 + $0x2960] sm:$0xff]
                %1107 = vst [vmem:[%s221 + $0xdd0] sm:$0xff] %v1106
                %v1108 = vld [vmem:[%s220 + $0x2968] sm:$0xff]
                %1109 = vst [vmem:[%s221 + $0xdd8] sm:$0xff] %v1108
                %v1110 = vld [vmem:[%s220 + $0x2970] sm:$0xff]
                %1111 = vst [vmem:[%s221 + $0xde0] sm:$0xff] %v1110
                %v1112 = vld [vmem:[%s220 + $0x2978] sm:$0xff]
                %1113 = vst [vmem:[%s221 + $0xde8] sm:$0xff] %v1112
                %v1114 = vld [vmem:[%s220 + $0x2980] sm:$0xff]
                %1115 = vst [vmem:[%s221 + $0xdf0] sm:$0xff] %v1114
                %v1116 = vld [vmem:[%s220 + $0x2988] sm:$0xff]
                %1117 = vst [vmem:[%s221 + $0xdf8] sm:$0xff] %v1116
                %v1118 = vld [vmem:[%s220 + $0x2990] sm:$0xff]
                %1119 = vst [vmem:[%s221 + $0xe00] sm:$0xff] %v1118
                %v1120 = vld [vmem:[%s220 + $0x2998] sm:$0xff]
                %1121 = vst [vmem:[%s221 + $0xe08] sm:$0xff] %v1120
                %v1122 = vld [vmem:[%s220 + $0x2a30] sm:$0xff]
                %1123 = vst [vmem:[%s221 + $0xe10] sm:$0xff] %v1122
                %v1124 = vld [vmem:[%s220 + $0x2a38] sm:$0xff]
                %1125 = vst [vmem:[%s221 + $0xe18] sm:$0xff] %v1124
                %v1126 = vld [vmem:[%s220 + $0x2a40] sm:$0xff]
                %1127 = vst [vmem:[%s221 + $0xe20] sm:$0xff] %v1126
                %v1128 = vld [vmem:[%s220 + $0x2a48] sm:$0xff]
                %1129 = vst [vmem:[%s221 + $0xe28] sm:$0xff] %v1128
                %v1130 = vld [vmem:[%s220 + $0x2a50] sm:$0xff]
                %1131 = vst [vmem:[%s221 + $0xe30] sm:$0xff] %v1130
                %v1132 = vld [vmem:[%s220 + $0x2a58] sm:$0xff]
                %1133 = vst [vmem:[%s221 + $0xe38] sm:$0xff] %v1132
                %v1134 = vld [vmem:[%s220 + $0x2a60] sm:$0xff]
                %1135 = vst [vmem:[%s221 + $0xe40] sm:$0xff] %v1134
                %v1136 = vld [vmem:[%s220 + $0x2a68] sm:$0xff]
                %1137 = vst [vmem:[%s221 + $0xe48] sm:$0xff] %v1136
                %v1138 = vld [vmem:[%s220 + $0x2a70] sm:$0xff]
                %1139 = vst [vmem:[%s221 + $0xe50] sm:$0xff] %v1138
                %v1140 = vld [vmem:[%s220 + $0x2b08] sm:$0xff]
                %1141 = vst [vmem:[%s221 + $0xe58] sm:$0xff] %v1140
                %v1142 = vld [vmem:[%s220 + $0x2b10] sm:$0xff]
                %1143 = vst [vmem:[%s221 + $0xe60] sm:$0xff] %v1142
                %v1144 = vld [vmem:[%s220 + $0x2b18] sm:$0xff]
                %1145 = vst [vmem:[%s221 + $0xe68] sm:$0xff] %v1144
                %v1146 = vld [vmem:[%s220 + $0x2b20] sm:$0xff]
                %1147 = vst [vmem:[%s221 + $0xe70] sm:$0xff] %v1146
                %v1148 = vld [vmem:[%s220 + $0x2b28] sm:$0xff]
                %1149 = vst [vmem:[%s221 + $0xe78] sm:$0xff] %v1148
                %v1150 = vld [vmem:[%s220 + $0x2b30] sm:$0xff]
                %1151 = vst [vmem:[%s221 + $0xe80] sm:$0xff] %v1150
                %v1152 = vld [vmem:[%s220 + $0x2b38] sm:$0xff]
                %1153 = vst [vmem:[%s221 + $0xe88] sm:$0xff] %v1152
                %v1154 = vld [vmem:[%s220 + $0x2b40] sm:$0xff]
                %1155 = vst [vmem:[%s221 + $0xe90] sm:$0xff] %v1154
                %v1156 = vld [vmem:[%s220 + $0x2b48] sm:$0xff]
                %1157 = vst [vmem:[%s221 + $0xe98] sm:$0xff] %v1156
                %v1158 = vld [vmem:[%s220 + $0x2be0] sm:$0xff]
                %1159 = vst [vmem:[%s221 + $0xea0] sm:$0xff] %v1158
                %v1160 = vld [vmem:[%s220 + $0x2be8] sm:$0xff]
                %1161 = vst [vmem:[%s221 + $0xea8] sm:$0xff] %v1160
                %v1162 = vld [vmem:[%s220 + $0x2bf0] sm:$0xff]
                %1163 = vst [vmem:[%s221 + $0xeb0] sm:$0xff] %v1162
                %v1164 = vld [vmem:[%s220 + $0x2bf8] sm:$0xff]
                %1165 = vst [vmem:[%s221 + $0xeb8] sm:$0xff] %v1164
                %v1166 = vld [vmem:[%s220 + $0x2c00] sm:$0xff]
                %1167 = vst [vmem:[%s221 + $0xec0] sm:$0xff] %v1166
                %v1168 = vld [vmem:[%s220 + $0x2c08] sm:$0xff]
                %1169 = vst [vmem:[%s221 + $0xec8] sm:$0xff] %v1168
                %v1170 = vld [vmem:[%s220 + $0x2c10] sm:$0xff]
                %1171 = vst [vmem:[%s221 + $0xed0] sm:$0xff] %v1170
                %v1172 = vld [vmem:[%s220 + $0x2c18] sm:$0xff]
                %1173 = vst [vmem:[%s221 + $0xed8] sm:$0xff] %v1172
                %v1174 = vld [vmem:[%s220 + $0x2c20] sm:$0xff]
                %1175 = vst [vmem:[%s221 + $0xee0] sm:$0xff] %v1174
                %v1176 = vld [vmem:[%s220 + $0x2cb8] sm:$0xff]
                %1177 = vst [vmem:[%s221 + $0xee8] sm:$0xff] %v1176
                %v1178 = vld [vmem:[%s220 + $0x2cc0] sm:$0xff]
                %1179 = vst [vmem:[%s221 + $0xef0] sm:$0xff] %v1178
                %v1180 = vld [vmem:[%s220 + $0x2cc8] sm:$0xff]
                %1181 = vst [vmem:[%s221 + $0xef8] sm:$0xff] %v1180
                %v1182 = vld [vmem:[%s220 + $0x2cd0] sm:$0xff]
                %1183 = vst [vmem:[%s221 + $0xf00] sm:$0xff] %v1182
                %v1184 = vld [vmem:[%s220 + $0x2cd8] sm:$0xff]
                %1185 = vst [vmem:[%s221 + $0xf08] sm:$0xff] %v1184
                %v1186 = vld [vmem:[%s220 + $0x2ce0] sm:$0xff]
                %1187 = vst [vmem:[%s221 + $0xf10] sm:$0xff] %v1186
                %v1188 = vld [vmem:[%s220 + $0x2ce8] sm:$0xff]
                %1189 = vst [vmem:[%s221 + $0xf18] sm:$0xff] %v1188
                %v1190 = vld [vmem:[%s220 + $0x2cf0] sm:$0xff]
                %1191 = vst [vmem:[%s221 + $0xf20] sm:$0xff] %v1190
                %v1192 = vld [vmem:[%s220 + $0x2cf8] sm:$0xff]
                %1193 = vst [vmem:[%s221 + $0xf28] sm:$0xff] %v1192
                %v1194 = vld [vmem:[%s220 + $0x2d90] sm:$0xff]
                %1195 = vst [vmem:[%s221 + $0xf30] sm:$0xff] %v1194
                %v1196 = vld [vmem:[%s220 + $0x2d98] sm:$0xff]
                %1197 = vst [vmem:[%s221 + $0xf38] sm:$0xff] %v1196
                %v1198 = vld [vmem:[%s220 + $0x2da0] sm:$0xff]
                %1199 = vst [vmem:[%s221 + $0xf40] sm:$0xff] %v1198
                %v1200 = vld [vmem:[%s220 + $0x2da8] sm:$0xff]
                %1201 = vst [vmem:[%s221 + $0xf48] sm:$0xff] %v1200
                %v1202 = vld [vmem:[%s220 + $0x2db0] sm:$0xff]
                %1203 = vst [vmem:[%s221 + $0xf50] sm:$0xff] %v1202
                %v1204 = vld [vmem:[%s220 + $0x2db8] sm:$0xff]
                %1205 = vst [vmem:[%s221 + $0xf58] sm:$0xff] %v1204
                %v1206 = vld [vmem:[%s220 + $0x2dc0] sm:$0xff]
                %1207 = vst [vmem:[%s221 + $0xf60] sm:$0xff] %v1206
                %v1208 = vld [vmem:[%s220 + $0x2dc8] sm:$0xff]
                %1209 = vst [vmem:[%s221 + $0xf68] sm:$0xff] %v1208
                %v1210 = vld [vmem:[%s220 + $0x2dd0] sm:$0xff]
                %1211 = vst [vmem:[%s221 + $0xf70] sm:$0xff] %v1210
                %v1212 = vld [vmem:[%s220 + $0x2e68] sm:$0xff]
                %1213 = vst [vmem:[%s221 + $0xf78] sm:$0xff] %v1212
                %v1214 = vld [vmem:[%s220 + $0x2e70] sm:$0xff]
                %1215 = vst [vmem:[%s221 + $0xf80] sm:$0xff] %v1214
                %v1216 = vld [vmem:[%s220 + $0x2e78] sm:$0xff]
                %1217 = vst [vmem:[%s221 + $0xf88] sm:$0xff] %v1216
                %v1218 = vld [vmem:[%s220 + $0x2e80] sm:$0xff]
                %1219 = vst [vmem:[%s221 + $0xf90] sm:$0xff] %v1218
                %v1220 = vld [vmem:[%s220 + $0x2e88] sm:$0xff]
                %1221 = vst [vmem:[%s221 + $0xf98] sm:$0xff] %v1220
                %v1222 = vld [vmem:[%s220 + $0x2e90] sm:$0xff]
                %1223 = vst [vmem:[%s221 + $0xfa0] sm:$0xff] %v1222
                %v1224 = vld [vmem:[%s220 + $0x2e98] sm:$0xff]
                %1225 = vst [vmem:[%s221 + $0xfa8] sm:$0xff] %v1224
                %v1226 = vld [vmem:[%s220 + $0x2ea0] sm:$0xff]
                %1227 = vst [vmem:[%s221 + $0xfb0] sm:$0xff] %v1226
                %v1228 = vld [vmem:[%s220 + $0x2ea8] sm:$0xff]
                %1229 = vst [vmem:[%s221 + $0xfb8] sm:$0xff] %v1228
                %v1230 = vld [vmem:[%s220 + $0x2f40] sm:$0xff]
                %1231 = vst [vmem:[%s221 + $0xfc0] sm:$0xff] %v1230
                %v1232 = vld [vmem:[%s220 + $0x2f48] sm:$0xff]
                %1233 = vst [vmem:[%s221 + $0xfc8] sm:$0xff] %v1232
                %v1234 = vld [vmem:[%s220 + $0x2f50] sm:$0xff]
                %1235 = vst [vmem:[%s221 + $0xfd0] sm:$0xff] %v1234
                %v1236 = vld [vmem:[%s220 + $0x2f58] sm:$0xff]
                %1237 = vst [vmem:[%s221 + $0xfd8] sm:$0xff] %v1236
                %v1238 = vld [vmem:[%s220 + $0x2f60] sm:$0xff]
                %1239 = vst [vmem:[%s221 + $0xfe0] sm:$0xff] %v1238
                %v1240 = vld [vmem:[%s220 + $0x2f68] sm:$0xff]
                %1241 = vst [vmem:[%s221 + $0xfe8] sm:$0xff] %v1240
                %v1242 = vld [vmem:[%s220 + $0x2f70] sm:$0xff]
                %1243 = vst [vmem:[%s221 + $0xff0] sm:$0xff] %v1242
                %v1244 = vld [vmem:[%s220 + $0x2f78] sm:$0xff]
                %1245 = vst [vmem:[%s221 + $0xff8] sm:$0xff] %v1244
                %v1246 = vld [vmem:[%s220 + $0x2f80] sm:$0xff]
                %1247 = vst [vmem:[%s221 + $0x1000] sm:$0xff] %v1246
                %v1248 = vld [vmem:[%s220 + $0x3018] sm:$0xff]
                %1249 = vst [vmem:[%s221 + $0x1008] sm:$0xff] %v1248
                %v1250 = vld [vmem:[%s220 + $0x3020] sm:$0xff]
                %1251 = vst [vmem:[%s221 + $0x1010] sm:$0xff] %v1250
                %v1252 = vld [vmem:[%s220 + $0x3028] sm:$0xff]
                %1253 = vst [vmem:[%s221 + $0x1018] sm:$0xff] %v1252
                %v1254 = vld [vmem:[%s220 + $0x3030] sm:$0xff]
                %1255 = vst [vmem:[%s221 + $0x1020] sm:$0xff] %v1254
                %v1256 = vld [vmem:[%s220 + $0x3038] sm:$0xff]
                %1257 = vst [vmem:[%s221 + $0x1028] sm:$0xff] %v1256
                %v1258 = vld [vmem:[%s220 + $0x3040] sm:$0xff]
                %1259 = vst [vmem:[%s221 + $0x1030] sm:$0xff] %v1258
                %v1260 = vld [vmem:[%s220 + $0x3048] sm:$0xff]
                %1261 = vst [vmem:[%s221 + $0x1038] sm:$0xff] %v1260
                %v1262 = vld [vmem:[%s220 + $0x3050] sm:$0xff]
                %1263 = vst [vmem:[%s221 + $0x1040] sm:$0xff] %v1262
                %v1264 = vld [vmem:[%s220 + $0x3058] sm:$0xff]
                %1265 = vst [vmem:[%s221 + $0x1048] sm:$0xff] %v1264
                %v1266 = vld [vmem:[%s220 + $0x30f0] sm:$0xff]
                %1267 = vst [vmem:[%s221 + $0x1050] sm:$0xff] %v1266
                %v1268 = vld [vmem:[%s220 + $0x30f8] sm:$0xff]
                %1269 = vst [vmem:[%s221 + $0x1058] sm:$0xff] %v1268
                %v1270 = vld [vmem:[%s220 + $0x3100] sm:$0xff]
                %1271 = vst [vmem:[%s221 + $0x1060] sm:$0xff] %v1270
                %v1272 = vld [vmem:[%s220 + $0x3108] sm:$0xff]
                %1273 = vst [vmem:[%s221 + $0x1068] sm:$0xff] %v1272
                %v1274 = vld [vmem:[%s220 + $0x3110] sm:$0xff]
                %1275 = vst [vmem:[%s221 + $0x1070] sm:$0xff] %v1274
                %v1276 = vld [vmem:[%s220 + $0x3118] sm:$0xff]
                %1277 = vst [vmem:[%s221 + $0x1078] sm:$0xff] %v1276
                %v1278 = vld [vmem:[%s220 + $0x3120] sm:$0xff]
                %1279 = vst [vmem:[%s221 + $0x1080] sm:$0xff] %v1278
                %v1280 = vld [vmem:[%s220 + $0x3128] sm:$0xff]
                %1281 = vst [vmem:[%s221 + $0x1088] sm:$0xff] %v1280
                %v1282 = vld [vmem:[%s220 + $0x3130] sm:$0xff]
                %1283 = vst [vmem:[%s221 + $0x1090] sm:$0xff] %v1282
                %v1284 = vld [vmem:[%s220 + $0x31c8] sm:$0xff]
                %1285 = vst [vmem:[%s221 + $0x1098] sm:$0xff] %v1284
                %v1286 = vld [vmem:[%s220 + $0x31d0] sm:$0xff]
                %1287 = vst [vmem:[%s221 + $0x10a0] sm:$0xff] %v1286
                %v1288 = vld [vmem:[%s220 + $0x31d8] sm:$0xff]
                %1289 = vst [vmem:[%s221 + $0x10a8] sm:$0xff] %v1288
                %v1290 = vld [vmem:[%s220 + $0x31e0] sm:$0xff]
                %1291 = vst [vmem:[%s221 + $0x10b0] sm:$0xff] %v1290
                %v1292 = vld [vmem:[%s220 + $0x31e8] sm:$0xff]
                %1293 = vst [vmem:[%s221 + $0x10b8] sm:$0xff] %v1292
                %v1294 = vld [vmem:[%s220 + $0x31f0] sm:$0xff]
                %1295 = vst [vmem:[%s221 + $0x10c0] sm:$0xff] %v1294
                %v1296 = vld [vmem:[%s220 + $0x31f8] sm:$0xff]
                %1297 = vst [vmem:[%s221 + $0x10c8] sm:$0xff] %v1296
                %v1298 = vld [vmem:[%s220 + $0x3200] sm:$0xff]
                %1299 = vst [vmem:[%s221 + $0x10d0] sm:$0xff] %v1298
                %v1300 = vld [vmem:[%s220 + $0x3208] sm:$0xff]
                %1301 = vst [vmem:[%s221 + $0x10d8] sm:$0xff] %v1300
                %v1302 = vld [vmem:[%s220 + $0x32a0] sm:$0xff]
                %1303 = vst [vmem:[%s221 + $0x10e0] sm:$0xff] %v1302
                %v1304 = vld [vmem:[%s220 + $0x32a8] sm:$0xff]
                %1305 = vst [vmem:[%s221 + $0x10e8] sm:$0xff] %v1304
                %v1306 = vld [vmem:[%s220 + $0x32b0] sm:$0xff]
                %1307 = vst [vmem:[%s221 + $0x10f0] sm:$0xff] %v1306
                %v1308 = vld [vmem:[%s220 + $0x32b8] sm:$0xff]
                %1309 = vst [vmem:[%s221 + $0x10f8] sm:$0xff] %v1308
                %v1310 = vld [vmem:[%s220 + $0x32c0] sm:$0xff]
                %1311 = vst [vmem:[%s221 + $0x1100] sm:$0xff] %v1310
                %v1312 = vld [vmem:[%s220 + $0x32c8] sm:$0xff]
                %1313 = vst [vmem:[%s221 + $0x1108] sm:$0xff] %v1312
                %v1314 = vld [vmem:[%s220 + $0x32d0] sm:$0xff]
                %1315 = vst [vmem:[%s221 + $0x1110] sm:$0xff] %v1314
                %v1316 = vld [vmem:[%s220 + $0x32d8] sm:$0xff]
                %1317 = vst [vmem:[%s221 + $0x1118] sm:$0xff] %v1316
                %v1318 = vld [vmem:[%s220 + $0x32e0] sm:$0xff]
                %1319 = vst [vmem:[%s221 + $0x1120] sm:$0xff] %v1318
                %v1320 = vld [vmem:[%s220 + $0x3378] sm:$0xff]
                %1321 = vst [vmem:[%s221 + $0x1128] sm:$0xff] %v1320
                %v1322 = vld [vmem:[%s220 + $0x3380] sm:$0xff]
                %1323 = vst [vmem:[%s221 + $0x1130] sm:$0xff] %v1322
                %v1324 = vld [vmem:[%s220 + $0x3388] sm:$0xff]
                %1325 = vst [vmem:[%s221 + $0x1138] sm:$0xff] %v1324
                %v1326 = vld [vmem:[%s220 + $0x3390] sm:$0xff]
                %1327 = vst [vmem:[%s221 + $0x1140] sm:$0xff] %v1326
                %v1328 = vld [vmem:[%s220 + $0x3398] sm:$0xff]
                %1329 = vst [vmem:[%s221 + $0x1148] sm:$0xff] %v1328
                %v1330 = vld [vmem:[%s220 + $0x33a0] sm:$0xff]
                %1331 = vst [vmem:[%s221 + $0x1150] sm:$0xff] %v1330
                %v1332 = vld [vmem:[%s220 + $0x33a8] sm:$0xff]
                %1333 = vst [vmem:[%s221 + $0x1158] sm:$0xff] %v1332
                %v1334 = vld [vmem:[%s220 + $0x33b0] sm:$0xff]
                %1335 = vst [vmem:[%s221 + $0x1160] sm:$0xff] %v1334
                %v1336 = vld [vmem:[%s220 + $0x33b8] sm:$0xff]
                %1337 = vst [vmem:[%s221 + $0x1168] sm:$0xff] %v1336
                %v1338 = vld [vmem:[%s220 + $0x3450] sm:$0xff]
                %1339 = vst [vmem:[%s221 + $0x1170] sm:$0xff] %v1338
                %v1340 = vld [vmem:[%s220 + $0x3458] sm:$0xff]
                %1341 = vst [vmem:[%s221 + $0x1178] sm:$0xff] %v1340
                %v1342 = vld [vmem:[%s220 + $0x3460] sm:$0xff]
                %1343 = vst [vmem:[%s221 + $0x1180] sm:$0xff] %v1342
                %v1344 = vld [vmem:[%s220 + $0x3468] sm:$0xff]
                %1345 = vst [vmem:[%s221 + $0x1188] sm:$0xff] %v1344
                %v1346 = vld [vmem:[%s220 + $0x3470] sm:$0xff]
                %1347 = vst [vmem:[%s221 + $0x1190] sm:$0xff] %v1346
                %v1348 = vld [vmem:[%s220 + $0x3478] sm:$0xff]
                %1349 = vst [vmem:[%s221 + $0x1198] sm:$0xff] %v1348
                %v1350 = vld [vmem:[%s220 + $0x3480] sm:$0xff]
                %1351 = vst [vmem:[%s221 + $0x11a0] sm:$0xff] %v1350
                %v1352 = vld [vmem:[%s220 + $0x3488] sm:$0xff]
                %1353 = vst [vmem:[%s221 + $0x11a8] sm:$0xff] %v1352
                %v1354 = vld [vmem:[%s220 + $0x3490] sm:$0xff]
                %1355 = vst [vmem:[%s221 + $0x11b0] sm:$0xff] %v1354
                %v1356 = vld [vmem:[%s220 + $0x3528] sm:$0xff]
                %1357 = vst [vmem:[%s221 + $0x11b8] sm:$0xff] %v1356
                %v1358 = vld [vmem:[%s220 + $0x3530] sm:$0xff]
                %1359 = vst [vmem:[%s221 + $0x11c0] sm:$0xff] %v1358
                %v1360 = vld [vmem:[%s220 + $0x3538] sm:$0xff]
                %1361 = vst [vmem:[%s221 + $0x11c8] sm:$0xff] %v1360
                %v1362 = vld [vmem:[%s220 + $0x3540] sm:$0xff]
                %1363 = vst [vmem:[%s221 + $0x11d0] sm:$0xff] %v1362
                %v1364 = vld [vmem:[%s220 + $0x3548] sm:$0xff]
                %1365 = vst [vmem:[%s221 + $0x11d8] sm:$0xff] %v1364
                %v1366 = vld [vmem:[%s220 + $0x3550] sm:$0xff]
                %1367 = vst [vmem:[%s221 + $0x11e0] sm:$0xff] %v1366
                %v1368 = vld [vmem:[%s220 + $0x3558] sm:$0xff]
                %1369 = vst [vmem:[%s221 + $0x11e8] sm:$0xff] %v1368
                %v1370 = vld [vmem:[%s220 + $0x3560] sm:$0xff]
                %1371 = vst [vmem:[%s221 + $0x11f0] sm:$0xff] %v1370
                %v1372 = vld [vmem:[%s220 + $0x3568] sm:$0xff]
                %1373 = vst [vmem:[%s221 + $0x11f8] sm:$0xff] %v1372
              $region41: #{forward.9} parent=35 // loop_footer
                %s219 = sadd.s32 1, %s215
              $region42: #{forward.9} parent=35 // loop_footer_branch
                %214 = sbr.rel target = $region38
              $region43: #{forward.9} parent=35 // loop_exit
                _
            $region36: #{forward.9} parent=31 // pred_fallthru
              _
            // Predicated region
            $region44: #{forward.9} parent=31 // pred_check
              _
            $region45: #{forward.9} parent=31 // pred_check_branch
              %1375 = sbr.rel target = $region47
            $region46: #{forward.9} parent=31 // pred_region
              _
            $region47: #{forward.9} parent=31 // pred_fallthru
              _
          $region32: #{forward.9} parent=27 // pred_fallthru
            _
          %1376 = vnop
        $region28: #{forward.9} parent=23 // pred_fallthru
          _
        // Predicated region
        $region48: #{forward.9} parent=23 // pred_check
          %p1377 = pneg %p80
        $region49: #{forward.9} parent=23 // pred_check_branch
          %1379 = sbr.rel (%p1377) target = $region51
        $region50: #{forward.9} parent=23 // pred_region
          %s1380 = smul.u32 288, %s20
          %p1381 = scmp.lt.s32.totalorder %s1380, 863
          %s1382 = scalar_select %p1381, %s1380, 863
          %p1383 = scmp.lt.s32.totalorder %s19, 0
          %s1384 = scalar_select %p1383, %s19, 0
          %s1385 = sadd.s32 %s1384, %s1382
          %s1386 = smul.addr %s1385, 4
          %s1387 = scalar_lea.vmem %s1, %s1386
          %s1388 = smul.u32 288, %s20
        $region51: #{forward.9} parent=23 // pred_fallthru
          _
      $region24: #{forward.9} parent=5 // pred_fallthru
        _
      %p1389 = scmp.le.s32.totalorder 1, %s11
      %p1390 = scmp.lt.s32.totalorder %s11, 4
      %p1391 = pnand %p1389, %p1390
      %p1392 = pneg %p1391
      // Predicated region
      $region52: #{forward.9} parent=5 // pred_check
        _
      $region53: #{forward.9} parent=5 // pred_check_branch
        %1394 = sbr.rel (%p1391) target = $region55
      $region54: #{forward.9} parent=5 // pred_region
        %s1395 = ssub.s32 %s11, 1
        %s1396 = sand.u32 %s45, 1
        %s1397 = sand.u32 %s45, 1
        %s1398 = smul.addr %s1397, 4608
        %s1399 = scalar_lea.vmem [#allocation3], %s1398
        // Predicated region
        $region56: #{forward.9} parent=54 // pred_check
          %p1400 = pneg %p58
        $region57: #{forward.9} parent=54 // pred_check_branch
          %1402 = sbr.rel (%p1400) target = $region59
        $region58: #{forward.9} parent=54 // pred_region
          _
        $region59: #{forward.9} parent=54 // pred_fallthru
          _
        %s1403 = sand.u32 %s45, 1
        %s1404 = sand.u32 %s45, 1
        %s1405 = smul.addr %s1404, 4608
        %s1406 = scalar_lea.vmem [#allocation3], %s1405
        %p1407 = pneg %p58
        %p1408 = pneg %p55
        %s1409 = smul.u32 288, %s23
        %p1410 = scmp.lt.s32.totalorder %s1409, 863
        %s1411 = scalar_select %p1410, %s1409, 863
        %p1412 = scmp.lt.s32.totalorder %s22, 0
        %s1413 = scalar_select %p1412, %s22, 0
        %s1414 = sadd.s32 %s1413, %s1411
        %s1415 = smul.addr %s1414, 4
        %s1416 = scalar_lea.vmem %s1, %s1415
        %p1417 = pneg %p86
        %p1418 = pneg %p83
        %p1419 = scmp.lt.s32.totalorder %s22, 0
        %s1420 = scalar_select %p1419, %s22, 0
        %s1421 = scalar_lea.vmem %s2, %s1420
        %p1422 = pneg %p112
        %p1423 = pneg %p109
        %p1424 = scmp.lt.s32.totalorder %s22, 0
        %s1425 = scalar_select %p1424, %s22, 0
        %s1426 = scalar_lea.vmem %s3, %s1425
        %p1427 = pneg %p138
        %p1428 = pneg %p135
        %p1429 = pneg %p166
        %p1430 = pneg %p163
        %s1431 = smul.u32 64, %s21
        %s1432 = smul.u32 18, %s23
        %s1433 = smul.u32 288, %s23
        %p1434 = scmp.lt.s32.totalorder %s1433, 863
        %s1435 = scalar_select %p1434, %s1433, 863
        %p1436 = scmp.lt.s32.totalorder %s22, 0
        %s1437 = scalar_select %p1436, %s22, 0
        %s1438 = sadd.s32 %s1437, %s1435
        %s1439 = smul.addr %s1438, 4
        %s1440 = scalar_lea.vmem %s1, %s1439
        %s1441 = smul.u32 288, %s23
        %p1442 = scmp.lt.s32.totalorder %s22, 0
        %s1443 = scalar_select %p1442, %s22, 0
        %s1444 = scalar_lea.vmem %s2, %s1443
        %p1445 = scmp.lt.s32.totalorder %s22, 0
        %s1446 = scalar_select %p1445, %s22, 0
        %s1447 = scalar_lea.vmem %s3, %s1446
        %s1448 = smul.u32 64, %s21
        %p1449 = scmp.eq.s32.totalorder %s23, 0
        // Predicated region
        $region60: #{forward.9} parent=54 // pred_check
          %p1450 = pneg %p1449
        $region61: #{forward.9} parent=54 // pred_check_branch
          %1452 = sbr.rel (%p1450) target = $region63
        $region62: #{forward.9} parent=54 // pred_region
          %1453 = vst [vmem:[#allocation2] sm:$0xff] 0.0
          %1454 = vst [vmem:[#allocation2 + $0x8] sm:$0xff] 0.0
          %1455 = vst [vmem:[#allocation2 + $0x10] sm:$0xff] 0.0
          %1456 = vst [vmem:[#allocation2 + $0x18] sm:$0xff] 0.0
          %1457 = vst [vmem:[#allocation2 + $0x20] sm:$0xff] 0.0
          %1458 = vst [vmem:[#allocation2 + $0x28] sm:$0xff] 0.0
          %1459 = vst [vmem:[#allocation2 + $0x30] sm:$0xff] 0.0
          %1460 = vst [vmem:[#allocation2 + $0x38] sm:$0xff] 0.0
          %1461 = vst [vmem:[#allocation2 + $0x40] sm:$0xff] 0.0
          %1462 = vst [vmem:[#allocation2 + $0x48] sm:$0xff] 0.0
          %1463 = vst [vmem:[#allocation2 + $0x50] sm:$0xff] 0.0
          %1464 = vst [vmem:[#allocation2 + $0x58] sm:$0xff] 0.0
          %1465 = vst [vmem:[#allocation2 + $0x60] sm:$0xff] 0.0
          %1466 = vst [vmem:[#allocation2 + $0x68] sm:$0xff] 0.0
          %1467 = vst [vmem:[#allocation2 + $0x70] sm:$0xff] 0.0
          %1468 = vst [vmem:[#allocation2 + $0x78] sm:$0xff] 0.0
          %1469 = vst [vmem:[#allocation2 + $0x80] sm:$0xff] 0.0
          %1470 = vst [vmem:[#allocation2 + $0x88] sm:$0xff] 0.0
          %1471 = vst [vmem:[#allocation2 + $0x90] sm:$0xff] 0.0
          %1472 = vst [vmem:[#allocation2 + $0x98] sm:$0xff] 0.0
          %1473 = vst [vmem:[#allocation2 + $0xa0] sm:$0xff] 0.0
          %1474 = vst [vmem:[#allocation2 + $0xa8] sm:$0xff] 0.0
          %1475 = vst [vmem:[#allocation2 + $0xb0] sm:$0xff] 0.0
          %1476 = vst [vmem:[#allocation2 + $0xb8] sm:$0xff] 0.0
          %1477 = vst [vmem:[#allocation2 + $0xc0] sm:$0xff] 0.0
          %1478 = vst [vmem:[#allocation2 + $0xc8] sm:$0xff] 0.0
          %1479 = vst [vmem:[#allocation2 + $0xd0] sm:$0xff] 0.0
          %1480 = vst [vmem:[#allocation2 + $0xd8] sm:$0xff] 0.0
          %1481 = vst [vmem:[#allocation2 + $0xe0] sm:$0xff] 0.0
          %1482 = vst [vmem:[#allocation2 + $0xe8] sm:$0xff] 0.0
          %1483 = vst [vmem:[#allocation2 + $0xf0] sm:$0xff] 0.0
          %1484 = vst [vmem:[#allocation2 + $0xf8] sm:$0xff] 0.0
          %1485 = vst [vmem:[#allocation2 + $0x100] sm:$0xff] 0.0
          %1486 = vst [vmem:[#allocation2 + $0x108] sm:$0xff] 0.0
          %1487 = vst [vmem:[#allocation2 + $0x110] sm:$0xff] 0.0
          %1488 = vst [vmem:[#allocation2 + $0x118] sm:$0xff] 0.0
          %1489 = vst [vmem:[#allocation2 + $0x120] sm:$0xff] 0.0
          %1490 = vst [vmem:[#allocation2 + $0x128] sm:$0xff] 0.0
          %1491 = vst [vmem:[#allocation2 + $0x130] sm:$0xff] 0.0
          %1492 = vst [vmem:[#allocation2 + $0x138] sm:$0xff] 0.0
          %1493 = vst [vmem:[#allocation2 + $0x140] sm:$0xff] 0.0
          %1494 = vst [vmem:[#allocation2 + $0x148] sm:$0xff] 0.0
          %1495 = vst [vmem:[#allocation2 + $0x150] sm:$0xff] 0.0
          %1496 = vst [vmem:[#allocation2 + $0x158] sm:$0xff] 0.0
          %1497 = vst [vmem:[#allocation2 + $0x160] sm:$0xff] 0.0
          %1498 = vst [vmem:[#allocation2 + $0x168] sm:$0xff] 0.0
          %1499 = vst [vmem:[#allocation2 + $0x170] sm:$0xff] 0.0
          %1500 = vst [vmem:[#allocation2 + $0x178] sm:$0xff] 0.0
          %1501 = vst [vmem:[#allocation2 + $0x180] sm:$0xff] 0.0
          %1502 = vst [vmem:[#allocation2 + $0x188] sm:$0xff] 0.0
          %1503 = vst [vmem:[#allocation2 + $0x190] sm:$0xff] 0.0
          %1504 = vst [vmem:[#allocation2 + $0x198] sm:$0xff] 0.0
          %1505 = vst [vmem:[#allocation2 + $0x1a0] sm:$0xff] 0.0
          %1506 = vst [vmem:[#allocation2 + $0x1a8] sm:$0xff] 0.0
          %1507 = vst [vmem:[#allocation2 + $0x1b0] sm:$0xff] 0.0
          %1508 = vst [vmem:[#allocation2 + $0x1b8] sm:$0xff] 0.0
          %1509 = vst [vmem:[#allocation2 + $0x1c0] sm:$0xff] 0.0
          %1510 = vst [vmem:[#allocation2 + $0x1c8] sm:$0xff] 0.0
          %1511 = vst [vmem:[#allocation2 + $0x1d0] sm:$0xff] 0.0
          %1512 = vst [vmem:[#allocation2 + $0x1d8] sm:$0xff] 0.0
          %1513 = vst [vmem:[#allocation2 + $0x1e0] sm:$0xff] 0.0
          %1514 = vst [vmem:[#allocation2 + $0x1e8] sm:$0xff] 0.0
          %1515 = vst [vmem:[#allocation2 + $0x1f0] sm:$0xff] 0.0
          %1516 = vst [vmem:[#allocation2 + $0x1f8] sm:$0xff] 0.0
        $region63: #{forward.9} parent=54 // pred_fallthru
          _
        %v1517 = vld [vmem:[#allocation2] sm:$0xff]
        %v1518 = vld [vmem:[#allocation2 + $0x8] sm:$0xff]
        %v1519 = vld [vmem:[#allocation2 + $0x10] sm:$0xff]
        %v1520 = vld [vmem:[#allocation2 + $0x18] sm:$0xff]
        %v1521 = vld [vmem:[#allocation2 + $0x20] sm:$0xff]
        %v1522 = vld [vmem:[#allocation2 + $0x28] sm:$0xff]
        %v1523 = vld [vmem:[#allocation2 + $0x30] sm:$0xff]
        %v1524 = vld [vmem:[#allocation2 + $0x38] sm:$0xff]
        %v1525 = vld [vmem:[#allocation2 + $0x40] sm:$0xff]
        %v1526 = vld [vmem:[#allocation2 + $0x48] sm:$0xff]
        %v1527 = vld [vmem:[#allocation2 + $0x50] sm:$0xff]
        %v1528 = vld [vmem:[#allocation2 + $0x58] sm:$0xff]
        %v1529 = vld [vmem:[#allocation2 + $0x60] sm:$0xff]
        %v1530 = vld [vmem:[#allocation2 + $0x68] sm:$0xff]
        %v1531 = vld [vmem:[#allocation2 + $0x70] sm:$0xff]
        %v1532 = vld [vmem:[#allocation2 + $0x78] sm:$0xff]
        %v1533 = vld [vmem:[#allocation2 + $0x80] sm:$0xff]
        %v1534 = vld [vmem:[#allocation2 + $0x88] sm:$0xff]
        %v1535 = vld [vmem:[#allocation2 + $0x90] sm:$0xff]
        %v1536 = vld [vmem:[#allocation2 + $0x98] sm:$0xff]
        %v1537 = vld [vmem:[#allocation2 + $0xa0] sm:$0xff]
        %v1538 = vld [vmem:[#allocation2 + $0xa8] sm:$0xff]
        %v1539 = vld [vmem:[#allocation2 + $0xb0] sm:$0xff]
        %v1540 = vld [vmem:[#allocation2 + $0xb8] sm:$0xff]
        %v1541 = vld [vmem:[#allocation2 + $0xc0] sm:$0xff]
        %v1542 = vld [vmem:[#allocation2 + $0xc8] sm:$0xff]
        %v1543 = vld [vmem:[#allocation2 + $0xd0] sm:$0xff]
        %v1544 = vld [vmem:[#allocation2 + $0xd8] sm:$0xff]
        %v1545 = vld [vmem:[#allocation2 + $0xe0] sm:$0xff]
        %v1546 = vld [vmem:[#allocation2 + $0xe8] sm:$0xff]
        %v1547 = vld [vmem:[#allocation2 + $0xf0] sm:$0xff]
        %v1548 = vld [vmem:[#allocation2 + $0xf8] sm:$0xff]
        %v1549 = vld [vmem:[#allocation2 + $0x100] sm:$0xff]
        %v1550 = vld [vmem:[#allocation2 + $0x108] sm:$0xff]
        %v1551 = vld [vmem:[#allocation2 + $0x110] sm:$0xff]
        %v1552 = vld [vmem:[#allocation2 + $0x118] sm:$0xff]
        %v1553 = vld [vmem:[#allocation2 + $0x120] sm:$0xff]
        %v1554 = vld [vmem:[#allocation2 + $0x128] sm:$0xff]
        %v1555 = vld [vmem:[#allocation2 + $0x130] sm:$0xff]
        %v1556 = vld [vmem:[#allocation2 + $0x138] sm:$0xff]
        %v1557 = vld [vmem:[#allocation2 + $0x140] sm:$0xff]
        %v1558 = vld [vmem:[#allocation2 + $0x148] sm:$0xff]
        %v1559 = vld [vmem:[#allocation2 + $0x150] sm:$0xff]
        %v1560 = vld [vmem:[#allocation2 + $0x158] sm:$0xff]
        %v1561 = vld [vmem:[#allocation2 + $0x160] sm:$0xff]
        %v1562 = vld [vmem:[#allocation2 + $0x168] sm:$0xff]
        %v1563 = vld [vmem:[#allocation2 + $0x170] sm:$0xff]
        %v1564 = vld [vmem:[#allocation2 + $0x178] sm:$0xff]
        %v1565 = vld [vmem:[#allocation2 + $0x180] sm:$0xff]
        %v1566 = vld [vmem:[#allocation2 + $0x188] sm:$0xff]
        %v1567 = vld [vmem:[#allocation2 + $0x190] sm:$0xff]
        %v1568 = vld [vmem:[#allocation2 + $0x198] sm:$0xff]
        %v1569 = vld [vmem:[#allocation2 + $0x1a0] sm:$0xff]
        %v1570 = vld [vmem:[#allocation2 + $0x1a8] sm:$0xff]
        %v1571 = vld [vmem:[#allocation2 + $0x1b0] sm:$0xff]
        %v1572 = vld [vmem:[#allocation2 + $0x1b8] sm:$0xff]
        %v1573 = vld [vmem:[#allocation2 + $0x1c0] sm:$0xff]
        %v1574 = vld [vmem:[#allocation2 + $0x1c8] sm:$0xff]
        %v1575 = vld [vmem:[#allocation2 + $0x1d0] sm:$0xff]
        %v1576 = vld [vmem:[#allocation2 + $0x1d8] sm:$0xff]
        %v1577 = vld [vmem:[#allocation2 + $0x1e0] sm:$0xff]
        %v1578 = vld [vmem:[#allocation2 + $0x1e8] sm:$0xff]
        %v1579 = vld [vmem:[#allocation2 + $0x1f0] sm:$0xff]
        %v1580 = vld [vmem:[#allocation2 + $0x1f8] sm:$0xff]
        %v1581 = vld [vmem:[%s1399] sm:$0xff]
        %v1582 = vld [vmem:[%s1399 + $0x8] sm:$0xff]
        %v1583 = vld [vmem:[%s1399 + $0x10] sm:$0xff]
        %v1584 = vld [vmem:[%s1399 + $0x18] sm:$0xff]
        %v1585 = vld [vmem:[%s1399 + $0x20] sm:$0xff]
        %v1586 = vld [vmem:[%s1399 + $0x28] sm:$0xff]
        %v1587 = vld [vmem:[%s1399 + $0x30] sm:$0xff]
        %v1588 = vld [vmem:[%s1399 + $0x38] sm:$0xff]
        %v1589 = vld [vmem:[%s1399 + $0x40] sm:$0xff]
        %v1590 = vld [vmem:[%s1399 + $0x48] sm:$0xff]
        %v1591 = vld [vmem:[%s1399 + $0x50] sm:$0xff]
        %v1592 = vld [vmem:[%s1399 + $0x58] sm:$0xff]
        %v1593 = vld [vmem:[%s1399 + $0x60] sm:$0xff]
        %v1594 = vld [vmem:[%s1399 + $0x68] sm:$0xff]
        %v1595 = vld [vmem:[%s1399 + $0x70] sm:$0xff]
        %v1596 = vld [vmem:[%s1399 + $0x78] sm:$0xff]
        %v1597 = vld [vmem:[%s1399 + $0x80] sm:$0xff]
        %v1598 = vld [vmem:[%s1399 + $0x88] sm:$0xff]
        %v1599 = vld [vmem:[%s1399 + $0x90] sm:$0xff]
        %v1600 = vld [vmem:[%s1399 + $0x98] sm:$0xff]
        %v1601 = vld [vmem:[%s1399 + $0xa0] sm:$0xff]
        %v1602 = vld [vmem:[%s1399 + $0xa8] sm:$0xff]
        %v1603 = vld [vmem:[%s1399 + $0xb0] sm:$0xff]
        %v1604 = vld [vmem:[%s1399 + $0xb8] sm:$0xff]
        %v1605 = vld [vmem:[%s1399 + $0xc0] sm:$0xff]
        %v1606 = vld [vmem:[%s1399 + $0xc8] sm:$0xff]
        %v1607 = vld [vmem:[%s1399 + $0xd0] sm:$0xff]
        %v1608 = vld [vmem:[%s1399 + $0xd8] sm:$0xff]
        %v1609 = vld [vmem:[%s1399 + $0xe0] sm:$0xff]
        %v1610 = vld [vmem:[%s1399 + $0xe8] sm:$0xff]
        %v1611 = vld [vmem:[%s1399 + $0xf0] sm:$0xff]
        %v1612 = vld [vmem:[%s1399 + $0xf8] sm:$0xff]
        %v1613 = vld [vmem:[%s1399 + $0x100] sm:$0xff]
        %v1614 = vld [vmem:[%s1399 + $0x108] sm:$0xff]
        %v1615 = vld [vmem:[%s1399 + $0x110] sm:$0xff]
        %v1616 = vld [vmem:[%s1399 + $0x118] sm:$0xff]
        %v1617 = vld [vmem:[%s1399 + $0x120] sm:$0xff]
        %v1618 = vld [vmem:[%s1399 + $0x128] sm:$0xff]
        %v1619 = vld [vmem:[%s1399 + $0x130] sm:$0xff]
        %v1620 = vld [vmem:[%s1399 + $0x138] sm:$0xff]
        %v1621 = vld [vmem:[%s1399 + $0x140] sm:$0xff]
        %v1622 = vld [vmem:[%s1399 + $0x148] sm:$0xff]
        %v1623 = vld [vmem:[%s1399 + $0x150] sm:$0xff]
        %v1624 = vld [vmem:[%s1399 + $0x158] sm:$0xff]
        %v1625 = vld [vmem:[%s1399 + $0x160] sm:$0xff]
        %v1626 = vld [vmem:[%s1399 + $0x168] sm:$0xff]
        %v1627 = vld [vmem:[%s1399 + $0x170] sm:$0xff]
        %v1628 = vld [vmem:[%s1399 + $0x178] sm:$0xff]
        %v1629 = vld [vmem:[%s1399 + $0x180] sm:$0xff]
        %v1630 = vld [vmem:[%s1399 + $0x188] sm:$0xff]
        %v1631 = vld [vmem:[%s1399 + $0x190] sm:$0xff]
        %v1632 = vld [vmem:[%s1399 + $0x198] sm:$0xff]
        %v1633 = vld [vmem:[%s1399 + $0x1a0] sm:$0xff]
        %v1634 = vld [vmem:[%s1399 + $0x1a8] sm:$0xff]
        %v1635 = vld [vmem:[%s1399 + $0x1b0] sm:$0xff]
        %v1636 = vld [vmem:[%s1399 + $0x1b8] sm:$0xff]
        %v1637 = vld [vmem:[%s1399 + $0x1c0] sm:$0xff]
        %v1638 = vld [vmem:[%s1399 + $0x1c8] sm:$0xff]
        %v1639 = vld [vmem:[%s1399 + $0x1d0] sm:$0xff]
        %v1640 = vld [vmem:[%s1399 + $0x1d8] sm:$0xff]
        %v1641 = vld [vmem:[%s1399 + $0x1e0] sm:$0xff]
        %v1642 = vld [vmem:[%s1399 + $0x1e8] sm:$0xff]
        %v1643 = vld [vmem:[%s1399 + $0x1f0] sm:$0xff]
        %v1644 = vld [vmem:[%s1399 + $0x1f8] sm:$0xff]
        %v1645 = vld [vmem:[%s1399 + $0x200] sm:$0xff]
        %v1646 = vld [vmem:[%s1399 + $0x208] sm:$0xff]
        %v1647 = vld [vmem:[%s1399 + $0x210] sm:$0xff]
        %v1648 = vld [vmem:[%s1399 + $0x218] sm:$0xff]
        %v1649 = vld [vmem:[%s1399 + $0x220] sm:$0xff]
        %v1650 = vld [vmem:[%s1399 + $0x228] sm:$0xff]
        %v1651 = vld [vmem:[%s1399 + $0x230] sm:$0xff]
        %v1652 = vld [vmem:[%s1399 + $0x238] sm:$0xff]
        %v1653 = vld [vmem:[%s1399 + $0x240] sm:$0xff]
        %v1654 = vld [vmem:[%s1399 + $0x248] sm:$0xff]
        %v1655 = vld [vmem:[%s1399 + $0x250] sm:$0xff]
        %v1656 = vld [vmem:[%s1399 + $0x258] sm:$0xff]
        %v1657 = vld [vmem:[%s1399 + $0x260] sm:$0xff]
        %v1658 = vld [vmem:[%s1399 + $0x268] sm:$0xff]
        %v1659 = vld [vmem:[%s1399 + $0x270] sm:$0xff]
        %v1660 = vld [vmem:[%s1399 + $0x278] sm:$0xff]
        %v1661 = vld [vmem:[%s1399 + $0x280] sm:$0xff]
        %v1662 = vld [vmem:[%s1399 + $0x288] sm:$0xff]
        %v1663 = vld [vmem:[%s1399 + $0x290] sm:$0xff]
        %v1664 = vld [vmem:[%s1399 + $0x298] sm:$0xff]
        %v1665 = vld [vmem:[%s1399 + $0x2a0] sm:$0xff]
        %v1666 = vld [vmem:[%s1399 + $0x2a8] sm:$0xff]
        %v1667 = vld [vmem:[%s1399 + $0x2b0] sm:$0xff]
        %v1668 = vld [vmem:[%s1399 + $0x2b8] sm:$0xff]
        %v1669 = vld [vmem:[%s1399 + $0x2c0] sm:$0xff]
        %v1670 = vld [vmem:[%s1399 + $0x2c8] sm:$0xff]
        %v1671 = vld [vmem:[%s1399 + $0x2d0] sm:$0xff]
        %v1672 = vld [vmem:[%s1399 + $0x2d8] sm:$0xff]
        %v1673 = vld [vmem:[%s1399 + $0x2e0] sm:$0xff]
        %v1674 = vld [vmem:[%s1399 + $0x2e8] sm:$0xff]
        %v1675 = vld [vmem:[%s1399 + $0x2f0] sm:$0xff]
        %v1676 = vld [vmem:[%s1399 + $0x2f8] sm:$0xff]
        %v1677 = vld [vmem:[%s1399 + $0x300] sm:$0xff]
        %v1678 = vld [vmem:[%s1399 + $0x308] sm:$0xff]
        %v1679 = vld [vmem:[%s1399 + $0x310] sm:$0xff]
        %v1680 = vld [vmem:[%s1399 + $0x318] sm:$0xff]
        %v1681 = vld [vmem:[%s1399 + $0x320] sm:$0xff]
        %v1682 = vld [vmem:[%s1399 + $0x328] sm:$0xff]
        %v1683 = vld [vmem:[%s1399 + $0x330] sm:$0xff]
        %v1684 = vld [vmem:[%s1399 + $0x338] sm:$0xff]
        %v1685 = vld [vmem:[%s1399 + $0x340] sm:$0xff]
        %v1686 = vld [vmem:[%s1399 + $0x348] sm:$0xff]
        %v1687 = vld [vmem:[%s1399 + $0x350] sm:$0xff]
        %v1688 = vld [vmem:[%s1399 + $0x358] sm:$0xff]
        %v1689 = vld [vmem:[%s1399 + $0x360] sm:$0xff]
        %v1690 = vld [vmem:[%s1399 + $0x368] sm:$0xff]
        %v1691 = vld [vmem:[%s1399 + $0x370] sm:$0xff]
        %v1692 = vld [vmem:[%s1399 + $0x378] sm:$0xff]
        %v1693 = vld [vmem:[%s1399 + $0x380] sm:$0xff]
        %v1694 = vld [vmem:[%s1399 + $0x388] sm:$0xff]
        %v1695 = vld [vmem:[%s1399 + $0x390] sm:$0xff]
        %v1696 = vld [vmem:[%s1399 + $0x398] sm:$0xff]
        %v1697 = vld [vmem:[%s1399 + $0x3a0] sm:$0xff]
        %v1698 = vld [vmem:[%s1399 + $0x3a8] sm:$0xff]
        %v1699 = vld [vmem:[%s1399 + $0x3b0] sm:$0xff]
        %v1700 = vld [vmem:[%s1399 + $0x3b8] sm:$0xff]
        %v1701 = vld [vmem:[%s1399 + $0x3c0] sm:$0xff]
        %v1702 = vld [vmem:[%s1399 + $0x3c8] sm:$0xff]
        %v1703 = vld [vmem:[%s1399 + $0x3d0] sm:$0xff]
        %v1704 = vld [vmem:[%s1399 + $0x3d8] sm:$0xff]
        %v1705 = vld [vmem:[%s1399 + $0x3e0] sm:$0xff]
        %v1706 = vld [vmem:[%s1399 + $0x3e8] sm:$0xff]
        %v1707 = vld [vmem:[%s1399 + $0x3f0] sm:$0xff]
        %v1708 = vld [vmem:[%s1399 + $0x3f8] sm:$0xff]
        %v1709 = vld [vmem:[%s1399 + $0x400] sm:$0xff]
        %v1710 = vld [vmem:[%s1399 + $0x408] sm:$0xff]
        %v1711 = vld [vmem:[%s1399 + $0x410] sm:$0xff]
        %v1712 = vld [vmem:[%s1399 + $0x418] sm:$0xff]
        %v1713 = vld [vmem:[%s1399 + $0x420] sm:$0xff]
        %v1714 = vld [vmem:[%s1399 + $0x428] sm:$0xff]
        %v1715 = vld [vmem:[%s1399 + $0x430] sm:$0xff]
        %v1716 = vld [vmem:[%s1399 + $0x438] sm:$0xff]
        %v1717 = vld [vmem:[%s1399 + $0x440] sm:$0xff]
        %v1718 = vld [vmem:[%s1399 + $0x448] sm:$0xff]
        %v1719 = vld [vmem:[%s1399 + $0x450] sm:$0xff]
        %v1720 = vld [vmem:[%s1399 + $0x458] sm:$0xff]
        %v1721 = vld [vmem:[%s1399 + $0x460] sm:$0xff]
        %v1722 = vld [vmem:[%s1399 + $0x468] sm:$0xff]
        %v1723 = vld [vmem:[%s1399 + $0x470] sm:$0xff]
        %v1724 = vld [vmem:[%s1399 + $0x478] sm:$0xff]
        %v1725 = vld [vmem:[%s1399 + $0x480] sm:$0xff]
        %v1726 = vld [vmem:[%s1399 + $0x488] sm:$0xff]
        %v1727 = vld [vmem:[%s1399 + $0x490] sm:$0xff]
        %v1728 = vld [vmem:[%s1399 + $0x498] sm:$0xff]
        %v1729 = vld [vmem:[%s1399 + $0x4a0] sm:$0xff]
        %v1730 = vld [vmem:[%s1399 + $0x4a8] sm:$0xff]
        %v1731 = vld [vmem:[%s1399 + $0x4b0] sm:$0xff]
        %v1732 = vld [vmem:[%s1399 + $0x4b8] sm:$0xff]
        %v1733 = vld [vmem:[%s1399 + $0x4c0] sm:$0xff]
        %v1734 = vld [vmem:[%s1399 + $0x4c8] sm:$0xff]
        %v1735 = vld [vmem:[%s1399 + $0x4d0] sm:$0xff]
        %v1736 = vld [vmem:[%s1399 + $0x4d8] sm:$0xff]
        %v1737 = vld [vmem:[%s1399 + $0x4e0] sm:$0xff]
        %v1738 = vld [vmem:[%s1399 + $0x4e8] sm:$0xff]
        %v1739 = vld [vmem:[%s1399 + $0x4f0] sm:$0xff]
        %v1740 = vld [vmem:[%s1399 + $0x4f8] sm:$0xff]
        %v1741 = vld [vmem:[%s1399 + $0x500] sm:$0xff]
        %v1742 = vld [vmem:[%s1399 + $0x508] sm:$0xff]
        %v1743 = vld [vmem:[%s1399 + $0x510] sm:$0xff]
        %v1744 = vld [vmem:[%s1399 + $0x518] sm:$0xff]
        %v1745 = vld [vmem:[%s1399 + $0x520] sm:$0xff]
        %v1746 = vld [vmem:[%s1399 + $0x528] sm:$0xff]
        %v1747 = vld [vmem:[%s1399 + $0x530] sm:$0xff]
        %v1748 = vld [vmem:[%s1399 + $0x538] sm:$0xff]
        %v1749 = vld [vmem:[%s1399 + $0x540] sm:$0xff]
        %v1750 = vld [vmem:[%s1399 + $0x548] sm:$0xff]
        %v1751 = vld [vmem:[%s1399 + $0x550] sm:$0xff]
        %v1752 = vld [vmem:[%s1399 + $0x558] sm:$0xff]
        %v1753 = vld [vmem:[%s1399 + $0x560] sm:$0xff]
        %v1754 = vld [vmem:[%s1399 + $0x568] sm:$0xff]
        %v1755 = vld [vmem:[%s1399 + $0x570] sm:$0xff]
        %v1756 = vld [vmem:[%s1399 + $0x578] sm:$0xff]
        %v1757 = vld [vmem:[%s1399 + $0x580] sm:$0xff]
        %v1758 = vld [vmem:[%s1399 + $0x588] sm:$0xff]
        %v1759 = vld [vmem:[%s1399 + $0x590] sm:$0xff]
        %v1760 = vld [vmem:[%s1399 + $0x598] sm:$0xff]
        %v1761 = vld [vmem:[%s1399 + $0x5a0] sm:$0xff]
        %v1762 = vld [vmem:[%s1399 + $0x5a8] sm:$0xff]
        %v1763 = vld [vmem:[%s1399 + $0x5b0] sm:$0xff]
        %v1764 = vld [vmem:[%s1399 + $0x5b8] sm:$0xff]
        %v1765 = vld [vmem:[%s1399 + $0x5c0] sm:$0xff]
        %v1766 = vld [vmem:[%s1399 + $0x5c8] sm:$0xff]
        %v1767 = vld [vmem:[%s1399 + $0x5d0] sm:$0xff]
        %v1768 = vld [vmem:[%s1399 + $0x5d8] sm:$0xff]
        %v1769 = vld [vmem:[%s1399 + $0x5e0] sm:$0xff]
        %v1770 = vld [vmem:[%s1399 + $0x5e8] sm:$0xff]
        %v1771 = vld [vmem:[%s1399 + $0x5f0] sm:$0xff]
        %v1772 = vld [vmem:[%s1399 + $0x5f8] sm:$0xff]
        %v1773 = vld [vmem:[%s1399 + $0x600] sm:$0xff]
        %v1774 = vld [vmem:[%s1399 + $0x608] sm:$0xff]
        %v1775 = vld [vmem:[%s1399 + $0x610] sm:$0xff]
        %v1776 = vld [vmem:[%s1399 + $0x618] sm:$0xff]
        %v1777 = vld [vmem:[%s1399 + $0x620] sm:$0xff]
        %v1778 = vld [vmem:[%s1399 + $0x628] sm:$0xff]
        %v1779 = vld [vmem:[%s1399 + $0x630] sm:$0xff]
        %v1780 = vld [vmem:[%s1399 + $0x638] sm:$0xff]
        %v1781 = vld [vmem:[%s1399 + $0x640] sm:$0xff]
        %v1782 = vld [vmem:[%s1399 + $0x648] sm:$0xff]
        %v1783 = vld [vmem:[%s1399 + $0x650] sm:$0xff]
        %v1784 = vld [vmem:[%s1399 + $0x658] sm:$0xff]
        %v1785 = vld [vmem:[%s1399 + $0x660] sm:$0xff]
        %v1786 = vld [vmem:[%s1399 + $0x668] sm:$0xff]
        %v1787 = vld [vmem:[%s1399 + $0x670] sm:$0xff]
        %v1788 = vld [vmem:[%s1399 + $0x678] sm:$0xff]
        %v1789 = vld [vmem:[%s1399 + $0x680] sm:$0xff]
        %v1790 = vld [vmem:[%s1399 + $0x688] sm:$0xff]
        %v1791 = vld [vmem:[%s1399 + $0x690] sm:$0xff]
        %v1792 = vld [vmem:[%s1399 + $0x698] sm:$0xff]
        %v1793 = vld [vmem:[%s1399 + $0x6a0] sm:$0xff]
        %v1794 = vld [vmem:[%s1399 + $0x6a8] sm:$0xff]
        %v1795 = vld [vmem:[%s1399 + $0x6b0] sm:$0xff]
        %v1796 = vld [vmem:[%s1399 + $0x6b8] sm:$0xff]
        %v1797 = vld [vmem:[%s1399 + $0x6c0] sm:$0xff]
        %v1798 = vld [vmem:[%s1399 + $0x6c8] sm:$0xff]
        %v1799 = vld [vmem:[%s1399 + $0x6d0] sm:$0xff]
        %v1800 = vld [vmem:[%s1399 + $0x6d8] sm:$0xff]
        %v1801 = vld [vmem:[%s1399 + $0x6e0] sm:$0xff]
        %v1802 = vld [vmem:[%s1399 + $0x6e8] sm:$0xff]
        %v1803 = vld [vmem:[%s1399 + $0x6f0] sm:$0xff]
        %v1804 = vld [vmem:[%s1399 + $0x6f8] sm:$0xff]
        %v1805 = vld [vmem:[%s1399 + $0x700] sm:$0xff]
        %v1806 = vld [vmem:[%s1399 + $0x708] sm:$0xff]
        %v1807 = vld [vmem:[%s1399 + $0x710] sm:$0xff]
        %v1808 = vld [vmem:[%s1399 + $0x718] sm:$0xff]
        %v1809 = vld [vmem:[%s1399 + $0x720] sm:$0xff]
        %v1810 = vld [vmem:[%s1399 + $0x728] sm:$0xff]
        %v1811 = vld [vmem:[%s1399 + $0x730] sm:$0xff]
        %v1812 = vld [vmem:[%s1399 + $0x738] sm:$0xff]
        %v1813 = vld [vmem:[%s1399 + $0x740] sm:$0xff]
        %v1814 = vld [vmem:[%s1399 + $0x748] sm:$0xff]
        %v1815 = vld [vmem:[%s1399 + $0x750] sm:$0xff]
        %v1816 = vld [vmem:[%s1399 + $0x758] sm:$0xff]
        %v1817 = vld [vmem:[%s1399 + $0x760] sm:$0xff]
        %v1818 = vld [vmem:[%s1399 + $0x768] sm:$0xff]
        %v1819 = vld [vmem:[%s1399 + $0x770] sm:$0xff]
        %v1820 = vld [vmem:[%s1399 + $0x778] sm:$0xff]
        %v1821 = vld [vmem:[%s1399 + $0x780] sm:$0xff]
        %v1822 = vld [vmem:[%s1399 + $0x788] sm:$0xff]
        %v1823 = vld [vmem:[%s1399 + $0x790] sm:$0xff]
        %v1824 = vld [vmem:[%s1399 + $0x798] sm:$0xff]
        %v1825 = vld [vmem:[%s1399 + $0x7a0] sm:$0xff]
        %v1826 = vld [vmem:[%s1399 + $0x7a8] sm:$0xff]
        %v1827 = vld [vmem:[%s1399 + $0x7b0] sm:$0xff]
        %v1828 = vld [vmem:[%s1399 + $0x7b8] sm:$0xff]
        %v1829 = vld [vmem:[%s1399 + $0x7c0] sm:$0xff]
        %v1830 = vld [vmem:[%s1399 + $0x7c8] sm:$0xff]
        %v1831 = vld [vmem:[%s1399 + $0x7d0] sm:$0xff]
        %v1832 = vld [vmem:[%s1399 + $0x7d8] sm:$0xff]
        %v1833 = vld [vmem:[%s1399 + $0x7e0] sm:$0xff]
        %v1834 = vld [vmem:[%s1399 + $0x7e8] sm:$0xff]
        %v1835 = vld [vmem:[%s1399 + $0x7f0] sm:$0xff]
        %v1836 = vld [vmem:[%s1399 + $0x7f8] sm:$0xff]
        %v1837 = vld [vmem:[%s1399 + $0x800] sm:$0xff]
        %v1838 = vld [vmem:[%s1399 + $0x808] sm:$0xff]
        %v1839 = vld [vmem:[%s1399 + $0x810] sm:$0xff]
        %v1840 = vld [vmem:[%s1399 + $0x818] sm:$0xff]
        %v1841 = vld [vmem:[%s1399 + $0x820] sm:$0xff]
        %v1842 = vld [vmem:[%s1399 + $0x828] sm:$0xff]
        %v1843 = vld [vmem:[%s1399 + $0x830] sm:$0xff]
        %v1844 = vld [vmem:[%s1399 + $0x838] sm:$0xff]
        %v1845 = vld [vmem:[%s1399 + $0x840] sm:$0xff]
        %v1846 = vld [vmem:[%s1399 + $0x848] sm:$0xff]
        %v1847 = vld [vmem:[%s1399 + $0x850] sm:$0xff]
        %v1848 = vld [vmem:[%s1399 + $0x858] sm:$0xff]
        %v1849 = vld [vmem:[%s1399 + $0x860] sm:$0xff]
        %v1850 = vld [vmem:[%s1399 + $0x868] sm:$0xff]
        %v1851 = vld [vmem:[%s1399 + $0x870] sm:$0xff]
        %v1852 = vld [vmem:[%s1399 + $0x878] sm:$0xff]
        %v1853 = vld [vmem:[%s1399 + $0x880] sm:$0xff]
        %v1854 = vld [vmem:[%s1399 + $0x888] sm:$0xff]
        %v1855 = vld [vmem:[%s1399 + $0x890] sm:$0xff]
        %v1856 = vld [vmem:[%s1399 + $0x898] sm:$0xff]
        %v1857 = vld [vmem:[%s1399 + $0x8a0] sm:$0xff]
        %v1858 = vld [vmem:[%s1399 + $0x8a8] sm:$0xff]
        %v1859 = vld [vmem:[%s1399 + $0x8b0] sm:$0xff]
        %v1860 = vld [vmem:[%s1399 + $0x8b8] sm:$0xff]
        %v1861 = vld [vmem:[%s1399 + $0x8c0] sm:$0xff]
        %v1862 = vld [vmem:[%s1399 + $0x8c8] sm:$0xff]
        %v1863 = vld [vmem:[%s1399 + $0x8d0] sm:$0xff]
        %v1864 = vld [vmem:[%s1399 + $0x8d8] sm:$0xff]
        %v1865 = vld [vmem:[%s1399 + $0x8e0] sm:$0xff]
        %v1866 = vld [vmem:[%s1399 + $0x8e8] sm:$0xff]
        %v1867 = vld [vmem:[%s1399 + $0x8f0] sm:$0xff]
        %v1868 = vld [vmem:[%s1399 + $0x8f8] sm:$0xff]
        %v1869 = vld [vmem:[%s1399 + $0x900] sm:$0xff]
        %v1870 = vld [vmem:[%s1399 + $0x908] sm:$0xff]
        %v1871 = vld [vmem:[%s1399 + $0x910] sm:$0xff]
        %v1872 = vld [vmem:[%s1399 + $0x918] sm:$0xff]
        %v1873 = vld [vmem:[%s1399 + $0x920] sm:$0xff]
        %v1874 = vld [vmem:[%s1399 + $0x928] sm:$0xff]
        %v1875 = vld [vmem:[%s1399 + $0x930] sm:$0xff]
        %v1876 = vld [vmem:[%s1399 + $0x938] sm:$0xff]
        %v1877 = vld [vmem:[%s1399 + $0x940] sm:$0xff]
        %v1878 = vld [vmem:[%s1399 + $0x948] sm:$0xff]
        %v1879 = vld [vmem:[%s1399 + $0x950] sm:$0xff]
        %v1880 = vld [vmem:[%s1399 + $0x958] sm:$0xff]
        %v1881 = vld [vmem:[%s1399 + $0x960] sm:$0xff]
        %v1882 = vld [vmem:[%s1399 + $0x968] sm:$0xff]
        %v1883 = vld [vmem:[%s1399 + $0x970] sm:$0xff]
        %v1884 = vld [vmem:[%s1399 + $0x978] sm:$0xff]
        %v1885 = vld [vmem:[%s1399 + $0x980] sm:$0xff]
        %v1886 = vld [vmem:[%s1399 + $0x988] sm:$0xff]
        %v1887 = vld [vmem:[%s1399 + $0x990] sm:$0xff]
        %v1888 = vld [vmem:[%s1399 + $0x998] sm:$0xff]
        %v1889 = vld [vmem:[%s1399 + $0x9a0] sm:$0xff]
        %v1890 = vld [vmem:[%s1399 + $0x9a8] sm:$0xff]
        %v1891 = vld [vmem:[%s1399 + $0x9b0] sm:$0xff]
        %v1892 = vld [vmem:[%s1399 + $0x9b8] sm:$0xff]
        %v1893 = vld [vmem:[%s1399 + $0x9c0] sm:$0xff]
        %v1894 = vld [vmem:[%s1399 + $0x9c8] sm:$0xff]
        %v1895 = vld [vmem:[%s1399 + $0x9d0] sm:$0xff]
        %v1896 = vld [vmem:[%s1399 + $0x9d8] sm:$0xff]
        %v1897 = vld [vmem:[%s1399 + $0x9e0] sm:$0xff]
        %v1898 = vld [vmem:[%s1399 + $0x9e8] sm:$0xff]
        %v1899 = vld [vmem:[%s1399 + $0x9f0] sm:$0xff]
        %v1900 = vld [vmem:[%s1399 + $0x9f8] sm:$0xff]
        %v1901 = vld [vmem:[%s1399 + $0xa00] sm:$0xff]
        %v1902 = vld [vmem:[%s1399 + $0xa08] sm:$0xff]
        %v1903 = vld [vmem:[%s1399 + $0xa10] sm:$0xff]
        %v1904 = vld [vmem:[%s1399 + $0xa18] sm:$0xff]
        %v1905 = vld [vmem:[%s1399 + $0xa20] sm:$0xff]
        %v1906 = vld [vmem:[%s1399 + $0xa28] sm:$0xff]
        %v1907 = vld [vmem:[%s1399 + $0xa30] sm:$0xff]
        %v1908 = vld [vmem:[%s1399 + $0xa38] sm:$0xff]
        %v1909 = vld [vmem:[%s1399 + $0xa40] sm:$0xff]
        %v1910 = vld [vmem:[%s1399 + $0xa48] sm:$0xff]
        %v1911 = vld [vmem:[%s1399 + $0xa50] sm:$0xff]
        %v1912 = vld [vmem:[%s1399 + $0xa58] sm:$0xff]
        %v1913 = vld [vmem:[%s1399 + $0xa60] sm:$0xff]
        %v1914 = vld [vmem:[%s1399 + $0xa68] sm:$0xff]
        %v1915 = vld [vmem:[%s1399 + $0xa70] sm:$0xff]
        %v1916 = vld [vmem:[%s1399 + $0xa78] sm:$0xff]
        %v1917 = vld [vmem:[%s1399 + $0xa80] sm:$0xff]
        %v1918 = vld [vmem:[%s1399 + $0xa88] sm:$0xff]
        %v1919 = vld [vmem:[%s1399 + $0xa90] sm:$0xff]
        %v1920 = vld [vmem:[%s1399 + $0xa98] sm:$0xff]
        %v1921 = vld [vmem:[%s1399 + $0xaa0] sm:$0xff]
        %v1922 = vld [vmem:[%s1399 + $0xaa8] sm:$0xff]
        %v1923 = vld [vmem:[%s1399 + $0xab0] sm:$0xff]
        %v1924 = vld [vmem:[%s1399 + $0xab8] sm:$0xff]
        %v1925 = vld [vmem:[%s1399 + $0xac0] sm:$0xff]
        %v1926 = vld [vmem:[%s1399 + $0xac8] sm:$0xff]
        %v1927 = vld [vmem:[%s1399 + $0xad0] sm:$0xff]
        %v1928 = vld [vmem:[%s1399 + $0xad8] sm:$0xff]
        %v1929 = vld [vmem:[%s1399 + $0xae0] sm:$0xff]
        %v1930 = vld [vmem:[%s1399 + $0xae8] sm:$0xff]
        %v1931 = vld [vmem:[%s1399 + $0xaf0] sm:$0xff]
        %v1932 = vld [vmem:[%s1399 + $0xaf8] sm:$0xff]
        %v1933 = vld [vmem:[%s1399 + $0xb00] sm:$0xff]
        %v1934 = vld [vmem:[%s1399 + $0xb08] sm:$0xff]
        %v1935 = vld [vmem:[%s1399 + $0xb10] sm:$0xff]
        %v1936 = vld [vmem:[%s1399 + $0xb18] sm:$0xff]
        %v1937 = vld [vmem:[%s1399 + $0xb20] sm:$0xff]
        %v1938 = vld [vmem:[%s1399 + $0xb28] sm:$0xff]
        %v1939 = vld [vmem:[%s1399 + $0xb30] sm:$0xff]
        %v1940 = vld [vmem:[%s1399 + $0xb38] sm:$0xff]
        %v1941 = vld [vmem:[%s1399 + $0xb40] sm:$0xff]
        %v1942 = vld [vmem:[%s1399 + $0xb48] sm:$0xff]
        %v1943 = vld [vmem:[%s1399 + $0xb50] sm:$0xff]
        %v1944 = vld [vmem:[%s1399 + $0xb58] sm:$0xff]
        %v1945 = vld [vmem:[%s1399 + $0xb60] sm:$0xff]
        %v1946 = vld [vmem:[%s1399 + $0xb68] sm:$0xff]
        %v1947 = vld [vmem:[%s1399 + $0xb70] sm:$0xff]
        %v1948 = vld [vmem:[%s1399 + $0xb78] sm:$0xff]
        %v1949 = vld [vmem:[%s1399 + $0xb80] sm:$0xff]
        %v1950 = vld [vmem:[%s1399 + $0xb88] sm:$0xff]
        %v1951 = vld [vmem:[%s1399 + $0xb90] sm:$0xff]
        %v1952 = vld [vmem:[%s1399 + $0xb98] sm:$0xff]
        %v1953 = vld [vmem:[%s1399 + $0xba0] sm:$0xff]
        %v1954 = vld [vmem:[%s1399 + $0xba8] sm:$0xff]
        %v1955 = vld [vmem:[%s1399 + $0xbb0] sm:$0xff]
        %v1956 = vld [vmem:[%s1399 + $0xbb8] sm:$0xff]
        %v1957 = vld [vmem:[%s1399 + $0xbc0] sm:$0xff]
        %v1958 = vld [vmem:[%s1399 + $0xbc8] sm:$0xff]
        %v1959 = vld [vmem:[%s1399 + $0xbd0] sm:$0xff]
        %v1960 = vld [vmem:[%s1399 + $0xbd8] sm:$0xff]
        %v1961 = vld [vmem:[%s1399 + $0xbe0] sm:$0xff]
        %v1962 = vld [vmem:[%s1399 + $0xbe8] sm:$0xff]
        %v1963 = vld [vmem:[%s1399 + $0xbf0] sm:$0xff]
        %v1964 = vld [vmem:[%s1399 + $0xbf8] sm:$0xff]
        %v1965 = vld [vmem:[%s1399 + $0xc00] sm:$0xff]
        %v1966 = vld [vmem:[%s1399 + $0xc08] sm:$0xff]
        %v1967 = vld [vmem:[%s1399 + $0xc10] sm:$0xff]
        %v1968 = vld [vmem:[%s1399 + $0xc18] sm:$0xff]
        %v1969 = vld [vmem:[%s1399 + $0xc20] sm:$0xff]
        %v1970 = vld [vmem:[%s1399 + $0xc28] sm:$0xff]
        %v1971 = vld [vmem:[%s1399 + $0xc30] sm:$0xff]
        %v1972 = vld [vmem:[%s1399 + $0xc38] sm:$0xff]
        %v1973 = vld [vmem:[%s1399 + $0xc40] sm:$0xff]
        %v1974 = vld [vmem:[%s1399 + $0xc48] sm:$0xff]
        %v1975 = vld [vmem:[%s1399 + $0xc50] sm:$0xff]
        %v1976 = vld [vmem:[%s1399 + $0xc58] sm:$0xff]
        %v1977 = vld [vmem:[%s1399 + $0xc60] sm:$0xff]
        %v1978 = vld [vmem:[%s1399 + $0xc68] sm:$0xff]
        %v1979 = vld [vmem:[%s1399 + $0xc70] sm:$0xff]
        %v1980 = vld [vmem:[%s1399 + $0xc78] sm:$0xff]
        %v1981 = vld [vmem:[%s1399 + $0xc80] sm:$0xff]
        %v1982 = vld [vmem:[%s1399 + $0xc88] sm:$0xff]
        %v1983 = vld [vmem:[%s1399 + $0xc90] sm:$0xff]
        %v1984 = vld [vmem:[%s1399 + $0xc98] sm:$0xff]
        %v1985 = vld [vmem:[%s1399 + $0xca0] sm:$0xff]
        %v1986 = vld [vmem:[%s1399 + $0xca8] sm:$0xff]
        %v1987 = vld [vmem:[%s1399 + $0xcb0] sm:$0xff]
        %v1988 = vld [vmem:[%s1399 + $0xcb8] sm:$0xff]
        %v1989 = vld [vmem:[%s1399 + $0xcc0] sm:$0xff]
        %v1990 = vld [vmem:[%s1399 + $0xcc8] sm:$0xff]
        %v1991 = vld [vmem:[%s1399 + $0xcd0] sm:$0xff]
        %v1992 = vld [vmem:[%s1399 + $0xcd8] sm:$0xff]
        %v1993 = vld [vmem:[%s1399 + $0xce0] sm:$0xff]
        %v1994 = vld [vmem:[%s1399 + $0xce8] sm:$0xff]
        %v1995 = vld [vmem:[%s1399 + $0xcf0] sm:$0xff]
        %v1996 = vld [vmem:[%s1399 + $0xcf8] sm:$0xff]
        %v1997 = vld [vmem:[%s1399 + $0xd00] sm:$0xff]
        %v1998 = vld [vmem:[%s1399 + $0xd08] sm:$0xff]
        %v1999 = vld [vmem:[%s1399 + $0xd10] sm:$0xff]
        %v2000 = vld [vmem:[%s1399 + $0xd18] sm:$0xff]
        %v2001 = vld [vmem:[%s1399 + $0xd20] sm:$0xff]
        %v2002 = vld [vmem:[%s1399 + $0xd28] sm:$0xff]
        %v2003 = vld [vmem:[%s1399 + $0xd30] sm:$0xff]
        %v2004 = vld [vmem:[%s1399 + $0xd38] sm:$0xff]
        %v2005 = vld [vmem:[%s1399 + $0xd40] sm:$0xff]
        %v2006 = vld [vmem:[%s1399 + $0xd48] sm:$0xff]
        %v2007 = vld [vmem:[%s1399 + $0xd50] sm:$0xff]
        %v2008 = vld [vmem:[%s1399 + $0xd58] sm:$0xff]
        %v2009 = vld [vmem:[%s1399 + $0xd60] sm:$0xff]
        %v2010 = vld [vmem:[%s1399 + $0xd68] sm:$0xff]
        %v2011 = vld [vmem:[%s1399 + $0xd70] sm:$0xff]
        %v2012 = vld [vmem:[%s1399 + $0xd78] sm:$0xff]
        %v2013 = vld [vmem:[%s1399 + $0xd80] sm:$0xff]
        %v2014 = vld [vmem:[%s1399 + $0xd88] sm:$0xff]
        %v2015 = vld [vmem:[%s1399 + $0xd90] sm:$0xff]
        %v2016 = vld [vmem:[%s1399 + $0xd98] sm:$0xff]
        %v2017 = vld [vmem:[%s1399 + $0xda0] sm:$0xff]
        %v2018 = vld [vmem:[%s1399 + $0xda8] sm:$0xff]
        %v2019 = vld [vmem:[%s1399 + $0xdb0] sm:$0xff]
        %v2020 = vld [vmem:[%s1399 + $0xdb8] sm:$0xff]
        %v2021 = vld [vmem:[%s1399 + $0xdc0] sm:$0xff]
        %v2022 = vld [vmem:[%s1399 + $0xdc8] sm:$0xff]
        %v2023 = vld [vmem:[%s1399 + $0xdd0] sm:$0xff]
        %v2024 = vld [vmem:[%s1399 + $0xdd8] sm:$0xff]
        %v2025 = vld [vmem:[%s1399 + $0xde0] sm:$0xff]
        %v2026 = vld [vmem:[%s1399 + $0xde8] sm:$0xff]
        %v2027 = vld [vmem:[%s1399 + $0xdf0] sm:$0xff]
        %v2028 = vld [vmem:[%s1399 + $0xdf8] sm:$0xff]
        %v2029 = vld [vmem:[%s1399 + $0xe00] sm:$0xff]
        %v2030 = vld [vmem:[%s1399 + $0xe08] sm:$0xff]
        %v2031 = vld [vmem:[%s1399 + $0xe10] sm:$0xff]
        %v2032 = vld [vmem:[%s1399 + $0xe18] sm:$0xff]
        %v2033 = vld [vmem:[%s1399 + $0xe20] sm:$0xff]
        %v2034 = vld [vmem:[%s1399 + $0xe28] sm:$0xff]
        %v2035 = vld [vmem:[%s1399 + $0xe30] sm:$0xff]
        %v2036 = vld [vmem:[%s1399 + $0xe38] sm:$0xff]
        %v2037 = vld [vmem:[%s1399 + $0xe40] sm:$0xff]
        %v2038 = vld [vmem:[%s1399 + $0xe48] sm:$0xff]
        %v2039 = vld [vmem:[%s1399 + $0xe50] sm:$0xff]
        %v2040 = vld [vmem:[%s1399 + $0xe58] sm:$0xff]
        %v2041 = vld [vmem:[%s1399 + $0xe60] sm:$0xff]
        %v2042 = vld [vmem:[%s1399 + $0xe68] sm:$0xff]
        %v2043 = vld [vmem:[%s1399 + $0xe70] sm:$0xff]
        %v2044 = vld [vmem:[%s1399 + $0xe78] sm:$0xff]
        %v2045 = vld [vmem:[%s1399 + $0xe80] sm:$0xff]
        %v2046 = vld [vmem:[%s1399 + $0xe88] sm:$0xff]
        %v2047 = vld [vmem:[%s1399 + $0xe90] sm:$0xff]
        %v2048 = vld [vmem:[%s1399 + $0xe98] sm:$0xff]
        %v2049 = vld [vmem:[%s1399 + $0xea0] sm:$0xff]
        %v2050 = vld [vmem:[%s1399 + $0xea8] sm:$0xff]
        %v2051 = vld [vmem:[%s1399 + $0xeb0] sm:$0xff]
        %v2052 = vld [vmem:[%s1399 + $0xeb8] sm:$0xff]
        %v2053 = vld [vmem:[%s1399 + $0xec0] sm:$0xff]
        %v2054 = vld [vmem:[%s1399 + $0xec8] sm:$0xff]
        %v2055 = vld [vmem:[%s1399 + $0xed0] sm:$0xff]
        %v2056 = vld [vmem:[%s1399 + $0xed8] sm:$0xff]
        %v2057 = vld [vmem:[%s1399 + $0xee0] sm:$0xff]
        %v2058 = vld [vmem:[%s1399 + $0xee8] sm:$0xff]
        %v2059 = vld [vmem:[%s1399 + $0xef0] sm:$0xff]
        %v2060 = vld [vmem:[%s1399 + $0xef8] sm:$0xff]
        %v2061 = vld [vmem:[%s1399 + $0xf00] sm:$0xff]
        %v2062 = vld [vmem:[%s1399 + $0xf08] sm:$0xff]
        %v2063 = vld [vmem:[%s1399 + $0xf10] sm:$0xff]
        %v2064 = vld [vmem:[%s1399 + $0xf18] sm:$0xff]
        %v2065 = vld [vmem:[%s1399 + $0xf20] sm:$0xff]
        %v2066 = vld [vmem:[%s1399 + $0xf28] sm:$0xff]
        %v2067 = vld [vmem:[%s1399 + $0xf30] sm:$0xff]
        %v2068 = vld [vmem:[%s1399 + $0xf38] sm:$0xff]
        %v2069 = vld [vmem:[%s1399 + $0xf40] sm:$0xff]
        %v2070 = vld [vmem:[%s1399 + $0xf48] sm:$0xff]
        %v2071 = vld [vmem:[%s1399 + $0xf50] sm:$0xff]
        %v2072 = vld [vmem:[%s1399 + $0xf58] sm:$0xff]
        %v2073 = vld [vmem:[%s1399 + $0xf60] sm:$0xff]
        %v2074 = vld [vmem:[%s1399 + $0xf68] sm:$0xff]
        %v2075 = vld [vmem:[%s1399 + $0xf70] sm:$0xff]
        %v2076 = vld [vmem:[%s1399 + $0xf78] sm:$0xff]
        %v2077 = vld [vmem:[%s1399 + $0xf80] sm:$0xff]
        %v2078 = vld [vmem:[%s1399 + $0xf88] sm:$0xff]
        %v2079 = vld [vmem:[%s1399 + $0xf90] sm:$0xff]
        %v2080 = vld [vmem:[%s1399 + $0xf98] sm:$0xff]
        %v2081 = vld [vmem:[%s1399 + $0xfa0] sm:$0xff]
        %v2082 = vld [vmem:[%s1399 + $0xfa8] sm:$0xff]
        %v2083 = vld [vmem:[%s1399 + $0xfb0] sm:$0xff]
        %v2084 = vld [vmem:[%s1399 + $0xfb8] sm:$0xff]
        %v2085 = vld [vmem:[%s1399 + $0xfc0] sm:$0xff]
        %v2086 = vld [vmem:[%s1399 + $0xfc8] sm:$0xff]
        %v2087 = vld [vmem:[%s1399 + $0xfd0] sm:$0xff]
        %v2088 = vld [vmem:[%s1399 + $0xfd8] sm:$0xff]
        %v2089 = vld [vmem:[%s1399 + $0xfe0] sm:$0xff]
        %v2090 = vld [vmem:[%s1399 + $0xfe8] sm:$0xff]
        %v2091 = vld [vmem:[%s1399 + $0xff0] sm:$0xff]
        %v2092 = vld [vmem:[%s1399 + $0xff8] sm:$0xff]
        %v2093 = vld [vmem:[%s1399 + $0x1000] sm:$0xff]
        %v2094 = vld [vmem:[%s1399 + $0x1008] sm:$0xff]
        %v2095 = vld [vmem:[%s1399 + $0x1010] sm:$0xff]
        %v2096 = vld [vmem:[%s1399 + $0x1018] sm:$0xff]
        %v2097 = vld [vmem:[%s1399 + $0x1020] sm:$0xff]
        %v2098 = vld [vmem:[%s1399 + $0x1028] sm:$0xff]
        %v2099 = vld [vmem:[%s1399 + $0x1030] sm:$0xff]
        %v2100 = vld [vmem:[%s1399 + $0x1038] sm:$0xff]
        %v2101 = vld [vmem:[%s1399 + $0x1040] sm:$0xff]
        %v2102 = vld [vmem:[%s1399 + $0x1048] sm:$0xff]
        %v2103 = vld [vmem:[%s1399 + $0x1050] sm:$0xff]
        %v2104 = vld [vmem:[%s1399 + $0x1058] sm:$0xff]
        %v2105 = vld [vmem:[%s1399 + $0x1060] sm:$0xff]
        %v2106 = vld [vmem:[%s1399 + $0x1068] sm:$0xff]
        %v2107 = vld [vmem:[%s1399 + $0x1070] sm:$0xff]
        %v2108 = vld [vmem:[%s1399 + $0x1078] sm:$0xff]
        %v2109 = vld [vmem:[%s1399 + $0x1080] sm:$0xff]
        %v2110 = vld [vmem:[%s1399 + $0x1088] sm:$0xff]
        %v2111 = vld [vmem:[%s1399 + $0x1090] sm:$0xff]
        %v2112 = vld [vmem:[%s1399 + $0x1098] sm:$0xff]
        %v2113 = vld [vmem:[%s1399 + $0x10a0] sm:$0xff]
        %v2114 = vld [vmem:[%s1399 + $0x10a8] sm:$0xff]
        %v2115 = vld [vmem:[%s1399 + $0x10b0] sm:$0xff]
        %v2116 = vld [vmem:[%s1399 + $0x10b8] sm:$0xff]
        %v2117 = vld [vmem:[%s1399 + $0x10c0] sm:$0xff]
        %v2118 = vld [vmem:[%s1399 + $0x10c8] sm:$0xff]
        %v2119 = vld [vmem:[%s1399 + $0x10d0] sm:$0xff]
        %v2120 = vld [vmem:[%s1399 + $0x10d8] sm:$0xff]
        %v2121 = vld [vmem:[%s1399 + $0x10e0] sm:$0xff]
        %v2122 = vld [vmem:[%s1399 + $0x10e8] sm:$0xff]
        %v2123 = vld [vmem:[%s1399 + $0x10f0] sm:$0xff]
        %v2124 = vld [vmem:[%s1399 + $0x10f8] sm:$0xff]
        %v2125 = vld [vmem:[%s1399 + $0x1100] sm:$0xff]
        %v2126 = vld [vmem:[%s1399 + $0x1108] sm:$0xff]
        %v2127 = vld [vmem:[%s1399 + $0x1110] sm:$0xff]
        %v2128 = vld [vmem:[%s1399 + $0x1118] sm:$0xff]
        %v2129 = vld [vmem:[%s1399 + $0x1120] sm:$0xff]
        %v2130 = vld [vmem:[%s1399 + $0x1128] sm:$0xff]
        %v2131 = vld [vmem:[%s1399 + $0x1130] sm:$0xff]
        %v2132 = vld [vmem:[%s1399 + $0x1138] sm:$0xff]
        %v2133 = vld [vmem:[%s1399 + $0x1140] sm:$0xff]
        %v2134 = vld [vmem:[%s1399 + $0x1148] sm:$0xff]
        %v2135 = vld [vmem:[%s1399 + $0x1150] sm:$0xff]
        %v2136 = vld [vmem:[%s1399 + $0x1158] sm:$0xff]
        %v2137 = vld [vmem:[%s1399 + $0x1160] sm:$0xff]
        %v2138 = vld [vmem:[%s1399 + $0x1168] sm:$0xff]
        %v2139 = vld [vmem:[%s1399 + $0x1170] sm:$0xff]
        %v2140 = vld [vmem:[%s1399 + $0x1178] sm:$0xff]
        %v2141 = vld [vmem:[%s1399 + $0x1180] sm:$0xff]
        %v2142 = vld [vmem:[%s1399 + $0x1188] sm:$0xff]
        %v2143 = vld [vmem:[%s1399 + $0x1190] sm:$0xff]
        %v2144 = vld [vmem:[%s1399 + $0x1198] sm:$0xff]
        %v2145 = vld [vmem:[%s1399 + $0x11a0] sm:$0xff]
        %v2146 = vld [vmem:[%s1399 + $0x11a8] sm:$0xff]
        %v2147 = vld [vmem:[%s1399 + $0x11b0] sm:$0xff]
        %v2148 = vld [vmem:[%s1399 + $0x11b8] sm:$0xff]
        %v2149 = vld [vmem:[%s1399 + $0x11c0] sm:$0xff]
        %v2150 = vld [vmem:[%s1399 + $0x11c8] sm:$0xff]
        %v2151 = vld [vmem:[%s1399 + $0x11d0] sm:$0xff]
        %v2152 = vld [vmem:[%s1399 + $0x11d8] sm:$0xff]
        %v2153 = vld [vmem:[%s1399 + $0x11e0] sm:$0xff]
        %v2154 = vld [vmem:[%s1399 + $0x11e8] sm:$0xff]
        %v2155 = vld [vmem:[%s1399 + $0x11f0] sm:$0xff]
        %v2156 = vld [vmem:[%s1399 + $0x11f8] sm:$0xff]
        %v2157 = vld [vmem:[%s1440] sm:$0xf]
        %v2158 = vld [vmem:[%s1440 + $0x4] sm:$0xf]
        %v2159 = vld [vmem:[%s1440 + $0x8] sm:$0xf]
        %v2160 = vld [vmem:[%s1440 + $0xc] sm:$0xf]
        %v2161 = vld [vmem:[%s1440 + $0x10] sm:$0xf]
        %v2162 = vld [vmem:[%s1440 + $0x14] sm:$0xf]
        %v2163 = vld [vmem:[%s1440 + $0x18] sm:$0xf]
        %v2164 = vld [vmem:[%s1440 + $0x1c] sm:$0xf]
        %v2165 = vld [vmem:[%s1440 + $0x20] sm:$0xf]
        %v2166 = vld [vmem:[%s1440 + $0x24] sm:$0xf]
        %v2167 = vld [vmem:[%s1440 + $0x28] sm:$0xf]
        %v2168 = vld [vmem:[%s1440 + $0x2c] sm:$0xf]
        %v2169 = vld [vmem:[%s1440 + $0x30] sm:$0xf]
        %v2170 = vld [vmem:[%s1440 + $0x34] sm:$0xf]
        %v2171 = vld [vmem:[%s1440 + $0x38] sm:$0xf]
        %v2172 = vld [vmem:[%s1440 + $0x3c] sm:$0xf]
        %v2173 = vld [vmem:[%s1440 + $0x40] sm:$0xf]
        %v2174 = vld [vmem:[%s1440 + $0x44] sm:$0xf]
        %v2175 = vld [vmem:[%s1440 + $0x48] sm:$0xf]
        %v2176 = vld [vmem:[%s1440 + $0x4c] sm:$0xf]
        %v2177 = vld [vmem:[%s1440 + $0x50] sm:$0xf]
        %v2178 = vld [vmem:[%s1440 + $0x54] sm:$0xf]
        %v2179 = vld [vmem:[%s1440 + $0x58] sm:$0xf]
        %v2180 = vld [vmem:[%s1440 + $0x5c] sm:$0xf]
        %v2181 = vld [vmem:[%s1440 + $0x60] sm:$0xf]
        %v2182 = vld [vmem:[%s1440 + $0x64] sm:$0xf]
        %v2183 = vld [vmem:[%s1440 + $0x68] sm:$0xf]
        %v2184 = vld [vmem:[%s1440 + $0x6c] sm:$0xf]
        %v2185 = vld [vmem:[%s1440 + $0x70] sm:$0xf]
        %v2186 = vld [vmem:[%s1440 + $0x74] sm:$0xf]
        %v2187 = vld [vmem:[%s1440 + $0x78] sm:$0xf]
        %v2188 = vld [vmem:[%s1440 + $0x7c] sm:$0xf]
        %v2189 = vld [vmem:[%s1440 + $0x80] sm:$0xf]
        %v2190 = vld [vmem:[%s1440 + $0x84] sm:$0xf]
        %v2191 = vld [vmem:[%s1440 + $0x88] sm:$0xf]
        %v2192 = vld [vmem:[%s1440 + $0x8c] sm:$0xf]
        %v2193 = vld [vmem:[%s1440 + $0x90] sm:$0xf]
        %v2194 = vld [vmem:[%s1440 + $0x94] sm:$0xf]
        %v2195 = vld [vmem:[%s1440 + $0x98] sm:$0xf]
        %v2196 = vld [vmem:[%s1440 + $0x9c] sm:$0xf]
        %v2197 = vld [vmem:[%s1440 + $0xa0] sm:$0xf]
        %v2198 = vld [vmem:[%s1440 + $0xa4] sm:$0xf]
        %v2199 = vld [vmem:[%s1440 + $0xa8] sm:$0xf]
        %v2200 = vld [vmem:[%s1440 + $0xac] sm:$0xf]
        %v2201 = vld [vmem:[%s1440 + $0xb0] sm:$0xf]
        %v2202 = vld [vmem:[%s1440 + $0xb4] sm:$0xf]
        %v2203 = vld [vmem:[%s1440 + $0xb8] sm:$0xf]
        %v2204 = vld [vmem:[%s1440 + $0xbc] sm:$0xf]
        %v2205 = vld [vmem:[%s1440 + $0xc0] sm:$0xf]
        %v2206 = vld [vmem:[%s1440 + $0xc4] sm:$0xf]
        %v2207 = vld [vmem:[%s1440 + $0xc8] sm:$0xf]
        %v2208 = vld [vmem:[%s1440 + $0xcc] sm:$0xf]
        %v2209 = vld [vmem:[%s1440 + $0xd0] sm:$0xf]
        %v2210 = vld [vmem:[%s1440 + $0xd4] sm:$0xf]
        %v2211 = vld [vmem:[%s1440 + $0xd8] sm:$0xf]
        %v2212 = vld [vmem:[%s1440 + $0xdc] sm:$0xf]
        %v2213 = vld [vmem:[%s1440 + $0xe0] sm:$0xf]
        %v2214 = vld [vmem:[%s1440 + $0xe4] sm:$0xf]
        %v2215 = vld [vmem:[%s1440 + $0xe8] sm:$0xf]
        %v2216 = vld [vmem:[%s1440 + $0xec] sm:$0xf]
        %v2217 = vld [vmem:[%s1440 + $0xf0] sm:$0xf]
        %v2218 = vld [vmem:[%s1440 + $0xf4] sm:$0xf]
        %v2219 = vld [vmem:[%s1440 + $0xf8] sm:$0xf]
        %v2220 = vld [vmem:[%s1440 + $0xfc] sm:$0xf]
        %v2221 = vld [vmem:[%s1440 + $0x100] sm:$0xf]
        %v2222 = vld [vmem:[%s1440 + $0x104] sm:$0xf]
        %v2223 = vld [vmem:[%s1440 + $0x108] sm:$0xf]
        %v2224 = vld [vmem:[%s1440 + $0x10c] sm:$0xf]
        %v2225 = vld [vmem:[%s1440 + $0x110] sm:$0xf]
        %v2226 = vld [vmem:[%s1440 + $0x114] sm:$0xf]
        %v2227 = vld [vmem:[%s1440 + $0x118] sm:$0xf]
        %v2228 = vld [vmem:[%s1440 + $0x11c] sm:$0xf]
        %v2229 = vld [vmem:[%s1440 + $0x120] sm:$0xf]
        %v2230 = vld [vmem:[%s1440 + $0x124] sm:$0xf]
        %v2231 = vld [vmem:[%s1440 + $0x128] sm:$0xf]
        %v2232 = vld [vmem:[%s1440 + $0x12c] sm:$0xf]
        %v2233 = vld [vmem:[%s1440 + $0x130] sm:$0xf]
        %v2234 = vld [vmem:[%s1440 + $0x134] sm:$0xf]
        %v2235 = vld [vmem:[%s1440 + $0x138] sm:$0xf]
        %v2236 = vld [vmem:[%s1440 + $0x13c] sm:$0xf]
        %v2237 = vld [vmem:[%s1440 + $0x140] sm:$0xf]
        %v2238 = vld [vmem:[%s1440 + $0x144] sm:$0xf]
        %v2239 = vld [vmem:[%s1440 + $0x148] sm:$0xf]
        %v2240 = vld [vmem:[%s1440 + $0x14c] sm:$0xf]
        %v2241 = vld [vmem:[%s1440 + $0x150] sm:$0xf]
        %v2242 = vld [vmem:[%s1440 + $0x154] sm:$0xf]
        %v2243 = vld [vmem:[%s1440 + $0x158] sm:$0xf]
        %v2244 = vld [vmem:[%s1440 + $0x15c] sm:$0xf]
        %v2245 = vld [vmem:[%s1440 + $0x160] sm:$0xf]
        %v2246 = vld [vmem:[%s1440 + $0x164] sm:$0xf]
        %v2247 = vld [vmem:[%s1440 + $0x168] sm:$0xf]
        %v2248 = vld [vmem:[%s1440 + $0x16c] sm:$0xf]
        %v2249 = vld [vmem:[%s1440 + $0x170] sm:$0xf]
        %v2250 = vld [vmem:[%s1440 + $0x174] sm:$0xf]
        %v2251 = vld [vmem:[%s1440 + $0x178] sm:$0xf]
        %v2252 = vld [vmem:[%s1440 + $0x17c] sm:$0xf]
        %v2253 = vld [vmem:[%s1440 + $0x180] sm:$0xf]
        %v2254 = vld [vmem:[%s1440 + $0x184] sm:$0xf]
        %v2255 = vld [vmem:[%s1440 + $0x188] sm:$0xf]
        %v2256 = vld [vmem:[%s1440 + $0x18c] sm:$0xf]
        %v2257 = vld [vmem:[%s1440 + $0x190] sm:$0xf]
        %v2258 = vld [vmem:[%s1440 + $0x194] sm:$0xf]
        %v2259 = vld [vmem:[%s1440 + $0x198] sm:$0xf]
        %v2260 = vld [vmem:[%s1440 + $0x19c] sm:$0xf]
        %v2261 = vld [vmem:[%s1440 + $0x1a0] sm:$0xf]
        %v2262 = vld [vmem:[%s1440 + $0x1a4] sm:$0xf]
        %v2263 = vld [vmem:[%s1440 + $0x1a8] sm:$0xf]
        %v2264 = vld [vmem:[%s1440 + $0x1ac] sm:$0xf]
        %v2265 = vld [vmem:[%s1440 + $0x1b0] sm:$0xf]
        %v2266 = vld [vmem:[%s1440 + $0x1b4] sm:$0xf]
        %v2267 = vld [vmem:[%s1440 + $0x1b8] sm:$0xf]
        %v2268 = vld [vmem:[%s1440 + $0x1bc] sm:$0xf]
        %v2269 = vld [vmem:[%s1440 + $0x1c0] sm:$0xf]
        %v2270 = vld [vmem:[%s1440 + $0x1c4] sm:$0xf]
        %v2271 = vld [vmem:[%s1440 + $0x1c8] sm:$0xf]
        %v2272 = vld [vmem:[%s1440 + $0x1cc] sm:$0xf]
        %v2273 = vld [vmem:[%s1440 + $0x1d0] sm:$0xf]
        %v2274 = vld [vmem:[%s1440 + $0x1d4] sm:$0xf]
        %v2275 = vld [vmem:[%s1440 + $0x1d8] sm:$0xf]
        %v2276 = vld [vmem:[%s1440 + $0x1dc] sm:$0xf]
        %v2277 = vld [vmem:[%s1440 + $0x1e0] sm:$0xf]
        %v2278 = vld [vmem:[%s1440 + $0x1e4] sm:$0xf]
        %v2279 = vld [vmem:[%s1440 + $0x1e8] sm:$0xf]
        %v2280 = vld [vmem:[%s1440 + $0x1ec] sm:$0xf]
        %v2281 = vld [vmem:[%s1440 + $0x1f0] sm:$0xf]
        %v2282 = vld [vmem:[%s1440 + $0x1f4] sm:$0xf]
        %v2283 = vld [vmem:[%s1440 + $0x1f8] sm:$0xf]
        %v2284 = vld [vmem:[%s1440 + $0x1fc] sm:$0xf]
        %v2285 = vld [vmem:[%s1440 + $0x200] sm:$0xf]
        %v2286 = vld [vmem:[%s1440 + $0x204] sm:$0xf]
        %v2287 = vld [vmem:[%s1440 + $0x208] sm:$0xf]
        %v2288 = vld [vmem:[%s1440 + $0x20c] sm:$0xf]
        %v2289 = vld [vmem:[%s1440 + $0x210] sm:$0xf]
        %v2290 = vld [vmem:[%s1440 + $0x214] sm:$0xf]
        %v2291 = vld [vmem:[%s1440 + $0x218] sm:$0xf]
        %v2292 = vld [vmem:[%s1440 + $0x21c] sm:$0xf]
        %v2293 = vld [vmem:[%s1440 + $0x220] sm:$0xf]
        %v2294 = vld [vmem:[%s1440 + $0x224] sm:$0xf]
        %v2295 = vld [vmem:[%s1440 + $0x228] sm:$0xf]
        %v2296 = vld [vmem:[%s1440 + $0x22c] sm:$0xf]
        %v2297 = vld [vmem:[%s1440 + $0x230] sm:$0xf]
        %v2298 = vld [vmem:[%s1440 + $0x234] sm:$0xf]
        %v2299 = vld [vmem:[%s1440 + $0x238] sm:$0xf]
        %v2300 = vld [vmem:[%s1440 + $0x23c] sm:$0xf]
        %v2301 = vld [vmem:[%s1440 + $0x240] sm:$0xf]
        %v2302 = vld [vmem:[%s1440 + $0x244] sm:$0xf]
        %v2303 = vld [vmem:[%s1440 + $0x248] sm:$0xf]
        %v2304 = vld [vmem:[%s1440 + $0x24c] sm:$0xf]
        %v2305 = vld [vmem:[%s1440 + $0x250] sm:$0xf]
        %v2306 = vld [vmem:[%s1440 + $0x254] sm:$0xf]
        %v2307 = vld [vmem:[%s1440 + $0x258] sm:$0xf]
        %v2308 = vld [vmem:[%s1440 + $0x25c] sm:$0xf]
        %v2309 = vld [vmem:[%s1440 + $0x260] sm:$0xf]
        %v2310 = vld [vmem:[%s1440 + $0x264] sm:$0xf]
        %v2311 = vld [vmem:[%s1440 + $0x268] sm:$0xf]
        %v2312 = vld [vmem:[%s1440 + $0x26c] sm:$0xf]
        %v2313 = vld [vmem:[%s1440 + $0x270] sm:$0xf]
        %v2314 = vld [vmem:[%s1440 + $0x274] sm:$0xf]
        %v2315 = vld [vmem:[%s1440 + $0x278] sm:$0xf]
        %v2316 = vld [vmem:[%s1440 + $0x27c] sm:$0xf]
        %v2317 = vld [vmem:[%s1440 + $0x280] sm:$0xf]
        %v2318 = vld [vmem:[%s1440 + $0x284] sm:$0xf]
        %v2319 = vld [vmem:[%s1440 + $0x288] sm:$0xf]
        %v2320 = vld [vmem:[%s1440 + $0x28c] sm:$0xf]
        %v2321 = vld [vmem:[%s1440 + $0x290] sm:$0xf]
        %v2322 = vld [vmem:[%s1440 + $0x294] sm:$0xf]
        %v2323 = vld [vmem:[%s1440 + $0x298] sm:$0xf]
        %v2324 = vld [vmem:[%s1440 + $0x29c] sm:$0xf]
        %v2325 = vld [vmem:[%s1440 + $0x2a0] sm:$0xf]
        %v2326 = vld [vmem:[%s1440 + $0x2a4] sm:$0xf]
        %v2327 = vld [vmem:[%s1440 + $0x2a8] sm:$0xf]
        %v2328 = vld [vmem:[%s1440 + $0x2ac] sm:$0xf]
        %v2329 = vld [vmem:[%s1440 + $0x2b0] sm:$0xf]
        %v2330 = vld [vmem:[%s1440 + $0x2b4] sm:$0xf]
        %v2331 = vld [vmem:[%s1440 + $0x2b8] sm:$0xf]
        %v2332 = vld [vmem:[%s1440 + $0x2bc] sm:$0xf]
        %v2333 = vld [vmem:[%s1440 + $0x2c0] sm:$0xf]
        %v2334 = vld [vmem:[%s1440 + $0x2c4] sm:$0xf]
        %v2335 = vld [vmem:[%s1440 + $0x2c8] sm:$0xf]
        %v2336 = vld [vmem:[%s1440 + $0x2cc] sm:$0xf]
        %v2337 = vld [vmem:[%s1440 + $0x2d0] sm:$0xf]
        %v2338 = vld [vmem:[%s1440 + $0x2d4] sm:$0xf]
        %v2339 = vld [vmem:[%s1440 + $0x2d8] sm:$0xf]
        %v2340 = vld [vmem:[%s1440 + $0x2dc] sm:$0xf]
        %v2341 = vld [vmem:[%s1440 + $0x2e0] sm:$0xf]
        %v2342 = vld [vmem:[%s1440 + $0x2e4] sm:$0xf]
        %v2343 = vld [vmem:[%s1440 + $0x2e8] sm:$0xf]
        %v2344 = vld [vmem:[%s1440 + $0x2ec] sm:$0xf]
        %v2345 = vld [vmem:[%s1440 + $0x2f0] sm:$0xf]
        %v2346 = vld [vmem:[%s1440 + $0x2f4] sm:$0xf]
        %v2347 = vld [vmem:[%s1440 + $0x2f8] sm:$0xf]
        %v2348 = vld [vmem:[%s1440 + $0x2fc] sm:$0xf]
        %v2349 = vld [vmem:[%s1440 + $0x300] sm:$0xf]
        %v2350 = vld [vmem:[%s1440 + $0x304] sm:$0xf]
        %v2351 = vld [vmem:[%s1440 + $0x308] sm:$0xf]
        %v2352 = vld [vmem:[%s1440 + $0x30c] sm:$0xf]
        %v2353 = vld [vmem:[%s1440 + $0x310] sm:$0xf]
        %v2354 = vld [vmem:[%s1440 + $0x314] sm:$0xf]
        %v2355 = vld [vmem:[%s1440 + $0x318] sm:$0xf]
        %v2356 = vld [vmem:[%s1440 + $0x31c] sm:$0xf]
        %v2357 = vld [vmem:[%s1440 + $0x320] sm:$0xf]
        %v2358 = vld [vmem:[%s1440 + $0x324] sm:$0xf]
        %v2359 = vld [vmem:[%s1440 + $0x328] sm:$0xf]
        %v2360 = vld [vmem:[%s1440 + $0x32c] sm:$0xf]
        %v2361 = vld [vmem:[%s1440 + $0x330] sm:$0xf]
        %v2362 = vld [vmem:[%s1440 + $0x334] sm:$0xf]
        %v2363 = vld [vmem:[%s1440 + $0x338] sm:$0xf]
        %v2364 = vld [vmem:[%s1440 + $0x33c] sm:$0xf]
        %v2365 = vld [vmem:[%s1440 + $0x340] sm:$0xf]
        %v2366 = vld [vmem:[%s1440 + $0x344] sm:$0xf]
        %v2367 = vld [vmem:[%s1440 + $0x348] sm:$0xf]
        %v2368 = vld [vmem:[%s1440 + $0x34c] sm:$0xf]
        %v2369 = vld [vmem:[%s1440 + $0x350] sm:$0xf]
        %v2370 = vld [vmem:[%s1440 + $0x354] sm:$0xf]
        %v2371 = vld [vmem:[%s1440 + $0x358] sm:$0xf]
        %v2372 = vld [vmem:[%s1440 + $0x35c] sm:$0xf]
        %v2373 = vld [vmem:[%s1440 + $0x360] sm:$0xf]
        %v2374 = vld [vmem:[%s1440 + $0x364] sm:$0xf]
        %v2375 = vld [vmem:[%s1440 + $0x368] sm:$0xf]
        %v2376 = vld [vmem:[%s1440 + $0x36c] sm:$0xf]
        %v2377 = vld [vmem:[%s1440 + $0x370] sm:$0xf]
        %v2378 = vld [vmem:[%s1440 + $0x374] sm:$0xf]
        %v2379 = vld [vmem:[%s1440 + $0x378] sm:$0xf]
        %v2380 = vld [vmem:[%s1440 + $0x37c] sm:$0xf]
        %v2381 = vld [vmem:[%s1440 + $0x380] sm:$0xf]
        %v2382 = vld [vmem:[%s1440 + $0x384] sm:$0xf]
        %v2383 = vld [vmem:[%s1440 + $0x388] sm:$0xf]
        %v2384 = vld [vmem:[%s1440 + $0x38c] sm:$0xf]
        %v2385 = vld [vmem:[%s1440 + $0x390] sm:$0xf]
        %v2386 = vld [vmem:[%s1440 + $0x394] sm:$0xf]
        %v2387 = vld [vmem:[%s1440 + $0x398] sm:$0xf]
        %v2388 = vld [vmem:[%s1440 + $0x39c] sm:$0xf]
        %v2389 = vld [vmem:[%s1440 + $0x3a0] sm:$0xf]
        %v2390 = vld [vmem:[%s1440 + $0x3a4] sm:$0xf]
        %v2391 = vld [vmem:[%s1440 + $0x3a8] sm:$0xf]
        %v2392 = vld [vmem:[%s1440 + $0x3ac] sm:$0xf]
        %v2393 = vld [vmem:[%s1440 + $0x3b0] sm:$0xf]
        %v2394 = vld [vmem:[%s1440 + $0x3b4] sm:$0xf]
        %v2395 = vld [vmem:[%s1440 + $0x3b8] sm:$0xf]
        %v2396 = vld [vmem:[%s1440 + $0x3bc] sm:$0xf]
        %v2397 = vld [vmem:[%s1440 + $0x3c0] sm:$0xf]
        %v2398 = vld [vmem:[%s1440 + $0x3c4] sm:$0xf]
        %v2399 = vld [vmem:[%s1440 + $0x3c8] sm:$0xf]
        %v2400 = vld [vmem:[%s1440 + $0x3cc] sm:$0xf]
        %v2401 = vld [vmem:[%s1440 + $0x3d0] sm:$0xf]
        %v2402 = vld [vmem:[%s1440 + $0x3d4] sm:$0xf]
        %v2403 = vld [vmem:[%s1440 + $0x3d8] sm:$0xf]
        %v2404 = vld [vmem:[%s1440 + $0x3dc] sm:$0xf]
        %v2405 = vld [vmem:[%s1440 + $0x3e0] sm:$0xf]
        %v2406 = vld [vmem:[%s1440 + $0x3e4] sm:$0xf]
        %v2407 = vld [vmem:[%s1440 + $0x3e8] sm:$0xf]
        %v2408 = vld [vmem:[%s1440 + $0x3ec] sm:$0xf]
        %v2409 = vld [vmem:[%s1440 + $0x3f0] sm:$0xf]
        %v2410 = vld [vmem:[%s1440 + $0x3f4] sm:$0xf]
        %v2411 = vld [vmem:[%s1440 + $0x3f8] sm:$0xf]
        %v2412 = vld [vmem:[%s1440 + $0x3fc] sm:$0xf]
        %v2413 = vld [vmem:[%s1440 + $0x400] sm:$0xf]
        %v2414 = vld [vmem:[%s1440 + $0x404] sm:$0xf]
        %v2415 = vld [vmem:[%s1440 + $0x408] sm:$0xf]
        %v2416 = vld [vmem:[%s1440 + $0x40c] sm:$0xf]
        %v2417 = vld [vmem:[%s1440 + $0x410] sm:$0xf]
        %v2418 = vld [vmem:[%s1440 + $0x414] sm:$0xf]
        %v2419 = vld [vmem:[%s1440 + $0x418] sm:$0xf]
        %v2420 = vld [vmem:[%s1440 + $0x41c] sm:$0xf]
        %v2421 = vld [vmem:[%s1440 + $0x420] sm:$0xf]
        %v2422 = vld [vmem:[%s1440 + $0x424] sm:$0xf]
        %v2423 = vld [vmem:[%s1440 + $0x428] sm:$0xf]
        %v2424 = vld [vmem:[%s1440 + $0x42c] sm:$0xf]
        %v2425 = vld [vmem:[%s1440 + $0x430] sm:$0xf]
        %v2426 = vld [vmem:[%s1440 + $0x434] sm:$0xf]
        %v2427 = vld [vmem:[%s1440 + $0x438] sm:$0xf]
        %v2428 = vld [vmem:[%s1440 + $0x43c] sm:$0xf]
        %v2429 = vld [vmem:[%s1440 + $0x440] sm:$0xf]
        %v2430 = vld [vmem:[%s1440 + $0x444] sm:$0xf]
        %v2431 = vld [vmem:[%s1440 + $0x448] sm:$0xf]
        %v2432 = vld [vmem:[%s1440 + $0x44c] sm:$0xf]
        %v2433 = vld [vmem:[%s1440 + $0x450] sm:$0xf]
        %v2434 = vld [vmem:[%s1440 + $0x454] sm:$0xf]
        %v2435 = vld [vmem:[%s1440 + $0x458] sm:$0xf]
        %v2436 = vld [vmem:[%s1440 + $0x45c] sm:$0xf]
        %v2437 = vld [vmem:[%s1440 + $0x460] sm:$0xf]
        %v2438 = vld [vmem:[%s1440 + $0x464] sm:$0xf]
        %v2439 = vld [vmem:[%s1440 + $0x468] sm:$0xf]
        %v2440 = vld [vmem:[%s1440 + $0x46c] sm:$0xf]
        %v2441 = vld [vmem:[%s1440 + $0x470] sm:$0xf]
        %v2442 = vld [vmem:[%s1440 + $0x474] sm:$0xf]
        %v2443 = vld [vmem:[%s1440 + $0x478] sm:$0xf]
        %v2444 = vld [vmem:[%s1440 + $0x47c] sm:$0xf]
        %v3021 = vunpack.c.l.b16 %v1581
        %v3022 = vunpack.c.h.b16 %v1581
        %v3023 = vunpack.c.l.b16 %v1582
        %v3024 = vunpack.c.h.b16 %v1582
        %v3025 = vunpack.c.l.b16 %v1583
        %v3026 = vunpack.c.h.b16 %v1583
        %v3027 = vunpack.c.l.b16 %v1584
        %v3028 = vunpack.c.h.b16 %v1584
        %v3029 = vunpack.c.l.b16 %v1585
        %v3030 = vunpack.c.h.b16 %v1585
        %v3031 = vunpack.c.l.b16 %v1586
        %v3032 = vunpack.c.h.b16 %v1586
        %v3033 = vunpack.c.l.b16 %v1587
        %v3034 = vunpack.c.h.b16 %v1587
        %v3035 = vunpack.c.l.b16 %v1588
        %v3036 = vunpack.c.h.b16 %v1588
        %v3037 = vunpack.c.l.b16 %v1589
        %v3038 = vunpack.c.h.b16 %v1589
        %v3039 = vunpack.c.l.b16 %v1590
        %v3040 = vunpack.c.h.b16 %v1590
        %v3041 = vunpack.c.l.b16 %v1591
        %v3042 = vunpack.c.h.b16 %v1591
        %v3043 = vunpack.c.l.b16 %v1592
        %v3044 = vunpack.c.h.b16 %v1592
        %v3045 = vunpack.c.l.b16 %v1593
        %v3046 = vunpack.c.h.b16 %v1593
        %v3047 = vunpack.c.l.b16 %v1594
        %v3048 = vunpack.c.h.b16 %v1594
        %v3049 = vunpack.c.l.b16 %v1595
        %v3050 = vunpack.c.h.b16 %v1595
        %v3051 = vunpack.c.l.b16 %v1596
        %v3052 = vunpack.c.h.b16 %v1596
        %v3053 = vunpack.c.l.b16 %v1597
        %v3054 = vunpack.c.h.b16 %v1597
        %v3055 = vunpack.c.l.b16 %v1598
        %v3056 = vunpack.c.h.b16 %v1598
        %v3057 = vunpack.c.l.b16 %v1599
        %v3058 = vunpack.c.h.b16 %v1599
        %v3059 = vunpack.c.l.b16 %v1600
        %v3060 = vunpack.c.h.b16 %v1600
        %v3061 = vunpack.c.l.b16 %v1601
        %v3062 = vunpack.c.h.b16 %v1601
        %v3063 = vunpack.c.l.b16 %v1602
        %v3064 = vunpack.c.h.b16 %v1602
        %v3065 = vunpack.c.l.b16 %v1603
        %v3066 = vunpack.c.h.b16 %v1603
        %v3067 = vunpack.c.l.b16 %v1604
        %v3068 = vunpack.c.h.b16 %v1604
        %v3069 = vunpack.c.l.b16 %v1605
        %v3070 = vunpack.c.h.b16 %v1605
        %v3071 = vunpack.c.l.b16 %v1606
        %v3072 = vunpack.c.h.b16 %v1606
        %v3073 = vunpack.c.l.b16 %v1607
        %v3074 = vunpack.c.h.b16 %v1607
        %v3075 = vunpack.c.l.b16 %v1608
        %v3076 = vunpack.c.h.b16 %v1608
        %v3077 = vunpack.c.l.b16 %v1609
        %v3078 = vunpack.c.h.b16 %v1609
        %v3079 = vunpack.c.l.b16 %v1610
        %v3080 = vunpack.c.h.b16 %v1610
        %v3081 = vunpack.c.l.b16 %v1611
        %v3082 = vunpack.c.h.b16 %v1611
        %v3083 = vunpack.c.l.b16 %v1612
        %v3084 = vunpack.c.h.b16 %v1612
        %v3085 = vunpack.c.l.b16 %v1613
        %v3086 = vunpack.c.h.b16 %v1613
        %v3087 = vunpack.c.l.b16 %v1614
        %v3088 = vunpack.c.h.b16 %v1614
        %v3089 = vunpack.c.l.b16 %v1615
        %v3090 = vunpack.c.h.b16 %v1615
        %v3091 = vunpack.c.l.b16 %v1616
        %v3092 = vunpack.c.h.b16 %v1616
        %v3093 = vunpack.c.l.b16 %v1617
        %v3094 = vunpack.c.h.b16 %v1617
        %v3095 = vunpack.c.l.b16 %v1618
        %v3096 = vunpack.c.h.b16 %v1618
        %v3097 = vunpack.c.l.b16 %v1619
        %v3098 = vunpack.c.h.b16 %v1619
        %v3099 = vunpack.c.l.b16 %v1620
        %v3100 = vunpack.c.h.b16 %v1620
        %v3101 = vunpack.c.l.b16 %v1621
        %v3102 = vunpack.c.h.b16 %v1621
        %v3103 = vunpack.c.l.b16 %v1622
        %v3104 = vunpack.c.h.b16 %v1622
        %v3105 = vunpack.c.l.b16 %v1623
        %v3106 = vunpack.c.h.b16 %v1623
        %v3107 = vunpack.c.l.b16 %v1624
        %v3108 = vunpack.c.h.b16 %v1624
        %v3109 = vunpack.c.l.b16 %v1625
        %v3110 = vunpack.c.h.b16 %v1625
        %v3111 = vunpack.c.l.b16 %v1626
        %v3112 = vunpack.c.h.b16 %v1626
        %v3113 = vunpack.c.l.b16 %v1627
        %v3114 = vunpack.c.h.b16 %v1627
        %v3115 = vunpack.c.l.b16 %v1628
        %v3116 = vunpack.c.h.b16 %v1628
        %v3117 = vunpack.c.l.b16 %v1629
        %v3118 = vunpack.c.h.b16 %v1629
        %v3119 = vunpack.c.l.b16 %v1630
        %v3120 = vunpack.c.h.b16 %v1630
        %v3121 = vunpack.c.l.b16 %v1631
        %v3122 = vunpack.c.h.b16 %v1631
        %v3123 = vunpack.c.l.b16 %v1632
        %v3124 = vunpack.c.h.b16 %v1632
        %v3125 = vunpack.c.l.b16 %v1633
        %v3126 = vunpack.c.h.b16 %v1633
        %v3127 = vunpack.c.l.b16 %v1634
        %v3128 = vunpack.c.h.b16 %v1634
        %v3129 = vunpack.c.l.b16 %v1635
        %v3130 = vunpack.c.h.b16 %v1635
        %v3131 = vunpack.c.l.b16 %v1636
        %v3132 = vunpack.c.h.b16 %v1636
        %v3133 = vunpack.c.l.b16 %v1637
        %v3134 = vunpack.c.h.b16 %v1637
        %v3135 = vunpack.c.l.b16 %v1638
        %v3136 = vunpack.c.h.b16 %v1638
        %v3137 = vunpack.c.l.b16 %v1639
        %v3138 = vunpack.c.h.b16 %v1639
        %v3139 = vunpack.c.l.b16 %v1640
        %v3140 = vunpack.c.h.b16 %v1640
        %v3141 = vunpack.c.l.b16 %v1641
        %v3142 = vunpack.c.h.b16 %v1641
        %v3143 = vunpack.c.l.b16 %v1642
        %v3144 = vunpack.c.h.b16 %v1642
        %v3145 = vunpack.c.l.b16 %v1643
        %v3146 = vunpack.c.h.b16 %v1643
        %v3147 = vunpack.c.l.b16 %v1644
        %v3148 = vunpack.c.h.b16 %v1644
        %v3149 = vunpack.c.l.b16 %v1645
        %v3150 = vunpack.c.h.b16 %v1645
        %v3151 = vunpack.c.l.b16 %v1646
        %v3152 = vunpack.c.h.b16 %v1646
        %v3153 = vunpack.c.l.b16 %v1647
        %v3154 = vunpack.c.h.b16 %v1647
        %v3155 = vunpack.c.l.b16 %v1648
        %v3156 = vunpack.c.h.b16 %v1648
        %v3157 = vunpack.c.l.b16 %v1649
        %v3158 = vunpack.c.h.b16 %v1649
        %v3159 = vunpack.c.l.b16 %v1650
        %v3160 = vunpack.c.h.b16 %v1650
        %v3161 = vunpack.c.l.b16 %v1651
        %v3162 = vunpack.c.h.b16 %v1651
        %v3163 = vunpack.c.l.b16 %v1652
        %v3164 = vunpack.c.h.b16 %v1652
        %v3165 = vunpack.c.l.b16 %v1653
        %v3166 = vunpack.c.h.b16 %v1653
        %v3167 = vunpack.c.l.b16 %v1654
        %v3168 = vunpack.c.h.b16 %v1654
        %v3169 = vunpack.c.l.b16 %v1655
        %v3170 = vunpack.c.h.b16 %v1655
        %v3171 = vunpack.c.l.b16 %v1656
        %v3172 = vunpack.c.h.b16 %v1656
        %v3173 = vunpack.c.l.b16 %v1657
        %v3174 = vunpack.c.h.b16 %v1657
        %v3175 = vunpack.c.l.b16 %v1658
        %v3176 = vunpack.c.h.b16 %v1658
        %v3177 = vunpack.c.l.b16 %v1659
        %v3178 = vunpack.c.h.b16 %v1659
        %v3179 = vunpack.c.l.b16 %v1660
        %v3180 = vunpack.c.h.b16 %v1660
        %v3181 = vunpack.c.l.b16 %v1661
        %v3182 = vunpack.c.h.b16 %v1661
        %v3183 = vunpack.c.l.b16 %v1662
        %v3184 = vunpack.c.h.b16 %v1662
        %v3185 = vunpack.c.l.b16 %v1663
        %v3186 = vunpack.c.h.b16 %v1663
        %v3187 = vunpack.c.l.b16 %v1664
        %v3188 = vunpack.c.h.b16 %v1664
        %v3189 = vunpack.c.l.b16 %v1665
        %v3190 = vunpack.c.h.b16 %v1665
        %v3191 = vunpack.c.l.b16 %v1666
        %v3192 = vunpack.c.h.b16 %v1666
        %v3193 = vunpack.c.l.b16 %v1667
        %v3194 = vunpack.c.h.b16 %v1667
        %v3195 = vunpack.c.l.b16 %v1668
        %v3196 = vunpack.c.h.b16 %v1668
        %v3197 = vunpack.c.l.b16 %v1669
        %v3198 = vunpack.c.h.b16 %v1669
        %v3199 = vunpack.c.l.b16 %v1670
        %v3200 = vunpack.c.h.b16 %v1670
        %v3201 = vunpack.c.l.b16 %v1671
        %v3202 = vunpack.c.h.b16 %v1671
        %v3203 = vunpack.c.l.b16 %v1672
        %v3204 = vunpack.c.h.b16 %v1672
        %v3205 = vunpack.c.l.b16 %v1673
        %v3206 = vunpack.c.h.b16 %v1673
        %v3207 = vunpack.c.l.b16 %v1674
        %v3208 = vunpack.c.h.b16 %v1674
        %v3209 = vunpack.c.l.b16 %v1675
        %v3210 = vunpack.c.h.b16 %v1675
        %v3211 = vunpack.c.l.b16 %v1676
        %v3212 = vunpack.c.h.b16 %v1676
        %v3213 = vunpack.c.l.b16 %v1677
        %v3214 = vunpack.c.h.b16 %v1677
        %v3215 = vunpack.c.l.b16 %v1678
        %v3216 = vunpack.c.h.b16 %v1678
        %v3217 = vunpack.c.l.b16 %v1679
        %v3218 = vunpack.c.h.b16 %v1679
        %v3219 = vunpack.c.l.b16 %v1680
        %v3220 = vunpack.c.h.b16 %v1680
        %v3221 = vunpack.c.l.b16 %v1681
        %v3222 = vunpack.c.h.b16 %v1681
        %v3223 = vunpack.c.l.b16 %v1682
        %v3224 = vunpack.c.h.b16 %v1682
        %v3225 = vunpack.c.l.b16 %v1683
        %v3226 = vunpack.c.h.b16 %v1683
        %v3227 = vunpack.c.l.b16 %v1684
        %v3228 = vunpack.c.h.b16 %v1684
        %v3229 = vunpack.c.l.b16 %v1685
        %v3230 = vunpack.c.h.b16 %v1685
        %v3231 = vunpack.c.l.b16 %v1686
        %v3232 = vunpack.c.h.b16 %v1686
        %v3233 = vunpack.c.l.b16 %v1687
        %v3234 = vunpack.c.h.b16 %v1687
        %v3235 = vunpack.c.l.b16 %v1688
        %v3236 = vunpack.c.h.b16 %v1688
        %v3237 = vunpack.c.l.b16 %v1689
        %v3238 = vunpack.c.h.b16 %v1689
        %v3239 = vunpack.c.l.b16 %v1690
        %v3240 = vunpack.c.h.b16 %v1690
        %v3241 = vunpack.c.l.b16 %v1691
        %v3242 = vunpack.c.h.b16 %v1691
        %v3243 = vunpack.c.l.b16 %v1692
        %v3244 = vunpack.c.h.b16 %v1692
        %v3245 = vunpack.c.l.b16 %v1693
        %v3246 = vunpack.c.h.b16 %v1693
        %v3247 = vunpack.c.l.b16 %v1694
        %v3248 = vunpack.c.h.b16 %v1694
        %v3249 = vunpack.c.l.b16 %v1695
        %v3250 = vunpack.c.h.b16 %v1695
        %v3251 = vunpack.c.l.b16 %v1696
        %v3252 = vunpack.c.h.b16 %v1696
        %v3253 = vunpack.c.l.b16 %v1697
        %v3254 = vunpack.c.h.b16 %v1697
        %v3255 = vunpack.c.l.b16 %v1698
        %v3256 = vunpack.c.h.b16 %v1698
        %v3257 = vunpack.c.l.b16 %v1699
        %v3258 = vunpack.c.h.b16 %v1699
        %v3259 = vunpack.c.l.b16 %v1700
        %v3260 = vunpack.c.h.b16 %v1700
        %v3261 = vunpack.c.l.b16 %v1701
        %v3262 = vunpack.c.h.b16 %v1701
        %v3263 = vunpack.c.l.b16 %v1702
        %v3264 = vunpack.c.h.b16 %v1702
        %v3265 = vunpack.c.l.b16 %v1703
        %v3266 = vunpack.c.h.b16 %v1703
        %v3267 = vunpack.c.l.b16 %v1704
        %v3268 = vunpack.c.h.b16 %v1704
        %v3269 = vunpack.c.l.b16 %v1705
        %v3270 = vunpack.c.h.b16 %v1705
        %v3271 = vunpack.c.l.b16 %v1706
        %v3272 = vunpack.c.h.b16 %v1706
        %v3273 = vunpack.c.l.b16 %v1707
        %v3274 = vunpack.c.h.b16 %v1707
        %v3275 = vunpack.c.l.b16 %v1708
        %v3276 = vunpack.c.h.b16 %v1708
        %v3277 = vunpack.c.l.b16 %v1709
        %v3278 = vunpack.c.h.b16 %v1709
        %v3279 = vunpack.c.l.b16 %v1710
        %v3280 = vunpack.c.h.b16 %v1710
        %v3281 = vunpack.c.l.b16 %v1711
        %v3282 = vunpack.c.h.b16 %v1711
        %v3283 = vunpack.c.l.b16 %v1712
        %v3284 = vunpack.c.h.b16 %v1712
        %v3285 = vunpack.c.l.b16 %v1713
        %v3286 = vunpack.c.h.b16 %v1713
        %v3287 = vunpack.c.l.b16 %v1714
        %v3288 = vunpack.c.h.b16 %v1714
        %v3289 = vunpack.c.l.b16 %v1715
        %v3290 = vunpack.c.h.b16 %v1715
        %v3291 = vunpack.c.l.b16 %v1716
        %v3292 = vunpack.c.h.b16 %v1716
        %v3293 = vunpack.c.l.b16 %v1717
        %v3294 = vunpack.c.h.b16 %v1717
        %v3295 = vunpack.c.l.b16 %v1718
        %v3296 = vunpack.c.h.b16 %v1718
        %v3297 = vunpack.c.l.b16 %v1719
        %v3298 = vunpack.c.h.b16 %v1719
        %v3299 = vunpack.c.l.b16 %v1720
        %v3300 = vunpack.c.h.b16 %v1720
        %v3301 = vunpack.c.l.b16 %v1721
        %v3302 = vunpack.c.h.b16 %v1721
        %v3303 = vunpack.c.l.b16 %v1722
        %v3304 = vunpack.c.h.b16 %v1722
        %v3305 = vunpack.c.l.b16 %v1723
        %v3306 = vunpack.c.h.b16 %v1723
        %v3307 = vunpack.c.l.b16 %v1724
        %v3308 = vunpack.c.h.b16 %v1724
        %v3309 = vunpack.c.l.b16 %v1725
        %v3310 = vunpack.c.h.b16 %v1725
        %v3311 = vunpack.c.l.b16 %v1726
        %v3312 = vunpack.c.h.b16 %v1726
        %v3313 = vunpack.c.l.b16 %v1727
        %v3314 = vunpack.c.h.b16 %v1727
        %v3315 = vunpack.c.l.b16 %v1728
        %v3316 = vunpack.c.h.b16 %v1728
        %v3317 = vunpack.c.l.b16 %v1729
        %v3318 = vunpack.c.h.b16 %v1729
        %v3319 = vunpack.c.l.b16 %v1730
        %v3320 = vunpack.c.h.b16 %v1730
        %v3321 = vunpack.c.l.b16 %v1731
        %v3322 = vunpack.c.h.b16 %v1731
        %v3323 = vunpack.c.l.b16 %v1732
        %v3324 = vunpack.c.h.b16 %v1732
        %v3325 = vunpack.c.l.b16 %v1733
        %v3326 = vunpack.c.h.b16 %v1733
        %v3327 = vunpack.c.l.b16 %v1734
        %v3328 = vunpack.c.h.b16 %v1734
        %v3329 = vunpack.c.l.b16 %v1735
        %v3330 = vunpack.c.h.b16 %v1735
        %v3331 = vunpack.c.l.b16 %v1736
        %v3332 = vunpack.c.h.b16 %v1736
        %v3333 = vunpack.c.l.b16 %v1737
        %v3334 = vunpack.c.h.b16 %v1737
        %v3335 = vunpack.c.l.b16 %v1738
        %v3336 = vunpack.c.h.b16 %v1738
        %v3337 = vunpack.c.l.b16 %v1739
        %v3338 = vunpack.c.h.b16 %v1739
        %v3339 = vunpack.c.l.b16 %v1740
        %v3340 = vunpack.c.h.b16 %v1740
        %v3341 = vunpack.c.l.b16 %v1741
        %v3342 = vunpack.c.h.b16 %v1741
        %v3343 = vunpack.c.l.b16 %v1742
        %v3344 = vunpack.c.h.b16 %v1742
        %v3345 = vunpack.c.l.b16 %v1743
        %v3346 = vunpack.c.h.b16 %v1743
        %v3347 = vunpack.c.l.b16 %v1744
        %v3348 = vunpack.c.h.b16 %v1744
        %v3349 = vunpack.c.l.b16 %v1745
        %v3350 = vunpack.c.h.b16 %v1745
        %v3351 = vunpack.c.l.b16 %v1746
        %v3352 = vunpack.c.h.b16 %v1746
        %v3353 = vunpack.c.l.b16 %v1747
        %v3354 = vunpack.c.h.b16 %v1747
        %v3355 = vunpack.c.l.b16 %v1748
        %v3356 = vunpack.c.h.b16 %v1748
        %v3357 = vunpack.c.l.b16 %v1749
        %v3358 = vunpack.c.h.b16 %v1749
        %v3359 = vunpack.c.l.b16 %v1750
        %v3360 = vunpack.c.h.b16 %v1750
        %v3361 = vunpack.c.l.b16 %v1751
        %v3362 = vunpack.c.h.b16 %v1751
        %v3363 = vunpack.c.l.b16 %v1752
        %v3364 = vunpack.c.h.b16 %v1752
        %v3365 = vunpack.c.l.b16 %v1753
        %v3366 = vunpack.c.h.b16 %v1753
        %v3367 = vunpack.c.l.b16 %v1754
        %v3368 = vunpack.c.h.b16 %v1754
        %v3369 = vunpack.c.l.b16 %v1755
        %v3370 = vunpack.c.h.b16 %v1755
        %v3371 = vunpack.c.l.b16 %v1756
        %v3372 = vunpack.c.h.b16 %v1756
        %v3373 = vunpack.c.l.b16 %v1757
        %v3374 = vunpack.c.h.b16 %v1757
        %v3375 = vunpack.c.l.b16 %v1758
        %v3376 = vunpack.c.h.b16 %v1758
        %v3377 = vunpack.c.l.b16 %v1759
        %v3378 = vunpack.c.h.b16 %v1759
        %v3379 = vunpack.c.l.b16 %v1760
        %v3380 = vunpack.c.h.b16 %v1760
        %v3381 = vunpack.c.l.b16 %v1761
        %v3382 = vunpack.c.h.b16 %v1761
        %v3383 = vunpack.c.l.b16 %v1762
        %v3384 = vunpack.c.h.b16 %v1762
        %v3385 = vunpack.c.l.b16 %v1763
        %v3386 = vunpack.c.h.b16 %v1763
        %v3387 = vunpack.c.l.b16 %v1764
        %v3388 = vunpack.c.h.b16 %v1764
        %v3389 = vunpack.c.l.b16 %v1765
        %v3390 = vunpack.c.h.b16 %v1765
        %v3391 = vunpack.c.l.b16 %v1766
        %v3392 = vunpack.c.h.b16 %v1766
        %v3393 = vunpack.c.l.b16 %v1767
        %v3394 = vunpack.c.h.b16 %v1767
        %v3395 = vunpack.c.l.b16 %v1768
        %v3396 = vunpack.c.h.b16 %v1768
        %v3397 = vunpack.c.l.b16 %v1769
        %v3398 = vunpack.c.h.b16 %v1769
        %v3399 = vunpack.c.l.b16 %v1770
        %v3400 = vunpack.c.h.b16 %v1770
        %v3401 = vunpack.c.l.b16 %v1771
        %v3402 = vunpack.c.h.b16 %v1771
        %v3403 = vunpack.c.l.b16 %v1772
        %v3404 = vunpack.c.h.b16 %v1772
        %v3405 = vunpack.c.l.b16 %v1773
        %v3406 = vunpack.c.h.b16 %v1773
        %v3407 = vunpack.c.l.b16 %v1774
        %v3408 = vunpack.c.h.b16 %v1774
        %v3409 = vunpack.c.l.b16 %v1775
        %v3410 = vunpack.c.h.b16 %v1775
        %v3411 = vunpack.c.l.b16 %v1776
        %v3412 = vunpack.c.h.b16 %v1776
        %v3413 = vunpack.c.l.b16 %v1777
        %v3414 = vunpack.c.h.b16 %v1777
        %v3415 = vunpack.c.l.b16 %v1778
        %v3416 = vunpack.c.h.b16 %v1778
        %v3417 = vunpack.c.l.b16 %v1779
        %v3418 = vunpack.c.h.b16 %v1779
        %v3419 = vunpack.c.l.b16 %v1780
        %v3420 = vunpack.c.h.b16 %v1780
        %v3421 = vunpack.c.l.b16 %v1781
        %v3422 = vunpack.c.h.b16 %v1781
        %v3423 = vunpack.c.l.b16 %v1782
        %v3424 = vunpack.c.h.b16 %v1782
        %v3425 = vunpack.c.l.b16 %v1783
        %v3426 = vunpack.c.h.b16 %v1783
        %v3427 = vunpack.c.l.b16 %v1784
        %v3428 = vunpack.c.h.b16 %v1784
        %v3429 = vunpack.c.l.b16 %v1785
        %v3430 = vunpack.c.h.b16 %v1785
        %v3431 = vunpack.c.l.b16 %v1786
        %v3432 = vunpack.c.h.b16 %v1786
        %v3433 = vunpack.c.l.b16 %v1787
        %v3434 = vunpack.c.h.b16 %v1787
        %v3435 = vunpack.c.l.b16 %v1788
        %v3436 = vunpack.c.h.b16 %v1788
        %v3437 = vunpack.c.l.b16 %v1789
        %v3438 = vunpack.c.h.b16 %v1789
        %v3439 = vunpack.c.l.b16 %v1790
        %v3440 = vunpack.c.h.b16 %v1790
        %v3441 = vunpack.c.l.b16 %v1791
        %v3442 = vunpack.c.h.b16 %v1791
        %v3443 = vunpack.c.l.b16 %v1792
        %v3444 = vunpack.c.h.b16 %v1792
        %v3445 = vunpack.c.l.b16 %v1793
        %v3446 = vunpack.c.h.b16 %v1793
        %v3447 = vunpack.c.l.b16 %v1794
        %v3448 = vunpack.c.h.b16 %v1794
        %v3449 = vunpack.c.l.b16 %v1795
        %v3450 = vunpack.c.h.b16 %v1795
        %v3451 = vunpack.c.l.b16 %v1796
        %v3452 = vunpack.c.h.b16 %v1796
        %v3453 = vunpack.c.l.b16 %v1797
        %v3454 = vunpack.c.h.b16 %v1797
        %v3455 = vunpack.c.l.b16 %v1798
        %v3456 = vunpack.c.h.b16 %v1798
        %v3457 = vunpack.c.l.b16 %v1799
        %v3458 = vunpack.c.h.b16 %v1799
        %v3459 = vunpack.c.l.b16 %v1800
        %v3460 = vunpack.c.h.b16 %v1800
        %v3461 = vunpack.c.l.b16 %v1801
        %v3462 = vunpack.c.h.b16 %v1801
        %v3463 = vunpack.c.l.b16 %v1802
        %v3464 = vunpack.c.h.b16 %v1802
        %v3465 = vunpack.c.l.b16 %v1803
        %v3466 = vunpack.c.h.b16 %v1803
        %v3467 = vunpack.c.l.b16 %v1804
        %v3468 = vunpack.c.h.b16 %v1804
        %v3469 = vunpack.c.l.b16 %v1805
        %v3470 = vunpack.c.h.b16 %v1805
        %v3471 = vunpack.c.l.b16 %v1806
        %v3472 = vunpack.c.h.b16 %v1806
        %v3473 = vunpack.c.l.b16 %v1807
        %v3474 = vunpack.c.h.b16 %v1807
        %v3475 = vunpack.c.l.b16 %v1808
        %v3476 = vunpack.c.h.b16 %v1808
        %v3477 = vunpack.c.l.b16 %v1809
        %v3478 = vunpack.c.h.b16 %v1809
        %v3479 = vunpack.c.l.b16 %v1810
        %v3480 = vunpack.c.h.b16 %v1810
        %v3481 = vunpack.c.l.b16 %v1811
        %v3482 = vunpack.c.h.b16 %v1811
        %v3483 = vunpack.c.l.b16 %v1812
        %v3484 = vunpack.c.h.b16 %v1812
        %v3485 = vunpack.c.l.b16 %v1813
        %v3486 = vunpack.c.h.b16 %v1813
        %v3487 = vunpack.c.l.b16 %v1814
        %v3488 = vunpack.c.h.b16 %v1814
        %v3489 = vunpack.c.l.b16 %v1815
        %v3490 = vunpack.c.h.b16 %v1815
        %v3491 = vunpack.c.l.b16 %v1816
        %v3492 = vunpack.c.h.b16 %v1816
        %v3493 = vunpack.c.l.b16 %v1817
        %v3494 = vunpack.c.h.b16 %v1817
        %v3495 = vunpack.c.l.b16 %v1818
        %v3496 = vunpack.c.h.b16 %v1818
        %v3497 = vunpack.c.l.b16 %v1819
        %v3498 = vunpack.c.h.b16 %v1819
        %v3499 = vunpack.c.l.b16 %v1820
        %v3500 = vunpack.c.h.b16 %v1820
        %v3501 = vunpack.c.l.b16 %v1821
        %v3502 = vunpack.c.h.b16 %v1821
        %v3503 = vunpack.c.l.b16 %v1822
        %v3504 = vunpack.c.h.b16 %v1822
        %v3505 = vunpack.c.l.b16 %v1823
        %v3506 = vunpack.c.h.b16 %v1823
        %v3507 = vunpack.c.l.b16 %v1824
        %v3508 = vunpack.c.h.b16 %v1824
        %v3509 = vunpack.c.l.b16 %v1825
        %v3510 = vunpack.c.h.b16 %v1825
        %v3511 = vunpack.c.l.b16 %v1826
        %v3512 = vunpack.c.h.b16 %v1826
        %v3513 = vunpack.c.l.b16 %v1827
        %v3514 = vunpack.c.h.b16 %v1827
        %v3515 = vunpack.c.l.b16 %v1828
        %v3516 = vunpack.c.h.b16 %v1828
        %v3517 = vunpack.c.l.b16 %v1829
        %v3518 = vunpack.c.h.b16 %v1829
        %v3519 = vunpack.c.l.b16 %v1830
        %v3520 = vunpack.c.h.b16 %v1830
        %v3521 = vunpack.c.l.b16 %v1831
        %v3522 = vunpack.c.h.b16 %v1831
        %v3523 = vunpack.c.l.b16 %v1832
        %v3524 = vunpack.c.h.b16 %v1832
        %v3525 = vunpack.c.l.b16 %v1833
        %v3526 = vunpack.c.h.b16 %v1833
        %v3527 = vunpack.c.l.b16 %v1834
        %v3528 = vunpack.c.h.b16 %v1834
        %v3529 = vunpack.c.l.b16 %v1835
        %v3530 = vunpack.c.h.b16 %v1835
        %v3531 = vunpack.c.l.b16 %v1836
        %v3532 = vunpack.c.h.b16 %v1836
        %v3533 = vunpack.c.l.b16 %v1837
        %v3534 = vunpack.c.h.b16 %v1837
        %v3535 = vunpack.c.l.b16 %v1838
        %v3536 = vunpack.c.h.b16 %v1838
        %v3537 = vunpack.c.l.b16 %v1839
        %v3538 = vunpack.c.h.b16 %v1839
        %v3539 = vunpack.c.l.b16 %v1840
        %v3540 = vunpack.c.h.b16 %v1840
        %v3541 = vunpack.c.l.b16 %v1841
        %v3542 = vunpack.c.h.b16 %v1841
        %v3543 = vunpack.c.l.b16 %v1842
        %v3544 = vunpack.c.h.b16 %v1842
        %v3545 = vunpack.c.l.b16 %v1843
        %v3546 = vunpack.c.h.b16 %v1843
        %v3547 = vunpack.c.l.b16 %v1844
        %v3548 = vunpack.c.h.b16 %v1844
        %v3549 = vunpack.c.l.b16 %v1845
        %v3550 = vunpack.c.h.b16 %v1845
        %v3551 = vunpack.c.l.b16 %v1846
        %v3552 = vunpack.c.h.b16 %v1846
        %v3553 = vunpack.c.l.b16 %v1847
        %v3554 = vunpack.c.h.b16 %v1847
        %v3555 = vunpack.c.l.b16 %v1848
        %v3556 = vunpack.c.h.b16 %v1848
        %v3557 = vunpack.c.l.b16 %v1849
        %v3558 = vunpack.c.h.b16 %v1849
        %v3559 = vunpack.c.l.b16 %v1850
        %v3560 = vunpack.c.h.b16 %v1850
        %v3561 = vunpack.c.l.b16 %v1851
        %v3562 = vunpack.c.h.b16 %v1851
        %v3563 = vunpack.c.l.b16 %v1852
        %v3564 = vunpack.c.h.b16 %v1852
        %v3565 = vunpack.c.l.b16 %v1853
        %v3566 = vunpack.c.h.b16 %v1853
        %v3567 = vunpack.c.l.b16 %v1854
        %v3568 = vunpack.c.h.b16 %v1854
        %v3569 = vunpack.c.l.b16 %v1855
        %v3570 = vunpack.c.h.b16 %v1855
        %v3571 = vunpack.c.l.b16 %v1856
        %v3572 = vunpack.c.h.b16 %v1856
        %v3573 = vunpack.c.l.b16 %v1857
        %v3574 = vunpack.c.h.b16 %v1857
        %v3575 = vunpack.c.l.b16 %v1858
        %v3576 = vunpack.c.h.b16 %v1858
        %v3577 = vunpack.c.l.b16 %v1859
        %v3578 = vunpack.c.h.b16 %v1859
        %v3579 = vunpack.c.l.b16 %v1860
        %v3580 = vunpack.c.h.b16 %v1860
        %v3581 = vunpack.c.l.b16 %v1861
        %v3582 = vunpack.c.h.b16 %v1861
        %v3583 = vunpack.c.l.b16 %v1862
        %v3584 = vunpack.c.h.b16 %v1862
        %v3585 = vunpack.c.l.b16 %v1863
        %v3586 = vunpack.c.h.b16 %v1863
        %v3587 = vunpack.c.l.b16 %v1864
        %v3588 = vunpack.c.h.b16 %v1864
        %v3589 = vunpack.c.l.b16 %v1865
        %v3590 = vunpack.c.h.b16 %v1865
        %v3591 = vunpack.c.l.b16 %v1866
        %v3592 = vunpack.c.h.b16 %v1866
        %v3593 = vunpack.c.l.b16 %v1867
        %v3594 = vunpack.c.h.b16 %v1867
        %v3595 = vunpack.c.l.b16 %v1868
        %v3596 = vunpack.c.h.b16 %v1868
        %v3597 = vunpack.c.l.b16 %v1869
        %v3598 = vunpack.c.h.b16 %v1869
        %v3599 = vunpack.c.l.b16 %v1870
        %v3600 = vunpack.c.h.b16 %v1870
        %v3601 = vunpack.c.l.b16 %v1871
        %v3602 = vunpack.c.h.b16 %v1871
        %v3603 = vunpack.c.l.b16 %v1872
        %v3604 = vunpack.c.h.b16 %v1872
        %v3605 = vunpack.c.l.b16 %v1873
        %v3606 = vunpack.c.h.b16 %v1873
        %v3607 = vunpack.c.l.b16 %v1874
        %v3608 = vunpack.c.h.b16 %v1874
        %v3609 = vunpack.c.l.b16 %v1875
        %v3610 = vunpack.c.h.b16 %v1875
        %v3611 = vunpack.c.l.b16 %v1876
        %v3612 = vunpack.c.h.b16 %v1876
        %v3613 = vunpack.c.l.b16 %v1877
        %v3614 = vunpack.c.h.b16 %v1877
        %v3615 = vunpack.c.l.b16 %v1878
        %v3616 = vunpack.c.h.b16 %v1878
        %v3617 = vunpack.c.l.b16 %v1879
        %v3618 = vunpack.c.h.b16 %v1879
        %v3619 = vunpack.c.l.b16 %v1880
        %v3620 = vunpack.c.h.b16 %v1880
        %v3621 = vunpack.c.l.b16 %v1881
        %v3622 = vunpack.c.h.b16 %v1881
        %v3623 = vunpack.c.l.b16 %v1882
        %v3624 = vunpack.c.h.b16 %v1882
        %v3625 = vunpack.c.l.b16 %v1883
        %v3626 = vunpack.c.h.b16 %v1883
        %v3627 = vunpack.c.l.b16 %v1884
        %v3628 = vunpack.c.h.b16 %v1884
        %v3629 = vunpack.c.l.b16 %v1885
        %v3630 = vunpack.c.h.b16 %v1885
        %v3631 = vunpack.c.l.b16 %v1886
        %v3632 = vunpack.c.h.b16 %v1886
        %v3633 = vunpack.c.l.b16 %v1887
        %v3634 = vunpack.c.h.b16 %v1887
        %v3635 = vunpack.c.l.b16 %v1888
        %v3636 = vunpack.c.h.b16 %v1888
        %v3637 = vunpack.c.l.b16 %v1889
        %v3638 = vunpack.c.h.b16 %v1889
        %v3639 = vunpack.c.l.b16 %v1890
        %v3640 = vunpack.c.h.b16 %v1890
        %v3641 = vunpack.c.l.b16 %v1891
        %v3642 = vunpack.c.h.b16 %v1891
        %v3643 = vunpack.c.l.b16 %v1892
        %v3644 = vunpack.c.h.b16 %v1892
        %v3645 = vunpack.c.l.b16 %v1893
        %v3646 = vunpack.c.h.b16 %v1893
        %v3647 = vunpack.c.l.b16 %v1894
        %v3648 = vunpack.c.h.b16 %v1894
        %v3649 = vunpack.c.l.b16 %v1895
        %v3650 = vunpack.c.h.b16 %v1895
        %v3651 = vunpack.c.l.b16 %v1896
        %v3652 = vunpack.c.h.b16 %v1896
        %v3653 = vunpack.c.l.b16 %v1897
        %v3654 = vunpack.c.h.b16 %v1897
        %v3655 = vunpack.c.l.b16 %v1898
        %v3656 = vunpack.c.h.b16 %v1898
        %v3657 = vunpack.c.l.b16 %v1899
        %v3658 = vunpack.c.h.b16 %v1899
        %v3659 = vunpack.c.l.b16 %v1900
        %v3660 = vunpack.c.h.b16 %v1900
        %v3661 = vunpack.c.l.b16 %v1901
        %v3662 = vunpack.c.h.b16 %v1901
        %v3663 = vunpack.c.l.b16 %v1902
        %v3664 = vunpack.c.h.b16 %v1902
        %v3665 = vunpack.c.l.b16 %v1903
        %v3666 = vunpack.c.h.b16 %v1903
        %v3667 = vunpack.c.l.b16 %v1904
        %v3668 = vunpack.c.h.b16 %v1904
        %v3669 = vunpack.c.l.b16 %v1905
        %v3670 = vunpack.c.h.b16 %v1905
        %v3671 = vunpack.c.l.b16 %v1906
        %v3672 = vunpack.c.h.b16 %v1906
        %v3673 = vunpack.c.l.b16 %v1907
        %v3674 = vunpack.c.h.b16 %v1907
        %v3675 = vunpack.c.l.b16 %v1908
        %v3676 = vunpack.c.h.b16 %v1908
        %v3677 = vunpack.c.l.b16 %v1909
        %v3678 = vunpack.c.h.b16 %v1909
        %v3679 = vunpack.c.l.b16 %v1910
        %v3680 = vunpack.c.h.b16 %v1910
        %v3681 = vunpack.c.l.b16 %v1911
        %v3682 = vunpack.c.h.b16 %v1911
        %v3683 = vunpack.c.l.b16 %v1912
        %v3684 = vunpack.c.h.b16 %v1912
        %v3685 = vunpack.c.l.b16 %v1913
        %v3686 = vunpack.c.h.b16 %v1913
        %v3687 = vunpack.c.l.b16 %v1914
        %v3688 = vunpack.c.h.b16 %v1914
        %v3689 = vunpack.c.l.b16 %v1915
        %v3690 = vunpack.c.h.b16 %v1915
        %v3691 = vunpack.c.l.b16 %v1916
        %v3692 = vunpack.c.h.b16 %v1916
        %v3693 = vunpack.c.l.b16 %v1917
        %v3694 = vunpack.c.h.b16 %v1917
        %v3695 = vunpack.c.l.b16 %v1918
        %v3696 = vunpack.c.h.b16 %v1918
        %v3697 = vunpack.c.l.b16 %v1919
        %v3698 = vunpack.c.h.b16 %v1919
        %v3699 = vunpack.c.l.b16 %v1920
        %v3700 = vunpack.c.h.b16 %v1920
        %v3701 = vunpack.c.l.b16 %v1921
        %v3702 = vunpack.c.h.b16 %v1921
        %v3703 = vunpack.c.l.b16 %v1922
        %v3704 = vunpack.c.h.b16 %v1922
        %v3705 = vunpack.c.l.b16 %v1923
        %v3706 = vunpack.c.h.b16 %v1923
        %v3707 = vunpack.c.l.b16 %v1924
        %v3708 = vunpack.c.h.b16 %v1924
        %v3709 = vunpack.c.l.b16 %v1925
        %v3710 = vunpack.c.h.b16 %v1925
        %v3711 = vunpack.c.l.b16 %v1926
        %v3712 = vunpack.c.h.b16 %v1926
        %v3713 = vunpack.c.l.b16 %v1927
        %v3714 = vunpack.c.h.b16 %v1927
        %v3715 = vunpack.c.l.b16 %v1928
        %v3716 = vunpack.c.h.b16 %v1928
        %v3717 = vunpack.c.l.b16 %v1929
        %v3718 = vunpack.c.h.b16 %v1929
        %v3719 = vunpack.c.l.b16 %v1930
        %v3720 = vunpack.c.h.b16 %v1930
        %v3721 = vunpack.c.l.b16 %v1931
        %v3722 = vunpack.c.h.b16 %v1931
        %v3723 = vunpack.c.l.b16 %v1932
        %v3724 = vunpack.c.h.b16 %v1932
        %v3725 = vunpack.c.l.b16 %v1933
        %v3726 = vunpack.c.h.b16 %v1933
        %v3727 = vunpack.c.l.b16 %v1934
        %v3728 = vunpack.c.h.b16 %v1934
        %v3729 = vunpack.c.l.b16 %v1935
        %v3730 = vunpack.c.h.b16 %v1935
        %v3731 = vunpack.c.l.b16 %v1936
        %v3732 = vunpack.c.h.b16 %v1936
        %v3733 = vunpack.c.l.b16 %v1937
        %v3734 = vunpack.c.h.b16 %v1937
        %v3735 = vunpack.c.l.b16 %v1938
        %v3736 = vunpack.c.h.b16 %v1938
        %v3737 = vunpack.c.l.b16 %v1939
        %v3738 = vunpack.c.h.b16 %v1939
        %v3739 = vunpack.c.l.b16 %v1940
        %v3740 = vunpack.c.h.b16 %v1940
        %v3741 = vunpack.c.l.b16 %v1941
        %v3742 = vunpack.c.h.b16 %v1941
        %v3743 = vunpack.c.l.b16 %v1942
        %v3744 = vunpack.c.h.b16 %v1942
        %v3745 = vunpack.c.l.b16 %v1943
        %v3746 = vunpack.c.h.b16 %v1943
        %v3747 = vunpack.c.l.b16 %v1944
        %v3748 = vunpack.c.h.b16 %v1944
        %v3749 = vunpack.c.l.b16 %v1945
        %v3750 = vunpack.c.h.b16 %v1945
        %v3751 = vunpack.c.l.b16 %v1946
        %v3752 = vunpack.c.h.b16 %v1946
        %v3753 = vunpack.c.l.b16 %v1947
        %v3754 = vunpack.c.h.b16 %v1947
        %v3755 = vunpack.c.l.b16 %v1948
        %v3756 = vunpack.c.h.b16 %v1948
        %v3757 = vunpack.c.l.b16 %v1949
        %v3758 = vunpack.c.h.b16 %v1949
        %v3759 = vunpack.c.l.b16 %v1950
        %v3760 = vunpack.c.h.b16 %v1950
        %v3761 = vunpack.c.l.b16 %v1951
        %v3762 = vunpack.c.h.b16 %v1951
        %v3763 = vunpack.c.l.b16 %v1952
        %v3764 = vunpack.c.h.b16 %v1952
        %v3765 = vunpack.c.l.b16 %v1953
        %v3766 = vunpack.c.h.b16 %v1953
        %v3767 = vunpack.c.l.b16 %v1954
        %v3768 = vunpack.c.h.b16 %v1954
        %v3769 = vunpack.c.l.b16 %v1955
        %v3770 = vunpack.c.h.b16 %v1955
        %v3771 = vunpack.c.l.b16 %v1956
        %v3772 = vunpack.c.h.b16 %v1956
        %v3773 = vunpack.c.l.b16 %v1957
        %v3774 = vunpack.c.h.b16 %v1957
        %v3775 = vunpack.c.l.b16 %v1958
        %v3776 = vunpack.c.h.b16 %v1958
        %v3777 = vunpack.c.l.b16 %v1959
        %v3778 = vunpack.c.h.b16 %v1959
        %v3779 = vunpack.c.l.b16 %v1960
        %v3780 = vunpack.c.h.b16 %v1960
        %v3781 = vunpack.c.l.b16 %v1961
        %v3782 = vunpack.c.h.b16 %v1961
        %v3783 = vunpack.c.l.b16 %v1962
        %v3784 = vunpack.c.h.b16 %v1962
        %v3785 = vunpack.c.l.b16 %v1963
        %v3786 = vunpack.c.h.b16 %v1963
        %v3787 = vunpack.c.l.b16 %v1964
        %v3788 = vunpack.c.h.b16 %v1964
        %v3789 = vunpack.c.l.b16 %v1965
        %v3790 = vunpack.c.h.b16 %v1965
        %v3791 = vunpack.c.l.b16 %v1966
        %v3792 = vunpack.c.h.b16 %v1966
        %v3793 = vunpack.c.l.b16 %v1967
        %v3794 = vunpack.c.h.b16 %v1967
        %v3795 = vunpack.c.l.b16 %v1968
        %v3796 = vunpack.c.h.b16 %v1968
        %v3797 = vunpack.c.l.b16 %v1969
        %v3798 = vunpack.c.h.b16 %v1969
        %v3799 = vunpack.c.l.b16 %v1970
        %v3800 = vunpack.c.h.b16 %v1970
        %v3801 = vunpack.c.l.b16 %v1971
        %v3802 = vunpack.c.h.b16 %v1971
        %v3803 = vunpack.c.l.b16 %v1972
        %v3804 = vunpack.c.h.b16 %v1972
        %v3805 = vunpack.c.l.b16 %v1973
        %v3806 = vunpack.c.h.b16 %v1973
        %v3807 = vunpack.c.l.b16 %v1974
        %v3808 = vunpack.c.h.b16 %v1974
        %v3809 = vunpack.c.l.b16 %v1975
        %v3810 = vunpack.c.h.b16 %v1975
        %v3811 = vunpack.c.l.b16 %v1976
        %v3812 = vunpack.c.h.b16 %v1976
        %v3813 = vunpack.c.l.b16 %v1977
        %v3814 = vunpack.c.h.b16 %v1977
        %v3815 = vunpack.c.l.b16 %v1978
        %v3816 = vunpack.c.h.b16 %v1978
        %v3817 = vunpack.c.l.b16 %v1979
        %v3818 = vunpack.c.h.b16 %v1979
        %v3819 = vunpack.c.l.b16 %v1980
        %v3820 = vunpack.c.h.b16 %v1980
        %v3821 = vunpack.c.l.b16 %v1981
        %v3822 = vunpack.c.h.b16 %v1981
        %v3823 = vunpack.c.l.b16 %v1982
        %v3824 = vunpack.c.h.b16 %v1982
        %v3825 = vunpack.c.l.b16 %v1983
        %v3826 = vunpack.c.h.b16 %v1983
        %v3827 = vunpack.c.l.b16 %v1984
        %v3828 = vunpack.c.h.b16 %v1984
        %v3829 = vunpack.c.l.b16 %v1985
        %v3830 = vunpack.c.h.b16 %v1985
        %v3831 = vunpack.c.l.b16 %v1986
        %v3832 = vunpack.c.h.b16 %v1986
        %v3833 = vunpack.c.l.b16 %v1987
        %v3834 = vunpack.c.h.b16 %v1987
        %v3835 = vunpack.c.l.b16 %v1988
        %v3836 = vunpack.c.h.b16 %v1988
        %v3837 = vunpack.c.l.b16 %v1989
        %v3838 = vunpack.c.h.b16 %v1989
        %v3839 = vunpack.c.l.b16 %v1990
        %v3840 = vunpack.c.h.b16 %v1990
        %v3841 = vunpack.c.l.b16 %v1991
        %v3842 = vunpack.c.h.b16 %v1991
        %v3843 = vunpack.c.l.b16 %v1992
        %v3844 = vunpack.c.h.b16 %v1992
        %v3845 = vunpack.c.l.b16 %v1993
        %v3846 = vunpack.c.h.b16 %v1993
        %v3847 = vunpack.c.l.b16 %v1994
        %v3848 = vunpack.c.h.b16 %v1994
        %v3849 = vunpack.c.l.b16 %v1995
        %v3850 = vunpack.c.h.b16 %v1995
        %v3851 = vunpack.c.l.b16 %v1996
        %v3852 = vunpack.c.h.b16 %v1996
        %v3853 = vunpack.c.l.b16 %v1997
        %v3854 = vunpack.c.h.b16 %v1997
        %v3855 = vunpack.c.l.b16 %v1998
        %v3856 = vunpack.c.h.b16 %v1998
        %v3857 = vunpack.c.l.b16 %v1999
        %v3858 = vunpack.c.h.b16 %v1999
        %v3859 = vunpack.c.l.b16 %v2000
        %v3860 = vunpack.c.h.b16 %v2000
        %v3861 = vunpack.c.l.b16 %v2001
        %v3862 = vunpack.c.h.b16 %v2001
        %v3863 = vunpack.c.l.b16 %v2002
        %v3864 = vunpack.c.h.b16 %v2002
        %v3865 = vunpack.c.l.b16 %v2003
        %v3866 = vunpack.c.h.b16 %v2003
        %v3867 = vunpack.c.l.b16 %v2004
        %v3868 = vunpack.c.h.b16 %v2004
        %v3869 = vunpack.c.l.b16 %v2005
        %v3870 = vunpack.c.h.b16 %v2005
        %v3871 = vunpack.c.l.b16 %v2006
        %v3872 = vunpack.c.h.b16 %v2006
        %v3873 = vunpack.c.l.b16 %v2007
        %v3874 = vunpack.c.h.b16 %v2007
        %v3875 = vunpack.c.l.b16 %v2008
        %v3876 = vunpack.c.h.b16 %v2008
        %v3877 = vunpack.c.l.b16 %v2009
        %v3878 = vunpack.c.h.b16 %v2009
        %v3879 = vunpack.c.l.b16 %v2010
        %v3880 = vunpack.c.h.b16 %v2010
        %v3881 = vunpack.c.l.b16 %v2011
        %v3882 = vunpack.c.h.b16 %v2011
        %v3883 = vunpack.c.l.b16 %v2012
        %v3884 = vunpack.c.h.b16 %v2012
        %v3885 = vunpack.c.l.b16 %v2013
        %v3886 = vunpack.c.h.b16 %v2013
        %v3887 = vunpack.c.l.b16 %v2014
        %v3888 = vunpack.c.h.b16 %v2014
        %v3889 = vunpack.c.l.b16 %v2015
        %v3890 = vunpack.c.h.b16 %v2015
        %v3891 = vunpack.c.l.b16 %v2016
        %v3892 = vunpack.c.h.b16 %v2016
        %v3893 = vunpack.c.l.b16 %v2017
        %v3894 = vunpack.c.h.b16 %v2017
        %v3895 = vunpack.c.l.b16 %v2018
        %v3896 = vunpack.c.h.b16 %v2018
        %v3897 = vunpack.c.l.b16 %v2019
        %v3898 = vunpack.c.h.b16 %v2019
        %v3899 = vunpack.c.l.b16 %v2020
        %v3900 = vunpack.c.h.b16 %v2020
        %v3901 = vunpack.c.l.b16 %v2021
        %v3902 = vunpack.c.h.b16 %v2021
        %v3903 = vunpack.c.l.b16 %v2022
        %v3904 = vunpack.c.h.b16 %v2022
        %v3905 = vunpack.c.l.b16 %v2023
        %v3906 = vunpack.c.h.b16 %v2023
        %v3907 = vunpack.c.l.b16 %v2024
        %v3908 = vunpack.c.h.b16 %v2024
        %v3909 = vunpack.c.l.b16 %v2025
        %v3910 = vunpack.c.h.b16 %v2025
        %v3911 = vunpack.c.l.b16 %v2026
        %v3912 = vunpack.c.h.b16 %v2026
        %v3913 = vunpack.c.l.b16 %v2027
        %v3914 = vunpack.c.h.b16 %v2027
        %v3915 = vunpack.c.l.b16 %v2028
        %v3916 = vunpack.c.h.b16 %v2028
        %v3917 = vunpack.c.l.b16 %v2029
        %v3918 = vunpack.c.h.b16 %v2029
        %v3919 = vunpack.c.l.b16 %v2030
        %v3920 = vunpack.c.h.b16 %v2030
        %v3921 = vunpack.c.l.b16 %v2031
        %v3922 = vunpack.c.h.b16 %v2031
        %v3923 = vunpack.c.l.b16 %v2032
        %v3924 = vunpack.c.h.b16 %v2032
        %v3925 = vunpack.c.l.b16 %v2033
        %v3926 = vunpack.c.h.b16 %v2033
        %v3927 = vunpack.c.l.b16 %v2034
        %v3928 = vunpack.c.h.b16 %v2034
        %v3929 = vunpack.c.l.b16 %v2035
        %v3930 = vunpack.c.h.b16 %v2035
        %v3931 = vunpack.c.l.b16 %v2036
        %v3932 = vunpack.c.h.b16 %v2036
        %v3933 = vunpack.c.l.b16 %v2037
        %v3934 = vunpack.c.h.b16 %v2037
        %v3935 = vunpack.c.l.b16 %v2038
        %v3936 = vunpack.c.h.b16 %v2038
        %v3937 = vunpack.c.l.b16 %v2039
        %v3938 = vunpack.c.h.b16 %v2039
        %v3939 = vunpack.c.l.b16 %v2040
        %v3940 = vunpack.c.h.b16 %v2040
        %v3941 = vunpack.c.l.b16 %v2041
        %v3942 = vunpack.c.h.b16 %v2041
        %v3943 = vunpack.c.l.b16 %v2042
        %v3944 = vunpack.c.h.b16 %v2042
        %v3945 = vunpack.c.l.b16 %v2043
        %v3946 = vunpack.c.h.b16 %v2043
        %v3947 = vunpack.c.l.b16 %v2044
        %v3948 = vunpack.c.h.b16 %v2044
        %v3949 = vunpack.c.l.b16 %v2045
        %v3950 = vunpack.c.h.b16 %v2045
        %v3951 = vunpack.c.l.b16 %v2046
        %v3952 = vunpack.c.h.b16 %v2046
        %v3953 = vunpack.c.l.b16 %v2047
        %v3954 = vunpack.c.h.b16 %v2047
        %v3955 = vunpack.c.l.b16 %v2048
        %v3956 = vunpack.c.h.b16 %v2048
        %v3957 = vunpack.c.l.b16 %v2049
        %v3958 = vunpack.c.h.b16 %v2049
        %v3959 = vunpack.c.l.b16 %v2050
        %v3960 = vunpack.c.h.b16 %v2050
        %v3961 = vunpack.c.l.b16 %v2051
        %v3962 = vunpack.c.h.b16 %v2051
        %v3963 = vunpack.c.l.b16 %v2052
        %v3964 = vunpack.c.h.b16 %v2052
        %v3965 = vunpack.c.l.b16 %v2053
        %v3966 = vunpack.c.h.b16 %v2053
        %v3967 = vunpack.c.l.b16 %v2054
        %v3968 = vunpack.c.h.b16 %v2054
        %v3969 = vunpack.c.l.b16 %v2055
        %v3970 = vunpack.c.h.b16 %v2055
        %v3971 = vunpack.c.l.b16 %v2056
        %v3972 = vunpack.c.h.b16 %v2056
        %v3973 = vunpack.c.l.b16 %v2057
        %v3974 = vunpack.c.h.b16 %v2057
        %v3975 = vunpack.c.l.b16 %v2058
        %v3976 = vunpack.c.h.b16 %v2058
        %v3977 = vunpack.c.l.b16 %v2059
        %v3978 = vunpack.c.h.b16 %v2059
        %v3979 = vunpack.c.l.b16 %v2060
        %v3980 = vunpack.c.h.b16 %v2060
        %v3981 = vunpack.c.l.b16 %v2061
        %v3982 = vunpack.c.h.b16 %v2061
        %v3983 = vunpack.c.l.b16 %v2062
        %v3984 = vunpack.c.h.b16 %v2062
        %v3985 = vunpack.c.l.b16 %v2063
        %v3986 = vunpack.c.h.b16 %v2063
        %v3987 = vunpack.c.l.b16 %v2064
        %v3988 = vunpack.c.h.b16 %v2064
        %v3989 = vunpack.c.l.b16 %v2065
        %v3990 = vunpack.c.h.b16 %v2065
        %v3991 = vunpack.c.l.b16 %v2066
        %v3992 = vunpack.c.h.b16 %v2066
        %v3993 = vunpack.c.l.b16 %v2067
        %v3994 = vunpack.c.h.b16 %v2067
        %v3995 = vunpack.c.l.b16 %v2068
        %v3996 = vunpack.c.h.b16 %v2068
        %v3997 = vunpack.c.l.b16 %v2069
        %v3998 = vunpack.c.h.b16 %v2069
        %v3999 = vunpack.c.l.b16 %v2070
        %v4000 = vunpack.c.h.b16 %v2070
        %v4001 = vunpack.c.l.b16 %v2071
        %v4002 = vunpack.c.h.b16 %v2071
        %v4003 = vunpack.c.l.b16 %v2072
        %v4004 = vunpack.c.h.b16 %v2072
        %v4005 = vunpack.c.l.b16 %v2073
        %v4006 = vunpack.c.h.b16 %v2073
        %v4007 = vunpack.c.l.b16 %v2074
        %v4008 = vunpack.c.h.b16 %v2074
        %v4009 = vunpack.c.l.b16 %v2075
        %v4010 = vunpack.c.h.b16 %v2075
        %v4011 = vunpack.c.l.b16 %v2076
        %v4012 = vunpack.c.h.b16 %v2076
        %v4013 = vunpack.c.l.b16 %v2077
        %v4014 = vunpack.c.h.b16 %v2077
        %v4015 = vunpack.c.l.b16 %v2078
        %v4016 = vunpack.c.h.b16 %v2078
        %v4017 = vunpack.c.l.b16 %v2079
        %v4018 = vunpack.c.h.b16 %v2079
        %v4019 = vunpack.c.l.b16 %v2080
        %v4020 = vunpack.c.h.b16 %v2080
        %v4021 = vunpack.c.l.b16 %v2081
        %v4022 = vunpack.c.h.b16 %v2081
        %v4023 = vunpack.c.l.b16 %v2082
        %v4024 = vunpack.c.h.b16 %v2082
        %v4025 = vunpack.c.l.b16 %v2083
        %v4026 = vunpack.c.h.b16 %v2083
        %v4027 = vunpack.c.l.b16 %v2084
        %v4028 = vunpack.c.h.b16 %v2084
        %v4029 = vunpack.c.l.b16 %v2085
        %v4030 = vunpack.c.h.b16 %v2085
        %v4031 = vunpack.c.l.b16 %v2086
        %v4032 = vunpack.c.h.b16 %v2086
        %v4033 = vunpack.c.l.b16 %v2087
        %v4034 = vunpack.c.h.b16 %v2087
        %v4035 = vunpack.c.l.b16 %v2088
        %v4036 = vunpack.c.h.b16 %v2088
        %v4037 = vunpack.c.l.b16 %v2089
        %v4038 = vunpack.c.h.b16 %v2089
        %v4039 = vunpack.c.l.b16 %v2090
        %v4040 = vunpack.c.h.b16 %v2090
        %v4041 = vunpack.c.l.b16 %v2091
        %v4042 = vunpack.c.h.b16 %v2091
        %v4043 = vunpack.c.l.b16 %v2092
        %v4044 = vunpack.c.h.b16 %v2092
        %v4045 = vunpack.c.l.b16 %v2093
        %v4046 = vunpack.c.h.b16 %v2093
        %v4047 = vunpack.c.l.b16 %v2094
        %v4048 = vunpack.c.h.b16 %v2094
        %v4049 = vunpack.c.l.b16 %v2095
        %v4050 = vunpack.c.h.b16 %v2095
        %v4051 = vunpack.c.l.b16 %v2096
        %v4052 = vunpack.c.h.b16 %v2096
        %v4053 = vunpack.c.l.b16 %v2097
        %v4054 = vunpack.c.h.b16 %v2097
        %v4055 = vunpack.c.l.b16 %v2098
        %v4056 = vunpack.c.h.b16 %v2098
        %v4057 = vunpack.c.l.b16 %v2099
        %v4058 = vunpack.c.h.b16 %v2099
        %v4059 = vunpack.c.l.b16 %v2100
        %v4060 = vunpack.c.h.b16 %v2100
        %v4061 = vunpack.c.l.b16 %v2101
        %v4062 = vunpack.c.h.b16 %v2101
        %v4063 = vunpack.c.l.b16 %v2102
        %v4064 = vunpack.c.h.b16 %v2102
        %v4065 = vunpack.c.l.b16 %v2103
        %v4066 = vunpack.c.h.b16 %v2103
        %v4067 = vunpack.c.l.b16 %v2104
        %v4068 = vunpack.c.h.b16 %v2104
        %v4069 = vunpack.c.l.b16 %v2105
        %v4070 = vunpack.c.h.b16 %v2105
        %v4071 = vunpack.c.l.b16 %v2106
        %v4072 = vunpack.c.h.b16 %v2106
        %v4073 = vunpack.c.l.b16 %v2107
        %v4074 = vunpack.c.h.b16 %v2107
        %v4075 = vunpack.c.l.b16 %v2108
        %v4076 = vunpack.c.h.b16 %v2108
        %v4077 = vunpack.c.l.b16 %v2109
        %v4078 = vunpack.c.h.b16 %v2109
        %v4079 = vunpack.c.l.b16 %v2110
        %v4080 = vunpack.c.h.b16 %v2110
        %v4081 = vunpack.c.l.b16 %v2111
        %v4082 = vunpack.c.h.b16 %v2111
        %v4083 = vunpack.c.l.b16 %v2112
        %v4084 = vunpack.c.h.b16 %v2112
        %v4085 = vunpack.c.l.b16 %v2113
        %v4086 = vunpack.c.h.b16 %v2113
        %v4087 = vunpack.c.l.b16 %v2114
        %v4088 = vunpack.c.h.b16 %v2114
        %v4089 = vunpack.c.l.b16 %v2115
        %v4090 = vunpack.c.h.b16 %v2115
        %v4091 = vunpack.c.l.b16 %v2116
        %v4092 = vunpack.c.h.b16 %v2116
        %v4093 = vunpack.c.l.b16 %v2117
        %v4094 = vunpack.c.h.b16 %v2117
        %v4095 = vunpack.c.l.b16 %v2118
        %v4096 = vunpack.c.h.b16 %v2118
        %v4097 = vunpack.c.l.b16 %v2119
        %v4098 = vunpack.c.h.b16 %v2119
        %v4099 = vunpack.c.l.b16 %v2120
        %v4100 = vunpack.c.h.b16 %v2120
        %v4101 = vunpack.c.l.b16 %v2121
        %v4102 = vunpack.c.h.b16 %v2121
        %v4103 = vunpack.c.l.b16 %v2122
        %v4104 = vunpack.c.h.b16 %v2122
        %v4105 = vunpack.c.l.b16 %v2123
        %v4106 = vunpack.c.h.b16 %v2123
        %v4107 = vunpack.c.l.b16 %v2124
        %v4108 = vunpack.c.h.b16 %v2124
        %v4109 = vunpack.c.l.b16 %v2125
        %v4110 = vunpack.c.h.b16 %v2125
        %v4111 = vunpack.c.l.b16 %v2126
        %v4112 = vunpack.c.h.b16 %v2126
        %v4113 = vunpack.c.l.b16 %v2127
        %v4114 = vunpack.c.h.b16 %v2127
        %v4115 = vunpack.c.l.b16 %v2128
        %v4116 = vunpack.c.h.b16 %v2128
        %v4117 = vunpack.c.l.b16 %v2129
        %v4118 = vunpack.c.h.b16 %v2129
        %v4119 = vunpack.c.l.b16 %v2130
        %v4120 = vunpack.c.h.b16 %v2130
        %v4121 = vunpack.c.l.b16 %v2131
        %v4122 = vunpack.c.h.b16 %v2131
        %v4123 = vunpack.c.l.b16 %v2132
        %v4124 = vunpack.c.h.b16 %v2132
        %v4125 = vunpack.c.l.b16 %v2133
        %v4126 = vunpack.c.h.b16 %v2133
        %v4127 = vunpack.c.l.b16 %v2134
        %v4128 = vunpack.c.h.b16 %v2134
        %v4129 = vunpack.c.l.b16 %v2135
        %v4130 = vunpack.c.h.b16 %v2135
        %v4131 = vunpack.c.l.b16 %v2136
        %v4132 = vunpack.c.h.b16 %v2136
        %v4133 = vunpack.c.l.b16 %v2137
        %v4134 = vunpack.c.h.b16 %v2137
        %v4135 = vunpack.c.l.b16 %v2138
        %v4136 = vunpack.c.h.b16 %v2138
        %v4137 = vunpack.c.l.b16 %v2139
        %v4138 = vunpack.c.h.b16 %v2139
        %v4139 = vunpack.c.l.b16 %v2140
        %v4140 = vunpack.c.h.b16 %v2140
        %v4141 = vunpack.c.l.b16 %v2141
        %v4142 = vunpack.c.h.b16 %v2141
        %v4143 = vunpack.c.l.b16 %v2142
        %v4144 = vunpack.c.h.b16 %v2142
        %v4145 = vunpack.c.l.b16 %v2143
        %v4146 = vunpack.c.h.b16 %v2143
        %v4147 = vunpack.c.l.b16 %v2144
        %v4148 = vunpack.c.h.b16 %v2144
        %v4149 = vunpack.c.l.b16 %v2145
        %v4150 = vunpack.c.h.b16 %v2145
        %v4151 = vunpack.c.l.b16 %v2146
        %v4152 = vunpack.c.h.b16 %v2146
        %v4153 = vunpack.c.l.b16 %v2147
        %v4154 = vunpack.c.h.b16 %v2147
        %v4155 = vunpack.c.l.b16 %v2148
        %v4156 = vunpack.c.h.b16 %v2148
        %v4157 = vunpack.c.l.b16 %v2149
        %v4158 = vunpack.c.h.b16 %v2149
        %v4159 = vunpack.c.l.b16 %v2150
        %v4160 = vunpack.c.h.b16 %v2150
        %v4161 = vunpack.c.l.b16 %v2151
        %v4162 = vunpack.c.h.b16 %v2151
        %v4163 = vunpack.c.l.b16 %v2152
        %v4164 = vunpack.c.h.b16 %v2152
        %v4165 = vunpack.c.l.b16 %v2153
        %v4166 = vunpack.c.h.b16 %v2153
        %v4167 = vunpack.c.l.b16 %v2154
        %v4168 = vunpack.c.h.b16 %v2154
        %v4169 = vunpack.c.l.b16 %v2155
        %v4170 = vunpack.c.h.b16 %v2155
        %v4171 = vunpack.c.l.b16 %v2156
        %v4172 = vunpack.c.h.b16 %v2156
        %v4173 = vpack.c.b16 %v3039, %v3021
        %v4174 = vpack.c.b16 %v3040, %v3022
        %v4175 = vpack.c.b16 %v3041, %v3023
        %v4176 = vpack.c.b16 %v3042, %v3024
        %v4177 = vpack.c.b16 %v3043, %v3025
        %v4178 = vpack.c.b16 %v3044, %v3026
        %v4179 = vpack.c.b16 %v3045, %v3027
        %v4180 = vpack.c.b16 %v3046, %v3028
        %v4181 = vpack.c.b16 %v3047, %v3029
        %v4182 = vpack.c.b16 %v3048, %v3030
        %v4183 = vpack.c.b16 %v3049, %v3031
        %v4184 = vpack.c.b16 %v3050, %v3032
        %v4185 = vpack.c.b16 %v3051, %v3033
        %v4186 = vpack.c.b16 %v3052, %v3034
        %v4187 = vpack.c.b16 %v3053, %v3035
        %v4188 = vpack.c.b16 %v3054, %v3036
        %v4189 = vpack.c.b16 %v3055, %v3037
        %v4190 = vpack.c.b16 %v3056, %v3038
        %v4191 = vpack.c.b16 %v3075, %v3057
        %v4192 = vpack.c.b16 %v3076, %v3058
        %v4193 = vpack.c.b16 %v3077, %v3059
        %v4194 = vpack.c.b16 %v3078, %v3060
        %v4195 = vpack.c.b16 %v3079, %v3061
        %v4196 = vpack.c.b16 %v3080, %v3062
        %v4197 = vpack.c.b16 %v3081, %v3063
        %v4198 = vpack.c.b16 %v3082, %v3064
        %v4199 = vpack.c.b16 %v3083, %v3065
        %v4200 = vpack.c.b16 %v3084, %v3066
        %v4201 = vpack.c.b16 %v3085, %v3067
        %v4202 = vpack.c.b16 %v3086, %v3068
        %v4203 = vpack.c.b16 %v3087, %v3069
        %v4204 = vpack.c.b16 %v3088, %v3070
        %v4205 = vpack.c.b16 %v3089, %v3071
        %v4206 = vpack.c.b16 %v3090, %v3072
        %v4207 = vpack.c.b16 %v3091, %v3073
        %v4208 = vpack.c.b16 %v3092, %v3074
        %v4209 = vpack.c.b16 %v3111, %v3093
        %v4210 = vpack.c.b16 %v3112, %v3094
        %v4211 = vpack.c.b16 %v3113, %v3095
        %v4212 = vpack.c.b16 %v3114, %v3096
        %v4213 = vpack.c.b16 %v3115, %v3097
        %v4214 = vpack.c.b16 %v3116, %v3098
        %v4215 = vpack.c.b16 %v3117, %v3099
        %v4216 = vpack.c.b16 %v3118, %v3100
        %v4217 = vpack.c.b16 %v3119, %v3101
        %v4218 = vpack.c.b16 %v3120, %v3102
        %v4219 = vpack.c.b16 %v3121, %v3103
        %v4220 = vpack.c.b16 %v3122, %v3104
        %v4221 = vpack.c.b16 %v3123, %v3105
        %v4222 = vpack.c.b16 %v3124, %v3106
        %v4223 = vpack.c.b16 %v3125, %v3107
        %v4224 = vpack.c.b16 %v3126, %v3108
        %v4225 = vpack.c.b16 %v3127, %v3109
        %v4226 = vpack.c.b16 %v3128, %v3110
        %v4227 = vpack.c.b16 %v3147, %v3129
        %v4228 = vpack.c.b16 %v3148, %v3130
        %v4229 = vpack.c.b16 %v3149, %v3131
        %v4230 = vpack.c.b16 %v3150, %v3132
        %v4231 = vpack.c.b16 %v3151, %v3133
        %v4232 = vpack.c.b16 %v3152, %v3134
        %v4233 = vpack.c.b16 %v3153, %v3135
        %v4234 = vpack.c.b16 %v3154, %v3136
        %v4235 = vpack.c.b16 %v3155, %v3137
        %v4236 = vpack.c.b16 %v3156, %v3138
        %v4237 = vpack.c.b16 %v3157, %v3139
        %v4238 = vpack.c.b16 %v3158, %v3140
        %v4239 = vpack.c.b16 %v3159, %v3141
        %v4240 = vpack.c.b16 %v3160, %v3142
        %v4241 = vpack.c.b16 %v3161, %v3143
        %v4242 = vpack.c.b16 %v3162, %v3144
        %v4243 = vpack.c.b16 %v3163, %v3145
        %v4244 = vpack.c.b16 %v3164, %v3146
        %v4245 = vpack.c.b16 %v3183, %v3165
        %v4246 = vpack.c.b16 %v3184, %v3166
        %v4247 = vpack.c.b16 %v3185, %v3167
        %v4248 = vpack.c.b16 %v3186, %v3168
        %v4249 = vpack.c.b16 %v3187, %v3169
        %v4250 = vpack.c.b16 %v3188, %v3170
        %v4251 = vpack.c.b16 %v3189, %v3171
        %v4252 = vpack.c.b16 %v3190, %v3172
        %v4253 = vpack.c.b16 %v3191, %v3173
        %v4254 = vpack.c.b16 %v3192, %v3174
        %v4255 = vpack.c.b16 %v3193, %v3175
        %v4256 = vpack.c.b16 %v3194, %v3176
        %v4257 = vpack.c.b16 %v3195, %v3177
        %v4258 = vpack.c.b16 %v3196, %v3178
        %v4259 = vpack.c.b16 %v3197, %v3179
        %v4260 = vpack.c.b16 %v3198, %v3180
        %v4261 = vpack.c.b16 %v3199, %v3181
        %v4262 = vpack.c.b16 %v3200, %v3182
        %v4263 = vpack.c.b16 %v3219, %v3201
        %v4264 = vpack.c.b16 %v3220, %v3202
        %v4265 = vpack.c.b16 %v3221, %v3203
        %v4266 = vpack.c.b16 %v3222, %v3204
        %v4267 = vpack.c.b16 %v3223, %v3205
        %v4268 = vpack.c.b16 %v3224, %v3206
        %v4269 = vpack.c.b16 %v3225, %v3207
        %v4270 = vpack.c.b16 %v3226, %v3208
        %v4271 = vpack.c.b16 %v3227, %v3209
        %v4272 = vpack.c.b16 %v3228, %v3210
        %v4273 = vpack.c.b16 %v3229, %v3211
        %v4274 = vpack.c.b16 %v3230, %v3212
        %v4275 = vpack.c.b16 %v3231, %v3213
        %v4276 = vpack.c.b16 %v3232, %v3214
        %v4277 = vpack.c.b16 %v3233, %v3215
        %v4278 = vpack.c.b16 %v3234, %v3216
        %v4279 = vpack.c.b16 %v3235, %v3217
        %v4280 = vpack.c.b16 %v3236, %v3218
        %v4281 = vpack.c.b16 %v3255, %v3237
        %v4282 = vpack.c.b16 %v3256, %v3238
        %v4283 = vpack.c.b16 %v3257, %v3239
        %v4284 = vpack.c.b16 %v3258, %v3240
        %v4285 = vpack.c.b16 %v3259, %v3241
        %v4286 = vpack.c.b16 %v3260, %v3242
        %v4287 = vpack.c.b16 %v3261, %v3243
        %v4288 = vpack.c.b16 %v3262, %v3244
        %v4289 = vpack.c.b16 %v3263, %v3245
        %v4290 = vpack.c.b16 %v3264, %v3246
        %v4291 = vpack.c.b16 %v3265, %v3247
        %v4292 = vpack.c.b16 %v3266, %v3248
        %v4293 = vpack.c.b16 %v3267, %v3249
        %v4294 = vpack.c.b16 %v3268, %v3250
        %v4295 = vpack.c.b16 %v3269, %v3251
        %v4296 = vpack.c.b16 %v3270, %v3252
        %v4297 = vpack.c.b16 %v3271, %v3253
        %v4298 = vpack.c.b16 %v3272, %v3254
        %v4299 = vpack.c.b16 %v3291, %v3273
        %v4300 = vpack.c.b16 %v3292, %v3274
        %v4301 = vpack.c.b16 %v3293, %v3275
        %v4302 = vpack.c.b16 %v3294, %v3276
        %v4303 = vpack.c.b16 %v3295, %v3277
        %v4304 = vpack.c.b16 %v3296, %v3278
        %v4305 = vpack.c.b16 %v3297, %v3279
        %v4306 = vpack.c.b16 %v3298, %v3280
        %v4307 = vpack.c.b16 %v3299, %v3281
        %v4308 = vpack.c.b16 %v3300, %v3282
        %v4309 = vpack.c.b16 %v3301, %v3283
        %v4310 = vpack.c.b16 %v3302, %v3284
        %v4311 = vpack.c.b16 %v3303, %v3285
        %v4312 = vpack.c.b16 %v3304, %v3286
        %v4313 = vpack.c.b16 %v3305, %v3287
        %v4314 = vpack.c.b16 %v3306, %v3288
        %v4315 = vpack.c.b16 %v3307, %v3289
        %v4316 = vpack.c.b16 %v3308, %v3290
        %v4317 = vpack.c.b16 %v3327, %v3309
        %v4318 = vpack.c.b16 %v3328, %v3310
        %v4319 = vpack.c.b16 %v3329, %v3311
        %v4320 = vpack.c.b16 %v3330, %v3312
        %v4321 = vpack.c.b16 %v3331, %v3313
        %v4322 = vpack.c.b16 %v3332, %v3314
        %v4323 = vpack.c.b16 %v3333, %v3315
        %v4324 = vpack.c.b16 %v3334, %v3316
        %v4325 = vpack.c.b16 %v3335, %v3317
        %v4326 = vpack.c.b16 %v3336, %v3318
        %v4327 = vpack.c.b16 %v3337, %v3319
        %v4328 = vpack.c.b16 %v3338, %v3320
        %v4329 = vpack.c.b16 %v3339, %v3321
        %v4330 = vpack.c.b16 %v3340, %v3322
        %v4331 = vpack.c.b16 %v3341, %v3323
        %v4332 = vpack.c.b16 %v3342, %v3324
        %v4333 = vpack.c.b16 %v3343, %v3325
        %v4334 = vpack.c.b16 %v3344, %v3326
        %v4335 = vpack.c.b16 %v3363, %v3345
        %v4336 = vpack.c.b16 %v3364, %v3346
        %v4337 = vpack.c.b16 %v3365, %v3347
        %v4338 = vpack.c.b16 %v3366, %v3348
        %v4339 = vpack.c.b16 %v3367, %v3349
        %v4340 = vpack.c.b16 %v3368, %v3350
        %v4341 = vpack.c.b16 %v3369, %v3351
        %v4342 = vpack.c.b16 %v3370, %v3352
        %v4343 = vpack.c.b16 %v3371, %v3353
        %v4344 = vpack.c.b16 %v3372, %v3354
        %v4345 = vpack.c.b16 %v3373, %v3355
        %v4346 = vpack.c.b16 %v3374, %v3356
        %v4347 = vpack.c.b16 %v3375, %v3357
        %v4348 = vpack.c.b16 %v3376, %v3358
        %v4349 = vpack.c.b16 %v3377, %v3359
        %v4350 = vpack.c.b16 %v3378, %v3360
        %v4351 = vpack.c.b16 %v3379, %v3361
        %v4352 = vpack.c.b16 %v3380, %v3362
        %v4353 = vpack.c.b16 %v3399, %v3381
        %v4354 = vpack.c.b16 %v3400, %v3382
        %v4355 = vpack.c.b16 %v3401, %v3383
        %v4356 = vpack.c.b16 %v3402, %v3384
        %v4357 = vpack.c.b16 %v3403, %v3385
        %v4358 = vpack.c.b16 %v3404, %v3386
        %v4359 = vpack.c.b16 %v3405, %v3387
        %v4360 = vpack.c.b16 %v3406, %v3388
        %v4361 = vpack.c.b16 %v3407, %v3389
        %v4362 = vpack.c.b16 %v3408, %v3390
        %v4363 = vpack.c.b16 %v3409, %v3391
        %v4364 = vpack.c.b16 %v3410, %v3392
        %v4365 = vpack.c.b16 %v3411, %v3393
        %v4366 = vpack.c.b16 %v3412, %v3394
        %v4367 = vpack.c.b16 %v3413, %v3395
        %v4368 = vpack.c.b16 %v3414, %v3396
        %v4369 = vpack.c.b16 %v3415, %v3397
        %v4370 = vpack.c.b16 %v3416, %v3398
        %v4371 = vpack.c.b16 %v3435, %v3417
        %v4372 = vpack.c.b16 %v3436, %v3418
        %v4373 = vpack.c.b16 %v3437, %v3419
        %v4374 = vpack.c.b16 %v3438, %v3420
        %v4375 = vpack.c.b16 %v3439, %v3421
        %v4376 = vpack.c.b16 %v3440, %v3422
        %v4377 = vpack.c.b16 %v3441, %v3423
        %v4378 = vpack.c.b16 %v3442, %v3424
        %v4379 = vpack.c.b16 %v3443, %v3425
        %v4380 = vpack.c.b16 %v3444, %v3426
        %v4381 = vpack.c.b16 %v3445, %v3427
        %v4382 = vpack.c.b16 %v3446, %v3428
        %v4383 = vpack.c.b16 %v3447, %v3429
        %v4384 = vpack.c.b16 %v3448, %v3430
        %v4385 = vpack.c.b16 %v3449, %v3431
        %v4386 = vpack.c.b16 %v3450, %v3432
        %v4387 = vpack.c.b16 %v3451, %v3433
        %v4388 = vpack.c.b16 %v3452, %v3434
        %v4389 = vpack.c.b16 %v3471, %v3453
        %v4390 = vpack.c.b16 %v3472, %v3454
        %v4391 = vpack.c.b16 %v3473, %v3455
        %v4392 = vpack.c.b16 %v3474, %v3456
        %v4393 = vpack.c.b16 %v3475, %v3457
        %v4394 = vpack.c.b16 %v3476, %v3458
        %v4395 = vpack.c.b16 %v3477, %v3459
        %v4396 = vpack.c.b16 %v3478, %v3460
        %v4397 = vpack.c.b16 %v3479, %v3461
        %v4398 = vpack.c.b16 %v3480, %v3462
        %v4399 = vpack.c.b16 %v3481, %v3463
        %v4400 = vpack.c.b16 %v3482, %v3464
        %v4401 = vpack.c.b16 %v3483, %v3465
        %v4402 = vpack.c.b16 %v3484, %v3466
        %v4403 = vpack.c.b16 %v3485, %v3467
        %v4404 = vpack.c.b16 %v3486, %v3468
        %v4405 = vpack.c.b16 %v3487, %v3469
        %v4406 = vpack.c.b16 %v3488, %v3470
        %v4407 = vpack.c.b16 %v3507, %v3489
        %v4408 = vpack.c.b16 %v3508, %v3490
        %v4409 = vpack.c.b16 %v3509, %v3491
        %v4410 = vpack.c.b16 %v3510, %v3492
        %v4411 = vpack.c.b16 %v3511, %v3493
        %v4412 = vpack.c.b16 %v3512, %v3494
        %v4413 = vpack.c.b16 %v3513, %v3495
        %v4414 = vpack.c.b16 %v3514, %v3496
        %v4415 = vpack.c.b16 %v3515, %v3497
        %v4416 = vpack.c.b16 %v3516, %v3498
        %v4417 = vpack.c.b16 %v3517, %v3499
        %v4418 = vpack.c.b16 %v3518, %v3500
        %v4419 = vpack.c.b16 %v3519, %v3501
        %v4420 = vpack.c.b16 %v3520, %v3502
        %v4421 = vpack.c.b16 %v3521, %v3503
        %v4422 = vpack.c.b16 %v3522, %v3504
        %v4423 = vpack.c.b16 %v3523, %v3505
        %v4424 = vpack.c.b16 %v3524, %v3506
        %v4425 = vpack.c.b16 %v3543, %v3525
        %v4426 = vpack.c.b16 %v3544, %v3526
        %v4427 = vpack.c.b16 %v3545, %v3527
        %v4428 = vpack.c.b16 %v3546, %v3528
        %v4429 = vpack.c.b16 %v3547, %v3529
        %v4430 = vpack.c.b16 %v3548, %v3530
        %v4431 = vpack.c.b16 %v3549, %v3531
        %v4432 = vpack.c.b16 %v3550, %v3532
        %v4433 = vpack.c.b16 %v3551, %v3533
        %v4434 = vpack.c.b16 %v3552, %v3534
        %v4435 = vpack.c.b16 %v3553, %v3535
        %v4436 = vpack.c.b16 %v3554, %v3536
        %v4437 = vpack.c.b16 %v3555, %v3537
        %v4438 = vpack.c.b16 %v3556, %v3538
        %v4439 = vpack.c.b16 %v3557, %v3539
        %v4440 = vpack.c.b16 %v3558, %v3540
        %v4441 = vpack.c.b16 %v3559, %v3541
        %v4442 = vpack.c.b16 %v3560, %v3542
        %v4443 = vpack.c.b16 %v3579, %v3561
        %v4444 = vpack.c.b16 %v3580, %v3562
        %v4445 = vpack.c.b16 %v3581, %v3563
        %v4446 = vpack.c.b16 %v3582, %v3564
        %v4447 = vpack.c.b16 %v3583, %v3565
        %v4448 = vpack.c.b16 %v3584, %v3566
        %v4449 = vpack.c.b16 %v3585, %v3567
        %v4450 = vpack.c.b16 %v3586, %v3568
        %v4451 = vpack.c.b16 %v3587, %v3569
        %v4452 = vpack.c.b16 %v3588, %v3570
        %v4453 = vpack.c.b16 %v3589, %v3571
        %v4454 = vpack.c.b16 %v3590, %v3572
        %v4455 = vpack.c.b16 %v3591, %v3573
        %v4456 = vpack.c.b16 %v3592, %v3574
        %v4457 = vpack.c.b16 %v3593, %v3575
        %v4458 = vpack.c.b16 %v3594, %v3576
        %v4459 = vpack.c.b16 %v3595, %v3577
        %v4460 = vpack.c.b16 %v3596, %v3578
        %v4461 = vpack.c.b16 %v3615, %v3597
        %v4462 = vpack.c.b16 %v3616, %v3598
        %v4463 = vpack.c.b16 %v3617, %v3599
        %v4464 = vpack.c.b16 %v3618, %v3600
        %v4465 = vpack.c.b16 %v3619, %v3601
        %v4466 = vpack.c.b16 %v3620, %v3602
        %v4467 = vpack.c.b16 %v3621, %v3603
        %v4468 = vpack.c.b16 %v3622, %v3604
        %v4469 = vpack.c.b16 %v3623, %v3605
        %v4470 = vpack.c.b16 %v3624, %v3606
        %v4471 = vpack.c.b16 %v3625, %v3607
        %v4472 = vpack.c.b16 %v3626, %v3608
        %v4473 = vpack.c.b16 %v3627, %v3609
        %v4474 = vpack.c.b16 %v3628, %v3610
        %v4475 = vpack.c.b16 %v3629, %v3611
        %v4476 = vpack.c.b16 %v3630, %v3612
        %v4477 = vpack.c.b16 %v3631, %v3613
        %v4478 = vpack.c.b16 %v3632, %v3614
        %v4479 = vpack.c.b16 %v3651, %v3633
        %v4480 = vpack.c.b16 %v3652, %v3634
        %v4481 = vpack.c.b16 %v3653, %v3635
        %v4482 = vpack.c.b16 %v3654, %v3636
        %v4483 = vpack.c.b16 %v3655, %v3637
        %v4484 = vpack.c.b16 %v3656, %v3638
        %v4485 = vpack.c.b16 %v3657, %v3639
        %v4486 = vpack.c.b16 %v3658, %v3640
        %v4487 = vpack.c.b16 %v3659, %v3641
        %v4488 = vpack.c.b16 %v3660, %v3642
        %v4489 = vpack.c.b16 %v3661, %v3643
        %v4490 = vpack.c.b16 %v3662, %v3644
        %v4491 = vpack.c.b16 %v3663, %v3645
        %v4492 = vpack.c.b16 %v3664, %v3646
        %v4493 = vpack.c.b16 %v3665, %v3647
        %v4494 = vpack.c.b16 %v3666, %v3648
        %v4495 = vpack.c.b16 %v3667, %v3649
        %v4496 = vpack.c.b16 %v3668, %v3650
        %v4497 = vpack.c.b16 %v3687, %v3669
        %v4498 = vpack.c.b16 %v3688, %v3670
        %v4499 = vpack.c.b16 %v3689, %v3671
        %v4500 = vpack.c.b16 %v3690, %v3672
        %v4501 = vpack.c.b16 %v3691, %v3673
        %v4502 = vpack.c.b16 %v3692, %v3674
        %v4503 = vpack.c.b16 %v3693, %v3675
        %v4504 = vpack.c.b16 %v3694, %v3676
        %v4505 = vpack.c.b16 %v3695, %v3677
        %v4506 = vpack.c.b16 %v3696, %v3678
        %v4507 = vpack.c.b16 %v3697, %v3679
        %v4508 = vpack.c.b16 %v3698, %v3680
        %v4509 = vpack.c.b16 %v3699, %v3681
        %v4510 = vpack.c.b16 %v3700, %v3682
        %v4511 = vpack.c.b16 %v3701, %v3683
        %v4512 = vpack.c.b16 %v3702, %v3684
        %v4513 = vpack.c.b16 %v3703, %v3685
        %v4514 = vpack.c.b16 %v3704, %v3686
        %v4515 = vpack.c.b16 %v3723, %v3705
        %v4516 = vpack.c.b16 %v3724, %v3706
        %v4517 = vpack.c.b16 %v3725, %v3707
        %v4518 = vpack.c.b16 %v3726, %v3708
        %v4519 = vpack.c.b16 %v3727, %v3709
        %v4520 = vpack.c.b16 %v3728, %v3710
        %v4521 = vpack.c.b16 %v3729, %v3711
        %v4522 = vpack.c.b16 %v3730, %v3712
        %v4523 = vpack.c.b16 %v3731, %v3713
        %v4524 = vpack.c.b16 %v3732, %v3714
        %v4525 = vpack.c.b16 %v3733, %v3715
        %v4526 = vpack.c.b16 %v3734, %v3716
        %v4527 = vpack.c.b16 %v3735, %v3717
        %v4528 = vpack.c.b16 %v3736, %v3718
        %v4529 = vpack.c.b16 %v3737, %v3719
        %v4530 = vpack.c.b16 %v3738, %v3720
        %v4531 = vpack.c.b16 %v3739, %v3721
        %v4532 = vpack.c.b16 %v3740, %v3722
        %v4533 = vpack.c.b16 %v3759, %v3741
        %v4534 = vpack.c.b16 %v3760, %v3742
        %v4535 = vpack.c.b16 %v3761, %v3743
        %v4536 = vpack.c.b16 %v3762, %v3744
        %v4537 = vpack.c.b16 %v3763, %v3745
        %v4538 = vpack.c.b16 %v3764, %v3746
        %v4539 = vpack.c.b16 %v3765, %v3747
        %v4540 = vpack.c.b16 %v3766, %v3748
        %v4541 = vpack.c.b16 %v3767, %v3749
        %v4542 = vpack.c.b16 %v3768, %v3750
        %v4543 = vpack.c.b16 %v3769, %v3751
        %v4544 = vpack.c.b16 %v3770, %v3752
        %v4545 = vpack.c.b16 %v3771, %v3753
        %v4546 = vpack.c.b16 %v3772, %v3754
        %v4547 = vpack.c.b16 %v3773, %v3755
        %v4548 = vpack.c.b16 %v3774, %v3756
        %v4549 = vpack.c.b16 %v3775, %v3757
        %v4550 = vpack.c.b16 %v3776, %v3758
        %v4551 = vpack.c.b16 %v3795, %v3777
        %v4552 = vpack.c.b16 %v3796, %v3778
        %v4553 = vpack.c.b16 %v3797, %v3779
        %v4554 = vpack.c.b16 %v3798, %v3780
        %v4555 = vpack.c.b16 %v3799, %v3781
        %v4556 = vpack.c.b16 %v3800, %v3782
        %v4557 = vpack.c.b16 %v3801, %v3783
        %v4558 = vpack.c.b16 %v3802, %v3784
        %v4559 = vpack.c.b16 %v3803, %v3785
        %v4560 = vpack.c.b16 %v3804, %v3786
        %v4561 = vpack.c.b16 %v3805, %v3787
        %v4562 = vpack.c.b16 %v3806, %v3788
        %v4563 = vpack.c.b16 %v3807, %v3789
        %v4564 = vpack.c.b16 %v3808, %v3790
        %v4565 = vpack.c.b16 %v3809, %v3791
        %v4566 = vpack.c.b16 %v3810, %v3792
        %v4567 = vpack.c.b16 %v3811, %v3793
        %v4568 = vpack.c.b16 %v3812, %v3794
        %v4569 = vpack.c.b16 %v3831, %v3813
        %v4570 = vpack.c.b16 %v3832, %v3814
        %v4571 = vpack.c.b16 %v3833, %v3815
        %v4572 = vpack.c.b16 %v3834, %v3816
        %v4573 = vpack.c.b16 %v3835, %v3817
        %v4574 = vpack.c.b16 %v3836, %v3818
        %v4575 = vpack.c.b16 %v3837, %v3819
        %v4576 = vpack.c.b16 %v3838, %v3820
        %v4577 = vpack.c.b16 %v3839, %v3821
        %v4578 = vpack.c.b16 %v3840, %v3822
        %v4579 = vpack.c.b16 %v3841, %v3823
        %v4580 = vpack.c.b16 %v3842, %v3824
        %v4581 = vpack.c.b16 %v3843, %v3825
        %v4582 = vpack.c.b16 %v3844, %v3826
        %v4583 = vpack.c.b16 %v3845, %v3827
        %v4584 = vpack.c.b16 %v3846, %v3828
        %v4585 = vpack.c.b16 %v3847, %v3829
        %v4586 = vpack.c.b16 %v3848, %v3830
        %v4587 = vpack.c.b16 %v3867, %v3849
        %v4588 = vpack.c.b16 %v3868, %v3850
        %v4589 = vpack.c.b16 %v3869, %v3851
        %v4590 = vpack.c.b16 %v3870, %v3852
        %v4591 = vpack.c.b16 %v3871, %v3853
        %v4592 = vpack.c.b16 %v3872, %v3854
        %v4593 = vpack.c.b16 %v3873, %v3855
        %v4594 = vpack.c.b16 %v3874, %v3856
        %v4595 = vpack.c.b16 %v3875, %v3857
        %v4596 = vpack.c.b16 %v3876, %v3858
        %v4597 = vpack.c.b16 %v3877, %v3859
        %v4598 = vpack.c.b16 %v3878, %v3860
        %v4599 = vpack.c.b16 %v3879, %v3861
        %v4600 = vpack.c.b16 %v3880, %v3862
        %v4601 = vpack.c.b16 %v3881, %v3863
        %v4602 = vpack.c.b16 %v3882, %v3864
        %v4603 = vpack.c.b16 %v3883, %v3865
        %v4604 = vpack.c.b16 %v3884, %v3866
        %v4605 = vpack.c.b16 %v3903, %v3885
        %v4606 = vpack.c.b16 %v3904, %v3886
        %v4607 = vpack.c.b16 %v3905, %v3887
        %v4608 = vpack.c.b16 %v3906, %v3888
        %v4609 = vpack.c.b16 %v3907, %v3889
        %v4610 = vpack.c.b16 %v3908, %v3890
        %v4611 = vpack.c.b16 %v3909, %v3891
        %v4612 = vpack.c.b16 %v3910, %v3892
        %v4613 = vpack.c.b16 %v3911, %v3893
        %v4614 = vpack.c.b16 %v3912, %v3894
        %v4615 = vpack.c.b16 %v3913, %v3895
        %v4616 = vpack.c.b16 %v3914, %v3896
        %v4617 = vpack.c.b16 %v3915, %v3897
        %v4618 = vpack.c.b16 %v3916, %v3898
        %v4619 = vpack.c.b16 %v3917, %v3899
        %v4620 = vpack.c.b16 %v3918, %v3900
        %v4621 = vpack.c.b16 %v3919, %v3901
        %v4622 = vpack.c.b16 %v3920, %v3902
        %v4623 = vpack.c.b16 %v3939, %v3921
        %v4624 = vpack.c.b16 %v3940, %v3922
        %v4625 = vpack.c.b16 %v3941, %v3923
        %v4626 = vpack.c.b16 %v3942, %v3924
        %v4627 = vpack.c.b16 %v3943, %v3925
        %v4628 = vpack.c.b16 %v3944, %v3926
        %v4629 = vpack.c.b16 %v3945, %v3927
        %v4630 = vpack.c.b16 %v3946, %v3928
        %v4631 = vpack.c.b16 %v3947, %v3929
        %v4632 = vpack.c.b16 %v3948, %v3930
        %v4633 = vpack.c.b16 %v3949, %v3931
        %v4634 = vpack.c.b16 %v3950, %v3932
        %v4635 = vpack.c.b16 %v3951, %v3933
        %v4636 = vpack.c.b16 %v3952, %v3934
        %v4637 = vpack.c.b16 %v3953, %v3935
        %v4638 = vpack.c.b16 %v3954, %v3936
        %v4639 = vpack.c.b16 %v3955, %v3937
        %v4640 = vpack.c.b16 %v3956, %v3938
        %v4641 = vpack.c.b16 %v3975, %v3957
        %v4642 = vpack.c.b16 %v3976, %v3958
        %v4643 = vpack.c.b16 %v3977, %v3959
        %v4644 = vpack.c.b16 %v3978, %v3960
        %v4645 = vpack.c.b16 %v3979, %v3961
        %v4646 = vpack.c.b16 %v3980, %v3962
        %v4647 = vpack.c.b16 %v3981, %v3963
        %v4648 = vpack.c.b16 %v3982, %v3964
        %v4649 = vpack.c.b16 %v3983, %v3965
        %v4650 = vpack.c.b16 %v3984, %v3966
        %v4651 = vpack.c.b16 %v3985, %v3967
        %v4652 = vpack.c.b16 %v3986, %v3968
        %v4653 = vpack.c.b16 %v3987, %v3969
        %v4654 = vpack.c.b16 %v3988, %v3970
        %v4655 = vpack.c.b16 %v3989, %v3971
        %v4656 = vpack.c.b16 %v3990, %v3972
        %v4657 = vpack.c.b16 %v3991, %v3973
        %v4658 = vpack.c.b16 %v3992, %v3974
        %v4659 = vpack.c.b16 %v4011, %v3993
        %v4660 = vpack.c.b16 %v4012, %v3994
        %v4661 = vpack.c.b16 %v4013, %v3995
        %v4662 = vpack.c.b16 %v4014, %v3996
        %v4663 = vpack.c.b16 %v4015, %v3997
        %v4664 = vpack.c.b16 %v4016, %v3998
        %v4665 = vpack.c.b16 %v4017, %v3999
        %v4666 = vpack.c.b16 %v4018, %v4000
        %v4667 = vpack.c.b16 %v4019, %v4001
        %v4668 = vpack.c.b16 %v4020, %v4002
        %v4669 = vpack.c.b16 %v4021, %v4003
        %v4670 = vpack.c.b16 %v4022, %v4004
        %v4671 = vpack.c.b16 %v4023, %v4005
        %v4672 = vpack.c.b16 %v4024, %v4006
        %v4673 = vpack.c.b16 %v4025, %v4007
        %v4674 = vpack.c.b16 %v4026, %v4008
        %v4675 = vpack.c.b16 %v4027, %v4009
        %v4676 = vpack.c.b16 %v4028, %v4010
        %v4677 = vpack.c.b16 %v4047, %v4029
        %v4678 = vpack.c.b16 %v4048, %v4030
        %v4679 = vpack.c.b16 %v4049, %v4031
        %v4680 = vpack.c.b16 %v4050, %v4032
        %v4681 = vpack.c.b16 %v4051, %v4033
        %v4682 = vpack.c.b16 %v4052, %v4034
        %v4683 = vpack.c.b16 %v4053, %v4035
        %v4684 = vpack.c.b16 %v4054, %v4036
        %v4685 = vpack.c.b16 %v4055, %v4037
        %v4686 = vpack.c.b16 %v4056, %v4038
        %v4687 = vpack.c.b16 %v4057, %v4039
        %v4688 = vpack.c.b16 %v4058, %v4040
        %v4689 = vpack.c.b16 %v4059, %v4041
        %v4690 = vpack.c.b16 %v4060, %v4042
        %v4691 = vpack.c.b16 %v4061, %v4043
        %v4692 = vpack.c.b16 %v4062, %v4044
        %v4693 = vpack.c.b16 %v4063, %v4045
        %v4694 = vpack.c.b16 %v4064, %v4046
        %v4695 = vpack.c.b16 %v4083, %v4065
        %v4696 = vpack.c.b16 %v4084, %v4066
        %v4697 = vpack.c.b16 %v4085, %v4067
        %v4698 = vpack.c.b16 %v4086, %v4068
        %v4699 = vpack.c.b16 %v4087, %v4069
        %v4700 = vpack.c.b16 %v4088, %v4070
        %v4701 = vpack.c.b16 %v4089, %v4071
        %v4702 = vpack.c.b16 %v4090, %v4072
        %v4703 = vpack.c.b16 %v4091, %v4073
        %v4704 = vpack.c.b16 %v4092, %v4074
        %v4705 = vpack.c.b16 %v4093, %v4075
        %v4706 = vpack.c.b16 %v4094, %v4076
        %v4707 = vpack.c.b16 %v4095, %v4077
        %v4708 = vpack.c.b16 %v4096, %v4078
        %v4709 = vpack.c.b16 %v4097, %v4079
        %v4710 = vpack.c.b16 %v4098, %v4080
        %v4711 = vpack.c.b16 %v4099, %v4081
        %v4712 = vpack.c.b16 %v4100, %v4082
        %v4713 = vpack.c.b16 %v4119, %v4101
        %v4714 = vpack.c.b16 %v4120, %v4102
        %v4715 = vpack.c.b16 %v4121, %v4103
        %v4716 = vpack.c.b16 %v4122, %v4104
        %v4717 = vpack.c.b16 %v4123, %v4105
        %v4718 = vpack.c.b16 %v4124, %v4106
        %v4719 = vpack.c.b16 %v4125, %v4107
        %v4720 = vpack.c.b16 %v4126, %v4108
        %v4721 = vpack.c.b16 %v4127, %v4109
        %v4722 = vpack.c.b16 %v4128, %v4110
        %v4723 = vpack.c.b16 %v4129, %v4111
        %v4724 = vpack.c.b16 %v4130, %v4112
        %v4725 = vpack.c.b16 %v4131, %v4113
        %v4726 = vpack.c.b16 %v4132, %v4114
        %v4727 = vpack.c.b16 %v4133, %v4115
        %v4728 = vpack.c.b16 %v4134, %v4116
        %v4729 = vpack.c.b16 %v4135, %v4117
        %v4730 = vpack.c.b16 %v4136, %v4118
        %v4731 = vpack.c.b16 %v4155, %v4137
        %v4732 = vpack.c.b16 %v4156, %v4138
        %v4733 = vpack.c.b16 %v4157, %v4139
        %v4734 = vpack.c.b16 %v4158, %v4140
        %v4735 = vpack.c.b16 %v4159, %v4141
        %v4736 = vpack.c.b16 %v4160, %v4142
        %v4737 = vpack.c.b16 %v4161, %v4143
        %v4738 = vpack.c.b16 %v4162, %v4144
        %v4739 = vpack.c.b16 %v4163, %v4145
        %v4740 = vpack.c.b16 %v4164, %v4146
        %v4741 = vpack.c.b16 %v4165, %v4147
        %v4742 = vpack.c.b16 %v4166, %v4148
        %v4743 = vpack.c.b16 %v4167, %v4149
        %v4744 = vpack.c.b16 %v4168, %v4150
        %v4745 = vpack.c.b16 %v4169, %v4151
        %v4746 = vpack.c.b16 %v4170, %v4152
        %v4747 = vpack.c.b16 %v4171, %v4153
        %v4748 = vpack.c.b16 %v4172, %v4154
        %v5613 = vunpack.c.l.b16 %v2157
        %v5614 = vunpack.c.l.b16 %v2158
        %v5615 = vunpack.c.l.b16 %v2159
        %v5616 = vunpack.c.l.b16 %v2160
        %v5617 = vunpack.c.l.b16 %v2161
        %v5618 = vunpack.c.l.b16 %v2162
        %v5619 = vunpack.c.l.b16 %v2163
        %v5620 = vunpack.c.l.b16 %v2164
        %v5621 = vunpack.c.l.b16 %v2165
        %v5622 = vunpack.c.l.b16 %v2166
        %v5623 = vunpack.c.l.b16 %v2167
        %v5624 = vunpack.c.l.b16 %v2168
        %v5625 = vunpack.c.l.b16 %v2169
        %v5626 = vunpack.c.l.b16 %v2170
        %v5627 = vunpack.c.l.b16 %v2171
        %v5628 = vunpack.c.l.b16 %v2172
        %v5629 = vunpack.c.l.b16 %v2173
        %v5630 = vunpack.c.l.b16 %v2174
        %v5631 = vunpack.c.l.b16 %v2175
        %v5632 = vunpack.c.l.b16 %v2176
        %v5633 = vunpack.c.l.b16 %v2177
        %v5634 = vunpack.c.l.b16 %v2178
        %v5635 = vunpack.c.l.b16 %v2179
        %v5636 = vunpack.c.l.b16 %v2180
        %v5637 = vunpack.c.l.b16 %v2181
        %v5638 = vunpack.c.l.b16 %v2182
        %v5639 = vunpack.c.l.b16 %v2183
        %v5640 = vunpack.c.l.b16 %v2184
        %v5641 = vunpack.c.l.b16 %v2185
        %v5642 = vunpack.c.l.b16 %v2186
        %v5643 = vunpack.c.l.b16 %v2187
        %v5644 = vunpack.c.l.b16 %v2188
        %v5645 = vunpack.c.l.b16 %v2189
        %v5646 = vunpack.c.l.b16 %v2190
        %v5647 = vunpack.c.l.b16 %v2191
        %v5648 = vunpack.c.l.b16 %v2192
        %v5649 = vunpack.c.l.b16 %v2193
        %v5650 = vunpack.c.l.b16 %v2194
        %v5651 = vunpack.c.l.b16 %v2195
        %v5652 = vunpack.c.l.b16 %v2196
        %v5653 = vunpack.c.l.b16 %v2197
        %v5654 = vunpack.c.l.b16 %v2198
        %v5655 = vunpack.c.l.b16 %v2199
        %v5656 = vunpack.c.l.b16 %v2200
        %v5657 = vunpack.c.l.b16 %v2201
        %v5658 = vunpack.c.l.b16 %v2202
        %v5659 = vunpack.c.l.b16 %v2203
        %v5660 = vunpack.c.l.b16 %v2204
        %v5661 = vunpack.c.l.b16 %v2205
        %v5662 = vunpack.c.l.b16 %v2206
        %v5663 = vunpack.c.l.b16 %v2207
        %v5664 = vunpack.c.l.b16 %v2208
        %v5665 = vunpack.c.l.b16 %v2209
        %v5666 = vunpack.c.l.b16 %v2210
        %v5667 = vunpack.c.l.b16 %v2211
        %v5668 = vunpack.c.l.b16 %v2212
        %v5669 = vunpack.c.l.b16 %v2213
        %v5670 = vunpack.c.l.b16 %v2214
        %v5671 = vunpack.c.l.b16 %v2215
        %v5672 = vunpack.c.l.b16 %v2216
        %v5673 = vunpack.c.l.b16 %v2217
        %v5674 = vunpack.c.l.b16 %v2218
        %v5675 = vunpack.c.l.b16 %v2219
        %v5676 = vunpack.c.l.b16 %v2220
        %v5677 = vunpack.c.l.b16 %v2221
        %v5678 = vunpack.c.l.b16 %v2222
        %v5679 = vunpack.c.l.b16 %v2223
        %v5680 = vunpack.c.l.b16 %v2224
        %v5681 = vunpack.c.l.b16 %v2225
        %v5682 = vunpack.c.l.b16 %v2226
        %v5683 = vunpack.c.l.b16 %v2227
        %v5684 = vunpack.c.l.b16 %v2228
        %v5685 = vunpack.c.l.b16 %v2229
        %v5686 = vunpack.c.l.b16 %v2230
        %v5687 = vunpack.c.l.b16 %v2231
        %v5688 = vunpack.c.l.b16 %v2232
        %v5689 = vunpack.c.l.b16 %v2233
        %v5690 = vunpack.c.l.b16 %v2234
        %v5691 = vunpack.c.l.b16 %v2235
        %v5692 = vunpack.c.l.b16 %v2236
        %v5693 = vunpack.c.l.b16 %v2237
        %v5694 = vunpack.c.l.b16 %v2238
        %v5695 = vunpack.c.l.b16 %v2239
        %v5696 = vunpack.c.l.b16 %v2240
        %v5697 = vunpack.c.l.b16 %v2241
        %v5698 = vunpack.c.l.b16 %v2242
        %v5699 = vunpack.c.l.b16 %v2243
        %v5700 = vunpack.c.l.b16 %v2244
        %v5701 = vunpack.c.l.b16 %v2245
        %v5702 = vunpack.c.l.b16 %v2246
        %v5703 = vunpack.c.l.b16 %v2247
        %v5704 = vunpack.c.l.b16 %v2248
        %v5705 = vunpack.c.l.b16 %v2249
        %v5706 = vunpack.c.l.b16 %v2250
        %v5707 = vunpack.c.l.b16 %v2251
        %v5708 = vunpack.c.l.b16 %v2252
        %v5709 = vunpack.c.l.b16 %v2253
        %v5710 = vunpack.c.l.b16 %v2254
        %v5711 = vunpack.c.l.b16 %v2255
        %v5712 = vunpack.c.l.b16 %v2256
        %v5713 = vunpack.c.l.b16 %v2257
        %v5714 = vunpack.c.l.b16 %v2258
        %v5715 = vunpack.c.l.b16 %v2259
        %v5716 = vunpack.c.l.b16 %v2260
        %v5717 = vunpack.c.l.b16 %v2261
        %v5718 = vunpack.c.l.b16 %v2262
        %v5719 = vunpack.c.l.b16 %v2263
        %v5720 = vunpack.c.l.b16 %v2264
        %v5721 = vunpack.c.l.b16 %v2265
        %v5722 = vunpack.c.l.b16 %v2266
        %v5723 = vunpack.c.l.b16 %v2267
        %v5724 = vunpack.c.l.b16 %v2268
        %v5725 = vunpack.c.l.b16 %v2269
        %v5726 = vunpack.c.l.b16 %v2270
        %v5727 = vunpack.c.l.b16 %v2271
        %v5728 = vunpack.c.l.b16 %v2272
        %v5729 = vunpack.c.l.b16 %v2273
        %v5730 = vunpack.c.l.b16 %v2274
        %v5731 = vunpack.c.l.b16 %v2275
        %v5732 = vunpack.c.l.b16 %v2276
        %v5733 = vunpack.c.l.b16 %v2277
        %v5734 = vunpack.c.l.b16 %v2278
        %v5735 = vunpack.c.l.b16 %v2279
        %v5736 = vunpack.c.l.b16 %v2280
        %v5737 = vunpack.c.l.b16 %v2281
        %v5738 = vunpack.c.l.b16 %v2282
        %v5739 = vunpack.c.l.b16 %v2283
        %v5740 = vunpack.c.l.b16 %v2284
        %v5741 = vunpack.c.l.b16 %v2285
        %v5742 = vunpack.c.l.b16 %v2286
        %v5743 = vunpack.c.l.b16 %v2287
        %v5744 = vunpack.c.l.b16 %v2288
        %v5745 = vunpack.c.l.b16 %v2289
        %v5746 = vunpack.c.l.b16 %v2290
        %v5747 = vunpack.c.l.b16 %v2291
        %v5748 = vunpack.c.l.b16 %v2292
        %v5749 = vunpack.c.l.b16 %v2293
        %v5750 = vunpack.c.l.b16 %v2294
        %v5751 = vunpack.c.l.b16 %v2295
        %v5752 = vunpack.c.l.b16 %v2296
        %v5753 = vunpack.c.l.b16 %v2297
        %v5754 = vunpack.c.l.b16 %v2298
        %v5755 = vunpack.c.l.b16 %v2299
        %v5756 = vunpack.c.l.b16 %v2300
        %v5757 = vunpack.c.l.b16 %v2301
        %v5758 = vunpack.c.l.b16 %v2302
        %v5759 = vunpack.c.l.b16 %v2303
        %v5760 = vunpack.c.l.b16 %v2304
        %v5761 = vunpack.c.l.b16 %v2305
        %v5762 = vunpack.c.l.b16 %v2306
        %v5763 = vunpack.c.l.b16 %v2307
        %v5764 = vunpack.c.l.b16 %v2308
        %v5765 = vunpack.c.l.b16 %v2309
        %v5766 = vunpack.c.l.b16 %v2310
        %v5767 = vunpack.c.l.b16 %v2311
        %v5768 = vunpack.c.l.b16 %v2312
        %v5769 = vunpack.c.l.b16 %v2313
        %v5770 = vunpack.c.l.b16 %v2314
        %v5771 = vunpack.c.l.b16 %v2315
        %v5772 = vunpack.c.l.b16 %v2316
        %v5773 = vunpack.c.l.b16 %v2317
        %v5774 = vunpack.c.l.b16 %v2318
        %v5775 = vunpack.c.l.b16 %v2319
        %v5776 = vunpack.c.l.b16 %v2320
        %v5777 = vunpack.c.l.b16 %v2321
        %v5778 = vunpack.c.l.b16 %v2322
        %v5779 = vunpack.c.l.b16 %v2323
        %v5780 = vunpack.c.l.b16 %v2324
        %v5781 = vunpack.c.l.b16 %v2325
        %v5782 = vunpack.c.l.b16 %v2326
        %v5783 = vunpack.c.l.b16 %v2327
        %v5784 = vunpack.c.l.b16 %v2328
        %v5785 = vunpack.c.l.b16 %v2329
        %v5786 = vunpack.c.l.b16 %v2330
        %v5787 = vunpack.c.l.b16 %v2331
        %v5788 = vunpack.c.l.b16 %v2332
        %v5789 = vunpack.c.l.b16 %v2333
        %v5790 = vunpack.c.l.b16 %v2334
        %v5791 = vunpack.c.l.b16 %v2335
        %v5792 = vunpack.c.l.b16 %v2336
        %v5793 = vunpack.c.l.b16 %v2337
        %v5794 = vunpack.c.l.b16 %v2338
        %v5795 = vunpack.c.l.b16 %v2339
        %v5796 = vunpack.c.l.b16 %v2340
        %v5797 = vunpack.c.l.b16 %v2341
        %v5798 = vunpack.c.l.b16 %v2342
        %v5799 = vunpack.c.l.b16 %v2343
        %v5800 = vunpack.c.l.b16 %v2344
        %v5801 = vunpack.c.l.b16 %v2345
        %v5802 = vunpack.c.l.b16 %v2346
        %v5803 = vunpack.c.l.b16 %v2347
        %v5804 = vunpack.c.l.b16 %v2348
        %v5805 = vunpack.c.l.b16 %v2349
        %v5806 = vunpack.c.l.b16 %v2350
        %v5807 = vunpack.c.l.b16 %v2351
        %v5808 = vunpack.c.l.b16 %v2352
        %v5809 = vunpack.c.l.b16 %v2353
        %v5810 = vunpack.c.l.b16 %v2354
        %v5811 = vunpack.c.l.b16 %v2355
        %v5812 = vunpack.c.l.b16 %v2356
        %v5813 = vunpack.c.l.b16 %v2357
        %v5814 = vunpack.c.l.b16 %v2358
        %v5815 = vunpack.c.l.b16 %v2359
        %v5816 = vunpack.c.l.b16 %v2360
        %v5817 = vunpack.c.l.b16 %v2361
        %v5818 = vunpack.c.l.b16 %v2362
        %v5819 = vunpack.c.l.b16 %v2363
        %v5820 = vunpack.c.l.b16 %v2364
        %v5821 = vunpack.c.l.b16 %v2365
        %v5822 = vunpack.c.l.b16 %v2366
        %v5823 = vunpack.c.l.b16 %v2367
        %v5824 = vunpack.c.l.b16 %v2368
        %v5825 = vunpack.c.l.b16 %v2369
        %v5826 = vunpack.c.l.b16 %v2370
        %v5827 = vunpack.c.l.b16 %v2371
        %v5828 = vunpack.c.l.b16 %v2372
        %v5829 = vunpack.c.l.b16 %v2373
        %v5830 = vunpack.c.l.b16 %v2374
        %v5831 = vunpack.c.l.b16 %v2375
        %v5832 = vunpack.c.l.b16 %v2376
        %v5833 = vunpack.c.l.b16 %v2377
        %v5834 = vunpack.c.l.b16 %v2378
        %v5835 = vunpack.c.l.b16 %v2379
        %v5836 = vunpack.c.l.b16 %v2380
        %v5837 = vunpack.c.l.b16 %v2381
        %v5838 = vunpack.c.l.b16 %v2382
        %v5839 = vunpack.c.l.b16 %v2383
        %v5840 = vunpack.c.l.b16 %v2384
        %v5841 = vunpack.c.l.b16 %v2385
        %v5842 = vunpack.c.l.b16 %v2386
        %v5843 = vunpack.c.l.b16 %v2387
        %v5844 = vunpack.c.l.b16 %v2388
        %v5845 = vunpack.c.l.b16 %v2389
        %v5846 = vunpack.c.l.b16 %v2390
        %v5847 = vunpack.c.l.b16 %v2391
        %v5848 = vunpack.c.l.b16 %v2392
        %v5849 = vunpack.c.l.b16 %v2393
        %v5850 = vunpack.c.l.b16 %v2394
        %v5851 = vunpack.c.l.b16 %v2395
        %v5852 = vunpack.c.l.b16 %v2396
        %v5853 = vunpack.c.l.b16 %v2397
        %v5854 = vunpack.c.l.b16 %v2398
        %v5855 = vunpack.c.l.b16 %v2399
        %v5856 = vunpack.c.l.b16 %v2400
        %v5857 = vunpack.c.l.b16 %v2401
        %v5858 = vunpack.c.l.b16 %v2402
        %v5859 = vunpack.c.l.b16 %v2403
        %v5860 = vunpack.c.l.b16 %v2404
        %v5861 = vunpack.c.l.b16 %v2405
        %v5862 = vunpack.c.l.b16 %v2406
        %v5863 = vunpack.c.l.b16 %v2407
        %v5864 = vunpack.c.l.b16 %v2408
        %v5865 = vunpack.c.l.b16 %v2409
        %v5866 = vunpack.c.l.b16 %v2410
        %v5867 = vunpack.c.l.b16 %v2411
        %v5868 = vunpack.c.l.b16 %v2412
        %v5869 = vunpack.c.l.b16 %v2413
        %v5870 = vunpack.c.l.b16 %v2414
        %v5871 = vunpack.c.l.b16 %v2415
        %v5872 = vunpack.c.l.b16 %v2416
        %v5873 = vunpack.c.l.b16 %v2417
        %v5874 = vunpack.c.l.b16 %v2418
        %v5875 = vunpack.c.l.b16 %v2419
        %v5876 = vunpack.c.l.b16 %v2420
        %v5877 = vunpack.c.l.b16 %v2421
        %v5878 = vunpack.c.l.b16 %v2422
        %v5879 = vunpack.c.l.b16 %v2423
        %v5880 = vunpack.c.l.b16 %v2424
        %v5881 = vunpack.c.l.b16 %v2425
        %v5882 = vunpack.c.l.b16 %v2426
        %v5883 = vunpack.c.l.b16 %v2427
        %v5884 = vunpack.c.l.b16 %v2428
        %v5885 = vunpack.c.l.b16 %v2429
        %v5886 = vunpack.c.l.b16 %v2430
        %v5887 = vunpack.c.l.b16 %v2431
        %v5888 = vunpack.c.l.b16 %v2432
        %v5889 = vunpack.c.l.b16 %v2433
        %v5890 = vunpack.c.l.b16 %v2434
        %v5891 = vunpack.c.l.b16 %v2435
        %v5892 = vunpack.c.l.b16 %v2436
        %v5893 = vunpack.c.l.b16 %v2437
        %v5894 = vunpack.c.l.b16 %v2438
        %v5895 = vunpack.c.l.b16 %v2439
        %v5896 = vunpack.c.l.b16 %v2440
        %v5897 = vunpack.c.l.b16 %v2441
        %v5898 = vunpack.c.l.b16 %v2442
        %v5899 = vunpack.c.l.b16 %v2443
        %v5900 = vunpack.c.l.b16 %v2444
        %v5901 = vpack.c.b16 %v5614, %v5613
        %v5902 = vpack.c.b16 %v5616, %v5615
        %v5903 = vpack.c.b16 %v5618, %v5617
        %v5904 = vpack.c.b16 %v5620, %v5619
        %v5905 = vpack.c.b16 %v5622, %v5621
        %v5906 = vpack.c.b16 %v5624, %v5623
        %v5907 = vpack.c.b16 %v5626, %v5625
        %v5908 = vpack.c.b16 %v5628, %v5627
        %v5909 = vpack.c.b16 %v5630, %v5629
        %v5910 = vpack.c.b16 %v5632, %v5631
        %v5911 = vpack.c.b16 %v5634, %v5633
        %v5912 = vpack.c.b16 %v5636, %v5635
        %v5913 = vpack.c.b16 %v5638, %v5637
        %v5914 = vpack.c.b16 %v5640, %v5639
        %v5915 = vpack.c.b16 %v5642, %v5641
        %v5916 = vpack.c.b16 %v5644, %v5643
        %v5917 = vpack.c.b16 %v5646, %v5645
        %v5918 = vpack.c.b16 %v5648, %v5647
        %v5919 = vpack.c.b16 %v5650, %v5649
        %v5920 = vpack.c.b16 %v5652, %v5651
        %v5921 = vpack.c.b16 %v5654, %v5653
        %v5922 = vpack.c.b16 %v5656, %v5655
        %v5923 = vpack.c.b16 %v5658, %v5657
        %v5924 = vpack.c.b16 %v5660, %v5659
        %v5925 = vpack.c.b16 %v5662, %v5661
        %v5926 = vpack.c.b16 %v5664, %v5663
        %v5927 = vpack.c.b16 %v5666, %v5665
        %v5928 = vpack.c.b16 %v5668, %v5667
        %v5929 = vpack.c.b16 %v5670, %v5669
        %v5930 = vpack.c.b16 %v5672, %v5671
        %v5931 = vpack.c.b16 %v5674, %v5673
        %v5932 = vpack.c.b16 %v5676, %v5675
        %v5933 = vpack.c.b16 %v5678, %v5677
        %v5934 = vpack.c.b16 %v5680, %v5679
        %v5935 = vpack.c.b16 %v5682, %v5681
        %v5936 = vpack.c.b16 %v5684, %v5683
        %v5937 = vpack.c.b16 %v5686, %v5685
        %v5938 = vpack.c.b16 %v5688, %v5687
        %v5939 = vpack.c.b16 %v5690, %v5689
        %v5940 = vpack.c.b16 %v5692, %v5691
        %v5941 = vpack.c.b16 %v5694, %v5693
        %v5942 = vpack.c.b16 %v5696, %v5695
        %v5943 = vpack.c.b16 %v5698, %v5697
        %v5944 = vpack.c.b16 %v5700, %v5699
        %v5945 = vpack.c.b16 %v5702, %v5701
        %v5946 = vpack.c.b16 %v5704, %v5703
        %v5947 = vpack.c.b16 %v5706, %v5705
        %v5948 = vpack.c.b16 %v5708, %v5707
        %v5949 = vpack.c.b16 %v5710, %v5709
        %v5950 = vpack.c.b16 %v5712, %v5711
        %v5951 = vpack.c.b16 %v5714, %v5713
        %v5952 = vpack.c.b16 %v5716, %v5715
        %v5953 = vpack.c.b16 %v5718, %v5717
        %v5954 = vpack.c.b16 %v5720, %v5719
        %v5955 = vpack.c.b16 %v5722, %v5721
        %v5956 = vpack.c.b16 %v5724, %v5723
        %v5957 = vpack.c.b16 %v5726, %v5725
        %v5958 = vpack.c.b16 %v5728, %v5727
        %v5959 = vpack.c.b16 %v5730, %v5729
        %v5960 = vpack.c.b16 %v5732, %v5731
        %v5961 = vpack.c.b16 %v5734, %v5733
        %v5962 = vpack.c.b16 %v5736, %v5735
        %v5963 = vpack.c.b16 %v5738, %v5737
        %v5964 = vpack.c.b16 %v5740, %v5739
        %v5965 = vpack.c.b16 %v5742, %v5741
        %v5966 = vpack.c.b16 %v5744, %v5743
        %v5967 = vpack.c.b16 %v5746, %v5745
        %v5968 = vpack.c.b16 %v5748, %v5747
        %v5969 = vpack.c.b16 %v5750, %v5749
        %v5970 = vpack.c.b16 %v5752, %v5751
        %v5971 = vpack.c.b16 %v5754, %v5753
        %v5972 = vpack.c.b16 %v5756, %v5755
        %v5973 = vpack.c.b16 %v5758, %v5757
        %v5974 = vpack.c.b16 %v5760, %v5759
        %v5975 = vpack.c.b16 %v5762, %v5761
        %v5976 = vpack.c.b16 %v5764, %v5763
        %v5977 = vpack.c.b16 %v5766, %v5765
        %v5978 = vpack.c.b16 %v5768, %v5767
        %v5979 = vpack.c.b16 %v5770, %v5769
        %v5980 = vpack.c.b16 %v5772, %v5771
        %v5981 = vpack.c.b16 %v5774, %v5773
        %v5982 = vpack.c.b16 %v5776, %v5775
        %v5983 = vpack.c.b16 %v5778, %v5777
        %v5984 = vpack.c.b16 %v5780, %v5779
        %v5985 = vpack.c.b16 %v5782, %v5781
        %v5986 = vpack.c.b16 %v5784, %v5783
        %v5987 = vpack.c.b16 %v5786, %v5785
        %v5988 = vpack.c.b16 %v5788, %v5787
        %v5989 = vpack.c.b16 %v5790, %v5789
        %v5990 = vpack.c.b16 %v5792, %v5791
        %v5991 = vpack.c.b16 %v5794, %v5793
        %v5992 = vpack.c.b16 %v5796, %v5795
        %v5993 = vpack.c.b16 %v5798, %v5797
        %v5994 = vpack.c.b16 %v5800, %v5799
        %v5995 = vpack.c.b16 %v5802, %v5801
        %v5996 = vpack.c.b16 %v5804, %v5803
        %v5997 = vpack.c.b16 %v5806, %v5805
        %v5998 = vpack.c.b16 %v5808, %v5807
        %v5999 = vpack.c.b16 %v5810, %v5809
        %v6000 = vpack.c.b16 %v5812, %v5811
        %v6001 = vpack.c.b16 %v5814, %v5813
        %v6002 = vpack.c.b16 %v5816, %v5815
        %v6003 = vpack.c.b16 %v5818, %v5817
        %v6004 = vpack.c.b16 %v5820, %v5819
        %v6005 = vpack.c.b16 %v5822, %v5821
        %v6006 = vpack.c.b16 %v5824, %v5823
        %v6007 = vpack.c.b16 %v5826, %v5825
        %v6008 = vpack.c.b16 %v5828, %v5827
        %v6009 = vpack.c.b16 %v5830, %v5829
        %v6010 = vpack.c.b16 %v5832, %v5831
        %v6011 = vpack.c.b16 %v5834, %v5833
        %v6012 = vpack.c.b16 %v5836, %v5835
        %v6013 = vpack.c.b16 %v5838, %v5837
        %v6014 = vpack.c.b16 %v5840, %v5839
        %v6015 = vpack.c.b16 %v5842, %v5841
        %v6016 = vpack.c.b16 %v5844, %v5843
        %v6017 = vpack.c.b16 %v5846, %v5845
        %v6018 = vpack.c.b16 %v5848, %v5847
        %v6019 = vpack.c.b16 %v5850, %v5849
        %v6020 = vpack.c.b16 %v5852, %v5851
        %v6021 = vpack.c.b16 %v5854, %v5853
        %v6022 = vpack.c.b16 %v5856, %v5855
        %v6023 = vpack.c.b16 %v5858, %v5857
        %v6024 = vpack.c.b16 %v5860, %v5859
        %v6025 = vpack.c.b16 %v5862, %v5861
        %v6026 = vpack.c.b16 %v5864, %v5863
        %v6027 = vpack.c.b16 %v5866, %v5865
        %v6028 = vpack.c.b16 %v5868, %v5867
        %v6029 = vpack.c.b16 %v5870, %v5869
        %v6030 = vpack.c.b16 %v5872, %v5871
        %v6031 = vpack.c.b16 %v5874, %v5873
        %v6032 = vpack.c.b16 %v5876, %v5875
        %v6033 = vpack.c.b16 %v5878, %v5877
        %v6034 = vpack.c.b16 %v5880, %v5879
        %v6035 = vpack.c.b16 %v5882, %v5881
        %v6036 = vpack.c.b16 %v5884, %v5883
        %v6037 = vpack.c.b16 %v5886, %v5885
        %v6038 = vpack.c.b16 %v5888, %v5887
        %v6039 = vpack.c.b16 %v5890, %v5889
        %v6040 = vpack.c.b16 %v5892, %v5891
        %v6041 = vpack.c.b16 %v5894, %v5893
        %v6042 = vpack.c.b16 %v5896, %v5895
        %v6043 = vpack.c.b16 %v5898, %v5897
        %v6044 = vpack.c.b16 %v5900, %v5899
        %6189 = vmatpush.bf16.msra.mxu0 %v5908
        %6190 = vmatpush.bf16.msra.mxu0 %v5907
        %6191 = vmatpush.bf16.msra.mxu0 %v5906
        %6192 = vmatpush.bf16.msra.mxu0 %v5905
        %6193 = vmatpush.bf16.msra.mxu0 %v5904
        %6194 = vmatpush.bf16.msra.mxu0 %v5903
        %6195 = vmatpush.bf16.msra.mxu0 %v5902
        %6196 = vmatpush.bf16.msra.mxu0 %v5901
        %6197 = vmatmul.bf16.gmra.mxu0 %v4173
        %v6198 = vpop.f32.mrf.mxu0
        %v6199 = vadd.f32 0.0, %v6198
        %v6200 = vpop.f32.mrf.mxu0
        %v6201 = vadd.f32 0.0, %v6200
        %6202 = vmatmul.bf16.gmra.mxu0 %v4191
        %v6203 = vpop.f32.mrf.mxu0
        %v6204 = vadd.f32 0.0, %v6203
        %v6205 = vpop.f32.mrf.mxu0
        %v6206 = vadd.f32 0.0, %v6205
        %6207 = vmatmul.bf16.gmra.mxu0 %v4209
        %v6208 = vpop.f32.mrf.mxu0
        %v6209 = vadd.f32 0.0, %v6208
        %v6210 = vpop.f32.mrf.mxu0
        %v6211 = vadd.f32 0.0, %v6210
        %6212 = vmatmul.bf16.gmra.mxu0 %v4227
        %v6213 = vpop.f32.mrf.mxu0
        %v6214 = vadd.f32 0.0, %v6213
        %v6215 = vpop.f32.mrf.mxu0
        %v6216 = vadd.f32 0.0, %v6215
        %6217 = vmatmul.bf16.gmra.mxu0 %v4245
        %v6218 = vpop.f32.mrf.mxu0
        %v6219 = vadd.f32 0.0, %v6218
        %v6220 = vpop.f32.mrf.mxu0
        %v6221 = vadd.f32 0.0, %v6220
        %6222 = vmatmul.bf16.gmra.mxu0 %v4263
        %v6223 = vpop.f32.mrf.mxu0
        %v6224 = vadd.f32 0.0, %v6223
        %v6225 = vpop.f32.mrf.mxu0
        %v6226 = vadd.f32 0.0, %v6225
        %6227 = vmatmul.bf16.gmra.mxu0 %v4281
        %v6228 = vpop.f32.mrf.mxu0
        %v6229 = vadd.f32 0.0, %v6228
        %v6230 = vpop.f32.mrf.mxu0
        %v6231 = vadd.f32 0.0, %v6230
        %6232 = vmatmul.bf16.gmra.mxu0 %v4299
        %v6233 = vpop.f32.mrf.mxu0
        %v6234 = vadd.f32 0.0, %v6233
        %v6235 = vpop.f32.mrf.mxu0
        %v6236 = vadd.f32 0.0, %v6235
        %6237 = vmatmul.bf16.gmra.mxu0 %v4317
        %v6238 = vpop.f32.mrf.mxu0
        %v6239 = vadd.f32 0.0, %v6238
        %v6240 = vpop.f32.mrf.mxu0
        %v6241 = vadd.f32 0.0, %v6240
        %6242 = vmatmul.bf16.gmra.mxu0 %v4335
        %v6243 = vpop.f32.mrf.mxu0
        %v6244 = vadd.f32 0.0, %v6243
        %v6245 = vpop.f32.mrf.mxu0
        %v6246 = vadd.f32 0.0, %v6245
        %6247 = vmatmul.bf16.gmra.mxu0 %v4353
        %v6248 = vpop.f32.mrf.mxu0
        %v6249 = vadd.f32 0.0, %v6248
        %v6250 = vpop.f32.mrf.mxu0
        %v6251 = vadd.f32 0.0, %v6250
        %6252 = vmatmul.bf16.gmra.mxu0 %v4371
        %v6253 = vpop.f32.mrf.mxu0
        %v6254 = vadd.f32 0.0, %v6253
        %v6255 = vpop.f32.mrf.mxu0
        %v6256 = vadd.f32 0.0, %v6255
        %6257 = vmatmul.bf16.gmra.mxu0 %v4389
        %v6258 = vpop.f32.mrf.mxu0
        %v6259 = vadd.f32 0.0, %v6258
        %v6260 = vpop.f32.mrf.mxu0
        %v6261 = vadd.f32 0.0, %v6260
        %6262 = vmatmul.bf16.gmra.mxu0 %v4407
        %v6263 = vpop.f32.mrf.mxu0
        %v6264 = vadd.f32 0.0, %v6263
        %v6265 = vpop.f32.mrf.mxu0
        %v6266 = vadd.f32 0.0, %v6265
        %6267 = vmatmul.bf16.gmra.mxu0 %v4425
        %v6268 = vpop.f32.mrf.mxu0
        %v6269 = vadd.f32 0.0, %v6268
        %v6270 = vpop.f32.mrf.mxu0
        %v6271 = vadd.f32 0.0, %v6270
        %6272 = vmatmul.bf16.gmra.mxu0 %v4443
        %v6273 = vpop.f32.mrf.mxu0
        %v6274 = vadd.f32 0.0, %v6273
        %v6275 = vpop.f32.mrf.mxu0
        %v6276 = vadd.f32 0.0, %v6275
        %6277 = vmatmul.bf16.gmra.mxu0 %v4461
        %v6278 = vpop.f32.mrf.mxu0
        %v6279 = vadd.f32 0.0, %v6278
        %v6280 = vpop.f32.mrf.mxu0
        %v6281 = vadd.f32 0.0, %v6280
        %6282 = vmatmul.bf16.gmra.mxu0 %v4479
        %v6283 = vpop.f32.mrf.mxu0
        %v6284 = vadd.f32 0.0, %v6283
        %v6285 = vpop.f32.mrf.mxu0
        %v6286 = vadd.f32 0.0, %v6285
        %6287 = vmatmul.bf16.gmra.mxu0 %v4497
        %v6288 = vpop.f32.mrf.mxu0
        %v6289 = vadd.f32 0.0, %v6288
        %v6290 = vpop.f32.mrf.mxu0
        %v6291 = vadd.f32 0.0, %v6290
        %6292 = vmatmul.bf16.gmra.mxu0 %v4515
        %v6293 = vpop.f32.mrf.mxu0
        %v6294 = vadd.f32 0.0, %v6293
        %v6295 = vpop.f32.mrf.mxu0
        %v6296 = vadd.f32 0.0, %v6295
        %6297 = vmatmul.bf16.gmra.mxu0 %v4533
        %v6298 = vpop.f32.mrf.mxu0
        %v6299 = vadd.f32 0.0, %v6298
        %v6300 = vpop.f32.mrf.mxu0
        %v6301 = vadd.f32 0.0, %v6300
        %6302 = vmatmul.bf16.gmra.mxu0 %v4551
        %v6303 = vpop.f32.mrf.mxu0
        %v6304 = vadd.f32 0.0, %v6303
        %v6305 = vpop.f32.mrf.mxu0
        %v6306 = vadd.f32 0.0, %v6305
        %6307 = vmatmul.bf16.gmra.mxu0 %v4569
        %v6308 = vpop.f32.mrf.mxu0
        %v6309 = vadd.f32 0.0, %v6308
        %v6310 = vpop.f32.mrf.mxu0
        %v6311 = vadd.f32 0.0, %v6310
        %6312 = vmatmul.bf16.gmra.mxu0 %v4587
        %v6313 = vpop.f32.mrf.mxu0
        %v6314 = vadd.f32 0.0, %v6313
        %v6315 = vpop.f32.mrf.mxu0
        %v6316 = vadd.f32 0.0, %v6315
        %6317 = vmatmul.bf16.gmra.mxu0 %v4605
        %v6318 = vpop.f32.mrf.mxu0
        %v6319 = vadd.f32 0.0, %v6318
        %v6320 = vpop.f32.mrf.mxu0
        %v6321 = vadd.f32 0.0, %v6320
        %6322 = vmatmul.bf16.gmra.mxu0 %v4623
        %v6323 = vpop.f32.mrf.mxu0
        %v6324 = vadd.f32 0.0, %v6323
        %v6325 = vpop.f32.mrf.mxu0
        %v6326 = vadd.f32 0.0, %v6325
        %6327 = vmatmul.bf16.gmra.mxu0 %v4641
        %v6328 = vpop.f32.mrf.mxu0
        %v6329 = vadd.f32 0.0, %v6328
        %v6330 = vpop.f32.mrf.mxu0
        %v6331 = vadd.f32 0.0, %v6330
        %6332 = vmatmul.bf16.gmra.mxu0 %v4659
        %v6333 = vpop.f32.mrf.mxu0
        %v6334 = vadd.f32 0.0, %v6333
        %v6335 = vpop.f32.mrf.mxu0
        %v6336 = vadd.f32 0.0, %v6335
        %6337 = vmatmul.bf16.gmra.mxu0 %v4677
        %v6338 = vpop.f32.mrf.mxu0
        %v6339 = vadd.f32 0.0, %v6338
        %v6340 = vpop.f32.mrf.mxu0
        %v6341 = vadd.f32 0.0, %v6340
        %6342 = vmatmul.bf16.gmra.mxu0 %v4695
        %v6343 = vpop.f32.mrf.mxu0
        %v6344 = vadd.f32 0.0, %v6343
        %v6345 = vpop.f32.mrf.mxu0
        %v6346 = vadd.f32 0.0, %v6345
        %6347 = vmatmul.bf16.gmra.mxu0 %v4713
        %v6348 = vpop.f32.mrf.mxu0
        %v6349 = vadd.f32 0.0, %v6348
        %v6350 = vpop.f32.mrf.mxu0
        %v6351 = vadd.f32 0.0, %v6350
        %6352 = vmatmul.bf16.gmra.mxu0 %v4731
        %v6353 = vpop.f32.mrf.mxu0
        %v6354 = vadd.f32 0.0, %v6353
        %v6355 = vpop.f32.mrf.mxu0
        %v6356 = vadd.f32 0.0, %v6355
        %6357 = vdwg.mxu0
        %6358 = vmatpush.bf16.msra.mxu0 %v5916
        %6359 = vmatpush.bf16.msra.mxu0 %v5915
        %6360 = vmatpush.bf16.msra.mxu0 %v5914
        %6361 = vmatpush.bf16.msra.mxu0 %v5913
        %6362 = vmatpush.bf16.msra.mxu0 %v5912
        %6363 = vmatpush.bf16.msra.mxu0 %v5911
        %6364 = vmatpush.bf16.msra.mxu0 %v5910
        %6365 = vmatpush.bf16.msra.mxu0 %v5909
        %6366 = vmatmul.bf16.gmra.mxu0 %v4174
        %v6367 = vpop.f32.mrf.mxu0
        %v6368 = vadd.f32 %v6199, %v6367
        %v6369 = vpop.f32.mrf.mxu0
        %v6370 = vadd.f32 %v6201, %v6369
        %6371 = vmatmul.bf16.gmra.mxu0 %v4192
        %v6372 = vpop.f32.mrf.mxu0
        %v6373 = vadd.f32 %v6204, %v6372
        %v6374 = vpop.f32.mrf.mxu0
        %v6375 = vadd.f32 %v6206, %v6374
        %6376 = vmatmul.bf16.gmra.mxu0 %v4210
        %v6377 = vpop.f32.mrf.mxu0
        %v6378 = vadd.f32 %v6209, %v6377
        %v6379 = vpop.f32.mrf.mxu0
        %v6380 = vadd.f32 %v6211, %v6379
        %6381 = vmatmul.bf16.gmra.mxu0 %v4228
        %v6382 = vpop.f32.mrf.mxu0
        %v6383 = vadd.f32 %v6214, %v6382
        %v6384 = vpop.f32.mrf.mxu0
        %v6385 = vadd.f32 %v6216, %v6384
        %6386 = vmatmul.bf16.gmra.mxu0 %v4246
        %v6387 = vpop.f32.mrf.mxu0
        %v6388 = vadd.f32 %v6219, %v6387
        %v6389 = vpop.f32.mrf.mxu0
        %v6390 = vadd.f32 %v6221, %v6389
        %6391 = vmatmul.bf16.gmra.mxu0 %v4264
        %v6392 = vpop.f32.mrf.mxu0
        %v6393 = vadd.f32 %v6224, %v6392
        %v6394 = vpop.f32.mrf.mxu0
        %v6395 = vadd.f32 %v6226, %v6394
        %6396 = vmatmul.bf16.gmra.mxu0 %v4282
        %v6397 = vpop.f32.mrf.mxu0
        %v6398 = vadd.f32 %v6229, %v6397
        %v6399 = vpop.f32.mrf.mxu0
        %v6400 = vadd.f32 %v6231, %v6399
        %6401 = vmatmul.bf16.gmra.mxu0 %v4300
        %v6402 = vpop.f32.mrf.mxu0
        %v6403 = vadd.f32 %v6234, %v6402
        %v6404 = vpop.f32.mrf.mxu0
        %v6405 = vadd.f32 %v6236, %v6404
        %6406 = vmatmul.bf16.gmra.mxu0 %v4318
        %v6407 = vpop.f32.mrf.mxu0
        %v6408 = vadd.f32 %v6239, %v6407
        %v6409 = vpop.f32.mrf.mxu0
        %v6410 = vadd.f32 %v6241, %v6409
        %6411 = vmatmul.bf16.gmra.mxu0 %v4336
        %v6412 = vpop.f32.mrf.mxu0
        %v6413 = vadd.f32 %v6244, %v6412
        %v6414 = vpop.f32.mrf.mxu0
        %v6415 = vadd.f32 %v6246, %v6414
        %6416 = vmatmul.bf16.gmra.mxu0 %v4354
        %v6417 = vpop.f32.mrf.mxu0
        %v6418 = vadd.f32 %v6249, %v6417
        %v6419 = vpop.f32.mrf.mxu0
        %v6420 = vadd.f32 %v6251, %v6419
        %6421 = vmatmul.bf16.gmra.mxu0 %v4372
        %v6422 = vpop.f32.mrf.mxu0
        %v6423 = vadd.f32 %v6254, %v6422
        %v6424 = vpop.f32.mrf.mxu0
        %v6425 = vadd.f32 %v6256, %v6424
        %6426 = vmatmul.bf16.gmra.mxu0 %v4390
        %v6427 = vpop.f32.mrf.mxu0
        %v6428 = vadd.f32 %v6259, %v6427
        %v6429 = vpop.f32.mrf.mxu0
        %v6430 = vadd.f32 %v6261, %v6429
        %6431 = vmatmul.bf16.gmra.mxu0 %v4408
        %v6432 = vpop.f32.mrf.mxu0
        %v6433 = vadd.f32 %v6264, %v6432
        %v6434 = vpop.f32.mrf.mxu0
        %v6435 = vadd.f32 %v6266, %v6434
        %6436 = vmatmul.bf16.gmra.mxu0 %v4426
        %v6437 = vpop.f32.mrf.mxu0
        %v6438 = vadd.f32 %v6269, %v6437
        %v6439 = vpop.f32.mrf.mxu0
        %v6440 = vadd.f32 %v6271, %v6439
        %6441 = vmatmul.bf16.gmra.mxu0 %v4444
        %v6442 = vpop.f32.mrf.mxu0
        %v6443 = vadd.f32 %v6274, %v6442
        %v6444 = vpop.f32.mrf.mxu0
        %v6445 = vadd.f32 %v6276, %v6444
        %6446 = vmatmul.bf16.gmra.mxu0 %v4462
        %v6447 = vpop.f32.mrf.mxu0
        %v6448 = vadd.f32 %v6279, %v6447
        %v6449 = vpop.f32.mrf.mxu0
        %v6450 = vadd.f32 %v6281, %v6449
        %6451 = vmatmul.bf16.gmra.mxu0 %v4480
        %v6452 = vpop.f32.mrf.mxu0
        %v6453 = vadd.f32 %v6284, %v6452
        %v6454 = vpop.f32.mrf.mxu0
        %v6455 = vadd.f32 %v6286, %v6454
        %6456 = vmatmul.bf16.gmra.mxu0 %v4498
        %v6457 = vpop.f32.mrf.mxu0
        %v6458 = vadd.f32 %v6289, %v6457
        %v6459 = vpop.f32.mrf.mxu0
        %v6460 = vadd.f32 %v6291, %v6459
        %6461 = vmatmul.bf16.gmra.mxu0 %v4516
        %v6462 = vpop.f32.mrf.mxu0
        %v6463 = vadd.f32 %v6294, %v6462
        %v6464 = vpop.f32.mrf.mxu0
        %v6465 = vadd.f32 %v6296, %v6464
        %6466 = vmatmul.bf16.gmra.mxu0 %v4534
        %v6467 = vpop.f32.mrf.mxu0
        %v6468 = vadd.f32 %v6299, %v6467
        %v6469 = vpop.f32.mrf.mxu0
        %v6470 = vadd.f32 %v6301, %v6469
        %6471 = vmatmul.bf16.gmra.mxu0 %v4552
        %v6472 = vpop.f32.mrf.mxu0
        %v6473 = vadd.f32 %v6304, %v6472
        %v6474 = vpop.f32.mrf.mxu0
        %v6475 = vadd.f32 %v6306, %v6474
        %6476 = vmatmul.bf16.gmra.mxu0 %v4570
        %v6477 = vpop.f32.mrf.mxu0
        %v6478 = vadd.f32 %v6309, %v6477
        %v6479 = vpop.f32.mrf.mxu0
        %v6480 = vadd.f32 %v6311, %v6479
        %6481 = vmatmul.bf16.gmra.mxu0 %v4588
        %v6482 = vpop.f32.mrf.mxu0
        %v6483 = vadd.f32 %v6314, %v6482
        %v6484 = vpop.f32.mrf.mxu0
        %v6485 = vadd.f32 %v6316, %v6484
        %6486 = vmatmul.bf16.gmra.mxu0 %v4606
        %v6487 = vpop.f32.mrf.mxu0
        %v6488 = vadd.f32 %v6319, %v6487
        %v6489 = vpop.f32.mrf.mxu0
        %v6490 = vadd.f32 %v6321, %v6489
        %6491 = vmatmul.bf16.gmra.mxu0 %v4624
        %v6492 = vpop.f32.mrf.mxu0
        %v6493 = vadd.f32 %v6324, %v6492
        %v6494 = vpop.f32.mrf.mxu0
        %v6495 = vadd.f32 %v6326, %v6494
        %6496 = vmatmul.bf16.gmra.mxu0 %v4642
        %v6497 = vpop.f32.mrf.mxu0
        %v6498 = vadd.f32 %v6329, %v6497
        %v6499 = vpop.f32.mrf.mxu0
        %v6500 = vadd.f32 %v6331, %v6499
        %6501 = vmatmul.bf16.gmra.mxu0 %v4660
        %v6502 = vpop.f32.mrf.mxu0
        %v6503 = vadd.f32 %v6334, %v6502
        %v6504 = vpop.f32.mrf.mxu0
        %v6505 = vadd.f32 %v6336, %v6504
        %6506 = vmatmul.bf16.gmra.mxu0 %v4678
        %v6507 = vpop.f32.mrf.mxu0
        %v6508 = vadd.f32 %v6339, %v6507
        %v6509 = vpop.f32.mrf.mxu0
        %v6510 = vadd.f32 %v6341, %v6509
        %6511 = vmatmul.bf16.gmra.mxu0 %v4696
        %v6512 = vpop.f32.mrf.mxu0
        %v6513 = vadd.f32 %v6344, %v6512
        %v6514 = vpop.f32.mrf.mxu0
        %v6515 = vadd.f32 %v6346, %v6514
        %6516 = vmatmul.bf16.gmra.mxu0 %v4714
        %v6517 = vpop.f32.mrf.mxu0
        %v6518 = vadd.f32 %v6349, %v6517
        %v6519 = vpop.f32.mrf.mxu0
        %v6520 = vadd.f32 %v6351, %v6519
        %6521 = vmatmul.bf16.gmra.mxu0 %v4732
        %v6522 = vpop.f32.mrf.mxu0
        %v6523 = vadd.f32 %v6354, %v6522
        %v6524 = vpop.f32.mrf.mxu0
        %v6525 = vadd.f32 %v6356, %v6524
        %6526 = vdwg.mxu0
        %6527 = vmatpush.bf16.msra.mxu0 %v5924
        %6528 = vmatpush.bf16.msra.mxu0 %v5923
        %6529 = vmatpush.bf16.msra.mxu0 %v5922
        %6530 = vmatpush.bf16.msra.mxu0 %v5921
        %6531 = vmatpush.bf16.msra.mxu0 %v5920
        %6532 = vmatpush.bf16.msra.mxu0 %v5919
        %6533 = vmatpush.bf16.msra.mxu0 %v5918
        %6534 = vmatpush.bf16.msra.mxu0 %v5917
        %6535 = vmatmul.bf16.gmra.mxu0 %v4175
        %v6536 = vpop.f32.mrf.mxu0
        %v6537 = vadd.f32 %v6368, %v6536
        %v6538 = vpop.f32.mrf.mxu0
        %v6539 = vadd.f32 %v6370, %v6538
        %6540 = vmatmul.bf16.gmra.mxu0 %v4193
        %v6541 = vpop.f32.mrf.mxu0
        %v6542 = vadd.f32 %v6373, %v6541
        %v6543 = vpop.f32.mrf.mxu0
        %v6544 = vadd.f32 %v6375, %v6543
        %6545 = vmatmul.bf16.gmra.mxu0 %v4211
        %v6546 = vpop.f32.mrf.mxu0
        %v6547 = vadd.f32 %v6378, %v6546
        %v6548 = vpop.f32.mrf.mxu0
        %v6549 = vadd.f32 %v6380, %v6548
        %6550 = vmatmul.bf16.gmra.mxu0 %v4229
        %v6551 = vpop.f32.mrf.mxu0
        %v6552 = vadd.f32 %v6383, %v6551
        %v6553 = vpop.f32.mrf.mxu0
        %v6554 = vadd.f32 %v6385, %v6553
        %6555 = vmatmul.bf16.gmra.mxu0 %v4247
        %v6556 = vpop.f32.mrf.mxu0
        %v6557 = vadd.f32 %v6388, %v6556
        %v6558 = vpop.f32.mrf.mxu0
        %v6559 = vadd.f32 %v6390, %v6558
        %6560 = vmatmul.bf16.gmra.mxu0 %v4265
        %v6561 = vpop.f32.mrf.mxu0
        %v6562 = vadd.f32 %v6393, %v6561
        %v6563 = vpop.f32.mrf.mxu0
        %v6564 = vadd.f32 %v6395, %v6563
        %6565 = vmatmul.bf16.gmra.mxu0 %v4283
        %v6566 = vpop.f32.mrf.mxu0
        %v6567 = vadd.f32 %v6398, %v6566
        %v6568 = vpop.f32.mrf.mxu0
        %v6569 = vadd.f32 %v6400, %v6568
        %6570 = vmatmul.bf16.gmra.mxu0 %v4301
        %v6571 = vpop.f32.mrf.mxu0
        %v6572 = vadd.f32 %v6403, %v6571
        %v6573 = vpop.f32.mrf.mxu0
        %v6574 = vadd.f32 %v6405, %v6573
        %6575 = vmatmul.bf16.gmra.mxu0 %v4319
        %v6576 = vpop.f32.mrf.mxu0
        %v6577 = vadd.f32 %v6408, %v6576
        %v6578 = vpop.f32.mrf.mxu0
        %v6579 = vadd.f32 %v6410, %v6578
        %6580 = vmatmul.bf16.gmra.mxu0 %v4337
        %v6581 = vpop.f32.mrf.mxu0
        %v6582 = vadd.f32 %v6413, %v6581
        %v6583 = vpop.f32.mrf.mxu0
        %v6584 = vadd.f32 %v6415, %v6583
        %6585 = vmatmul.bf16.gmra.mxu0 %v4355
        %v6586 = vpop.f32.mrf.mxu0
        %v6587 = vadd.f32 %v6418, %v6586
        %v6588 = vpop.f32.mrf.mxu0
        %v6589 = vadd.f32 %v6420, %v6588
        %6590 = vmatmul.bf16.gmra.mxu0 %v4373
        %v6591 = vpop.f32.mrf.mxu0
        %v6592 = vadd.f32 %v6423, %v6591
        %v6593 = vpop.f32.mrf.mxu0
        %v6594 = vadd.f32 %v6425, %v6593
        %6595 = vmatmul.bf16.gmra.mxu0 %v4391
        %v6596 = vpop.f32.mrf.mxu0
        %v6597 = vadd.f32 %v6428, %v6596
        %v6598 = vpop.f32.mrf.mxu0
        %v6599 = vadd.f32 %v6430, %v6598
        %6600 = vmatmul.bf16.gmra.mxu0 %v4409
        %v6601 = vpop.f32.mrf.mxu0
        %v6602 = vadd.f32 %v6433, %v6601
        %v6603 = vpop.f32.mrf.mxu0
        %v6604 = vadd.f32 %v6435, %v6603
        %6605 = vmatmul.bf16.gmra.mxu0 %v4427
        %v6606 = vpop.f32.mrf.mxu0
        %v6607 = vadd.f32 %v6438, %v6606
        %v6608 = vpop.f32.mrf.mxu0
        %v6609 = vadd.f32 %v6440, %v6608
        %6610 = vmatmul.bf16.gmra.mxu0 %v4445
        %v6611 = vpop.f32.mrf.mxu0
        %v6612 = vadd.f32 %v6443, %v6611
        %v6613 = vpop.f32.mrf.mxu0
        %v6614 = vadd.f32 %v6445, %v6613
        %6615 = vmatmul.bf16.gmra.mxu0 %v4463
        %v6616 = vpop.f32.mrf.mxu0
        %v6617 = vadd.f32 %v6448, %v6616
        %v6618 = vpop.f32.mrf.mxu0
        %v6619 = vadd.f32 %v6450, %v6618
        %6620 = vmatmul.bf16.gmra.mxu0 %v4481
        %v6621 = vpop.f32.mrf.mxu0
        %v6622 = vadd.f32 %v6453, %v6621
        %v6623 = vpop.f32.mrf.mxu0
        %v6624 = vadd.f32 %v6455, %v6623
        %6625 = vmatmul.bf16.gmra.mxu0 %v4499
        %v6626 = vpop.f32.mrf.mxu0
        %v6627 = vadd.f32 %v6458, %v6626
        %v6628 = vpop.f32.mrf.mxu0
        %v6629 = vadd.f32 %v6460, %v6628
        %6630 = vmatmul.bf16.gmra.mxu0 %v4517
        %v6631 = vpop.f32.mrf.mxu0
        %v6632 = vadd.f32 %v6463, %v6631
        %v6633 = vpop.f32.mrf.mxu0
        %v6634 = vadd.f32 %v6465, %v6633
        %6635 = vmatmul.bf16.gmra.mxu0 %v4535
        %v6636 = vpop.f32.mrf.mxu0
        %v6637 = vadd.f32 %v6468, %v6636
        %v6638 = vpop.f32.mrf.mxu0
        %v6639 = vadd.f32 %v6470, %v6638
        %6640 = vmatmul.bf16.gmra.mxu0 %v4553
        %v6641 = vpop.f32.mrf.mxu0
        %v6642 = vadd.f32 %v6473, %v6641
        %v6643 = vpop.f32.mrf.mxu0
        %v6644 = vadd.f32 %v6475, %v6643
        %6645 = vmatmul.bf16.gmra.mxu0 %v4571
        %v6646 = vpop.f32.mrf.mxu0
        %v6647 = vadd.f32 %v6478, %v6646
        %v6648 = vpop.f32.mrf.mxu0
        %v6649 = vadd.f32 %v6480, %v6648
        %6650 = vmatmul.bf16.gmra.mxu0 %v4589
        %v6651 = vpop.f32.mrf.mxu0
        %v6652 = vadd.f32 %v6483, %v6651
        %v6653 = vpop.f32.mrf.mxu0
        %v6654 = vadd.f32 %v6485, %v6653
        %6655 = vmatmul.bf16.gmra.mxu0 %v4607
        %v6656 = vpop.f32.mrf.mxu0
        %v6657 = vadd.f32 %v6488, %v6656
        %v6658 = vpop.f32.mrf.mxu0
        %v6659 = vadd.f32 %v6490, %v6658
        %6660 = vmatmul.bf16.gmra.mxu0 %v4625
        %v6661 = vpop.f32.mrf.mxu0
        %v6662 = vadd.f32 %v6493, %v6661
        %v6663 = vpop.f32.mrf.mxu0
        %v6664 = vadd.f32 %v6495, %v6663
        %6665 = vmatmul.bf16.gmra.mxu0 %v4643
        %v6666 = vpop.f32.mrf.mxu0
        %v6667 = vadd.f32 %v6498, %v6666
        %v6668 = vpop.f32.mrf.mxu0
        %v6669 = vadd.f32 %v6500, %v6668
        %6670 = vmatmul.bf16.gmra.mxu0 %v4661
        %v6671 = vpop.f32.mrf.mxu0
        %v6672 = vadd.f32 %v6503, %v6671
        %v6673 = vpop.f32.mrf.mxu0
        %v6674 = vadd.f32 %v6505, %v6673
        %6675 = vmatmul.bf16.gmra.mxu0 %v4679
        %v6676 = vpop.f32.mrf.mxu0
        %v6677 = vadd.f32 %v6508, %v6676
        %v6678 = vpop.f32.mrf.mxu0
        %v6679 = vadd.f32 %v6510, %v6678
        %6680 = vmatmul.bf16.gmra.mxu0 %v4697
        %v6681 = vpop.f32.mrf.mxu0
        %v6682 = vadd.f32 %v6513, %v6681
        %v6683 = vpop.f32.mrf.mxu0
        %v6684 = vadd.f32 %v6515, %v6683
        %6685 = vmatmul.bf16.gmra.mxu0 %v4715
        %v6686 = vpop.f32.mrf.mxu0
        %v6687 = vadd.f32 %v6518, %v6686
        %v6688 = vpop.f32.mrf.mxu0
        %v6689 = vadd.f32 %v6520, %v6688
        %6690 = vmatmul.bf16.gmra.mxu0 %v4733
        %v6691 = vpop.f32.mrf.mxu0
        %v6692 = vadd.f32 %v6523, %v6691
        %v6693 = vpop.f32.mrf.mxu0
        %v6694 = vadd.f32 %v6525, %v6693
        %6695 = vdwg.mxu0
        %6696 = vmatpush.bf16.msra.mxu0 %v5932
        %6697 = vmatpush.bf16.msra.mxu0 %v5931
        %6698 = vmatpush.bf16.msra.mxu0 %v5930
        %6699 = vmatpush.bf16.msra.mxu0 %v5929
        %6700 = vmatpush.bf16.msra.mxu0 %v5928
        %6701 = vmatpush.bf16.msra.mxu0 %v5927
        %6702 = vmatpush.bf16.msra.mxu0 %v5926
        %6703 = vmatpush.bf16.msra.mxu0 %v5925
        %6704 = vmatmul.bf16.gmra.mxu0 %v4176
        %v6705 = vpop.f32.mrf.mxu0
        %v6706 = vadd.f32 %v6537, %v6705
        %v6707 = vpop.f32.mrf.mxu0
        %v6708 = vadd.f32 %v6539, %v6707
        %6709 = vmatmul.bf16.gmra.mxu0 %v4194
        %v6710 = vpop.f32.mrf.mxu0
        %v6711 = vadd.f32 %v6542, %v6710
        %v6712 = vpop.f32.mrf.mxu0
        %v6713 = vadd.f32 %v6544, %v6712
        %6714 = vmatmul.bf16.gmra.mxu0 %v4212
        %v6715 = vpop.f32.mrf.mxu0
        %v6716 = vadd.f32 %v6547, %v6715
        %v6717 = vpop.f32.mrf.mxu0
        %v6718 = vadd.f32 %v6549, %v6717
        %6719 = vmatmul.bf16.gmra.mxu0 %v4230
        %v6720 = vpop.f32.mrf.mxu0
        %v6721 = vadd.f32 %v6552, %v6720
        %v6722 = vpop.f32.mrf.mxu0
        %v6723 = vadd.f32 %v6554, %v6722
        %6724 = vmatmul.bf16.gmra.mxu0 %v4248
        %v6725 = vpop.f32.mrf.mxu0
        %v6726 = vadd.f32 %v6557, %v6725
        %v6727 = vpop.f32.mrf.mxu0
        %v6728 = vadd.f32 %v6559, %v6727
        %6729 = vmatmul.bf16.gmra.mxu0 %v4266
        %v6730 = vpop.f32.mrf.mxu0
        %v6731 = vadd.f32 %v6562, %v6730
        %v6732 = vpop.f32.mrf.mxu0
        %v6733 = vadd.f32 %v6564, %v6732
        %6734 = vmatmul.bf16.gmra.mxu0 %v4284
        %v6735 = vpop.f32.mrf.mxu0
        %v6736 = vadd.f32 %v6567, %v6735
        %v6737 = vpop.f32.mrf.mxu0
        %v6738 = vadd.f32 %v6569, %v6737
        %6739 = vmatmul.bf16.gmra.mxu0 %v4302
        %v6740 = vpop.f32.mrf.mxu0
        %v6741 = vadd.f32 %v6572, %v6740
        %v6742 = vpop.f32.mrf.mxu0
        %v6743 = vadd.f32 %v6574, %v6742
        %6744 = vmatmul.bf16.gmra.mxu0 %v4320
        %v6745 = vpop.f32.mrf.mxu0
        %v6746 = vadd.f32 %v6577, %v6745
        %v6747 = vpop.f32.mrf.mxu0
        %v6748 = vadd.f32 %v6579, %v6747
        %6749 = vmatmul.bf16.gmra.mxu0 %v4338
        %v6750 = vpop.f32.mrf.mxu0
        %v6751 = vadd.f32 %v6582, %v6750
        %v6752 = vpop.f32.mrf.mxu0
        %v6753 = vadd.f32 %v6584, %v6752
        %6754 = vmatmul.bf16.gmra.mxu0 %v4356
        %v6755 = vpop.f32.mrf.mxu0
        %v6756 = vadd.f32 %v6587, %v6755
        %v6757 = vpop.f32.mrf.mxu0
        %v6758 = vadd.f32 %v6589, %v6757
        %6759 = vmatmul.bf16.gmra.mxu0 %v4374
        %v6760 = vpop.f32.mrf.mxu0
        %v6761 = vadd.f32 %v6592, %v6760
        %v6762 = vpop.f32.mrf.mxu0
        %v6763 = vadd.f32 %v6594, %v6762
        %6764 = vmatmul.bf16.gmra.mxu0 %v4392
        %v6765 = vpop.f32.mrf.mxu0
        %v6766 = vadd.f32 %v6597, %v6765
        %v6767 = vpop.f32.mrf.mxu0
        %v6768 = vadd.f32 %v6599, %v6767
        %6769 = vmatmul.bf16.gmra.mxu0 %v4410
        %v6770 = vpop.f32.mrf.mxu0
        %v6771 = vadd.f32 %v6602, %v6770
        %v6772 = vpop.f32.mrf.mxu0
        %v6773 = vadd.f32 %v6604, %v6772
        %6774 = vmatmul.bf16.gmra.mxu0 %v4428
        %v6775 = vpop.f32.mrf.mxu0
        %v6776 = vadd.f32 %v6607, %v6775
        %v6777 = vpop.f32.mrf.mxu0
        %v6778 = vadd.f32 %v6609, %v6777
        %6779 = vmatmul.bf16.gmra.mxu0 %v4446
        %v6780 = vpop.f32.mrf.mxu0
        %v6781 = vadd.f32 %v6612, %v6780
        %v6782 = vpop.f32.mrf.mxu0
        %v6783 = vadd.f32 %v6614, %v6782
        %6784 = vmatmul.bf16.gmra.mxu0 %v4464
        %v6785 = vpop.f32.mrf.mxu0
        %v6786 = vadd.f32 %v6617, %v6785
        %v6787 = vpop.f32.mrf.mxu0
        %v6788 = vadd.f32 %v6619, %v6787
        %6789 = vmatmul.bf16.gmra.mxu0 %v4482
        %v6790 = vpop.f32.mrf.mxu0
        %v6791 = vadd.f32 %v6622, %v6790
        %v6792 = vpop.f32.mrf.mxu0
        %v6793 = vadd.f32 %v6624, %v6792
        %6794 = vmatmul.bf16.gmra.mxu0 %v4500
        %v6795 = vpop.f32.mrf.mxu0
        %v6796 = vadd.f32 %v6627, %v6795
        %v6797 = vpop.f32.mrf.mxu0
        %v6798 = vadd.f32 %v6629, %v6797
        %6799 = vmatmul.bf16.gmra.mxu0 %v4518
        %v6800 = vpop.f32.mrf.mxu0
        %v6801 = vadd.f32 %v6632, %v6800
        %v6802 = vpop.f32.mrf.mxu0
        %v6803 = vadd.f32 %v6634, %v6802
        %6804 = vmatmul.bf16.gmra.mxu0 %v4536
        %v6805 = vpop.f32.mrf.mxu0
        %v6806 = vadd.f32 %v6637, %v6805
        %v6807 = vpop.f32.mrf.mxu0
        %v6808 = vadd.f32 %v6639, %v6807
        %6809 = vmatmul.bf16.gmra.mxu0 %v4554
        %v6810 = vpop.f32.mrf.mxu0
        %v6811 = vadd.f32 %v6642, %v6810
        %v6812 = vpop.f32.mrf.mxu0
        %v6813 = vadd.f32 %v6644, %v6812
        %6814 = vmatmul.bf16.gmra.mxu0 %v4572
        %v6815 = vpop.f32.mrf.mxu0
        %v6816 = vadd.f32 %v6647, %v6815
        %v6817 = vpop.f32.mrf.mxu0
        %v6818 = vadd.f32 %v6649, %v6817
        %6819 = vmatmul.bf16.gmra.mxu0 %v4590
        %v6820 = vpop.f32.mrf.mxu0
        %v6821 = vadd.f32 %v6652, %v6820
        %v6822 = vpop.f32.mrf.mxu0
        %v6823 = vadd.f32 %v6654, %v6822
        %6824 = vmatmul.bf16.gmra.mxu0 %v4608
        %v6825 = vpop.f32.mrf.mxu0
        %v6826 = vadd.f32 %v6657, %v6825
        %v6827 = vpop.f32.mrf.mxu0
        %v6828 = vadd.f32 %v6659, %v6827
        %6829 = vmatmul.bf16.gmra.mxu0 %v4626
        %v6830 = vpop.f32.mrf.mxu0
        %v6831 = vadd.f32 %v6662, %v6830
        %v6832 = vpop.f32.mrf.mxu0
        %v6833 = vadd.f32 %v6664, %v6832
        %6834 = vmatmul.bf16.gmra.mxu0 %v4644
        %v6835 = vpop.f32.mrf.mxu0
        %v6836 = vadd.f32 %v6667, %v6835
        %v6837 = vpop.f32.mrf.mxu0
        %v6838 = vadd.f32 %v6669, %v6837
        %6839 = vmatmul.bf16.gmra.mxu0 %v4662
        %v6840 = vpop.f32.mrf.mxu0
        %v6841 = vadd.f32 %v6672, %v6840
        %v6842 = vpop.f32.mrf.mxu0
        %v6843 = vadd.f32 %v6674, %v6842
        %6844 = vmatmul.bf16.gmra.mxu0 %v4680
        %v6845 = vpop.f32.mrf.mxu0
        %v6846 = vadd.f32 %v6677, %v6845
        %v6847 = vpop.f32.mrf.mxu0
        %v6848 = vadd.f32 %v6679, %v6847
        %6849 = vmatmul.bf16.gmra.mxu0 %v4698
        %v6850 = vpop.f32.mrf.mxu0
        %v6851 = vadd.f32 %v6682, %v6850
        %v6852 = vpop.f32.mrf.mxu0
        %v6853 = vadd.f32 %v6684, %v6852
        %6854 = vmatmul.bf16.gmra.mxu0 %v4716
        %v6855 = vpop.f32.mrf.mxu0
        %v6856 = vadd.f32 %v6687, %v6855
        %v6857 = vpop.f32.mrf.mxu0
        %v6858 = vadd.f32 %v6689, %v6857
        %6859 = vmatmul.bf16.gmra.mxu0 %v4734
        %v6860 = vpop.f32.mrf.mxu0
        %v6861 = vadd.f32 %v6692, %v6860
        %v6862 = vpop.f32.mrf.mxu0
        %v6863 = vadd.f32 %v6694, %v6862
        %6864 = vdwg.mxu0
        %6865 = vmatpush.bf16.msra.mxu0 %v5940
        %6866 = vmatpush.bf16.msra.mxu0 %v5939
        %6867 = vmatpush.bf16.msra.mxu0 %v5938
        %6868 = vmatpush.bf16.msra.mxu0 %v5937
        %6869 = vmatpush.bf16.msra.mxu0 %v5936
        %6870 = vmatpush.bf16.msra.mxu0 %v5935
        %6871 = vmatpush.bf16.msra.mxu0 %v5934
        %6872 = vmatpush.bf16.msra.mxu0 %v5933
        %6873 = vmatmul.bf16.gmra.mxu0 %v4177
        %v6874 = vpop.f32.mrf.mxu0
        %v6875 = vadd.f32 %v6706, %v6874
        %v6876 = vpop.f32.mrf.mxu0
        %v6877 = vadd.f32 %v6708, %v6876
        %6878 = vmatmul.bf16.gmra.mxu0 %v4195
        %v6879 = vpop.f32.mrf.mxu0
        %v6880 = vadd.f32 %v6711, %v6879
        %v6881 = vpop.f32.mrf.mxu0
        %v6882 = vadd.f32 %v6713, %v6881
        %6883 = vmatmul.bf16.gmra.mxu0 %v4213
        %v6884 = vpop.f32.mrf.mxu0
        %v6885 = vadd.f32 %v6716, %v6884
        %v6886 = vpop.f32.mrf.mxu0
        %v6887 = vadd.f32 %v6718, %v6886
        %6888 = vmatmul.bf16.gmra.mxu0 %v4231
        %v6889 = vpop.f32.mrf.mxu0
        %v6890 = vadd.f32 %v6721, %v6889
        %v6891 = vpop.f32.mrf.mxu0
        %v6892 = vadd.f32 %v6723, %v6891
        %6893 = vmatmul.bf16.gmra.mxu0 %v4249
        %v6894 = vpop.f32.mrf.mxu0
        %v6895 = vadd.f32 %v6726, %v6894
        %v6896 = vpop.f32.mrf.mxu0
        %v6897 = vadd.f32 %v6728, %v6896
        %6898 = vmatmul.bf16.gmra.mxu0 %v4267
        %v6899 = vpop.f32.mrf.mxu0
        %v6900 = vadd.f32 %v6731, %v6899
        %v6901 = vpop.f32.mrf.mxu0
        %v6902 = vadd.f32 %v6733, %v6901
        %6903 = vmatmul.bf16.gmra.mxu0 %v4285
        %v6904 = vpop.f32.mrf.mxu0
        %v6905 = vadd.f32 %v6736, %v6904
        %v6906 = vpop.f32.mrf.mxu0
        %v6907 = vadd.f32 %v6738, %v6906
        %6908 = vmatmul.bf16.gmra.mxu0 %v4303
        %v6909 = vpop.f32.mrf.mxu0
        %v6910 = vadd.f32 %v6741, %v6909
        %v6911 = vpop.f32.mrf.mxu0
        %v6912 = vadd.f32 %v6743, %v6911
        %6913 = vmatmul.bf16.gmra.mxu0 %v4321
        %v6914 = vpop.f32.mrf.mxu0
        %v6915 = vadd.f32 %v6746, %v6914
        %v6916 = vpop.f32.mrf.mxu0
        %v6917 = vadd.f32 %v6748, %v6916
        %6918 = vmatmul.bf16.gmra.mxu0 %v4339
        %v6919 = vpop.f32.mrf.mxu0
        %v6920 = vadd.f32 %v6751, %v6919
        %v6921 = vpop.f32.mrf.mxu0
        %v6922 = vadd.f32 %v6753, %v6921
        %6923 = vmatmul.bf16.gmra.mxu0 %v4357
        %v6924 = vpop.f32.mrf.mxu0
        %v6925 = vadd.f32 %v6756, %v6924
        %v6926 = vpop.f32.mrf.mxu0
        %v6927 = vadd.f32 %v6758, %v6926
        %6928 = vmatmul.bf16.gmra.mxu0 %v4375
        %v6929 = vpop.f32.mrf.mxu0
        %v6930 = vadd.f32 %v6761, %v6929
        %v6931 = vpop.f32.mrf.mxu0
        %v6932 = vadd.f32 %v6763, %v6931
        %6933 = vmatmul.bf16.gmra.mxu0 %v4393
        %v6934 = vpop.f32.mrf.mxu0
        %v6935 = vadd.f32 %v6766, %v6934
        %v6936 = vpop.f32.mrf.mxu0
        %v6937 = vadd.f32 %v6768, %v6936
        %6938 = vmatmul.bf16.gmra.mxu0 %v4411
        %v6939 = vpop.f32.mrf.mxu0
        %v6940 = vadd.f32 %v6771, %v6939
        %v6941 = vpop.f32.mrf.mxu0
        %v6942 = vadd.f32 %v6773, %v6941
        %6943 = vmatmul.bf16.gmra.mxu0 %v4429
        %v6944 = vpop.f32.mrf.mxu0
        %v6945 = vadd.f32 %v6776, %v6944
        %v6946 = vpop.f32.mrf.mxu0
        %v6947 = vadd.f32 %v6778, %v6946
        %6948 = vmatmul.bf16.gmra.mxu0 %v4447
        %v6949 = vpop.f32.mrf.mxu0
        %v6950 = vadd.f32 %v6781, %v6949
        %v6951 = vpop.f32.mrf.mxu0
        %v6952 = vadd.f32 %v6783, %v6951
        %6953 = vmatmul.bf16.gmra.mxu0 %v4465
        %v6954 = vpop.f32.mrf.mxu0
        %v6955 = vadd.f32 %v6786, %v6954
        %v6956 = vpop.f32.mrf.mxu0
        %v6957 = vadd.f32 %v6788, %v6956
        %6958 = vmatmul.bf16.gmra.mxu0 %v4483
        %v6959 = vpop.f32.mrf.mxu0
        %v6960 = vadd.f32 %v6791, %v6959
        %v6961 = vpop.f32.mrf.mxu0
        %v6962 = vadd.f32 %v6793, %v6961
        %6963 = vmatmul.bf16.gmra.mxu0 %v4501
        %v6964 = vpop.f32.mrf.mxu0
        %v6965 = vadd.f32 %v6796, %v6964
        %v6966 = vpop.f32.mrf.mxu0
        %v6967 = vadd.f32 %v6798, %v6966
        %6968 = vmatmul.bf16.gmra.mxu0 %v4519
        %v6969 = vpop.f32.mrf.mxu0
        %v6970 = vadd.f32 %v6801, %v6969
        %v6971 = vpop.f32.mrf.mxu0
        %v6972 = vadd.f32 %v6803, %v6971
        %6973 = vmatmul.bf16.gmra.mxu0 %v4537
        %v6974 = vpop.f32.mrf.mxu0
        %v6975 = vadd.f32 %v6806, %v6974
        %v6976 = vpop.f32.mrf.mxu0
        %v6977 = vadd.f32 %v6808, %v6976
        %6978 = vmatmul.bf16.gmra.mxu0 %v4555
        %v6979 = vpop.f32.mrf.mxu0
        %v6980 = vadd.f32 %v6811, %v6979
        %v6981 = vpop.f32.mrf.mxu0
        %v6982 = vadd.f32 %v6813, %v6981
        %6983 = vmatmul.bf16.gmra.mxu0 %v4573
        %v6984 = vpop.f32.mrf.mxu0
        %v6985 = vadd.f32 %v6816, %v6984
        %v6986 = vpop.f32.mrf.mxu0
        %v6987 = vadd.f32 %v6818, %v6986
        %6988 = vmatmul.bf16.gmra.mxu0 %v4591
        %v6989 = vpop.f32.mrf.mxu0
        %v6990 = vadd.f32 %v6821, %v6989
        %v6991 = vpop.f32.mrf.mxu0
        %v6992 = vadd.f32 %v6823, %v6991
        %6993 = vmatmul.bf16.gmra.mxu0 %v4609
        %v6994 = vpop.f32.mrf.mxu0
        %v6995 = vadd.f32 %v6826, %v6994
        %v6996 = vpop.f32.mrf.mxu0
        %v6997 = vadd.f32 %v6828, %v6996
        %6998 = vmatmul.bf16.gmra.mxu0 %v4627
        %v6999 = vpop.f32.mrf.mxu0
        %v7000 = vadd.f32 %v6831, %v6999
        %v7001 = vpop.f32.mrf.mxu0
        %v7002 = vadd.f32 %v6833, %v7001
        %7003 = vmatmul.bf16.gmra.mxu0 %v4645
        %v7004 = vpop.f32.mrf.mxu0
        %v7005 = vadd.f32 %v6836, %v7004
        %v7006 = vpop.f32.mrf.mxu0
        %v7007 = vadd.f32 %v6838, %v7006
        %7008 = vmatmul.bf16.gmra.mxu0 %v4663
        %v7009 = vpop.f32.mrf.mxu0
        %v7010 = vadd.f32 %v6841, %v7009
        %v7011 = vpop.f32.mrf.mxu0
        %v7012 = vadd.f32 %v6843, %v7011
        %7013 = vmatmul.bf16.gmra.mxu0 %v4681
        %v7014 = vpop.f32.mrf.mxu0
        %v7015 = vadd.f32 %v6846, %v7014
        %v7016 = vpop.f32.mrf.mxu0
        %v7017 = vadd.f32 %v6848, %v7016
        %7018 = vmatmul.bf16.gmra.mxu0 %v4699
        %v7019 = vpop.f32.mrf.mxu0
        %v7020 = vadd.f32 %v6851, %v7019
        %v7021 = vpop.f32.mrf.mxu0
        %v7022 = vadd.f32 %v6853, %v7021
        %7023 = vmatmul.bf16.gmra.mxu0 %v4717
        %v7024 = vpop.f32.mrf.mxu0
        %v7025 = vadd.f32 %v6856, %v7024
        %v7026 = vpop.f32.mrf.mxu0
        %v7027 = vadd.f32 %v6858, %v7026
        %7028 = vmatmul.bf16.gmra.mxu0 %v4735
        %v7029 = vpop.f32.mrf.mxu0
        %v7030 = vadd.f32 %v6861, %v7029
        %v7031 = vpop.f32.mrf.mxu0
        %v7032 = vadd.f32 %v6863, %v7031
        %7033 = vdwg.mxu0
        %7034 = vmatpush.bf16.msra.mxu0 %v5948
        %7035 = vmatpush.bf16.msra.mxu0 %v5947
        %7036 = vmatpush.bf16.msra.mxu0 %v5946
        %7037 = vmatpush.bf16.msra.mxu0 %v5945
        %7038 = vmatpush.bf16.msra.mxu0 %v5944
        %7039 = vmatpush.bf16.msra.mxu0 %v5943
        %7040 = vmatpush.bf16.msra.mxu0 %v5942
        %7041 = vmatpush.bf16.msra.mxu0 %v5941
        %7042 = vmatmul.bf16.gmra.mxu0 %v4178
        %v7043 = vpop.f32.mrf.mxu0
        %v7044 = vadd.f32 %v6875, %v7043
        %v7045 = vpop.f32.mrf.mxu0
        %v7046 = vadd.f32 %v6877, %v7045
        %7047 = vmatmul.bf16.gmra.mxu0 %v4196
        %v7048 = vpop.f32.mrf.mxu0
        %v7049 = vadd.f32 %v6880, %v7048
        %v7050 = vpop.f32.mrf.mxu0
        %v7051 = vadd.f32 %v6882, %v7050
        %7052 = vmatmul.bf16.gmra.mxu0 %v4214
        %v7053 = vpop.f32.mrf.mxu0
        %v7054 = vadd.f32 %v6885, %v7053
        %v7055 = vpop.f32.mrf.mxu0
        %v7056 = vadd.f32 %v6887, %v7055
        %7057 = vmatmul.bf16.gmra.mxu0 %v4232
        %v7058 = vpop.f32.mrf.mxu0
        %v7059 = vadd.f32 %v6890, %v7058
        %v7060 = vpop.f32.mrf.mxu0
        %v7061 = vadd.f32 %v6892, %v7060
        %7062 = vmatmul.bf16.gmra.mxu0 %v4250
        %v7063 = vpop.f32.mrf.mxu0
        %v7064 = vadd.f32 %v6895, %v7063
        %v7065 = vpop.f32.mrf.mxu0
        %v7066 = vadd.f32 %v6897, %v7065
        %7067 = vmatmul.bf16.gmra.mxu0 %v4268
        %v7068 = vpop.f32.mrf.mxu0
        %v7069 = vadd.f32 %v6900, %v7068
        %v7070 = vpop.f32.mrf.mxu0
        %v7071 = vadd.f32 %v6902, %v7070
        %7072 = vmatmul.bf16.gmra.mxu0 %v4286
        %v7073 = vpop.f32.mrf.mxu0
        %v7074 = vadd.f32 %v6905, %v7073
        %v7075 = vpop.f32.mrf.mxu0
        %v7076 = vadd.f32 %v6907, %v7075
        %7077 = vmatmul.bf16.gmra.mxu0 %v4304
        %v7078 = vpop.f32.mrf.mxu0
        %v7079 = vadd.f32 %v6910, %v7078
        %v7080 = vpop.f32.mrf.mxu0
        %v7081 = vadd.f32 %v6912, %v7080
        %7082 = vmatmul.bf16.gmra.mxu0 %v4322
        %v7083 = vpop.f32.mrf.mxu0
        %v7084 = vadd.f32 %v6915, %v7083
        %v7085 = vpop.f32.mrf.mxu0
        %v7086 = vadd.f32 %v6917, %v7085
        %7087 = vmatmul.bf16.gmra.mxu0 %v4340
        %v7088 = vpop.f32.mrf.mxu0
        %v7089 = vadd.f32 %v6920, %v7088
        %v7090 = vpop.f32.mrf.mxu0
        %v7091 = vadd.f32 %v6922, %v7090
        %7092 = vmatmul.bf16.gmra.mxu0 %v4358
        %v7093 = vpop.f32.mrf.mxu0
        %v7094 = vadd.f32 %v6925, %v7093
        %v7095 = vpop.f32.mrf.mxu0
        %v7096 = vadd.f32 %v6927, %v7095
        %7097 = vmatmul.bf16.gmra.mxu0 %v4376
        %v7098 = vpop.f32.mrf.mxu0
        %v7099 = vadd.f32 %v6930, %v7098
        %v7100 = vpop.f32.mrf.mxu0
        %v7101 = vadd.f32 %v6932, %v7100
        %7102 = vmatmul.bf16.gmra.mxu0 %v4394
        %v7103 = vpop.f32.mrf.mxu0
        %v7104 = vadd.f32 %v6935, %v7103
        %v7105 = vpop.f32.mrf.mxu0
        %v7106 = vadd.f32 %v6937, %v7105
        %7107 = vmatmul.bf16.gmra.mxu0 %v4412
        %v7108 = vpop.f32.mrf.mxu0
        %v7109 = vadd.f32 %v6940, %v7108
        %v7110 = vpop.f32.mrf.mxu0
        %v7111 = vadd.f32 %v6942, %v7110
        %7112 = vmatmul.bf16.gmra.mxu0 %v4430
        %v7113 = vpop.f32.mrf.mxu0
        %v7114 = vadd.f32 %v6945, %v7113
        %v7115 = vpop.f32.mrf.mxu0
        %v7116 = vadd.f32 %v6947, %v7115
        %7117 = vmatmul.bf16.gmra.mxu0 %v4448
        %v7118 = vpop.f32.mrf.mxu0
        %v7119 = vadd.f32 %v6950, %v7118
        %v7120 = vpop.f32.mrf.mxu0
        %v7121 = vadd.f32 %v6952, %v7120
        %7122 = vmatmul.bf16.gmra.mxu0 %v4466
        %v7123 = vpop.f32.mrf.mxu0
        %v7124 = vadd.f32 %v6955, %v7123
        %v7125 = vpop.f32.mrf.mxu0
        %v7126 = vadd.f32 %v6957, %v7125
        %7127 = vmatmul.bf16.gmra.mxu0 %v4484
        %v7128 = vpop.f32.mrf.mxu0
        %v7129 = vadd.f32 %v6960, %v7128
        %v7130 = vpop.f32.mrf.mxu0
        %v7131 = vadd.f32 %v6962, %v7130
        %7132 = vmatmul.bf16.gmra.mxu0 %v4502
        %v7133 = vpop.f32.mrf.mxu0
        %v7134 = vadd.f32 %v6965, %v7133
        %v7135 = vpop.f32.mrf.mxu0
        %v7136 = vadd.f32 %v6967, %v7135
        %7137 = vmatmul.bf16.gmra.mxu0 %v4520
        %v7138 = vpop.f32.mrf.mxu0
        %v7139 = vadd.f32 %v6970, %v7138
        %v7140 = vpop.f32.mrf.mxu0
        %v7141 = vadd.f32 %v6972, %v7140
        %7142 = vmatmul.bf16.gmra.mxu0 %v4538
        %v7143 = vpop.f32.mrf.mxu0
        %v7144 = vadd.f32 %v6975, %v7143
        %v7145 = vpop.f32.mrf.mxu0
        %v7146 = vadd.f32 %v6977, %v7145
        %7147 = vmatmul.bf16.gmra.mxu0 %v4556
        %v7148 = vpop.f32.mrf.mxu0
        %v7149 = vadd.f32 %v6980, %v7148
        %v7150 = vpop.f32.mrf.mxu0
        %v7151 = vadd.f32 %v6982, %v7150
        %7152 = vmatmul.bf16.gmra.mxu0 %v4574
        %v7153 = vpop.f32.mrf.mxu0
        %v7154 = vadd.f32 %v6985, %v7153
        %v7155 = vpop.f32.mrf.mxu0
        %v7156 = vadd.f32 %v6987, %v7155
        %7157 = vmatmul.bf16.gmra.mxu0 %v4592
        %v7158 = vpop.f32.mrf.mxu0
        %v7159 = vadd.f32 %v6990, %v7158
        %v7160 = vpop.f32.mrf.mxu0
        %v7161 = vadd.f32 %v6992, %v7160
        %7162 = vmatmul.bf16.gmra.mxu0 %v4610
        %v7163 = vpop.f32.mrf.mxu0
        %v7164 = vadd.f32 %v6995, %v7163
        %v7165 = vpop.f32.mrf.mxu0
        %v7166 = vadd.f32 %v6997, %v7165
        %7167 = vmatmul.bf16.gmra.mxu0 %v4628
        %v7168 = vpop.f32.mrf.mxu0
        %v7169 = vadd.f32 %v7000, %v7168
        %v7170 = vpop.f32.mrf.mxu0
        %v7171 = vadd.f32 %v7002, %v7170
        %7172 = vmatmul.bf16.gmra.mxu0 %v4646
        %v7173 = vpop.f32.mrf.mxu0
        %v7174 = vadd.f32 %v7005, %v7173
        %v7175 = vpop.f32.mrf.mxu0
        %v7176 = vadd.f32 %v7007, %v7175
        %7177 = vmatmul.bf16.gmra.mxu0 %v4664
        %v7178 = vpop.f32.mrf.mxu0
        %v7179 = vadd.f32 %v7010, %v7178
        %v7180 = vpop.f32.mrf.mxu0
        %v7181 = vadd.f32 %v7012, %v7180
        %7182 = vmatmul.bf16.gmra.mxu0 %v4682
        %v7183 = vpop.f32.mrf.mxu0
        %v7184 = vadd.f32 %v7015, %v7183
        %v7185 = vpop.f32.mrf.mxu0
        %v7186 = vadd.f32 %v7017, %v7185
        %7187 = vmatmul.bf16.gmra.mxu0 %v4700
        %v7188 = vpop.f32.mrf.mxu0
        %v7189 = vadd.f32 %v7020, %v7188
        %v7190 = vpop.f32.mrf.mxu0
        %v7191 = vadd.f32 %v7022, %v7190
        %7192 = vmatmul.bf16.gmra.mxu0 %v4718
        %v7193 = vpop.f32.mrf.mxu0
        %v7194 = vadd.f32 %v7025, %v7193
        %v7195 = vpop.f32.mrf.mxu0
        %v7196 = vadd.f32 %v7027, %v7195
        %7197 = vmatmul.bf16.gmra.mxu0 %v4736
        %v7198 = vpop.f32.mrf.mxu0
        %v7199 = vadd.f32 %v7030, %v7198
        %v7200 = vpop.f32.mrf.mxu0
        %v7201 = vadd.f32 %v7032, %v7200
        %7202 = vdwg.mxu0
        %7203 = vmatpush.bf16.msra.mxu0 %v5956
        %7204 = vmatpush.bf16.msra.mxu0 %v5955
        %7205 = vmatpush.bf16.msra.mxu0 %v5954
        %7206 = vmatpush.bf16.msra.mxu0 %v5953
        %7207 = vmatpush.bf16.msra.mxu0 %v5952
        %7208 = vmatpush.bf16.msra.mxu0 %v5951
        %7209 = vmatpush.bf16.msra.mxu0 %v5950
        %7210 = vmatpush.bf16.msra.mxu0 %v5949
        %7211 = vmatmul.bf16.gmra.mxu0 %v4179
        %v7212 = vpop.f32.mrf.mxu0
        %v7213 = vadd.f32 %v7044, %v7212
        %v7214 = vpop.f32.mrf.mxu0
        %v7215 = vadd.f32 %v7046, %v7214
        %7216 = vmatmul.bf16.gmra.mxu0 %v4197
        %v7217 = vpop.f32.mrf.mxu0
        %v7218 = vadd.f32 %v7049, %v7217
        %v7219 = vpop.f32.mrf.mxu0
        %v7220 = vadd.f32 %v7051, %v7219
        %7221 = vmatmul.bf16.gmra.mxu0 %v4215
        %v7222 = vpop.f32.mrf.mxu0
        %v7223 = vadd.f32 %v7054, %v7222
        %v7224 = vpop.f32.mrf.mxu0
        %v7225 = vadd.f32 %v7056, %v7224
        %7226 = vmatmul.bf16.gmra.mxu0 %v4233
        %v7227 = vpop.f32.mrf.mxu0
        %v7228 = vadd.f32 %v7059, %v7227
        %v7229 = vpop.f32.mrf.mxu0
        %v7230 = vadd.f32 %v7061, %v7229
        %7231 = vmatmul.bf16.gmra.mxu0 %v4251
        %v7232 = vpop.f32.mrf.mxu0
        %v7233 = vadd.f32 %v7064, %v7232
        %v7234 = vpop.f32.mrf.mxu0
        %v7235 = vadd.f32 %v7066, %v7234
        %7236 = vmatmul.bf16.gmra.mxu0 %v4269
        %v7237 = vpop.f32.mrf.mxu0
        %v7238 = vadd.f32 %v7069, %v7237
        %v7239 = vpop.f32.mrf.mxu0
        %v7240 = vadd.f32 %v7071, %v7239
        %7241 = vmatmul.bf16.gmra.mxu0 %v4287
        %v7242 = vpop.f32.mrf.mxu0
        %v7243 = vadd.f32 %v7074, %v7242
        %v7244 = vpop.f32.mrf.mxu0
        %v7245 = vadd.f32 %v7076, %v7244
        %7246 = vmatmul.bf16.gmra.mxu0 %v4305
        %v7247 = vpop.f32.mrf.mxu0
        %v7248 = vadd.f32 %v7079, %v7247
        %v7249 = vpop.f32.mrf.mxu0
        %v7250 = vadd.f32 %v7081, %v7249
        %7251 = vmatmul.bf16.gmra.mxu0 %v4323
        %v7252 = vpop.f32.mrf.mxu0
        %v7253 = vadd.f32 %v7084, %v7252
        %v7254 = vpop.f32.mrf.mxu0
        %v7255 = vadd.f32 %v7086, %v7254
        %7256 = vmatmul.bf16.gmra.mxu0 %v4341
        %v7257 = vpop.f32.mrf.mxu0
        %v7258 = vadd.f32 %v7089, %v7257
        %v7259 = vpop.f32.mrf.mxu0
        %v7260 = vadd.f32 %v7091, %v7259
        %7261 = vmatmul.bf16.gmra.mxu0 %v4359
        %v7262 = vpop.f32.mrf.mxu0
        %v7263 = vadd.f32 %v7094, %v7262
        %v7264 = vpop.f32.mrf.mxu0
        %v7265 = vadd.f32 %v7096, %v7264
        %7266 = vmatmul.bf16.gmra.mxu0 %v4377
        %v7267 = vpop.f32.mrf.mxu0
        %v7268 = vadd.f32 %v7099, %v7267
        %v7269 = vpop.f32.mrf.mxu0
        %v7270 = vadd.f32 %v7101, %v7269
        %7271 = vmatmul.bf16.gmra.mxu0 %v4395
        %v7272 = vpop.f32.mrf.mxu0
        %v7273 = vadd.f32 %v7104, %v7272
        %v7274 = vpop.f32.mrf.mxu0
        %v7275 = vadd.f32 %v7106, %v7274
        %7276 = vmatmul.bf16.gmra.mxu0 %v4413
        %v7277 = vpop.f32.mrf.mxu0
        %v7278 = vadd.f32 %v7109, %v7277
        %v7279 = vpop.f32.mrf.mxu0
        %v7280 = vadd.f32 %v7111, %v7279
        %7281 = vmatmul.bf16.gmra.mxu0 %v4431
        %v7282 = vpop.f32.mrf.mxu0
        %v7283 = vadd.f32 %v7114, %v7282
        %v7284 = vpop.f32.mrf.mxu0
        %v7285 = vadd.f32 %v7116, %v7284
        %7286 = vmatmul.bf16.gmra.mxu0 %v4449
        %v7287 = vpop.f32.mrf.mxu0
        %v7288 = vadd.f32 %v7119, %v7287
        %v7289 = vpop.f32.mrf.mxu0
        %v7290 = vadd.f32 %v7121, %v7289
        %7291 = vmatmul.bf16.gmra.mxu0 %v4467
        %v7292 = vpop.f32.mrf.mxu0
        %v7293 = vadd.f32 %v7124, %v7292
        %v7294 = vpop.f32.mrf.mxu0
        %v7295 = vadd.f32 %v7126, %v7294
        %7296 = vmatmul.bf16.gmra.mxu0 %v4485
        %v7297 = vpop.f32.mrf.mxu0
        %v7298 = vadd.f32 %v7129, %v7297
        %v7299 = vpop.f32.mrf.mxu0
        %v7300 = vadd.f32 %v7131, %v7299
        %7301 = vmatmul.bf16.gmra.mxu0 %v4503
        %v7302 = vpop.f32.mrf.mxu0
        %v7303 = vadd.f32 %v7134, %v7302
        %v7304 = vpop.f32.mrf.mxu0
        %v7305 = vadd.f32 %v7136, %v7304
        %7306 = vmatmul.bf16.gmra.mxu0 %v4521
        %v7307 = vpop.f32.mrf.mxu0
        %v7308 = vadd.f32 %v7139, %v7307
        %v7309 = vpop.f32.mrf.mxu0
        %v7310 = vadd.f32 %v7141, %v7309
        %7311 = vmatmul.bf16.gmra.mxu0 %v4539
        %v7312 = vpop.f32.mrf.mxu0
        %v7313 = vadd.f32 %v7144, %v7312
        %v7314 = vpop.f32.mrf.mxu0
        %v7315 = vadd.f32 %v7146, %v7314
        %7316 = vmatmul.bf16.gmra.mxu0 %v4557
        %v7317 = vpop.f32.mrf.mxu0
        %v7318 = vadd.f32 %v7149, %v7317
        %v7319 = vpop.f32.mrf.mxu0
        %v7320 = vadd.f32 %v7151, %v7319
        %7321 = vmatmul.bf16.gmra.mxu0 %v4575
        %v7322 = vpop.f32.mrf.mxu0
        %v7323 = vadd.f32 %v7154, %v7322
        %v7324 = vpop.f32.mrf.mxu0
        %v7325 = vadd.f32 %v7156, %v7324
        %7326 = vmatmul.bf16.gmra.mxu0 %v4593
        %v7327 = vpop.f32.mrf.mxu0
        %v7328 = vadd.f32 %v7159, %v7327
        %v7329 = vpop.f32.mrf.mxu0
        %v7330 = vadd.f32 %v7161, %v7329
        %7331 = vmatmul.bf16.gmra.mxu0 %v4611
        %v7332 = vpop.f32.mrf.mxu0
        %v7333 = vadd.f32 %v7164, %v7332
        %v7334 = vpop.f32.mrf.mxu0
        %v7335 = vadd.f32 %v7166, %v7334
        %7336 = vmatmul.bf16.gmra.mxu0 %v4629
        %v7337 = vpop.f32.mrf.mxu0
        %v7338 = vadd.f32 %v7169, %v7337
        %v7339 = vpop.f32.mrf.mxu0
        %v7340 = vadd.f32 %v7171, %v7339
        %7341 = vmatmul.bf16.gmra.mxu0 %v4647
        %v7342 = vpop.f32.mrf.mxu0
        %v7343 = vadd.f32 %v7174, %v7342
        %v7344 = vpop.f32.mrf.mxu0
        %v7345 = vadd.f32 %v7176, %v7344
        %7346 = vmatmul.bf16.gmra.mxu0 %v4665
        %v7347 = vpop.f32.mrf.mxu0
        %v7348 = vadd.f32 %v7179, %v7347
        %v7349 = vpop.f32.mrf.mxu0
        %v7350 = vadd.f32 %v7181, %v7349
        %7351 = vmatmul.bf16.gmra.mxu0 %v4683
        %v7352 = vpop.f32.mrf.mxu0
        %v7353 = vadd.f32 %v7184, %v7352
        %v7354 = vpop.f32.mrf.mxu0
        %v7355 = vadd.f32 %v7186, %v7354
        %7356 = vmatmul.bf16.gmra.mxu0 %v4701
        %v7357 = vpop.f32.mrf.mxu0
        %v7358 = vadd.f32 %v7189, %v7357
        %v7359 = vpop.f32.mrf.mxu0
        %v7360 = vadd.f32 %v7191, %v7359
        %7361 = vmatmul.bf16.gmra.mxu0 %v4719
        %v7362 = vpop.f32.mrf.mxu0
        %v7363 = vadd.f32 %v7194, %v7362
        %v7364 = vpop.f32.mrf.mxu0
        %v7365 = vadd.f32 %v7196, %v7364
        %7366 = vmatmul.bf16.gmra.mxu0 %v4737
        %v7367 = vpop.f32.mrf.mxu0
        %v7368 = vadd.f32 %v7199, %v7367
        %v7369 = vpop.f32.mrf.mxu0
        %v7370 = vadd.f32 %v7201, %v7369
        %7371 = vdwg.mxu0
        %7372 = vmatpush.bf16.msra.mxu0 %v5964
        %7373 = vmatpush.bf16.msra.mxu0 %v5963
        %7374 = vmatpush.bf16.msra.mxu0 %v5962
        %7375 = vmatpush.bf16.msra.mxu0 %v5961
        %7376 = vmatpush.bf16.msra.mxu0 %v5960
        %7377 = vmatpush.bf16.msra.mxu0 %v5959
        %7378 = vmatpush.bf16.msra.mxu0 %v5958
        %7379 = vmatpush.bf16.msra.mxu0 %v5957
        %7380 = vmatmul.bf16.gmra.mxu0 %v4180
        %v7381 = vpop.f32.mrf.mxu0
        %v7382 = vadd.f32 %v7213, %v7381
        %v7383 = vpop.f32.mrf.mxu0
        %v7384 = vadd.f32 %v7215, %v7383
        %7385 = vmatmul.bf16.gmra.mxu0 %v4198
        %v7386 = vpop.f32.mrf.mxu0
        %v7387 = vadd.f32 %v7218, %v7386
        %v7388 = vpop.f32.mrf.mxu0
        %v7389 = vadd.f32 %v7220, %v7388
        %7390 = vmatmul.bf16.gmra.mxu0 %v4216
        %v7391 = vpop.f32.mrf.mxu0
        %v7392 = vadd.f32 %v7223, %v7391
        %v7393 = vpop.f32.mrf.mxu0
        %v7394 = vadd.f32 %v7225, %v7393
        %7395 = vmatmul.bf16.gmra.mxu0 %v4234
        %v7396 = vpop.f32.mrf.mxu0
        %v7397 = vadd.f32 %v7228, %v7396
        %v7398 = vpop.f32.mrf.mxu0
        %v7399 = vadd.f32 %v7230, %v7398
        %7400 = vmatmul.bf16.gmra.mxu0 %v4252
        %v7401 = vpop.f32.mrf.mxu0
        %v7402 = vadd.f32 %v7233, %v7401
        %v7403 = vpop.f32.mrf.mxu0
        %v7404 = vadd.f32 %v7235, %v7403
        %7405 = vmatmul.bf16.gmra.mxu0 %v4270
        %v7406 = vpop.f32.mrf.mxu0
        %v7407 = vadd.f32 %v7238, %v7406
        %v7408 = vpop.f32.mrf.mxu0
        %v7409 = vadd.f32 %v7240, %v7408
        %7410 = vmatmul.bf16.gmra.mxu0 %v4288
        %v7411 = vpop.f32.mrf.mxu0
        %v7412 = vadd.f32 %v7243, %v7411
        %v7413 = vpop.f32.mrf.mxu0
        %v7414 = vadd.f32 %v7245, %v7413
        %7415 = vmatmul.bf16.gmra.mxu0 %v4306
        %v7416 = vpop.f32.mrf.mxu0
        %v7417 = vadd.f32 %v7248, %v7416
        %v7418 = vpop.f32.mrf.mxu0
        %v7419 = vadd.f32 %v7250, %v7418
        %7420 = vmatmul.bf16.gmra.mxu0 %v4324
        %v7421 = vpop.f32.mrf.mxu0
        %v7422 = vadd.f32 %v7253, %v7421
        %v7423 = vpop.f32.mrf.mxu0
        %v7424 = vadd.f32 %v7255, %v7423
        %7425 = vmatmul.bf16.gmra.mxu0 %v4342
        %v7426 = vpop.f32.mrf.mxu0
        %v7427 = vadd.f32 %v7258, %v7426
        %v7428 = vpop.f32.mrf.mxu0
        %v7429 = vadd.f32 %v7260, %v7428
        %7430 = vmatmul.bf16.gmra.mxu0 %v4360
        %v7431 = vpop.f32.mrf.mxu0
        %v7432 = vadd.f32 %v7263, %v7431
        %v7433 = vpop.f32.mrf.mxu0
        %v7434 = vadd.f32 %v7265, %v7433
        %7435 = vmatmul.bf16.gmra.mxu0 %v4378
        %v7436 = vpop.f32.mrf.mxu0
        %v7437 = vadd.f32 %v7268, %v7436
        %v7438 = vpop.f32.mrf.mxu0
        %v7439 = vadd.f32 %v7270, %v7438
        %7440 = vmatmul.bf16.gmra.mxu0 %v4396
        %v7441 = vpop.f32.mrf.mxu0
        %v7442 = vadd.f32 %v7273, %v7441
        %v7443 = vpop.f32.mrf.mxu0
        %v7444 = vadd.f32 %v7275, %v7443
        %7445 = vmatmul.bf16.gmra.mxu0 %v4414
        %v7446 = vpop.f32.mrf.mxu0
        %v7447 = vadd.f32 %v7278, %v7446
        %v7448 = vpop.f32.mrf.mxu0
        %v7449 = vadd.f32 %v7280, %v7448
        %7450 = vmatmul.bf16.gmra.mxu0 %v4432
        %v7451 = vpop.f32.mrf.mxu0
        %v7452 = vadd.f32 %v7283, %v7451
        %v7453 = vpop.f32.mrf.mxu0
        %v7454 = vadd.f32 %v7285, %v7453
        %7455 = vmatmul.bf16.gmra.mxu0 %v4450
        %v7456 = vpop.f32.mrf.mxu0
        %v7457 = vadd.f32 %v7288, %v7456
        %v7458 = vpop.f32.mrf.mxu0
        %v7459 = vadd.f32 %v7290, %v7458
        %7460 = vmatmul.bf16.gmra.mxu0 %v4468
        %v7461 = vpop.f32.mrf.mxu0
        %v7462 = vadd.f32 %v7293, %v7461
        %v7463 = vpop.f32.mrf.mxu0
        %v7464 = vadd.f32 %v7295, %v7463
        %7465 = vmatmul.bf16.gmra.mxu0 %v4486
        %v7466 = vpop.f32.mrf.mxu0
        %v7467 = vadd.f32 %v7298, %v7466
        %v7468 = vpop.f32.mrf.mxu0
        %v7469 = vadd.f32 %v7300, %v7468
        %7470 = vmatmul.bf16.gmra.mxu0 %v4504
        %v7471 = vpop.f32.mrf.mxu0
        %v7472 = vadd.f32 %v7303, %v7471
        %v7473 = vpop.f32.mrf.mxu0
        %v7474 = vadd.f32 %v7305, %v7473
        %7475 = vmatmul.bf16.gmra.mxu0 %v4522
        %v7476 = vpop.f32.mrf.mxu0
        %v7477 = vadd.f32 %v7308, %v7476
        %v7478 = vpop.f32.mrf.mxu0
        %v7479 = vadd.f32 %v7310, %v7478
        %7480 = vmatmul.bf16.gmra.mxu0 %v4540
        %v7481 = vpop.f32.mrf.mxu0
        %v7482 = vadd.f32 %v7313, %v7481
        %v7483 = vpop.f32.mrf.mxu0
        %v7484 = vadd.f32 %v7315, %v7483
        %7485 = vmatmul.bf16.gmra.mxu0 %v4558
        %v7486 = vpop.f32.mrf.mxu0
        %v7487 = vadd.f32 %v7318, %v7486
        %v7488 = vpop.f32.mrf.mxu0
        %v7489 = vadd.f32 %v7320, %v7488
        %7490 = vmatmul.bf16.gmra.mxu0 %v4576
        %v7491 = vpop.f32.mrf.mxu0
        %v7492 = vadd.f32 %v7323, %v7491
        %v7493 = vpop.f32.mrf.mxu0
        %v7494 = vadd.f32 %v7325, %v7493
        %7495 = vmatmul.bf16.gmra.mxu0 %v4594
        %v7496 = vpop.f32.mrf.mxu0
        %v7497 = vadd.f32 %v7328, %v7496
        %v7498 = vpop.f32.mrf.mxu0
        %v7499 = vadd.f32 %v7330, %v7498
        %7500 = vmatmul.bf16.gmra.mxu0 %v4612
        %v7501 = vpop.f32.mrf.mxu0
        %v7502 = vadd.f32 %v7333, %v7501
        %v7503 = vpop.f32.mrf.mxu0
        %v7504 = vadd.f32 %v7335, %v7503
        %7505 = vmatmul.bf16.gmra.mxu0 %v4630
        %v7506 = vpop.f32.mrf.mxu0
        %v7507 = vadd.f32 %v7338, %v7506
        %v7508 = vpop.f32.mrf.mxu0
        %v7509 = vadd.f32 %v7340, %v7508
        %7510 = vmatmul.bf16.gmra.mxu0 %v4648
        %v7511 = vpop.f32.mrf.mxu0
        %v7512 = vadd.f32 %v7343, %v7511
        %v7513 = vpop.f32.mrf.mxu0
        %v7514 = vadd.f32 %v7345, %v7513
        %7515 = vmatmul.bf16.gmra.mxu0 %v4666
        %v7516 = vpop.f32.mrf.mxu0
        %v7517 = vadd.f32 %v7348, %v7516
        %v7518 = vpop.f32.mrf.mxu0
        %v7519 = vadd.f32 %v7350, %v7518
        %7520 = vmatmul.bf16.gmra.mxu0 %v4684
        %v7521 = vpop.f32.mrf.mxu0
        %v7522 = vadd.f32 %v7353, %v7521
        %v7523 = vpop.f32.mrf.mxu0
        %v7524 = vadd.f32 %v7355, %v7523
        %7525 = vmatmul.bf16.gmra.mxu0 %v4702
        %v7526 = vpop.f32.mrf.mxu0
        %v7527 = vadd.f32 %v7358, %v7526
        %v7528 = vpop.f32.mrf.mxu0
        %v7529 = vadd.f32 %v7360, %v7528
        %7530 = vmatmul.bf16.gmra.mxu0 %v4720
        %v7531 = vpop.f32.mrf.mxu0
        %v7532 = vadd.f32 %v7363, %v7531
        %v7533 = vpop.f32.mrf.mxu0
        %v7534 = vadd.f32 %v7365, %v7533
        %7535 = vmatmul.bf16.gmra.mxu0 %v4738
        %v7536 = vpop.f32.mrf.mxu0
        %v7537 = vadd.f32 %v7368, %v7536
        %v7538 = vpop.f32.mrf.mxu0
        %v7539 = vadd.f32 %v7370, %v7538
        %7540 = vdwg.mxu0
        %7541 = vmatpush.bf16.msra.mxu0 %v5972
        %7542 = vmatpush.bf16.msra.mxu0 %v5971
        %7543 = vmatpush.bf16.msra.mxu0 %v5970
        %7544 = vmatpush.bf16.msra.mxu0 %v5969
        %7545 = vmatpush.bf16.msra.mxu0 %v5968
        %7546 = vmatpush.bf16.msra.mxu0 %v5967
        %7547 = vmatpush.bf16.msra.mxu0 %v5966
        %7548 = vmatpush.bf16.msra.mxu0 %v5965
        %7549 = vmatmul.bf16.gmra.mxu0 %v4181
        %v7550 = vpop.f32.mrf.mxu0
        %v7551 = vadd.f32 %v7382, %v7550
        %v7552 = vpop.f32.mrf.mxu0
        %v7553 = vadd.f32 %v7384, %v7552
        %7554 = vmatmul.bf16.gmra.mxu0 %v4199
        %v7555 = vpop.f32.mrf.mxu0
        %v7556 = vadd.f32 %v7387, %v7555
        %v7557 = vpop.f32.mrf.mxu0
        %v7558 = vadd.f32 %v7389, %v7557
        %7559 = vmatmul.bf16.gmra.mxu0 %v4217
        %v7560 = vpop.f32.mrf.mxu0
        %v7561 = vadd.f32 %v7392, %v7560
        %v7562 = vpop.f32.mrf.mxu0
        %v7563 = vadd.f32 %v7394, %v7562
        %7564 = vmatmul.bf16.gmra.mxu0 %v4235
        %v7565 = vpop.f32.mrf.mxu0
        %v7566 = vadd.f32 %v7397, %v7565
        %v7567 = vpop.f32.mrf.mxu0
        %v7568 = vadd.f32 %v7399, %v7567
        %7569 = vmatmul.bf16.gmra.mxu0 %v4253
        %v7570 = vpop.f32.mrf.mxu0
        %v7571 = vadd.f32 %v7402, %v7570
        %v7572 = vpop.f32.mrf.mxu0
        %v7573 = vadd.f32 %v7404, %v7572
        %7574 = vmatmul.bf16.gmra.mxu0 %v4271
        %v7575 = vpop.f32.mrf.mxu0
        %v7576 = vadd.f32 %v7407, %v7575
        %v7577 = vpop.f32.mrf.mxu0
        %v7578 = vadd.f32 %v7409, %v7577
        %7579 = vmatmul.bf16.gmra.mxu0 %v4289
        %v7580 = vpop.f32.mrf.mxu0
        %v7581 = vadd.f32 %v7412, %v7580
        %v7582 = vpop.f32.mrf.mxu0
        %v7583 = vadd.f32 %v7414, %v7582
        %7584 = vmatmul.bf16.gmra.mxu0 %v4307
        %v7585 = vpop.f32.mrf.mxu0
        %v7586 = vadd.f32 %v7417, %v7585
        %v7587 = vpop.f32.mrf.mxu0
        %v7588 = vadd.f32 %v7419, %v7587
        %7589 = vmatmul.bf16.gmra.mxu0 %v4325
        %v7590 = vpop.f32.mrf.mxu0
        %v7591 = vadd.f32 %v7422, %v7590
        %v7592 = vpop.f32.mrf.mxu0
        %v7593 = vadd.f32 %v7424, %v7592
        %7594 = vmatmul.bf16.gmra.mxu0 %v4343
        %v7595 = vpop.f32.mrf.mxu0
        %v7596 = vadd.f32 %v7427, %v7595
        %v7597 = vpop.f32.mrf.mxu0
        %v7598 = vadd.f32 %v7429, %v7597
        %7599 = vmatmul.bf16.gmra.mxu0 %v4361
        %v7600 = vpop.f32.mrf.mxu0
        %v7601 = vadd.f32 %v7432, %v7600
        %v7602 = vpop.f32.mrf.mxu0
        %v7603 = vadd.f32 %v7434, %v7602
        %7604 = vmatmul.bf16.gmra.mxu0 %v4379
        %v7605 = vpop.f32.mrf.mxu0
        %v7606 = vadd.f32 %v7437, %v7605
        %v7607 = vpop.f32.mrf.mxu0
        %v7608 = vadd.f32 %v7439, %v7607
        %7609 = vmatmul.bf16.gmra.mxu0 %v4397
        %v7610 = vpop.f32.mrf.mxu0
        %v7611 = vadd.f32 %v7442, %v7610
        %v7612 = vpop.f32.mrf.mxu0
        %v7613 = vadd.f32 %v7444, %v7612
        %7614 = vmatmul.bf16.gmra.mxu0 %v4415
        %v7615 = vpop.f32.mrf.mxu0
        %v7616 = vadd.f32 %v7447, %v7615
        %v7617 = vpop.f32.mrf.mxu0
        %v7618 = vadd.f32 %v7449, %v7617
        %7619 = vmatmul.bf16.gmra.mxu0 %v4433
        %v7620 = vpop.f32.mrf.mxu0
        %v7621 = vadd.f32 %v7452, %v7620
        %v7622 = vpop.f32.mrf.mxu0
        %v7623 = vadd.f32 %v7454, %v7622
        %7624 = vmatmul.bf16.gmra.mxu0 %v4451
        %v7625 = vpop.f32.mrf.mxu0
        %v7626 = vadd.f32 %v7457, %v7625
        %v7627 = vpop.f32.mrf.mxu0
        %v7628 = vadd.f32 %v7459, %v7627
        %7629 = vmatmul.bf16.gmra.mxu0 %v4469
        %v7630 = vpop.f32.mrf.mxu0
        %v7631 = vadd.f32 %v7462, %v7630
        %v7632 = vpop.f32.mrf.mxu0
        %v7633 = vadd.f32 %v7464, %v7632
        %7634 = vmatmul.bf16.gmra.mxu0 %v4487
        %v7635 = vpop.f32.mrf.mxu0
        %v7636 = vadd.f32 %v7467, %v7635
        %v7637 = vpop.f32.mrf.mxu0
        %v7638 = vadd.f32 %v7469, %v7637
        %7639 = vmatmul.bf16.gmra.mxu0 %v4505
        %v7640 = vpop.f32.mrf.mxu0
        %v7641 = vadd.f32 %v7472, %v7640
        %v7642 = vpop.f32.mrf.mxu0
        %v7643 = vadd.f32 %v7474, %v7642
        %7644 = vmatmul.bf16.gmra.mxu0 %v4523
        %v7645 = vpop.f32.mrf.mxu0
        %v7646 = vadd.f32 %v7477, %v7645
        %v7647 = vpop.f32.mrf.mxu0
        %v7648 = vadd.f32 %v7479, %v7647
        %7649 = vmatmul.bf16.gmra.mxu0 %v4541
        %v7650 = vpop.f32.mrf.mxu0
        %v7651 = vadd.f32 %v7482, %v7650
        %v7652 = vpop.f32.mrf.mxu0
        %v7653 = vadd.f32 %v7484, %v7652
        %7654 = vmatmul.bf16.gmra.mxu0 %v4559
        %v7655 = vpop.f32.mrf.mxu0
        %v7656 = vadd.f32 %v7487, %v7655
        %v7657 = vpop.f32.mrf.mxu0
        %v7658 = vadd.f32 %v7489, %v7657
        %7659 = vmatmul.bf16.gmra.mxu0 %v4577
        %v7660 = vpop.f32.mrf.mxu0
        %v7661 = vadd.f32 %v7492, %v7660
        %v7662 = vpop.f32.mrf.mxu0
        %v7663 = vadd.f32 %v7494, %v7662
        %7664 = vmatmul.bf16.gmra.mxu0 %v4595
        %v7665 = vpop.f32.mrf.mxu0
        %v7666 = vadd.f32 %v7497, %v7665
        %v7667 = vpop.f32.mrf.mxu0
        %v7668 = vadd.f32 %v7499, %v7667
        %7669 = vmatmul.bf16.gmra.mxu0 %v4613
        %v7670 = vpop.f32.mrf.mxu0
        %v7671 = vadd.f32 %v7502, %v7670
        %v7672 = vpop.f32.mrf.mxu0
        %v7673 = vadd.f32 %v7504, %v7672
        %7674 = vmatmul.bf16.gmra.mxu0 %v4631
        %v7675 = vpop.f32.mrf.mxu0
        %v7676 = vadd.f32 %v7507, %v7675
        %v7677 = vpop.f32.mrf.mxu0
        %v7678 = vadd.f32 %v7509, %v7677
        %7679 = vmatmul.bf16.gmra.mxu0 %v4649
        %v7680 = vpop.f32.mrf.mxu0
        %v7681 = vadd.f32 %v7512, %v7680
        %v7682 = vpop.f32.mrf.mxu0
        %v7683 = vadd.f32 %v7514, %v7682
        %7684 = vmatmul.bf16.gmra.mxu0 %v4667
        %v7685 = vpop.f32.mrf.mxu0
        %v7686 = vadd.f32 %v7517, %v7685
        %v7687 = vpop.f32.mrf.mxu0
        %v7688 = vadd.f32 %v7519, %v7687
        %7689 = vmatmul.bf16.gmra.mxu0 %v4685
        %v7690 = vpop.f32.mrf.mxu0
        %v7691 = vadd.f32 %v7522, %v7690
        %v7692 = vpop.f32.mrf.mxu0
        %v7693 = vadd.f32 %v7524, %v7692
        %7694 = vmatmul.bf16.gmra.mxu0 %v4703
        %v7695 = vpop.f32.mrf.mxu0
        %v7696 = vadd.f32 %v7527, %v7695
        %v7697 = vpop.f32.mrf.mxu0
        %v7698 = vadd.f32 %v7529, %v7697
        %7699 = vmatmul.bf16.gmra.mxu0 %v4721
        %v7700 = vpop.f32.mrf.mxu0
        %v7701 = vadd.f32 %v7532, %v7700
        %v7702 = vpop.f32.mrf.mxu0
        %v7703 = vadd.f32 %v7534, %v7702
        %7704 = vmatmul.bf16.gmra.mxu0 %v4739
        %v7705 = vpop.f32.mrf.mxu0
        %v7706 = vadd.f32 %v7537, %v7705
        %v7707 = vpop.f32.mrf.mxu0
        %v7708 = vadd.f32 %v7539, %v7707
        %7709 = vdwg.mxu0
        %7710 = vmatpush.bf16.msra.mxu0 %v5980
        %7711 = vmatpush.bf16.msra.mxu0 %v5979
        %7712 = vmatpush.bf16.msra.mxu0 %v5978
        %7713 = vmatpush.bf16.msra.mxu0 %v5977
        %7714 = vmatpush.bf16.msra.mxu0 %v5976
        %7715 = vmatpush.bf16.msra.mxu0 %v5975
        %7716 = vmatpush.bf16.msra.mxu0 %v5974
        %7717 = vmatpush.bf16.msra.mxu0 %v5973
        %7718 = vmatmul.bf16.gmra.mxu0 %v4182
        %v7719 = vpop.f32.mrf.mxu0
        %v7720 = vadd.f32 %v7551, %v7719
        %v7721 = vpop.f32.mrf.mxu0
        %v7722 = vadd.f32 %v7553, %v7721
        %7723 = vmatmul.bf16.gmra.mxu0 %v4200
        %v7724 = vpop.f32.mrf.mxu0
        %v7725 = vadd.f32 %v7556, %v7724
        %v7726 = vpop.f32.mrf.mxu0
        %v7727 = vadd.f32 %v7558, %v7726
        %7728 = vmatmul.bf16.gmra.mxu0 %v4218
        %v7729 = vpop.f32.mrf.mxu0
        %v7730 = vadd.f32 %v7561, %v7729
        %v7731 = vpop.f32.mrf.mxu0
        %v7732 = vadd.f32 %v7563, %v7731
        %7733 = vmatmul.bf16.gmra.mxu0 %v4236
        %v7734 = vpop.f32.mrf.mxu0
        %v7735 = vadd.f32 %v7566, %v7734
        %v7736 = vpop.f32.mrf.mxu0
        %v7737 = vadd.f32 %v7568, %v7736
        %7738 = vmatmul.bf16.gmra.mxu0 %v4254
        %v7739 = vpop.f32.mrf.mxu0
        %v7740 = vadd.f32 %v7571, %v7739
        %v7741 = vpop.f32.mrf.mxu0
        %v7742 = vadd.f32 %v7573, %v7741
        %7743 = vmatmul.bf16.gmra.mxu0 %v4272
        %v7744 = vpop.f32.mrf.mxu0
        %v7745 = vadd.f32 %v7576, %v7744
        %v7746 = vpop.f32.mrf.mxu0
        %v7747 = vadd.f32 %v7578, %v7746
        %7748 = vmatmul.bf16.gmra.mxu0 %v4290
        %v7749 = vpop.f32.mrf.mxu0
        %v7750 = vadd.f32 %v7581, %v7749
        %v7751 = vpop.f32.mrf.mxu0
        %v7752 = vadd.f32 %v7583, %v7751
        %7753 = vmatmul.bf16.gmra.mxu0 %v4308
        %v7754 = vpop.f32.mrf.mxu0
        %v7755 = vadd.f32 %v7586, %v7754
        %v7756 = vpop.f32.mrf.mxu0
        %v7757 = vadd.f32 %v7588, %v7756
        %7758 = vmatmul.bf16.gmra.mxu0 %v4326
        %v7759 = vpop.f32.mrf.mxu0
        %v7760 = vadd.f32 %v7591, %v7759
        %v7761 = vpop.f32.mrf.mxu0
        %v7762 = vadd.f32 %v7593, %v7761
        %7763 = vmatmul.bf16.gmra.mxu0 %v4344
        %v7764 = vpop.f32.mrf.mxu0
        %v7765 = vadd.f32 %v7596, %v7764
        %v7766 = vpop.f32.mrf.mxu0
        %v7767 = vadd.f32 %v7598, %v7766
        %7768 = vmatmul.bf16.gmra.mxu0 %v4362
        %v7769 = vpop.f32.mrf.mxu0
        %v7770 = vadd.f32 %v7601, %v7769
        %v7771 = vpop.f32.mrf.mxu0
        %v7772 = vadd.f32 %v7603, %v7771
        %7773 = vmatmul.bf16.gmra.mxu0 %v4380
        %v7774 = vpop.f32.mrf.mxu0
        %v7775 = vadd.f32 %v7606, %v7774
        %v7776 = vpop.f32.mrf.mxu0
        %v7777 = vadd.f32 %v7608, %v7776
        %7778 = vmatmul.bf16.gmra.mxu0 %v4398
        %v7779 = vpop.f32.mrf.mxu0
        %v7780 = vadd.f32 %v7611, %v7779
        %v7781 = vpop.f32.mrf.mxu0
        %v7782 = vadd.f32 %v7613, %v7781
        %7783 = vmatmul.bf16.gmra.mxu0 %v4416
        %v7784 = vpop.f32.mrf.mxu0
        %v7785 = vadd.f32 %v7616, %v7784
        %v7786 = vpop.f32.mrf.mxu0
        %v7787 = vadd.f32 %v7618, %v7786
        %7788 = vmatmul.bf16.gmra.mxu0 %v4434
        %v7789 = vpop.f32.mrf.mxu0
        %v7790 = vadd.f32 %v7621, %v7789
        %v7791 = vpop.f32.mrf.mxu0
        %v7792 = vadd.f32 %v7623, %v7791
        %7793 = vmatmul.bf16.gmra.mxu0 %v4452
        %v7794 = vpop.f32.mrf.mxu0
        %v7795 = vadd.f32 %v7626, %v7794
        %v7796 = vpop.f32.mrf.mxu0
        %v7797 = vadd.f32 %v7628, %v7796
        %7798 = vmatmul.bf16.gmra.mxu0 %v4470
        %v7799 = vpop.f32.mrf.mxu0
        %v7800 = vadd.f32 %v7631, %v7799
        %v7801 = vpop.f32.mrf.mxu0
        %v7802 = vadd.f32 %v7633, %v7801
        %7803 = vmatmul.bf16.gmra.mxu0 %v4488
        %v7804 = vpop.f32.mrf.mxu0
        %v7805 = vadd.f32 %v7636, %v7804
        %v7806 = vpop.f32.mrf.mxu0
        %v7807 = vadd.f32 %v7638, %v7806
        %7808 = vmatmul.bf16.gmra.mxu0 %v4506
        %v7809 = vpop.f32.mrf.mxu0
        %v7810 = vadd.f32 %v7641, %v7809
        %v7811 = vpop.f32.mrf.mxu0
        %v7812 = vadd.f32 %v7643, %v7811
        %7813 = vmatmul.bf16.gmra.mxu0 %v4524
        %v7814 = vpop.f32.mrf.mxu0
        %v7815 = vadd.f32 %v7646, %v7814
        %v7816 = vpop.f32.mrf.mxu0
        %v7817 = vadd.f32 %v7648, %v7816
        %7818 = vmatmul.bf16.gmra.mxu0 %v4542
        %v7819 = vpop.f32.mrf.mxu0
        %v7820 = vadd.f32 %v7651, %v7819
        %v7821 = vpop.f32.mrf.mxu0
        %v7822 = vadd.f32 %v7653, %v7821
        %7823 = vmatmul.bf16.gmra.mxu0 %v4560
        %v7824 = vpop.f32.mrf.mxu0
        %v7825 = vadd.f32 %v7656, %v7824
        %v7826 = vpop.f32.mrf.mxu0
        %v7827 = vadd.f32 %v7658, %v7826
        %7828 = vmatmul.bf16.gmra.mxu0 %v4578
        %v7829 = vpop.f32.mrf.mxu0
        %v7830 = vadd.f32 %v7661, %v7829
        %v7831 = vpop.f32.mrf.mxu0
        %v7832 = vadd.f32 %v7663, %v7831
        %7833 = vmatmul.bf16.gmra.mxu0 %v4596
        %v7834 = vpop.f32.mrf.mxu0
        %v7835 = vadd.f32 %v7666, %v7834
        %v7836 = vpop.f32.mrf.mxu0
        %v7837 = vadd.f32 %v7668, %v7836
        %7838 = vmatmul.bf16.gmra.mxu0 %v4614
        %v7839 = vpop.f32.mrf.mxu0
        %v7840 = vadd.f32 %v7671, %v7839
        %v7841 = vpop.f32.mrf.mxu0
        %v7842 = vadd.f32 %v7673, %v7841
        %7843 = vmatmul.bf16.gmra.mxu0 %v4632
        %v7844 = vpop.f32.mrf.mxu0
        %v7845 = vadd.f32 %v7676, %v7844
        %v7846 = vpop.f32.mrf.mxu0
        %v7847 = vadd.f32 %v7678, %v7846
        %7848 = vmatmul.bf16.gmra.mxu0 %v4650
        %v7849 = vpop.f32.mrf.mxu0
        %v7850 = vadd.f32 %v7681, %v7849
        %v7851 = vpop.f32.mrf.mxu0
        %v7852 = vadd.f32 %v7683, %v7851
        %7853 = vmatmul.bf16.gmra.mxu0 %v4668
        %v7854 = vpop.f32.mrf.mxu0
        %v7855 = vadd.f32 %v7686, %v7854
        %v7856 = vpop.f32.mrf.mxu0
        %v7857 = vadd.f32 %v7688, %v7856
        %7858 = vmatmul.bf16.gmra.mxu0 %v4686
        %v7859 = vpop.f32.mrf.mxu0
        %v7860 = vadd.f32 %v7691, %v7859
        %v7861 = vpop.f32.mrf.mxu0
        %v7862 = vadd.f32 %v7693, %v7861
        %7863 = vmatmul.bf16.gmra.mxu0 %v4704
        %v7864 = vpop.f32.mrf.mxu0
        %v7865 = vadd.f32 %v7696, %v7864
        %v7866 = vpop.f32.mrf.mxu0
        %v7867 = vadd.f32 %v7698, %v7866
        %7868 = vmatmul.bf16.gmra.mxu0 %v4722
        %v7869 = vpop.f32.mrf.mxu0
        %v7870 = vadd.f32 %v7701, %v7869
        %v7871 = vpop.f32.mrf.mxu0
        %v7872 = vadd.f32 %v7703, %v7871
        %7873 = vmatmul.bf16.gmra.mxu0 %v4740
        %v7874 = vpop.f32.mrf.mxu0
        %v7875 = vadd.f32 %v7706, %v7874
        %v7876 = vpop.f32.mrf.mxu0
        %v7877 = vadd.f32 %v7708, %v7876
        %7878 = vdwg.mxu0
        %7879 = vmatpush.bf16.msra.mxu0 %v5988
        %7880 = vmatpush.bf16.msra.mxu0 %v5987
        %7881 = vmatpush.bf16.msra.mxu0 %v5986
        %7882 = vmatpush.bf16.msra.mxu0 %v5985
        %7883 = vmatpush.bf16.msra.mxu0 %v5984
        %7884 = vmatpush.bf16.msra.mxu0 %v5983
        %7885 = vmatpush.bf16.msra.mxu0 %v5982
        %7886 = vmatpush.bf16.msra.mxu0 %v5981
        %7887 = vmatmul.bf16.gmra.mxu0 %v4183
        %v7888 = vpop.f32.mrf.mxu0
        %v7889 = vadd.f32 %v7720, %v7888
        %v7890 = vpop.f32.mrf.mxu0
        %v7891 = vadd.f32 %v7722, %v7890
        %7892 = vmatmul.bf16.gmra.mxu0 %v4201
        %v7893 = vpop.f32.mrf.mxu0
        %v7894 = vadd.f32 %v7725, %v7893
        %v7895 = vpop.f32.mrf.mxu0
        %v7896 = vadd.f32 %v7727, %v7895
        %7897 = vmatmul.bf16.gmra.mxu0 %v4219
        %v7898 = vpop.f32.mrf.mxu0
        %v7899 = vadd.f32 %v7730, %v7898
        %v7900 = vpop.f32.mrf.mxu0
        %v7901 = vadd.f32 %v7732, %v7900
        %7902 = vmatmul.bf16.gmra.mxu0 %v4237
        %v7903 = vpop.f32.mrf.mxu0
        %v7904 = vadd.f32 %v7735, %v7903
        %v7905 = vpop.f32.mrf.mxu0
        %v7906 = vadd.f32 %v7737, %v7905
        %7907 = vmatmul.bf16.gmra.mxu0 %v4255
        %v7908 = vpop.f32.mrf.mxu0
        %v7909 = vadd.f32 %v7740, %v7908
        %v7910 = vpop.f32.mrf.mxu0
        %v7911 = vadd.f32 %v7742, %v7910
        %7912 = vmatmul.bf16.gmra.mxu0 %v4273
        %v7913 = vpop.f32.mrf.mxu0
        %v7914 = vadd.f32 %v7745, %v7913
        %v7915 = vpop.f32.mrf.mxu0
        %v7916 = vadd.f32 %v7747, %v7915
        %7917 = vmatmul.bf16.gmra.mxu0 %v4291
        %v7918 = vpop.f32.mrf.mxu0
        %v7919 = vadd.f32 %v7750, %v7918
        %v7920 = vpop.f32.mrf.mxu0
        %v7921 = vadd.f32 %v7752, %v7920
        %7922 = vmatmul.bf16.gmra.mxu0 %v4309
        %v7923 = vpop.f32.mrf.mxu0
        %v7924 = vadd.f32 %v7755, %v7923
        %v7925 = vpop.f32.mrf.mxu0
        %v7926 = vadd.f32 %v7757, %v7925
        %7927 = vmatmul.bf16.gmra.mxu0 %v4327
        %v7928 = vpop.f32.mrf.mxu0
        %v7929 = vadd.f32 %v7760, %v7928
        %v7930 = vpop.f32.mrf.mxu0
        %v7931 = vadd.f32 %v7762, %v7930
        %7932 = vmatmul.bf16.gmra.mxu0 %v4345
        %v7933 = vpop.f32.mrf.mxu0
        %v7934 = vadd.f32 %v7765, %v7933
        %v7935 = vpop.f32.mrf.mxu0
        %v7936 = vadd.f32 %v7767, %v7935
        %7937 = vmatmul.bf16.gmra.mxu0 %v4363
        %v7938 = vpop.f32.mrf.mxu0
        %v7939 = vadd.f32 %v7770, %v7938
        %v7940 = vpop.f32.mrf.mxu0
        %v7941 = vadd.f32 %v7772, %v7940
        %7942 = vmatmul.bf16.gmra.mxu0 %v4381
        %v7943 = vpop.f32.mrf.mxu0
        %v7944 = vadd.f32 %v7775, %v7943
        %v7945 = vpop.f32.mrf.mxu0
        %v7946 = vadd.f32 %v7777, %v7945
        %7947 = vmatmul.bf16.gmra.mxu0 %v4399
        %v7948 = vpop.f32.mrf.mxu0
        %v7949 = vadd.f32 %v7780, %v7948
        %v7950 = vpop.f32.mrf.mxu0
        %v7951 = vadd.f32 %v7782, %v7950
        %7952 = vmatmul.bf16.gmra.mxu0 %v4417
        %v7953 = vpop.f32.mrf.mxu0
        %v7954 = vadd.f32 %v7785, %v7953
        %v7955 = vpop.f32.mrf.mxu0
        %v7956 = vadd.f32 %v7787, %v7955
        %7957 = vmatmul.bf16.gmra.mxu0 %v4435
        %v7958 = vpop.f32.mrf.mxu0
        %v7959 = vadd.f32 %v7790, %v7958
        %v7960 = vpop.f32.mrf.mxu0
        %v7961 = vadd.f32 %v7792, %v7960
        %7962 = vmatmul.bf16.gmra.mxu0 %v4453
        %v7963 = vpop.f32.mrf.mxu0
        %v7964 = vadd.f32 %v7795, %v7963
        %v7965 = vpop.f32.mrf.mxu0
        %v7966 = vadd.f32 %v7797, %v7965
        %7967 = vmatmul.bf16.gmra.mxu0 %v4471
        %v7968 = vpop.f32.mrf.mxu0
        %v7969 = vadd.f32 %v7800, %v7968
        %v7970 = vpop.f32.mrf.mxu0
        %v7971 = vadd.f32 %v7802, %v7970
        %7972 = vmatmul.bf16.gmra.mxu0 %v4489
        %v7973 = vpop.f32.mrf.mxu0
        %v7974 = vadd.f32 %v7805, %v7973
        %v7975 = vpop.f32.mrf.mxu0
        %v7976 = vadd.f32 %v7807, %v7975
        %7977 = vmatmul.bf16.gmra.mxu0 %v4507
        %v7978 = vpop.f32.mrf.mxu0
        %v7979 = vadd.f32 %v7810, %v7978
        %v7980 = vpop.f32.mrf.mxu0
        %v7981 = vadd.f32 %v7812, %v7980
        %7982 = vmatmul.bf16.gmra.mxu0 %v4525
        %v7983 = vpop.f32.mrf.mxu0
        %v7984 = vadd.f32 %v7815, %v7983
        %v7985 = vpop.f32.mrf.mxu0
        %v7986 = vadd.f32 %v7817, %v7985
        %7987 = vmatmul.bf16.gmra.mxu0 %v4543
        %v7988 = vpop.f32.mrf.mxu0
        %v7989 = vadd.f32 %v7820, %v7988
        %v7990 = vpop.f32.mrf.mxu0
        %v7991 = vadd.f32 %v7822, %v7990
        %7992 = vmatmul.bf16.gmra.mxu0 %v4561
        %v7993 = vpop.f32.mrf.mxu0
        %v7994 = vadd.f32 %v7825, %v7993
        %v7995 = vpop.f32.mrf.mxu0
        %v7996 = vadd.f32 %v7827, %v7995
        %7997 = vmatmul.bf16.gmra.mxu0 %v4579
        %v7998 = vpop.f32.mrf.mxu0
        %v7999 = vadd.f32 %v7830, %v7998
        %v8000 = vpop.f32.mrf.mxu0
        %v8001 = vadd.f32 %v7832, %v8000
        %8002 = vmatmul.bf16.gmra.mxu0 %v4597
        %v8003 = vpop.f32.mrf.mxu0
        %v8004 = vadd.f32 %v7835, %v8003
        %v8005 = vpop.f32.mrf.mxu0
        %v8006 = vadd.f32 %v7837, %v8005
        %8007 = vmatmul.bf16.gmra.mxu0 %v4615
        %v8008 = vpop.f32.mrf.mxu0
        %v8009 = vadd.f32 %v7840, %v8008
        %v8010 = vpop.f32.mrf.mxu0
        %v8011 = vadd.f32 %v7842, %v8010
        %8012 = vmatmul.bf16.gmra.mxu0 %v4633
        %v8013 = vpop.f32.mrf.mxu0
        %v8014 = vadd.f32 %v7845, %v8013
        %v8015 = vpop.f32.mrf.mxu0
        %v8016 = vadd.f32 %v7847, %v8015
        %8017 = vmatmul.bf16.gmra.mxu0 %v4651
        %v8018 = vpop.f32.mrf.mxu0
        %v8019 = vadd.f32 %v7850, %v8018
        %v8020 = vpop.f32.mrf.mxu0
        %v8021 = vadd.f32 %v7852, %v8020
        %8022 = vmatmul.bf16.gmra.mxu0 %v4669
        %v8023 = vpop.f32.mrf.mxu0
        %v8024 = vadd.f32 %v7855, %v8023
        %v8025 = vpop.f32.mrf.mxu0
        %v8026 = vadd.f32 %v7857, %v8025
        %8027 = vmatmul.bf16.gmra.mxu0 %v4687
        %v8028 = vpop.f32.mrf.mxu0
        %v8029 = vadd.f32 %v7860, %v8028
        %v8030 = vpop.f32.mrf.mxu0
        %v8031 = vadd.f32 %v7862, %v8030
        %8032 = vmatmul.bf16.gmra.mxu0 %v4705
        %v8033 = vpop.f32.mrf.mxu0
        %v8034 = vadd.f32 %v7865, %v8033
        %v8035 = vpop.f32.mrf.mxu0
        %v8036 = vadd.f32 %v7867, %v8035
        %8037 = vmatmul.bf16.gmra.mxu0 %v4723
        %v8038 = vpop.f32.mrf.mxu0
        %v8039 = vadd.f32 %v7870, %v8038
        %v8040 = vpop.f32.mrf.mxu0
        %v8041 = vadd.f32 %v7872, %v8040
        %8042 = vmatmul.bf16.gmra.mxu0 %v4741
        %v8043 = vpop.f32.mrf.mxu0
        %v8044 = vadd.f32 %v7875, %v8043
        %v8045 = vpop.f32.mrf.mxu0
        %v8046 = vadd.f32 %v7877, %v8045
        %8047 = vdwg.mxu0
        %8048 = vmatpush.bf16.msra.mxu0 %v5996
        %8049 = vmatpush.bf16.msra.mxu0 %v5995
        %8050 = vmatpush.bf16.msra.mxu0 %v5994
        %8051 = vmatpush.bf16.msra.mxu0 %v5993
        %8052 = vmatpush.bf16.msra.mxu0 %v5992
        %8053 = vmatpush.bf16.msra.mxu0 %v5991
        %8054 = vmatpush.bf16.msra.mxu0 %v5990
        %8055 = vmatpush.bf16.msra.mxu0 %v5989
        %8056 = vmatmul.bf16.gmra.mxu0 %v4184
        %v8057 = vpop.f32.mrf.mxu0
        %v8058 = vadd.f32 %v7889, %v8057
        %v8059 = vpop.f32.mrf.mxu0
        %v8060 = vadd.f32 %v7891, %v8059
        %8061 = vmatmul.bf16.gmra.mxu0 %v4202
        %v8062 = vpop.f32.mrf.mxu0
        %v8063 = vadd.f32 %v7894, %v8062
        %v8064 = vpop.f32.mrf.mxu0
        %v8065 = vadd.f32 %v7896, %v8064
        %8066 = vmatmul.bf16.gmra.mxu0 %v4220
        %v8067 = vpop.f32.mrf.mxu0
        %v8068 = vadd.f32 %v7899, %v8067
        %v8069 = vpop.f32.mrf.mxu0
        %v8070 = vadd.f32 %v7901, %v8069
        %8071 = vmatmul.bf16.gmra.mxu0 %v4238
        %v8072 = vpop.f32.mrf.mxu0
        %v8073 = vadd.f32 %v7904, %v8072
        %v8074 = vpop.f32.mrf.mxu0
        %v8075 = vadd.f32 %v7906, %v8074
        %8076 = vmatmul.bf16.gmra.mxu0 %v4256
        %v8077 = vpop.f32.mrf.mxu0
        %v8078 = vadd.f32 %v7909, %v8077
        %v8079 = vpop.f32.mrf.mxu0
        %v8080 = vadd.f32 %v7911, %v8079
        %8081 = vmatmul.bf16.gmra.mxu0 %v4274
        %v8082 = vpop.f32.mrf.mxu0
        %v8083 = vadd.f32 %v7914, %v8082
        %v8084 = vpop.f32.mrf.mxu0
        %v8085 = vadd.f32 %v7916, %v8084
        %8086 = vmatmul.bf16.gmra.mxu0 %v4292
        %v8087 = vpop.f32.mrf.mxu0
        %v8088 = vadd.f32 %v7919, %v8087
        %v8089 = vpop.f32.mrf.mxu0
        %v8090 = vadd.f32 %v7921, %v8089
        %8091 = vmatmul.bf16.gmra.mxu0 %v4310
        %v8092 = vpop.f32.mrf.mxu0
        %v8093 = vadd.f32 %v7924, %v8092
        %v8094 = vpop.f32.mrf.mxu0
        %v8095 = vadd.f32 %v7926, %v8094
        %8096 = vmatmul.bf16.gmra.mxu0 %v4328
        %v8097 = vpop.f32.mrf.mxu0
        %v8098 = vadd.f32 %v7929, %v8097
        %v8099 = vpop.f32.mrf.mxu0
        %v8100 = vadd.f32 %v7931, %v8099
        %8101 = vmatmul.bf16.gmra.mxu0 %v4346
        %v8102 = vpop.f32.mrf.mxu0
        %v8103 = vadd.f32 %v7934, %v8102
        %v8104 = vpop.f32.mrf.mxu0
        %v8105 = vadd.f32 %v7936, %v8104
        %8106 = vmatmul.bf16.gmra.mxu0 %v4364
        %v8107 = vpop.f32.mrf.mxu0
        %v8108 = vadd.f32 %v7939, %v8107
        %v8109 = vpop.f32.mrf.mxu0
        %v8110 = vadd.f32 %v7941, %v8109
        %8111 = vmatmul.bf16.gmra.mxu0 %v4382
        %v8112 = vpop.f32.mrf.mxu0
        %v8113 = vadd.f32 %v7944, %v8112
        %v8114 = vpop.f32.mrf.mxu0
        %v8115 = vadd.f32 %v7946, %v8114
        %8116 = vmatmul.bf16.gmra.mxu0 %v4400
        %v8117 = vpop.f32.mrf.mxu0
        %v8118 = vadd.f32 %v7949, %v8117
        %v8119 = vpop.f32.mrf.mxu0
        %v8120 = vadd.f32 %v7951, %v8119
        %8121 = vmatmul.bf16.gmra.mxu0 %v4418
        %v8122 = vpop.f32.mrf.mxu0
        %v8123 = vadd.f32 %v7954, %v8122
        %v8124 = vpop.f32.mrf.mxu0
        %v8125 = vadd.f32 %v7956, %v8124
        %8126 = vmatmul.bf16.gmra.mxu0 %v4436
        %v8127 = vpop.f32.mrf.mxu0
        %v8128 = vadd.f32 %v7959, %v8127
        %v8129 = vpop.f32.mrf.mxu0
        %v8130 = vadd.f32 %v7961, %v8129
        %8131 = vmatmul.bf16.gmra.mxu0 %v4454
        %v8132 = vpop.f32.mrf.mxu0
        %v8133 = vadd.f32 %v7964, %v8132
        %v8134 = vpop.f32.mrf.mxu0
        %v8135 = vadd.f32 %v7966, %v8134
        %8136 = vmatmul.bf16.gmra.mxu0 %v4472
        %v8137 = vpop.f32.mrf.mxu0
        %v8138 = vadd.f32 %v7969, %v8137
        %v8139 = vpop.f32.mrf.mxu0
        %v8140 = vadd.f32 %v7971, %v8139
        %8141 = vmatmul.bf16.gmra.mxu0 %v4490
        %v8142 = vpop.f32.mrf.mxu0
        %v8143 = vadd.f32 %v7974, %v8142
        %v8144 = vpop.f32.mrf.mxu0
        %v8145 = vadd.f32 %v7976, %v8144
        %8146 = vmatmul.bf16.gmra.mxu0 %v4508
        %v8147 = vpop.f32.mrf.mxu0
        %v8148 = vadd.f32 %v7979, %v8147
        %v8149 = vpop.f32.mrf.mxu0
        %v8150 = vadd.f32 %v7981, %v8149
        %8151 = vmatmul.bf16.gmra.mxu0 %v4526
        %v8152 = vpop.f32.mrf.mxu0
        %v8153 = vadd.f32 %v7984, %v8152
        %v8154 = vpop.f32.mrf.mxu0
        %v8155 = vadd.f32 %v7986, %v8154
        %8156 = vmatmul.bf16.gmra.mxu0 %v4544
        %v8157 = vpop.f32.mrf.mxu0
        %v8158 = vadd.f32 %v7989, %v8157
        %v8159 = vpop.f32.mrf.mxu0
        %v8160 = vadd.f32 %v7991, %v8159
        %8161 = vmatmul.bf16.gmra.mxu0 %v4562
        %v8162 = vpop.f32.mrf.mxu0
        %v8163 = vadd.f32 %v7994, %v8162
        %v8164 = vpop.f32.mrf.mxu0
        %v8165 = vadd.f32 %v7996, %v8164
        %8166 = vmatmul.bf16.gmra.mxu0 %v4580
        %v8167 = vpop.f32.mrf.mxu0
        %v8168 = vadd.f32 %v7999, %v8167
        %v8169 = vpop.f32.mrf.mxu0
        %v8170 = vadd.f32 %v8001, %v8169
        %8171 = vmatmul.bf16.gmra.mxu0 %v4598
        %v8172 = vpop.f32.mrf.mxu0
        %v8173 = vadd.f32 %v8004, %v8172
        %v8174 = vpop.f32.mrf.mxu0
        %v8175 = vadd.f32 %v8006, %v8174
        %8176 = vmatmul.bf16.gmra.mxu0 %v4616
        %v8177 = vpop.f32.mrf.mxu0
        %v8178 = vadd.f32 %v8009, %v8177
        %v8179 = vpop.f32.mrf.mxu0
        %v8180 = vadd.f32 %v8011, %v8179
        %8181 = vmatmul.bf16.gmra.mxu0 %v4634
        %v8182 = vpop.f32.mrf.mxu0
        %v8183 = vadd.f32 %v8014, %v8182
        %v8184 = vpop.f32.mrf.mxu0
        %v8185 = vadd.f32 %v8016, %v8184
        %8186 = vmatmul.bf16.gmra.mxu0 %v4652
        %v8187 = vpop.f32.mrf.mxu0
        %v8188 = vadd.f32 %v8019, %v8187
        %v8189 = vpop.f32.mrf.mxu0
        %v8190 = vadd.f32 %v8021, %v8189
        %8191 = vmatmul.bf16.gmra.mxu0 %v4670
        %v8192 = vpop.f32.mrf.mxu0
        %v8193 = vadd.f32 %v8024, %v8192
        %v8194 = vpop.f32.mrf.mxu0
        %v8195 = vadd.f32 %v8026, %v8194
        %8196 = vmatmul.bf16.gmra.mxu0 %v4688
        %v8197 = vpop.f32.mrf.mxu0
        %v8198 = vadd.f32 %v8029, %v8197
        %v8199 = vpop.f32.mrf.mxu0
        %v8200 = vadd.f32 %v8031, %v8199
        %8201 = vmatmul.bf16.gmra.mxu0 %v4706
        %v8202 = vpop.f32.mrf.mxu0
        %v8203 = vadd.f32 %v8034, %v8202
        %v8204 = vpop.f32.mrf.mxu0
        %v8205 = vadd.f32 %v8036, %v8204
        %8206 = vmatmul.bf16.gmra.mxu0 %v4724
        %v8207 = vpop.f32.mrf.mxu0
        %v8208 = vadd.f32 %v8039, %v8207
        %v8209 = vpop.f32.mrf.mxu0
        %v8210 = vadd.f32 %v8041, %v8209
        %8211 = vmatmul.bf16.gmra.mxu0 %v4742
        %v8212 = vpop.f32.mrf.mxu0
        %v8213 = vadd.f32 %v8044, %v8212
        %v8214 = vpop.f32.mrf.mxu0
        %v8215 = vadd.f32 %v8046, %v8214
        %8216 = vdwg.mxu0
        %8217 = vmatpush.bf16.msra.mxu0 %v6004
        %8218 = vmatpush.bf16.msra.mxu0 %v6003
        %8219 = vmatpush.bf16.msra.mxu0 %v6002
        %8220 = vmatpush.bf16.msra.mxu0 %v6001
        %8221 = vmatpush.bf16.msra.mxu0 %v6000
        %8222 = vmatpush.bf16.msra.mxu0 %v5999
        %8223 = vmatpush.bf16.msra.mxu0 %v5998
        %8224 = vmatpush.bf16.msra.mxu0 %v5997
        %8225 = vmatmul.bf16.gmra.mxu0 %v4185
        %v8226 = vpop.f32.mrf.mxu0
        %v8227 = vadd.f32 %v8058, %v8226
        %v8228 = vpop.f32.mrf.mxu0
        %v8229 = vadd.f32 %v8060, %v8228
        %8230 = vmatmul.bf16.gmra.mxu0 %v4203
        %v8231 = vpop.f32.mrf.mxu0
        %v8232 = vadd.f32 %v8063, %v8231
        %v8233 = vpop.f32.mrf.mxu0
        %v8234 = vadd.f32 %v8065, %v8233
        %8235 = vmatmul.bf16.gmra.mxu0 %v4221
        %v8236 = vpop.f32.mrf.mxu0
        %v8237 = vadd.f32 %v8068, %v8236
        %v8238 = vpop.f32.mrf.mxu0
        %v8239 = vadd.f32 %v8070, %v8238
        %8240 = vmatmul.bf16.gmra.mxu0 %v4239
        %v8241 = vpop.f32.mrf.mxu0
        %v8242 = vadd.f32 %v8073, %v8241
        %v8243 = vpop.f32.mrf.mxu0
        %v8244 = vadd.f32 %v8075, %v8243
        %8245 = vmatmul.bf16.gmra.mxu0 %v4257
        %v8246 = vpop.f32.mrf.mxu0
        %v8247 = vadd.f32 %v8078, %v8246
        %v8248 = vpop.f32.mrf.mxu0
        %v8249 = vadd.f32 %v8080, %v8248
        %8250 = vmatmul.bf16.gmra.mxu0 %v4275
        %v8251 = vpop.f32.mrf.mxu0
        %v8252 = vadd.f32 %v8083, %v8251
        %v8253 = vpop.f32.mrf.mxu0
        %v8254 = vadd.f32 %v8085, %v8253
        %8255 = vmatmul.bf16.gmra.mxu0 %v4293
        %v8256 = vpop.f32.mrf.mxu0
        %v8257 = vadd.f32 %v8088, %v8256
        %v8258 = vpop.f32.mrf.mxu0
        %v8259 = vadd.f32 %v8090, %v8258
        %8260 = vmatmul.bf16.gmra.mxu0 %v4311
        %v8261 = vpop.f32.mrf.mxu0
        %v8262 = vadd.f32 %v8093, %v8261
        %v8263 = vpop.f32.mrf.mxu0
        %v8264 = vadd.f32 %v8095, %v8263
        %8265 = vmatmul.bf16.gmra.mxu0 %v4329
        %v8266 = vpop.f32.mrf.mxu0
        %v8267 = vadd.f32 %v8098, %v8266
        %v8268 = vpop.f32.mrf.mxu0
        %v8269 = vadd.f32 %v8100, %v8268
        %8270 = vmatmul.bf16.gmra.mxu0 %v4347
        %v8271 = vpop.f32.mrf.mxu0
        %v8272 = vadd.f32 %v8103, %v8271
        %v8273 = vpop.f32.mrf.mxu0
        %v8274 = vadd.f32 %v8105, %v8273
        %8275 = vmatmul.bf16.gmra.mxu0 %v4365
        %v8276 = vpop.f32.mrf.mxu0
        %v8277 = vadd.f32 %v8108, %v8276
        %v8278 = vpop.f32.mrf.mxu0
        %v8279 = vadd.f32 %v8110, %v8278
        %8280 = vmatmul.bf16.gmra.mxu0 %v4383
        %v8281 = vpop.f32.mrf.mxu0
        %v8282 = vadd.f32 %v8113, %v8281
        %v8283 = vpop.f32.mrf.mxu0
        %v8284 = vadd.f32 %v8115, %v8283
        %8285 = vmatmul.bf16.gmra.mxu0 %v4401
        %v8286 = vpop.f32.mrf.mxu0
        %v8287 = vadd.f32 %v8118, %v8286
        %v8288 = vpop.f32.mrf.mxu0
        %v8289 = vadd.f32 %v8120, %v8288
        %8290 = vmatmul.bf16.gmra.mxu0 %v4419
        %v8291 = vpop.f32.mrf.mxu0
        %v8292 = vadd.f32 %v8123, %v8291
        %v8293 = vpop.f32.mrf.mxu0
        %v8294 = vadd.f32 %v8125, %v8293
        %8295 = vmatmul.bf16.gmra.mxu0 %v4437
        %v8296 = vpop.f32.mrf.mxu0
        %v8297 = vadd.f32 %v8128, %v8296
        %v8298 = vpop.f32.mrf.mxu0
        %v8299 = vadd.f32 %v8130, %v8298
        %8300 = vmatmul.bf16.gmra.mxu0 %v4455
        %v8301 = vpop.f32.mrf.mxu0
        %v8302 = vadd.f32 %v8133, %v8301
        %v8303 = vpop.f32.mrf.mxu0
        %v8304 = vadd.f32 %v8135, %v8303
        %8305 = vmatmul.bf16.gmra.mxu0 %v4473
        %v8306 = vpop.f32.mrf.mxu0
        %v8307 = vadd.f32 %v8138, %v8306
        %v8308 = vpop.f32.mrf.mxu0
        %v8309 = vadd.f32 %v8140, %v8308
        %8310 = vmatmul.bf16.gmra.mxu0 %v4491
        %v8311 = vpop.f32.mrf.mxu0
        %v8312 = vadd.f32 %v8143, %v8311
        %v8313 = vpop.f32.mrf.mxu0
        %v8314 = vadd.f32 %v8145, %v8313
        %8315 = vmatmul.bf16.gmra.mxu0 %v4509
        %v8316 = vpop.f32.mrf.mxu0
        %v8317 = vadd.f32 %v8148, %v8316
        %v8318 = vpop.f32.mrf.mxu0
        %v8319 = vadd.f32 %v8150, %v8318
        %8320 = vmatmul.bf16.gmra.mxu0 %v4527
        %v8321 = vpop.f32.mrf.mxu0
        %v8322 = vadd.f32 %v8153, %v8321
        %v8323 = vpop.f32.mrf.mxu0
        %v8324 = vadd.f32 %v8155, %v8323
        %8325 = vmatmul.bf16.gmra.mxu0 %v4545
        %v8326 = vpop.f32.mrf.mxu0
        %v8327 = vadd.f32 %v8158, %v8326
        %v8328 = vpop.f32.mrf.mxu0
        %v8329 = vadd.f32 %v8160, %v8328
        %8330 = vmatmul.bf16.gmra.mxu0 %v4563
        %v8331 = vpop.f32.mrf.mxu0
        %v8332 = vadd.f32 %v8163, %v8331
        %v8333 = vpop.f32.mrf.mxu0
        %v8334 = vadd.f32 %v8165, %v8333
        %8335 = vmatmul.bf16.gmra.mxu0 %v4581
        %v8336 = vpop.f32.mrf.mxu0
        %v8337 = vadd.f32 %v8168, %v8336
        %v8338 = vpop.f32.mrf.mxu0
        %v8339 = vadd.f32 %v8170, %v8338
        %8340 = vmatmul.bf16.gmra.mxu0 %v4599
        %v8341 = vpop.f32.mrf.mxu0
        %v8342 = vadd.f32 %v8173, %v8341
        %v8343 = vpop.f32.mrf.mxu0
        %v8344 = vadd.f32 %v8175, %v8343
        %8345 = vmatmul.bf16.gmra.mxu0 %v4617
        %v8346 = vpop.f32.mrf.mxu0
        %v8347 = vadd.f32 %v8178, %v8346
        %v8348 = vpop.f32.mrf.mxu0
        %v8349 = vadd.f32 %v8180, %v8348
        %8350 = vmatmul.bf16.gmra.mxu0 %v4635
        %v8351 = vpop.f32.mrf.mxu0
        %v8352 = vadd.f32 %v8183, %v8351
        %v8353 = vpop.f32.mrf.mxu0
        %v8354 = vadd.f32 %v8185, %v8353
        %8355 = vmatmul.bf16.gmra.mxu0 %v4653
        %v8356 = vpop.f32.mrf.mxu0
        %v8357 = vadd.f32 %v8188, %v8356
        %v8358 = vpop.f32.mrf.mxu0
        %v8359 = vadd.f32 %v8190, %v8358
        %8360 = vmatmul.bf16.gmra.mxu0 %v4671
        %v8361 = vpop.f32.mrf.mxu0
        %v8362 = vadd.f32 %v8193, %v8361
        %v8363 = vpop.f32.mrf.mxu0
        %v8364 = vadd.f32 %v8195, %v8363
        %8365 = vmatmul.bf16.gmra.mxu0 %v4689
        %v8366 = vpop.f32.mrf.mxu0
        %v8367 = vadd.f32 %v8198, %v8366
        %v8368 = vpop.f32.mrf.mxu0
        %v8369 = vadd.f32 %v8200, %v8368
        %8370 = vmatmul.bf16.gmra.mxu0 %v4707
        %v8371 = vpop.f32.mrf.mxu0
        %v8372 = vadd.f32 %v8203, %v8371
        %v8373 = vpop.f32.mrf.mxu0
        %v8374 = vadd.f32 %v8205, %v8373
        %8375 = vmatmul.bf16.gmra.mxu0 %v4725
        %v8376 = vpop.f32.mrf.mxu0
        %v8377 = vadd.f32 %v8208, %v8376
        %v8378 = vpop.f32.mrf.mxu0
        %v8379 = vadd.f32 %v8210, %v8378
        %8380 = vmatmul.bf16.gmra.mxu0 %v4743
        %v8381 = vpop.f32.mrf.mxu0
        %v8382 = vadd.f32 %v8213, %v8381
        %v8383 = vpop.f32.mrf.mxu0
        %v8384 = vadd.f32 %v8215, %v8383
        %8385 = vdwg.mxu0
        %8386 = vmatpush.bf16.msra.mxu0 %v6012
        %8387 = vmatpush.bf16.msra.mxu0 %v6011
        %8388 = vmatpush.bf16.msra.mxu0 %v6010
        %8389 = vmatpush.bf16.msra.mxu0 %v6009
        %8390 = vmatpush.bf16.msra.mxu0 %v6008
        %8391 = vmatpush.bf16.msra.mxu0 %v6007
        %8392 = vmatpush.bf16.msra.mxu0 %v6006
        %8393 = vmatpush.bf16.msra.mxu0 %v6005
        %8394 = vmatmul.bf16.gmra.mxu0 %v4186
        %v8395 = vpop.f32.mrf.mxu0
        %v8396 = vadd.f32 %v8227, %v8395
        %v8397 = vpop.f32.mrf.mxu0
        %v8398 = vadd.f32 %v8229, %v8397
        %8399 = vmatmul.bf16.gmra.mxu0 %v4204
        %v8400 = vpop.f32.mrf.mxu0
        %v8401 = vadd.f32 %v8232, %v8400
        %v8402 = vpop.f32.mrf.mxu0
        %v8403 = vadd.f32 %v8234, %v8402
        %8404 = vmatmul.bf16.gmra.mxu0 %v4222
        %v8405 = vpop.f32.mrf.mxu0
        %v8406 = vadd.f32 %v8237, %v8405
        %v8407 = vpop.f32.mrf.mxu0
        %v8408 = vadd.f32 %v8239, %v8407
        %8409 = vmatmul.bf16.gmra.mxu0 %v4240
        %v8410 = vpop.f32.mrf.mxu0
        %v8411 = vadd.f32 %v8242, %v8410
        %v8412 = vpop.f32.mrf.mxu0
        %v8413 = vadd.f32 %v8244, %v8412
        %8414 = vmatmul.bf16.gmra.mxu0 %v4258
        %v8415 = vpop.f32.mrf.mxu0
        %v8416 = vadd.f32 %v8247, %v8415
        %v8417 = vpop.f32.mrf.mxu0
        %v8418 = vadd.f32 %v8249, %v8417
        %8419 = vmatmul.bf16.gmra.mxu0 %v4276
        %v8420 = vpop.f32.mrf.mxu0
        %v8421 = vadd.f32 %v8252, %v8420
        %v8422 = vpop.f32.mrf.mxu0
        %v8423 = vadd.f32 %v8254, %v8422
        %8424 = vmatmul.bf16.gmra.mxu0 %v4294
        %v8425 = vpop.f32.mrf.mxu0
        %v8426 = vadd.f32 %v8257, %v8425
        %v8427 = vpop.f32.mrf.mxu0
        %v8428 = vadd.f32 %v8259, %v8427
        %8429 = vmatmul.bf16.gmra.mxu0 %v4312
        %v8430 = vpop.f32.mrf.mxu0
        %v8431 = vadd.f32 %v8262, %v8430
        %v8432 = vpop.f32.mrf.mxu0
        %v8433 = vadd.f32 %v8264, %v8432
        %8434 = vmatmul.bf16.gmra.mxu0 %v4330
        %v8435 = vpop.f32.mrf.mxu0
        %v8436 = vadd.f32 %v8267, %v8435
        %v8437 = vpop.f32.mrf.mxu0
        %v8438 = vadd.f32 %v8269, %v8437
        %8439 = vmatmul.bf16.gmra.mxu0 %v4348
        %v8440 = vpop.f32.mrf.mxu0
        %v8441 = vadd.f32 %v8272, %v8440
        %v8442 = vpop.f32.mrf.mxu0
        %v8443 = vadd.f32 %v8274, %v8442
        %8444 = vmatmul.bf16.gmra.mxu0 %v4366
        %v8445 = vpop.f32.mrf.mxu0
        %v8446 = vadd.f32 %v8277, %v8445
        %v8447 = vpop.f32.mrf.mxu0
        %v8448 = vadd.f32 %v8279, %v8447
        %8449 = vmatmul.bf16.gmra.mxu0 %v4384
        %v8450 = vpop.f32.mrf.mxu0
        %v8451 = vadd.f32 %v8282, %v8450
        %v8452 = vpop.f32.mrf.mxu0
        %v8453 = vadd.f32 %v8284, %v8452
        %8454 = vmatmul.bf16.gmra.mxu0 %v4402
        %v8455 = vpop.f32.mrf.mxu0
        %v8456 = vadd.f32 %v8287, %v8455
        %v8457 = vpop.f32.mrf.mxu0
        %v8458 = vadd.f32 %v8289, %v8457
        %8459 = vmatmul.bf16.gmra.mxu0 %v4420
        %v8460 = vpop.f32.mrf.mxu0
        %v8461 = vadd.f32 %v8292, %v8460
        %v8462 = vpop.f32.mrf.mxu0
        %v8463 = vadd.f32 %v8294, %v8462
        %8464 = vmatmul.bf16.gmra.mxu0 %v4438
        %v8465 = vpop.f32.mrf.mxu0
        %v8466 = vadd.f32 %v8297, %v8465
        %v8467 = vpop.f32.mrf.mxu0
        %v8468 = vadd.f32 %v8299, %v8467
        %8469 = vmatmul.bf16.gmra.mxu0 %v4456
        %v8470 = vpop.f32.mrf.mxu0
        %v8471 = vadd.f32 %v8302, %v8470
        %v8472 = vpop.f32.mrf.mxu0
        %v8473 = vadd.f32 %v8304, %v8472
        %8474 = vmatmul.bf16.gmra.mxu0 %v4474
        %v8475 = vpop.f32.mrf.mxu0
        %v8476 = vadd.f32 %v8307, %v8475
        %v8477 = vpop.f32.mrf.mxu0
        %v8478 = vadd.f32 %v8309, %v8477
        %8479 = vmatmul.bf16.gmra.mxu0 %v4492
        %v8480 = vpop.f32.mrf.mxu0
        %v8481 = vadd.f32 %v8312, %v8480
        %v8482 = vpop.f32.mrf.mxu0
        %v8483 = vadd.f32 %v8314, %v8482
        %8484 = vmatmul.bf16.gmra.mxu0 %v4510
        %v8485 = vpop.f32.mrf.mxu0
        %v8486 = vadd.f32 %v8317, %v8485
        %v8487 = vpop.f32.mrf.mxu0
        %v8488 = vadd.f32 %v8319, %v8487
        %8489 = vmatmul.bf16.gmra.mxu0 %v4528
        %v8490 = vpop.f32.mrf.mxu0
        %v8491 = vadd.f32 %v8322, %v8490
        %v8492 = vpop.f32.mrf.mxu0
        %v8493 = vadd.f32 %v8324, %v8492
        %8494 = vmatmul.bf16.gmra.mxu0 %v4546
        %v8495 = vpop.f32.mrf.mxu0
        %v8496 = vadd.f32 %v8327, %v8495
        %v8497 = vpop.f32.mrf.mxu0
        %v8498 = vadd.f32 %v8329, %v8497
        %8499 = vmatmul.bf16.gmra.mxu0 %v4564
        %v8500 = vpop.f32.mrf.mxu0
        %v8501 = vadd.f32 %v8332, %v8500
        %v8502 = vpop.f32.mrf.mxu0
        %v8503 = vadd.f32 %v8334, %v8502
        %8504 = vmatmul.bf16.gmra.mxu0 %v4582
        %v8505 = vpop.f32.mrf.mxu0
        %v8506 = vadd.f32 %v8337, %v8505
        %v8507 = vpop.f32.mrf.mxu0
        %v8508 = vadd.f32 %v8339, %v8507
        %8509 = vmatmul.bf16.gmra.mxu0 %v4600
        %v8510 = vpop.f32.mrf.mxu0
        %v8511 = vadd.f32 %v8342, %v8510
        %v8512 = vpop.f32.mrf.mxu0
        %v8513 = vadd.f32 %v8344, %v8512
        %8514 = vmatmul.bf16.gmra.mxu0 %v4618
        %v8515 = vpop.f32.mrf.mxu0
        %v8516 = vadd.f32 %v8347, %v8515
        %v8517 = vpop.f32.mrf.mxu0
        %v8518 = vadd.f32 %v8349, %v8517
        %8519 = vmatmul.bf16.gmra.mxu0 %v4636
        %v8520 = vpop.f32.mrf.mxu0
        %v8521 = vadd.f32 %v8352, %v8520
        %v8522 = vpop.f32.mrf.mxu0
        %v8523 = vadd.f32 %v8354, %v8522
        %8524 = vmatmul.bf16.gmra.mxu0 %v4654
        %v8525 = vpop.f32.mrf.mxu0
        %v8526 = vadd.f32 %v8357, %v8525
        %v8527 = vpop.f32.mrf.mxu0
        %v8528 = vadd.f32 %v8359, %v8527
        %8529 = vmatmul.bf16.gmra.mxu0 %v4672
        %v8530 = vpop.f32.mrf.mxu0
        %v8531 = vadd.f32 %v8362, %v8530
        %v8532 = vpop.f32.mrf.mxu0
        %v8533 = vadd.f32 %v8364, %v8532
        %8534 = vmatmul.bf16.gmra.mxu0 %v4690
        %v8535 = vpop.f32.mrf.mxu0
        %v8536 = vadd.f32 %v8367, %v8535
        %v8537 = vpop.f32.mrf.mxu0
        %v8538 = vadd.f32 %v8369, %v8537
        %8539 = vmatmul.bf16.gmra.mxu0 %v4708
        %v8540 = vpop.f32.mrf.mxu0
        %v8541 = vadd.f32 %v8372, %v8540
        %v8542 = vpop.f32.mrf.mxu0
        %v8543 = vadd.f32 %v8374, %v8542
        %8544 = vmatmul.bf16.gmra.mxu0 %v4726
        %v8545 = vpop.f32.mrf.mxu0
        %v8546 = vadd.f32 %v8377, %v8545
        %v8547 = vpop.f32.mrf.mxu0
        %v8548 = vadd.f32 %v8379, %v8547
        %8549 = vmatmul.bf16.gmra.mxu0 %v4744
        %v8550 = vpop.f32.mrf.mxu0
        %v8551 = vadd.f32 %v8382, %v8550
        %v8552 = vpop.f32.mrf.mxu0
        %v8553 = vadd.f32 %v8384, %v8552
        %8554 = vdwg.mxu0
        %8555 = vmatpush.bf16.msra.mxu0 %v6020
        %8556 = vmatpush.bf16.msra.mxu0 %v6019
        %8557 = vmatpush.bf16.msra.mxu0 %v6018
        %8558 = vmatpush.bf16.msra.mxu0 %v6017
        %8559 = vmatpush.bf16.msra.mxu0 %v6016
        %8560 = vmatpush.bf16.msra.mxu0 %v6015
        %8561 = vmatpush.bf16.msra.mxu0 %v6014
        %8562 = vmatpush.bf16.msra.mxu0 %v6013
        %8563 = vmatmul.bf16.gmra.mxu0 %v4187
        %v8564 = vpop.f32.mrf.mxu0
        %v8565 = vadd.f32 %v8396, %v8564
        %v8566 = vpop.f32.mrf.mxu0
        %v8567 = vadd.f32 %v8398, %v8566
        %8568 = vmatmul.bf16.gmra.mxu0 %v4205
        %v8569 = vpop.f32.mrf.mxu0
        %v8570 = vadd.f32 %v8401, %v8569
        %v8571 = vpop.f32.mrf.mxu0
        %v8572 = vadd.f32 %v8403, %v8571
        %8573 = vmatmul.bf16.gmra.mxu0 %v4223
        %v8574 = vpop.f32.mrf.mxu0
        %v8575 = vadd.f32 %v8406, %v8574
        %v8576 = vpop.f32.mrf.mxu0
        %v8577 = vadd.f32 %v8408, %v8576
        %8578 = vmatmul.bf16.gmra.mxu0 %v4241
        %v8579 = vpop.f32.mrf.mxu0
        %v8580 = vadd.f32 %v8411, %v8579
        %v8581 = vpop.f32.mrf.mxu0
        %v8582 = vadd.f32 %v8413, %v8581
        %8583 = vmatmul.bf16.gmra.mxu0 %v4259
        %v8584 = vpop.f32.mrf.mxu0
        %v8585 = vadd.f32 %v8416, %v8584
        %v8586 = vpop.f32.mrf.mxu0
        %v8587 = vadd.f32 %v8418, %v8586
        %8588 = vmatmul.bf16.gmra.mxu0 %v4277
        %v8589 = vpop.f32.mrf.mxu0
        %v8590 = vadd.f32 %v8421, %v8589
        %v8591 = vpop.f32.mrf.mxu0
        %v8592 = vadd.f32 %v8423, %v8591
        %8593 = vmatmul.bf16.gmra.mxu0 %v4295
        %v8594 = vpop.f32.mrf.mxu0
        %v8595 = vadd.f32 %v8426, %v8594
        %v8596 = vpop.f32.mrf.mxu0
        %v8597 = vadd.f32 %v8428, %v8596
        %8598 = vmatmul.bf16.gmra.mxu0 %v4313
        %v8599 = vpop.f32.mrf.mxu0
        %v8600 = vadd.f32 %v8431, %v8599
        %v8601 = vpop.f32.mrf.mxu0
        %v8602 = vadd.f32 %v8433, %v8601
        %8603 = vmatmul.bf16.gmra.mxu0 %v4331
        %v8604 = vpop.f32.mrf.mxu0
        %v8605 = vadd.f32 %v8436, %v8604
        %v8606 = vpop.f32.mrf.mxu0
        %v8607 = vadd.f32 %v8438, %v8606
        %8608 = vmatmul.bf16.gmra.mxu0 %v4349
        %v8609 = vpop.f32.mrf.mxu0
        %v8610 = vadd.f32 %v8441, %v8609
        %v8611 = vpop.f32.mrf.mxu0
        %v8612 = vadd.f32 %v8443, %v8611
        %8613 = vmatmul.bf16.gmra.mxu0 %v4367
        %v8614 = vpop.f32.mrf.mxu0
        %v8615 = vadd.f32 %v8446, %v8614
        %v8616 = vpop.f32.mrf.mxu0
        %v8617 = vadd.f32 %v8448, %v8616
        %8618 = vmatmul.bf16.gmra.mxu0 %v4385
        %v8619 = vpop.f32.mrf.mxu0
        %v8620 = vadd.f32 %v8451, %v8619
        %v8621 = vpop.f32.mrf.mxu0
        %v8622 = vadd.f32 %v8453, %v8621
        %8623 = vmatmul.bf16.gmra.mxu0 %v4403
        %v8624 = vpop.f32.mrf.mxu0
        %v8625 = vadd.f32 %v8456, %v8624
        %v8626 = vpop.f32.mrf.mxu0
        %v8627 = vadd.f32 %v8458, %v8626
        %8628 = vmatmul.bf16.gmra.mxu0 %v4421
        %v8629 = vpop.f32.mrf.mxu0
        %v8630 = vadd.f32 %v8461, %v8629
        %v8631 = vpop.f32.mrf.mxu0
        %v8632 = vadd.f32 %v8463, %v8631
        %8633 = vmatmul.bf16.gmra.mxu0 %v4439
        %v8634 = vpop.f32.mrf.mxu0
        %v8635 = vadd.f32 %v8466, %v8634
        %v8636 = vpop.f32.mrf.mxu0
        %v8637 = vadd.f32 %v8468, %v8636
        %8638 = vmatmul.bf16.gmra.mxu0 %v4457
        %v8639 = vpop.f32.mrf.mxu0
        %v8640 = vadd.f32 %v8471, %v8639
        %v8641 = vpop.f32.mrf.mxu0
        %v8642 = vadd.f32 %v8473, %v8641
        %8643 = vmatmul.bf16.gmra.mxu0 %v4475
        %v8644 = vpop.f32.mrf.mxu0
        %v8645 = vadd.f32 %v8476, %v8644
        %v8646 = vpop.f32.mrf.mxu0
        %v8647 = vadd.f32 %v8478, %v8646
        %8648 = vmatmul.bf16.gmra.mxu0 %v4493
        %v8649 = vpop.f32.mrf.mxu0
        %v8650 = vadd.f32 %v8481, %v8649
        %v8651 = vpop.f32.mrf.mxu0
        %v8652 = vadd.f32 %v8483, %v8651
        %8653 = vmatmul.bf16.gmra.mxu0 %v4511
        %v8654 = vpop.f32.mrf.mxu0
        %v8655 = vadd.f32 %v8486, %v8654
        %v8656 = vpop.f32.mrf.mxu0
        %v8657 = vadd.f32 %v8488, %v8656
        %8658 = vmatmul.bf16.gmra.mxu0 %v4529
        %v8659 = vpop.f32.mrf.mxu0
        %v8660 = vadd.f32 %v8491, %v8659
        %v8661 = vpop.f32.mrf.mxu0
        %v8662 = vadd.f32 %v8493, %v8661
        %8663 = vmatmul.bf16.gmra.mxu0 %v4547
        %v8664 = vpop.f32.mrf.mxu0
        %v8665 = vadd.f32 %v8496, %v8664
        %v8666 = vpop.f32.mrf.mxu0
        %v8667 = vadd.f32 %v8498, %v8666
        %8668 = vmatmul.bf16.gmra.mxu0 %v4565
        %v8669 = vpop.f32.mrf.mxu0
        %v8670 = vadd.f32 %v8501, %v8669
        %v8671 = vpop.f32.mrf.mxu0
        %v8672 = vadd.f32 %v8503, %v8671
        %8673 = vmatmul.bf16.gmra.mxu0 %v4583
        %v8674 = vpop.f32.mrf.mxu0
        %v8675 = vadd.f32 %v8506, %v8674
        %v8676 = vpop.f32.mrf.mxu0
        %v8677 = vadd.f32 %v8508, %v8676
        %8678 = vmatmul.bf16.gmra.mxu0 %v4601
        %v8679 = vpop.f32.mrf.mxu0
        %v8680 = vadd.f32 %v8511, %v8679
        %v8681 = vpop.f32.mrf.mxu0
        %v8682 = vadd.f32 %v8513, %v8681
        %8683 = vmatmul.bf16.gmra.mxu0 %v4619
        %v8684 = vpop.f32.mrf.mxu0
        %v8685 = vadd.f32 %v8516, %v8684
        %v8686 = vpop.f32.mrf.mxu0
        %v8687 = vadd.f32 %v8518, %v8686
        %8688 = vmatmul.bf16.gmra.mxu0 %v4637
        %v8689 = vpop.f32.mrf.mxu0
        %v8690 = vadd.f32 %v8521, %v8689
        %v8691 = vpop.f32.mrf.mxu0
        %v8692 = vadd.f32 %v8523, %v8691
        %8693 = vmatmul.bf16.gmra.mxu0 %v4655
        %v8694 = vpop.f32.mrf.mxu0
        %v8695 = vadd.f32 %v8526, %v8694
        %v8696 = vpop.f32.mrf.mxu0
        %v8697 = vadd.f32 %v8528, %v8696
        %8698 = vmatmul.bf16.gmra.mxu0 %v4673
        %v8699 = vpop.f32.mrf.mxu0
        %v8700 = vadd.f32 %v8531, %v8699
        %v8701 = vpop.f32.mrf.mxu0
        %v8702 = vadd.f32 %v8533, %v8701
        %8703 = vmatmul.bf16.gmra.mxu0 %v4691
        %v8704 = vpop.f32.mrf.mxu0
        %v8705 = vadd.f32 %v8536, %v8704
        %v8706 = vpop.f32.mrf.mxu0
        %v8707 = vadd.f32 %v8538, %v8706
        %8708 = vmatmul.bf16.gmra.mxu0 %v4709
        %v8709 = vpop.f32.mrf.mxu0
        %v8710 = vadd.f32 %v8541, %v8709
        %v8711 = vpop.f32.mrf.mxu0
        %v8712 = vadd.f32 %v8543, %v8711
        %8713 = vmatmul.bf16.gmra.mxu0 %v4727
        %v8714 = vpop.f32.mrf.mxu0
        %v8715 = vadd.f32 %v8546, %v8714
        %v8716 = vpop.f32.mrf.mxu0
        %v8717 = vadd.f32 %v8548, %v8716
        %8718 = vmatmul.bf16.gmra.mxu0 %v4745
        %v8719 = vpop.f32.mrf.mxu0
        %v8720 = vadd.f32 %v8551, %v8719
        %v8721 = vpop.f32.mrf.mxu0
        %v8722 = vadd.f32 %v8553, %v8721
        %8723 = vdwg.mxu0
        %8724 = vmatpush.bf16.msra.mxu0 %v6028
        %8725 = vmatpush.bf16.msra.mxu0 %v6027
        %8726 = vmatpush.bf16.msra.mxu0 %v6026
        %8727 = vmatpush.bf16.msra.mxu0 %v6025
        %8728 = vmatpush.bf16.msra.mxu0 %v6024
        %8729 = vmatpush.bf16.msra.mxu0 %v6023
        %8730 = vmatpush.bf16.msra.mxu0 %v6022
        %8731 = vmatpush.bf16.msra.mxu0 %v6021
        %8732 = vmatmul.bf16.gmra.mxu0 %v4188
        %v8733 = vpop.f32.mrf.mxu0
        %v8734 = vadd.f32 %v8565, %v8733
        %v8735 = vpop.f32.mrf.mxu0
        %v8736 = vadd.f32 %v8567, %v8735
        %8737 = vmatmul.bf16.gmra.mxu0 %v4206
        %v8738 = vpop.f32.mrf.mxu0
        %v8739 = vadd.f32 %v8570, %v8738
        %v8740 = vpop.f32.mrf.mxu0
        %v8741 = vadd.f32 %v8572, %v8740
        %8742 = vmatmul.bf16.gmra.mxu0 %v4224
        %v8743 = vpop.f32.mrf.mxu0
        %v8744 = vadd.f32 %v8575, %v8743
        %v8745 = vpop.f32.mrf.mxu0
        %v8746 = vadd.f32 %v8577, %v8745
        %8747 = vmatmul.bf16.gmra.mxu0 %v4242
        %v8748 = vpop.f32.mrf.mxu0
        %v8749 = vadd.f32 %v8580, %v8748
        %v8750 = vpop.f32.mrf.mxu0
        %v8751 = vadd.f32 %v8582, %v8750
        %8752 = vmatmul.bf16.gmra.mxu0 %v4260
        %v8753 = vpop.f32.mrf.mxu0
        %v8754 = vadd.f32 %v8585, %v8753
        %v8755 = vpop.f32.mrf.mxu0
        %v8756 = vadd.f32 %v8587, %v8755
        %8757 = vmatmul.bf16.gmra.mxu0 %v4278
        %v8758 = vpop.f32.mrf.mxu0
        %v8759 = vadd.f32 %v8590, %v8758
        %v8760 = vpop.f32.mrf.mxu0
        %v8761 = vadd.f32 %v8592, %v8760
        %8762 = vmatmul.bf16.gmra.mxu0 %v4296
        %v8763 = vpop.f32.mrf.mxu0
        %v8764 = vadd.f32 %v8595, %v8763
        %v8765 = vpop.f32.mrf.mxu0
        %v8766 = vadd.f32 %v8597, %v8765
        %8767 = vmatmul.bf16.gmra.mxu0 %v4314
        %v8768 = vpop.f32.mrf.mxu0
        %v8769 = vadd.f32 %v8600, %v8768
        %v8770 = vpop.f32.mrf.mxu0
        %v8771 = vadd.f32 %v8602, %v8770
        %8772 = vmatmul.bf16.gmra.mxu0 %v4332
        %v8773 = vpop.f32.mrf.mxu0
        %v8774 = vadd.f32 %v8605, %v8773
        %v8775 = vpop.f32.mrf.mxu0
        %v8776 = vadd.f32 %v8607, %v8775
        %8777 = vmatmul.bf16.gmra.mxu0 %v4350
        %v8778 = vpop.f32.mrf.mxu0
        %v8779 = vadd.f32 %v8610, %v8778
        %v8780 = vpop.f32.mrf.mxu0
        %v8781 = vadd.f32 %v8612, %v8780
        %8782 = vmatmul.bf16.gmra.mxu0 %v4368
        %v8783 = vpop.f32.mrf.mxu0
        %v8784 = vadd.f32 %v8615, %v8783
        %v8785 = vpop.f32.mrf.mxu0
        %v8786 = vadd.f32 %v8617, %v8785
        %8787 = vmatmul.bf16.gmra.mxu0 %v4386
        %v8788 = vpop.f32.mrf.mxu0
        %v8789 = vadd.f32 %v8620, %v8788
        %v8790 = vpop.f32.mrf.mxu0
        %v8791 = vadd.f32 %v8622, %v8790
        %8792 = vmatmul.bf16.gmra.mxu0 %v4404
        %v8793 = vpop.f32.mrf.mxu0
        %v8794 = vadd.f32 %v8625, %v8793
        %v8795 = vpop.f32.mrf.mxu0
        %v8796 = vadd.f32 %v8627, %v8795
        %8797 = vmatmul.bf16.gmra.mxu0 %v4422
        %v8798 = vpop.f32.mrf.mxu0
        %v8799 = vadd.f32 %v8630, %v8798
        %v8800 = vpop.f32.mrf.mxu0
        %v8801 = vadd.f32 %v8632, %v8800
        %8802 = vmatmul.bf16.gmra.mxu0 %v4440
        %v8803 = vpop.f32.mrf.mxu0
        %v8804 = vadd.f32 %v8635, %v8803
        %v8805 = vpop.f32.mrf.mxu0
        %v8806 = vadd.f32 %v8637, %v8805
        %8807 = vmatmul.bf16.gmra.mxu0 %v4458
        %v8808 = vpop.f32.mrf.mxu0
        %v8809 = vadd.f32 %v8640, %v8808
        %v8810 = vpop.f32.mrf.mxu0
        %v8811 = vadd.f32 %v8642, %v8810
        %8812 = vmatmul.bf16.gmra.mxu0 %v4476
        %v8813 = vpop.f32.mrf.mxu0
        %v8814 = vadd.f32 %v8645, %v8813
        %v8815 = vpop.f32.mrf.mxu0
        %v8816 = vadd.f32 %v8647, %v8815
        %8817 = vmatmul.bf16.gmra.mxu0 %v4494
        %v8818 = vpop.f32.mrf.mxu0
        %v8819 = vadd.f32 %v8650, %v8818
        %v8820 = vpop.f32.mrf.mxu0
        %v8821 = vadd.f32 %v8652, %v8820
        %8822 = vmatmul.bf16.gmra.mxu0 %v4512
        %v8823 = vpop.f32.mrf.mxu0
        %v8824 = vadd.f32 %v8655, %v8823
        %v8825 = vpop.f32.mrf.mxu0
        %v8826 = vadd.f32 %v8657, %v8825
        %8827 = vmatmul.bf16.gmra.mxu0 %v4530
        %v8828 = vpop.f32.mrf.mxu0
        %v8829 = vadd.f32 %v8660, %v8828
        %v8830 = vpop.f32.mrf.mxu0
        %v8831 = vadd.f32 %v8662, %v8830
        %8832 = vmatmul.bf16.gmra.mxu0 %v4548
        %v8833 = vpop.f32.mrf.mxu0
        %v8834 = vadd.f32 %v8665, %v8833
        %v8835 = vpop.f32.mrf.mxu0
        %v8836 = vadd.f32 %v8667, %v8835
        %8837 = vmatmul.bf16.gmra.mxu0 %v4566
        %v8838 = vpop.f32.mrf.mxu0
        %v8839 = vadd.f32 %v8670, %v8838
        %v8840 = vpop.f32.mrf.mxu0
        %v8841 = vadd.f32 %v8672, %v8840
        %8842 = vmatmul.bf16.gmra.mxu0 %v4584
        %v8843 = vpop.f32.mrf.mxu0
        %v8844 = vadd.f32 %v8675, %v8843
        %v8845 = vpop.f32.mrf.mxu0
        %v8846 = vadd.f32 %v8677, %v8845
        %8847 = vmatmul.bf16.gmra.mxu0 %v4602
        %v8848 = vpop.f32.mrf.mxu0
        %v8849 = vadd.f32 %v8680, %v8848
        %v8850 = vpop.f32.mrf.mxu0
        %v8851 = vadd.f32 %v8682, %v8850
        %8852 = vmatmul.bf16.gmra.mxu0 %v4620
        %v8853 = vpop.f32.mrf.mxu0
        %v8854 = vadd.f32 %v8685, %v8853
        %v8855 = vpop.f32.mrf.mxu0
        %v8856 = vadd.f32 %v8687, %v8855
        %8857 = vmatmul.bf16.gmra.mxu0 %v4638
        %v8858 = vpop.f32.mrf.mxu0
        %v8859 = vadd.f32 %v8690, %v8858
        %v8860 = vpop.f32.mrf.mxu0
        %v8861 = vadd.f32 %v8692, %v8860
        %8862 = vmatmul.bf16.gmra.mxu0 %v4656
        %v8863 = vpop.f32.mrf.mxu0
        %v8864 = vadd.f32 %v8695, %v8863
        %v8865 = vpop.f32.mrf.mxu0
        %v8866 = vadd.f32 %v8697, %v8865
        %8867 = vmatmul.bf16.gmra.mxu0 %v4674
        %v8868 = vpop.f32.mrf.mxu0
        %v8869 = vadd.f32 %v8700, %v8868
        %v8870 = vpop.f32.mrf.mxu0
        %v8871 = vadd.f32 %v8702, %v8870
        %8872 = vmatmul.bf16.gmra.mxu0 %v4692
        %v8873 = vpop.f32.mrf.mxu0
        %v8874 = vadd.f32 %v8705, %v8873
        %v8875 = vpop.f32.mrf.mxu0
        %v8876 = vadd.f32 %v8707, %v8875
        %8877 = vmatmul.bf16.gmra.mxu0 %v4710
        %v8878 = vpop.f32.mrf.mxu0
        %v8879 = vadd.f32 %v8710, %v8878
        %v8880 = vpop.f32.mrf.mxu0
        %v8881 = vadd.f32 %v8712, %v8880
        %8882 = vmatmul.bf16.gmra.mxu0 %v4728
        %v8883 = vpop.f32.mrf.mxu0
        %v8884 = vadd.f32 %v8715, %v8883
        %v8885 = vpop.f32.mrf.mxu0
        %v8886 = vadd.f32 %v8717, %v8885
        %8887 = vmatmul.bf16.gmra.mxu0 %v4746
        %v8888 = vpop.f32.mrf.mxu0
        %v8889 = vadd.f32 %v8720, %v8888
        %v8890 = vpop.f32.mrf.mxu0
        %v8891 = vadd.f32 %v8722, %v8890
        %8892 = vdwg.mxu0
        %8893 = vmatpush.bf16.msra.mxu0 %v6036
        %8894 = vmatpush.bf16.msra.mxu0 %v6035
        %8895 = vmatpush.bf16.msra.mxu0 %v6034
        %8896 = vmatpush.bf16.msra.mxu0 %v6033
        %8897 = vmatpush.bf16.msra.mxu0 %v6032
        %8898 = vmatpush.bf16.msra.mxu0 %v6031
        %8899 = vmatpush.bf16.msra.mxu0 %v6030
        %8900 = vmatpush.bf16.msra.mxu0 %v6029
        %8901 = vmatmul.bf16.gmra.mxu0 %v4189
        %v8902 = vpop.f32.mrf.mxu0
        %v8903 = vadd.f32 %v8734, %v8902
        %v8904 = vpop.f32.mrf.mxu0
        %v8905 = vadd.f32 %v8736, %v8904
        %8906 = vmatmul.bf16.gmra.mxu0 %v4207
        %v8907 = vpop.f32.mrf.mxu0
        %v8908 = vadd.f32 %v8739, %v8907
        %v8909 = vpop.f32.mrf.mxu0
        %v8910 = vadd.f32 %v8741, %v8909
        %8911 = vmatmul.bf16.gmra.mxu0 %v4225
        %v8912 = vpop.f32.mrf.mxu0
        %v8913 = vadd.f32 %v8744, %v8912
        %v8914 = vpop.f32.mrf.mxu0
        %v8915 = vadd.f32 %v8746, %v8914
        %8916 = vmatmul.bf16.gmra.mxu0 %v4243
        %v8917 = vpop.f32.mrf.mxu0
        %v8918 = vadd.f32 %v8749, %v8917
        %v8919 = vpop.f32.mrf.mxu0
        %v8920 = vadd.f32 %v8751, %v8919
        %8921 = vmatmul.bf16.gmra.mxu0 %v4261
        %v8922 = vpop.f32.mrf.mxu0
        %v8923 = vadd.f32 %v8754, %v8922
        %v8924 = vpop.f32.mrf.mxu0
        %v8925 = vadd.f32 %v8756, %v8924
        %8926 = vmatmul.bf16.gmra.mxu0 %v4279
        %v8927 = vpop.f32.mrf.mxu0
        %v8928 = vadd.f32 %v8759, %v8927
        %v8929 = vpop.f32.mrf.mxu0
        %v8930 = vadd.f32 %v8761, %v8929
        %8931 = vmatmul.bf16.gmra.mxu0 %v4297
        %v8932 = vpop.f32.mrf.mxu0
        %v8933 = vadd.f32 %v8764, %v8932
        %v8934 = vpop.f32.mrf.mxu0
        %v8935 = vadd.f32 %v8766, %v8934
        %8936 = vmatmul.bf16.gmra.mxu0 %v4315
        %v8937 = vpop.f32.mrf.mxu0
        %v8938 = vadd.f32 %v8769, %v8937
        %v8939 = vpop.f32.mrf.mxu0
        %v8940 = vadd.f32 %v8771, %v8939
        %8941 = vmatmul.bf16.gmra.mxu0 %v4333
        %v8942 = vpop.f32.mrf.mxu0
        %v8943 = vadd.f32 %v8774, %v8942
        %v8944 = vpop.f32.mrf.mxu0
        %v8945 = vadd.f32 %v8776, %v8944
        %8946 = vmatmul.bf16.gmra.mxu0 %v4351
        %v8947 = vpop.f32.mrf.mxu0
        %v8948 = vadd.f32 %v8779, %v8947
        %v8949 = vpop.f32.mrf.mxu0
        %v8950 = vadd.f32 %v8781, %v8949
        %8951 = vmatmul.bf16.gmra.mxu0 %v4369
        %v8952 = vpop.f32.mrf.mxu0
        %v8953 = vadd.f32 %v8784, %v8952
        %v8954 = vpop.f32.mrf.mxu0
        %v8955 = vadd.f32 %v8786, %v8954
        %8956 = vmatmul.bf16.gmra.mxu0 %v4387
        %v8957 = vpop.f32.mrf.mxu0
        %v8958 = vadd.f32 %v8789, %v8957
        %v8959 = vpop.f32.mrf.mxu0
        %v8960 = vadd.f32 %v8791, %v8959
        %8961 = vmatmul.bf16.gmra.mxu0 %v4405
        %v8962 = vpop.f32.mrf.mxu0
        %v8963 = vadd.f32 %v8794, %v8962
        %v8964 = vpop.f32.mrf.mxu0
        %v8965 = vadd.f32 %v8796, %v8964
        %8966 = vmatmul.bf16.gmra.mxu0 %v4423
        %v8967 = vpop.f32.mrf.mxu0
        %v8968 = vadd.f32 %v8799, %v8967
        %v8969 = vpop.f32.mrf.mxu0
        %v8970 = vadd.f32 %v8801, %v8969
        %8971 = vmatmul.bf16.gmra.mxu0 %v4441
        %v8972 = vpop.f32.mrf.mxu0
        %v8973 = vadd.f32 %v8804, %v8972
        %v8974 = vpop.f32.mrf.mxu0
        %v8975 = vadd.f32 %v8806, %v8974
        %8976 = vmatmul.bf16.gmra.mxu0 %v4459
        %v8977 = vpop.f32.mrf.mxu0
        %v8978 = vadd.f32 %v8809, %v8977
        %v8979 = vpop.f32.mrf.mxu0
        %v8980 = vadd.f32 %v8811, %v8979
        %8981 = vmatmul.bf16.gmra.mxu0 %v4477
        %v8982 = vpop.f32.mrf.mxu0
        %v8983 = vadd.f32 %v8814, %v8982
        %v8984 = vpop.f32.mrf.mxu0
        %v8985 = vadd.f32 %v8816, %v8984
        %8986 = vmatmul.bf16.gmra.mxu0 %v4495
        %v8987 = vpop.f32.mrf.mxu0
        %v8988 = vadd.f32 %v8819, %v8987
        %v8989 = vpop.f32.mrf.mxu0
        %v8990 = vadd.f32 %v8821, %v8989
        %8991 = vmatmul.bf16.gmra.mxu0 %v4513
        %v8992 = vpop.f32.mrf.mxu0
        %v8993 = vadd.f32 %v8824, %v8992
        %v8994 = vpop.f32.mrf.mxu0
        %v8995 = vadd.f32 %v8826, %v8994
        %8996 = vmatmul.bf16.gmra.mxu0 %v4531
        %v8997 = vpop.f32.mrf.mxu0
        %v8998 = vadd.f32 %v8829, %v8997
        %v8999 = vpop.f32.mrf.mxu0
        %v9000 = vadd.f32 %v8831, %v8999
        %9001 = vmatmul.bf16.gmra.mxu0 %v4549
        %v9002 = vpop.f32.mrf.mxu0
        %v9003 = vadd.f32 %v8834, %v9002
        %v9004 = vpop.f32.mrf.mxu0
        %v9005 = vadd.f32 %v8836, %v9004
        %9006 = vmatmul.bf16.gmra.mxu0 %v4567
        %v9007 = vpop.f32.mrf.mxu0
        %v9008 = vadd.f32 %v8839, %v9007
        %v9009 = vpop.f32.mrf.mxu0
        %v9010 = vadd.f32 %v8841, %v9009
        %9011 = vmatmul.bf16.gmra.mxu0 %v4585
        %v9012 = vpop.f32.mrf.mxu0
        %v9013 = vadd.f32 %v8844, %v9012
        %v9014 = vpop.f32.mrf.mxu0
        %v9015 = vadd.f32 %v8846, %v9014
        %9016 = vmatmul.bf16.gmra.mxu0 %v4603
        %v9017 = vpop.f32.mrf.mxu0
        %v9018 = vadd.f32 %v8849, %v9017
        %v9019 = vpop.f32.mrf.mxu0
        %v9020 = vadd.f32 %v8851, %v9019
        %9021 = vmatmul.bf16.gmra.mxu0 %v4621
        %v9022 = vpop.f32.mrf.mxu0
        %v9023 = vadd.f32 %v8854, %v9022
        %v9024 = vpop.f32.mrf.mxu0
        %v9025 = vadd.f32 %v8856, %v9024
        %9026 = vmatmul.bf16.gmra.mxu0 %v4639
        %v9027 = vpop.f32.mrf.mxu0
        %v9028 = vadd.f32 %v8859, %v9027
        %v9029 = vpop.f32.mrf.mxu0
        %v9030 = vadd.f32 %v8861, %v9029
        %9031 = vmatmul.bf16.gmra.mxu0 %v4657
        %v9032 = vpop.f32.mrf.mxu0
        %v9033 = vadd.f32 %v8864, %v9032
        %v9034 = vpop.f32.mrf.mxu0
        %v9035 = vadd.f32 %v8866, %v9034
        %9036 = vmatmul.bf16.gmra.mxu0 %v4675
        %v9037 = vpop.f32.mrf.mxu0
        %v9038 = vadd.f32 %v8869, %v9037
        %v9039 = vpop.f32.mrf.mxu0
        %v9040 = vadd.f32 %v8871, %v9039
        %9041 = vmatmul.bf16.gmra.mxu0 %v4693
        %v9042 = vpop.f32.mrf.mxu0
        %v9043 = vadd.f32 %v8874, %v9042
        %v9044 = vpop.f32.mrf.mxu0
        %v9045 = vadd.f32 %v8876, %v9044
        %9046 = vmatmul.bf16.gmra.mxu0 %v4711
        %v9047 = vpop.f32.mrf.mxu0
        %v9048 = vadd.f32 %v8879, %v9047
        %v9049 = vpop.f32.mrf.mxu0
        %v9050 = vadd.f32 %v8881, %v9049
        %9051 = vmatmul.bf16.gmra.mxu0 %v4729
        %v9052 = vpop.f32.mrf.mxu0
        %v9053 = vadd.f32 %v8884, %v9052
        %v9054 = vpop.f32.mrf.mxu0
        %v9055 = vadd.f32 %v8886, %v9054
        %9056 = vmatmul.bf16.gmra.mxu0 %v4747
        %v9057 = vpop.f32.mrf.mxu0
        %v9058 = vadd.f32 %v8889, %v9057
        %v9059 = vpop.f32.mrf.mxu0
        %v9060 = vadd.f32 %v8891, %v9059
        %9061 = vdwg.mxu0
        %9062 = vmatpush.bf16.msra.mxu0 %v6044
        %9063 = vmatpush.bf16.msra.mxu0 %v6043
        %9064 = vmatpush.bf16.msra.mxu0 %v6042
        %9065 = vmatpush.bf16.msra.mxu0 %v6041
        %9066 = vmatpush.bf16.msra.mxu0 %v6040
        %9067 = vmatpush.bf16.msra.mxu0 %v6039
        %9068 = vmatpush.bf16.msra.mxu0 %v6038
        %9069 = vmatpush.bf16.msra.mxu0 %v6037
        %9070 = vmatmul.bf16.gmra.mxu0 %v4190
        %v9071 = vpop.f32.mrf.mxu0
        %v9072 = vadd.f32 %v8903, %v9071
        %v9073 = vpop.f32.mrf.mxu0
        %v9074 = vadd.f32 %v8905, %v9073
        %9075 = vmatmul.bf16.gmra.mxu0 %v4208
        %v9076 = vpop.f32.mrf.mxu0
        %v9077 = vadd.f32 %v8908, %v9076
        %v9078 = vpop.f32.mrf.mxu0
        %v9079 = vadd.f32 %v8910, %v9078
        %9080 = vmatmul.bf16.gmra.mxu0 %v4226
        %v9081 = vpop.f32.mrf.mxu0
        %v9082 = vadd.f32 %v8913, %v9081
        %v9083 = vpop.f32.mrf.mxu0
        %v9084 = vadd.f32 %v8915, %v9083
        %9085 = vmatmul.bf16.gmra.mxu0 %v4244
        %v9086 = vpop.f32.mrf.mxu0
        %v9087 = vadd.f32 %v8918, %v9086
        %v9088 = vpop.f32.mrf.mxu0
        %v9089 = vadd.f32 %v8920, %v9088
        %9090 = vmatmul.bf16.gmra.mxu0 %v4262
        %v9091 = vpop.f32.mrf.mxu0
        %v9092 = vadd.f32 %v8923, %v9091
        %v9093 = vpop.f32.mrf.mxu0
        %v9094 = vadd.f32 %v8925, %v9093
        %9095 = vmatmul.bf16.gmra.mxu0 %v4280
        %v9096 = vpop.f32.mrf.mxu0
        %v9097 = vadd.f32 %v8928, %v9096
        %v9098 = vpop.f32.mrf.mxu0
        %v9099 = vadd.f32 %v8930, %v9098
        %9100 = vmatmul.bf16.gmra.mxu0 %v4298
        %v9101 = vpop.f32.mrf.mxu0
        %v9102 = vadd.f32 %v8933, %v9101
        %v9103 = vpop.f32.mrf.mxu0
        %v9104 = vadd.f32 %v8935, %v9103
        %9105 = vmatmul.bf16.gmra.mxu0 %v4316
        %v9106 = vpop.f32.mrf.mxu0
        %v9107 = vadd.f32 %v8938, %v9106
        %v9108 = vpop.f32.mrf.mxu0
        %v9109 = vadd.f32 %v8940, %v9108
        %9110 = vmatmul.bf16.gmra.mxu0 %v4334
        %v9111 = vpop.f32.mrf.mxu0
        %v9112 = vadd.f32 %v8943, %v9111
        %v9113 = vpop.f32.mrf.mxu0
        %v9114 = vadd.f32 %v8945, %v9113
        %9115 = vmatmul.bf16.gmra.mxu0 %v4352
        %v9116 = vpop.f32.mrf.mxu0
        %v9117 = vadd.f32 %v8948, %v9116
        %v9118 = vpop.f32.mrf.mxu0
        %v9119 = vadd.f32 %v8950, %v9118
        %9120 = vmatmul.bf16.gmra.mxu0 %v4370
        %v9121 = vpop.f32.mrf.mxu0
        %v9122 = vadd.f32 %v8953, %v9121
        %v9123 = vpop.f32.mrf.mxu0
        %v9124 = vadd.f32 %v8955, %v9123
        %9125 = vmatmul.bf16.gmra.mxu0 %v4388
        %v9126 = vpop.f32.mrf.mxu0
        %v9127 = vadd.f32 %v8958, %v9126
        %v9128 = vpop.f32.mrf.mxu0
        %v9129 = vadd.f32 %v8960, %v9128
        %9130 = vmatmul.bf16.gmra.mxu0 %v4406
        %v9131 = vpop.f32.mrf.mxu0
        %v9132 = vadd.f32 %v8963, %v9131
        %v9133 = vpop.f32.mrf.mxu0
        %v9134 = vadd.f32 %v8965, %v9133
        %9135 = vmatmul.bf16.gmra.mxu0 %v4424
        %v9136 = vpop.f32.mrf.mxu0
        %v9137 = vadd.f32 %v8968, %v9136
        %v9138 = vpop.f32.mrf.mxu0
        %v9139 = vadd.f32 %v8970, %v9138
        %9140 = vmatmul.bf16.gmra.mxu0 %v4442
        %v9141 = vpop.f32.mrf.mxu0
        %v9142 = vadd.f32 %v8973, %v9141
        %v9143 = vpop.f32.mrf.mxu0
        %v9144 = vadd.f32 %v8975, %v9143
        %9145 = vmatmul.bf16.gmra.mxu0 %v4460
        %v9146 = vpop.f32.mrf.mxu0
        %v9147 = vadd.f32 %v8978, %v9146
        %v9148 = vpop.f32.mrf.mxu0
        %v9149 = vadd.f32 %v8980, %v9148
        %9150 = vmatmul.bf16.gmra.mxu0 %v4478
        %v9151 = vpop.f32.mrf.mxu0
        %v9152 = vadd.f32 %v8983, %v9151
        %v9153 = vpop.f32.mrf.mxu0
        %v9154 = vadd.f32 %v8985, %v9153
        %9155 = vmatmul.bf16.gmra.mxu0 %v4496
        %v9156 = vpop.f32.mrf.mxu0
        %v9157 = vadd.f32 %v8988, %v9156
        %v9158 = vpop.f32.mrf.mxu0
        %v9159 = vadd.f32 %v8990, %v9158
        %9160 = vmatmul.bf16.gmra.mxu0 %v4514
        %v9161 = vpop.f32.mrf.mxu0
        %v9162 = vadd.f32 %v8993, %v9161
        %v9163 = vpop.f32.mrf.mxu0
        %v9164 = vadd.f32 %v8995, %v9163
        %9165 = vmatmul.bf16.gmra.mxu0 %v4532
        %v9166 = vpop.f32.mrf.mxu0
        %v9167 = vadd.f32 %v8998, %v9166
        %v9168 = vpop.f32.mrf.mxu0
        %v9169 = vadd.f32 %v9000, %v9168
        %9170 = vmatmul.bf16.gmra.mxu0 %v4550
        %v9171 = vpop.f32.mrf.mxu0
        %v9172 = vadd.f32 %v9003, %v9171
        %v9173 = vpop.f32.mrf.mxu0
        %v9174 = vadd.f32 %v9005, %v9173
        %9175 = vmatmul.bf16.gmra.mxu0 %v4568
        %v9176 = vpop.f32.mrf.mxu0
        %v9177 = vadd.f32 %v9008, %v9176
        %v9178 = vpop.f32.mrf.mxu0
        %v9179 = vadd.f32 %v9010, %v9178
        %9180 = vmatmul.bf16.gmra.mxu0 %v4586
        %v9181 = vpop.f32.mrf.mxu0
        %v9182 = vadd.f32 %v9013, %v9181
        %v9183 = vpop.f32.mrf.mxu0
        %v9184 = vadd.f32 %v9015, %v9183
        %9185 = vmatmul.bf16.gmra.mxu0 %v4604
        %v9186 = vpop.f32.mrf.mxu0
        %v9187 = vadd.f32 %v9018, %v9186
        %v9188 = vpop.f32.mrf.mxu0
        %v9189 = vadd.f32 %v9020, %v9188
        %9190 = vmatmul.bf16.gmra.mxu0 %v4622
        %v9191 = vpop.f32.mrf.mxu0
        %v9192 = vadd.f32 %v9023, %v9191
        %v9193 = vpop.f32.mrf.mxu0
        %v9194 = vadd.f32 %v9025, %v9193
        %9195 = vmatmul.bf16.gmra.mxu0 %v4640
        %v9196 = vpop.f32.mrf.mxu0
        %v9197 = vadd.f32 %v9028, %v9196
        %v9198 = vpop.f32.mrf.mxu0
        %v9199 = vadd.f32 %v9030, %v9198
        %9200 = vmatmul.bf16.gmra.mxu0 %v4658
        %v9201 = vpop.f32.mrf.mxu0
        %v9202 = vadd.f32 %v9033, %v9201
        %v9203 = vpop.f32.mrf.mxu0
        %v9204 = vadd.f32 %v9035, %v9203
        %9205 = vmatmul.bf16.gmra.mxu0 %v4676
        %v9206 = vpop.f32.mrf.mxu0
        %v9207 = vadd.f32 %v9038, %v9206
        %v9208 = vpop.f32.mrf.mxu0
        %v9209 = vadd.f32 %v9040, %v9208
        %9210 = vmatmul.bf16.gmra.mxu0 %v4694
        %v9211 = vpop.f32.mrf.mxu0
        %v9212 = vadd.f32 %v9043, %v9211
        %v9213 = vpop.f32.mrf.mxu0
        %v9214 = vadd.f32 %v9045, %v9213
        %9215 = vmatmul.bf16.gmra.mxu0 %v4712
        %v9216 = vpop.f32.mrf.mxu0
        %v9217 = vadd.f32 %v9048, %v9216
        %v9218 = vpop.f32.mrf.mxu0
        %v9219 = vadd.f32 %v9050, %v9218
        %9220 = vmatmul.bf16.gmra.mxu0 %v4730
        %v9221 = vpop.f32.mrf.mxu0
        %v9222 = vadd.f32 %v9053, %v9221
        %v9223 = vpop.f32.mrf.mxu0
        %v9224 = vadd.f32 %v9055, %v9223
        %9225 = vmatmul.bf16.gmra.mxu0 %v4748
        %v9226 = vpop.f32.mrf.mxu0
        %v9227 = vadd.f32 %v9058, %v9226
        %v9228 = vpop.f32.mrf.mxu0
        %v9229 = vadd.f32 %v9060, %v9228
        %9230 = vdwg.mxu0
        %v9231 = vadd.f32 %v1517, %v9072
        %v9232 = vadd.f32 %v1518, %v9074
        %v9233 = vadd.f32 %v1519, %v9077
        %v9234 = vadd.f32 %v1520, %v9079
        %v9235 = vadd.f32 %v1521, %v9082
        %v9236 = vadd.f32 %v1522, %v9084
        %v9237 = vadd.f32 %v1523, %v9087
        %v9238 = vadd.f32 %v1524, %v9089
        %v9239 = vadd.f32 %v1525, %v9092
        %v9240 = vadd.f32 %v1526, %v9094
        %v9241 = vadd.f32 %v1527, %v9097
        %v9242 = vadd.f32 %v1528, %v9099
        %v9243 = vadd.f32 %v1529, %v9102
        %v9244 = vadd.f32 %v1530, %v9104
        %v9245 = vadd.f32 %v1531, %v9107
        %v9246 = vadd.f32 %v1532, %v9109
        %v9247 = vadd.f32 %v1533, %v9112
        %v9248 = vadd.f32 %v1534, %v9114
        %v9249 = vadd.f32 %v1535, %v9117
        %v9250 = vadd.f32 %v1536, %v9119
        %v9251 = vadd.f32 %v1537, %v9122
        %v9252 = vadd.f32 %v1538, %v9124
        %v9253 = vadd.f32 %v1539, %v9127
        %v9254 = vadd.f32 %v1540, %v9129
        %v9255 = vadd.f32 %v1541, %v9132
        %v9256 = vadd.f32 %v1542, %v9134
        %v9257 = vadd.f32 %v1543, %v9137
        %v9258 = vadd.f32 %v1544, %v9139
        %v9259 = vadd.f32 %v1545, %v9142
        %v9260 = vadd.f32 %v1546, %v9144
        %v9261 = vadd.f32 %v1547, %v9147
        %v9262 = vadd.f32 %v1548, %v9149
        %v9263 = vadd.f32 %v1549, %v9152
        %v9264 = vadd.f32 %v1550, %v9154
        %v9265 = vadd.f32 %v1551, %v9157
        %v9266 = vadd.f32 %v1552, %v9159
        %v9267 = vadd.f32 %v1553, %v9162
        %v9268 = vadd.f32 %v1554, %v9164
        %v9269 = vadd.f32 %v1555, %v9167
        %v9270 = vadd.f32 %v1556, %v9169
        %v9271 = vadd.f32 %v1557, %v9172
        %v9272 = vadd.f32 %v1558, %v9174
        %v9273 = vadd.f32 %v1559, %v9177
        %v9274 = vadd.f32 %v1560, %v9179
        %v9275 = vadd.f32 %v1561, %v9182
        %v9276 = vadd.f32 %v1562, %v9184
        %v9277 = vadd.f32 %v1563, %v9187
        %v9278 = vadd.f32 %v1564, %v9189
        %v9279 = vadd.f32 %v1565, %v9192
        %v9280 = vadd.f32 %v1566, %v9194
        %v9281 = vadd.f32 %v1567, %v9197
        %v9282 = vadd.f32 %v1568, %v9199
        %v9283 = vadd.f32 %v1569, %v9202
        %v9284 = vadd.f32 %v1570, %v9204
        %v9285 = vadd.f32 %v1571, %v9207
        %v9286 = vadd.f32 %v1572, %v9209
        %v9287 = vadd.f32 %v1573, %v9212
        %v9288 = vadd.f32 %v1574, %v9214
        %v9289 = vadd.f32 %v1575, %v9217
        %v9290 = vadd.f32 %v1576, %v9219
        %v9291 = vadd.f32 %v1577, %v9222
        %v9292 = vadd.f32 %v1578, %v9224
        %v9293 = vadd.f32 %v1579, %v9227
        %v9294 = vadd.f32 %v1580, %v9229
        %9295 = vst [vmem:[#allocation2] sm:$0xff] %v9231
        %9296 = vst [vmem:[#allocation2 + $0x8] sm:$0xff] %v9232
        %9297 = vst [vmem:[#allocation2 + $0x10] sm:$0xff] %v9233
        %9298 = vst [vmem:[#allocation2 + $0x18] sm:$0xff] %v9234
        %9299 = vst [vmem:[#allocation2 + $0x20] sm:$0xff] %v9235
        %9300 = vst [vmem:[#allocation2 + $0x28] sm:$0xff] %v9236
        %9301 = vst [vmem:[#allocation2 + $0x30] sm:$0xff] %v9237
        %9302 = vst [vmem:[#allocation2 + $0x38] sm:$0xff] %v9238
        %9303 = vst [vmem:[#allocation2 + $0x40] sm:$0xff] %v9239
        %9304 = vst [vmem:[#allocation2 + $0x48] sm:$0xff] %v9240
        %9305 = vst [vmem:[#allocation2 + $0x50] sm:$0xff] %v9241
        %9306 = vst [vmem:[#allocation2 + $0x58] sm:$0xff] %v9242
        %9307 = vst [vmem:[#allocation2 + $0x60] sm:$0xff] %v9243
        %9308 = vst [vmem:[#allocation2 + $0x68] sm:$0xff] %v9244
        %9309 = vst [vmem:[#allocation2 + $0x70] sm:$0xff] %v9245
        %9310 = vst [vmem:[#allocation2 + $0x78] sm:$0xff] %v9246
        %9311 = vst [vmem:[#allocation2 + $0x80] sm:$0xff] %v9247
        %9312 = vst [vmem:[#allocation2 + $0x88] sm:$0xff] %v9248
        %9313 = vst [vmem:[#allocation2 + $0x90] sm:$0xff] %v9249
        %9314 = vst [vmem:[#allocation2 + $0x98] sm:$0xff] %v9250
        %9315 = vst [vmem:[#allocation2 + $0xa0] sm:$0xff] %v9251
        %9316 = vst [vmem:[#allocation2 + $0xa8] sm:$0xff] %v9252
        %9317 = vst [vmem:[#allocation2 + $0xb0] sm:$0xff] %v9253
        %9318 = vst [vmem:[#allocation2 + $0xb8] sm:$0xff] %v9254
        %9319 = vst [vmem:[#allocation2 + $0xc0] sm:$0xff] %v9255
        %9320 = vst [vmem:[#allocation2 + $0xc8] sm:$0xff] %v9256
        %9321 = vst [vmem:[#allocation2 + $0xd0] sm:$0xff] %v9257
        %9322 = vst [vmem:[#allocation2 + $0xd8] sm:$0xff] %v9258
        %9323 = vst [vmem:[#allocation2 + $0xe0] sm:$0xff] %v9259
        %9324 = vst [vmem:[#allocation2 + $0xe8] sm:$0xff] %v9260
        %9325 = vst [vmem:[#allocation2 + $0xf0] sm:$0xff] %v9261
        %9326 = vst [vmem:[#allocation2 + $0xf8] sm:$0xff] %v9262
        %9327 = vst [vmem:[#allocation2 + $0x100] sm:$0xff] %v9263
        %9328 = vst [vmem:[#allocation2 + $0x108] sm:$0xff] %v9264
        %9329 = vst [vmem:[#allocation2 + $0x110] sm:$0xff] %v9265
        %9330 = vst [vmem:[#allocation2 + $0x118] sm:$0xff] %v9266
        %9331 = vst [vmem:[#allocation2 + $0x120] sm:$0xff] %v9267
        %9332 = vst [vmem:[#allocation2 + $0x128] sm:$0xff] %v9268
        %9333 = vst [vmem:[#allocation2 + $0x130] sm:$0xff] %v9269
        %9334 = vst [vmem:[#allocation2 + $0x138] sm:$0xff] %v9270
        %9335 = vst [vmem:[#allocation2 + $0x140] sm:$0xff] %v9271
        %9336 = vst [vmem:[#allocation2 + $0x148] sm:$0xff] %v9272
        %9337 = vst [vmem:[#allocation2 + $0x150] sm:$0xff] %v9273
        %9338 = vst [vmem:[#allocation2 + $0x158] sm:$0xff] %v9274
        %9339 = vst [vmem:[#allocation2 + $0x160] sm:$0xff] %v9275
        %9340 = vst [vmem:[#allocation2 + $0x168] sm:$0xff] %v9276
        %9341 = vst [vmem:[#allocation2 + $0x170] sm:$0xff] %v9277
        %9342 = vst [vmem:[#allocation2 + $0x178] sm:$0xff] %v9278
        %9343 = vst [vmem:[#allocation2 + $0x180] sm:$0xff] %v9279
        %9344 = vst [vmem:[#allocation2 + $0x188] sm:$0xff] %v9280
        %9345 = vst [vmem:[#allocation2 + $0x190] sm:$0xff] %v9281
        %9346 = vst [vmem:[#allocation2 + $0x198] sm:$0xff] %v9282
        %9347 = vst [vmem:[#allocation2 + $0x1a0] sm:$0xff] %v9283
        %9348 = vst [vmem:[#allocation2 + $0x1a8] sm:$0xff] %v9284
        %9349 = vst [vmem:[#allocation2 + $0x1b0] sm:$0xff] %v9285
        %9350 = vst [vmem:[#allocation2 + $0x1b8] sm:$0xff] %v9286
        %9351 = vst [vmem:[#allocation2 + $0x1c0] sm:$0xff] %v9287
        %9352 = vst [vmem:[#allocation2 + $0x1c8] sm:$0xff] %v9288
        %9353 = vst [vmem:[#allocation2 + $0x1d0] sm:$0xff] %v9289
        %9354 = vst [vmem:[#allocation2 + $0x1d8] sm:$0xff] %v9290
        %9355 = vst [vmem:[#allocation2 + $0x1e0] sm:$0xff] %v9291
        %9356 = vst [vmem:[#allocation2 + $0x1e8] sm:$0xff] %v9292
        %9357 = vst [vmem:[#allocation2 + $0x1f0] sm:$0xff] %v9293
        %9358 = vst [vmem:[#allocation2 + $0x1f8] sm:$0xff] %v9294
        %p9359 = scmp.eq.s32.totalorder %s23, 2
        // Predicated region
        $region64: #{forward.9} parent=54 // pred_check
          %p9360 = pneg %p9359
        $region65: #{forward.9} parent=54 // pred_check_branch
          %9362 = sbr.rel (%p9360) target = $region67
        $region66: #{forward.9} parent=54 // pred_region
          %v9363 = vld [vmem:[#allocation2] sm:$0xff]
          %v9364 = vld [vmem:[#allocation2 + $0x8] sm:$0xff]
          %v9365 = vld [vmem:[#allocation2 + $0x10] sm:$0xff]
          %v9366 = vld [vmem:[#allocation2 + $0x18] sm:$0xff]
          %v9367 = vld [vmem:[#allocation2 + $0x20] sm:$0xff]
          %v9368 = vld [vmem:[#allocation2 + $0x28] sm:$0xff]
          %v9369 = vld [vmem:[#allocation2 + $0x30] sm:$0xff]
          %v9370 = vld [vmem:[#allocation2 + $0x38] sm:$0xff]
          %v9371 = vld [vmem:[#allocation2 + $0x40] sm:$0xff]
          %v9372 = vld [vmem:[#allocation2 + $0x48] sm:$0xff]
          %v9373 = vld [vmem:[#allocation2 + $0x50] sm:$0xff]
          %v9374 = vld [vmem:[#allocation2 + $0x58] sm:$0xff]
          %v9375 = vld [vmem:[#allocation2 + $0x60] sm:$0xff]
          %v9376 = vld [vmem:[#allocation2 + $0x68] sm:$0xff]
          %v9377 = vld [vmem:[#allocation2 + $0x70] sm:$0xff]
          %v9378 = vld [vmem:[#allocation2 + $0x78] sm:$0xff]
          %v9379 = vld [vmem:[#allocation2 + $0x80] sm:$0xff]
          %v9380 = vld [vmem:[#allocation2 + $0x88] sm:$0xff]
          %v9381 = vld [vmem:[#allocation2 + $0x90] sm:$0xff]
          %v9382 = vld [vmem:[#allocation2 + $0x98] sm:$0xff]
          %v9383 = vld [vmem:[#allocation2 + $0xa0] sm:$0xff]
          %v9384 = vld [vmem:[#allocation2 + $0xa8] sm:$0xff]
          %v9385 = vld [vmem:[#allocation2 + $0xb0] sm:$0xff]
          %v9386 = vld [vmem:[#allocation2 + $0xb8] sm:$0xff]
          %v9387 = vld [vmem:[#allocation2 + $0xc0] sm:$0xff]
          %v9388 = vld [vmem:[#allocation2 + $0xc8] sm:$0xff]
          %v9389 = vld [vmem:[#allocation2 + $0xd0] sm:$0xff]
          %v9390 = vld [vmem:[#allocation2 + $0xd8] sm:$0xff]
          %v9391 = vld [vmem:[#allocation2 + $0xe0] sm:$0xff]
          %v9392 = vld [vmem:[#allocation2 + $0xe8] sm:$0xff]
          %v9393 = vld [vmem:[#allocation2 + $0xf0] sm:$0xff]
          %v9394 = vld [vmem:[#allocation2 + $0xf8] sm:$0xff]
          %v9395 = vld [vmem:[#allocation2 + $0x100] sm:$0xff]
          %v9396 = vld [vmem:[#allocation2 + $0x108] sm:$0xff]
          %v9397 = vld [vmem:[#allocation2 + $0x110] sm:$0xff]
          %v9398 = vld [vmem:[#allocation2 + $0x118] sm:$0xff]
          %v9399 = vld [vmem:[#allocation2 + $0x120] sm:$0xff]
          %v9400 = vld [vmem:[#allocation2 + $0x128] sm:$0xff]
          %v9401 = vld [vmem:[#allocation2 + $0x130] sm:$0xff]
          %v9402 = vld [vmem:[#allocation2 + $0x138] sm:$0xff]
          %v9403 = vld [vmem:[#allocation2 + $0x140] sm:$0xff]
          %v9404 = vld [vmem:[#allocation2 + $0x148] sm:$0xff]
          %v9405 = vld [vmem:[#allocation2 + $0x150] sm:$0xff]
          %v9406 = vld [vmem:[#allocation2 + $0x158] sm:$0xff]
          %v9407 = vld [vmem:[#allocation2 + $0x160] sm:$0xff]
          %v9408 = vld [vmem:[#allocation2 + $0x168] sm:$0xff]
          %v9409 = vld [vmem:[#allocation2 + $0x170] sm:$0xff]
          %v9410 = vld [vmem:[#allocation2 + $0x178] sm:$0xff]
          %v9411 = vld [vmem:[#allocation2 + $0x180] sm:$0xff]
          %v9412 = vld [vmem:[#allocation2 + $0x188] sm:$0xff]
          %v9413 = vld [vmem:[#allocation2 + $0x190] sm:$0xff]
          %v9414 = vld [vmem:[#allocation2 + $0x198] sm:$0xff]
          %v9415 = vld [vmem:[#allocation2 + $0x1a0] sm:$0xff]
          %v9416 = vld [vmem:[#allocation2 + $0x1a8] sm:$0xff]
          %v9417 = vld [vmem:[#allocation2 + $0x1b0] sm:$0xff]
          %v9418 = vld [vmem:[#allocation2 + $0x1b8] sm:$0xff]
          %v9419 = vld [vmem:[#allocation2 + $0x1c0] sm:$0xff]
          %v9420 = vld [vmem:[#allocation2 + $0x1c8] sm:$0xff]
          %v9421 = vld [vmem:[#allocation2 + $0x1d0] sm:$0xff]
          %v9422 = vld [vmem:[#allocation2 + $0x1d8] sm:$0xff]
          %v9423 = vld [vmem:[#allocation2 + $0x1e0] sm:$0xff]
          %v9424 = vld [vmem:[#allocation2 + $0x1e8] sm:$0xff]
          %v9425 = vld [vmem:[#allocation2 + $0x1f0] sm:$0xff]
          %v9426 = vld [vmem:[#allocation2 + $0x1f8] sm:$0xff]
          %v9427 = vld [vmem:[%s1444] sm:$0x1]
          %v9429 = vperm.slane %v9427, 0
          %v9431 = vmul.f32 %v9363, %v9429
          %v9432 = vmul.f32 %v9364, %v9429
          %v9433 = vmul.f32 %v9365, %v9429
          %v9434 = vmul.f32 %v9366, %v9429
          %v9435 = vmul.f32 %v9367, %v9429
          %v9436 = vmul.f32 %v9368, %v9429
          %v9437 = vmul.f32 %v9369, %v9429
          %v9438 = vmul.f32 %v9370, %v9429
          %v9439 = vmul.f32 %v9371, %v9429
          %v9440 = vmul.f32 %v9372, %v9429
          %v9441 = vmul.f32 %v9373, %v9429
          %v9442 = vmul.f32 %v9374, %v9429
          %v9443 = vmul.f32 %v9375, %v9429
          %v9444 = vmul.f32 %v9376, %v9429
          %v9445 = vmul.f32 %v9377, %v9429
          %v9446 = vmul.f32 %v9378, %v9429
          %v9447 = vmul.f32 %v9379, %v9429
          %v9448 = vmul.f32 %v9380, %v9429
          %v9449 = vmul.f32 %v9381, %v9429
          %v9450 = vmul.f32 %v9382, %v9429
          %v9451 = vmul.f32 %v9383, %v9429
          %v9452 = vmul.f32 %v9384, %v9429
          %v9453 = vmul.f32 %v9385, %v9429
          %v9454 = vmul.f32 %v9386, %v9429
          %v9455 = vmul.f32 %v9387, %v9429
          %v9456 = vmul.f32 %v9388, %v9429
          %v9457 = vmul.f32 %v9389, %v9429
          %v9458 = vmul.f32 %v9390, %v9429
          %v9459 = vmul.f32 %v9391, %v9429
          %v9460 = vmul.f32 %v9392, %v9429
          %v9461 = vmul.f32 %v9393, %v9429
          %v9462 = vmul.f32 %v9394, %v9429
          %v9463 = vmul.f32 %v9395, %v9429
          %v9464 = vmul.f32 %v9396, %v9429
          %v9465 = vmul.f32 %v9397, %v9429
          %v9466 = vmul.f32 %v9398, %v9429
          %v9467 = vmul.f32 %v9399, %v9429
          %v9468 = vmul.f32 %v9400, %v9429
          %v9469 = vmul.f32 %v9401, %v9429
          %v9470 = vmul.f32 %v9402, %v9429
          %v9471 = vmul.f32 %v9403, %v9429
          %v9472 = vmul.f32 %v9404, %v9429
          %v9473 = vmul.f32 %v9405, %v9429
          %v9474 = vmul.f32 %v9406, %v9429
          %v9475 = vmul.f32 %v9407, %v9429
          %v9476 = vmul.f32 %v9408, %v9429
          %v9477 = vmul.f32 %v9409, %v9429
          %v9478 = vmul.f32 %v9410, %v9429
          %v9479 = vmul.f32 %v9411, %v9429
          %v9480 = vmul.f32 %v9412, %v9429
          %v9481 = vmul.f32 %v9413, %v9429
          %v9482 = vmul.f32 %v9414, %v9429
          %v9483 = vmul.f32 %v9415, %v9429
          %v9484 = vmul.f32 %v9416, %v9429
          %v9485 = vmul.f32 %v9417, %v9429
          %v9486 = vmul.f32 %v9418, %v9429
          %v9487 = vmul.f32 %v9419, %v9429
          %v9488 = vmul.f32 %v9420, %v9429
          %v9489 = vmul.f32 %v9421, %v9429
          %v9490 = vmul.f32 %v9422, %v9429
          %v9491 = vmul.f32 %v9423, %v9429
          %v9492 = vmul.f32 %v9424, %v9429
          %v9493 = vmul.f32 %v9425, %v9429
          %v9494 = vmul.f32 %v9426, %v9429
          %v9495 = vld [vmem:[%s1447] sm:$0x1]
          %v9497 = vperm.slane %v9495, 0
          %v9499 = vadd.f32 %v9431, %v9497
          %v9500 = vadd.f32 %v9432, %v9497
          %v9501 = vadd.f32 %v9433, %v9497
          %v9502 = vadd.f32 %v9434, %v9497
          %v9503 = vadd.f32 %v9435, %v9497
          %v9504 = vadd.f32 %v9436, %v9497
          %v9505 = vadd.f32 %v9437, %v9497
          %v9506 = vadd.f32 %v9438, %v9497
          %v9507 = vadd.f32 %v9439, %v9497
          %v9508 = vadd.f32 %v9440, %v9497
          %v9509 = vadd.f32 %v9441, %v9497
          %v9510 = vadd.f32 %v9442, %v9497
          %v9511 = vadd.f32 %v9443, %v9497
          %v9512 = vadd.f32 %v9444, %v9497
          %v9513 = vadd.f32 %v9445, %v9497
          %v9514 = vadd.f32 %v9446, %v9497
          %v9515 = vadd.f32 %v9447, %v9497
          %v9516 = vadd.f32 %v9448, %v9497
          %v9517 = vadd.f32 %v9449, %v9497
          %v9518 = vadd.f32 %v9450, %v9497
          %v9519 = vadd.f32 %v9451, %v9497
          %v9520 = vadd.f32 %v9452, %v9497
          %v9521 = vadd.f32 %v9453, %v9497
          %v9522 = vadd.f32 %v9454, %v9497
          %v9523 = vadd.f32 %v9455, %v9497
          %v9524 = vadd.f32 %v9456, %v9497
          %v9525 = vadd.f32 %v9457, %v9497
          %v9526 = vadd.f32 %v9458, %v9497
          %v9527 = vadd.f32 %v9459, %v9497
          %v9528 = vadd.f32 %v9460, %v9497
          %v9529 = vadd.f32 %v9461, %v9497
          %v9530 = vadd.f32 %v9462, %v9497
          %v9531 = vadd.f32 %v9463, %v9497
          %v9532 = vadd.f32 %v9464, %v9497
          %v9533 = vadd.f32 %v9465, %v9497
          %v9534 = vadd.f32 %v9466, %v9497
          %v9535 = vadd.f32 %v9467, %v9497
          %v9536 = vadd.f32 %v9468, %v9497
          %v9537 = vadd.f32 %v9469, %v9497
          %v9538 = vadd.f32 %v9470, %v9497
          %v9539 = vadd.f32 %v9471, %v9497
          %v9540 = vadd.f32 %v9472, %v9497
          %v9541 = vadd.f32 %v9473, %v9497
          %v9542 = vadd.f32 %v9474, %v9497
          %v9543 = vadd.f32 %v9475, %v9497
          %v9544 = vadd.f32 %v9476, %v9497
          %v9545 = vadd.f32 %v9477, %v9497
          %v9546 = vadd.f32 %v9478, %v9497
          %v9547 = vadd.f32 %v9479, %v9497
          %v9548 = vadd.f32 %v9480, %v9497
          %v9549 = vadd.f32 %v9481, %v9497
          %v9550 = vadd.f32 %v9482, %v9497
          %v9551 = vadd.f32 %v9483, %v9497
          %v9552 = vadd.f32 %v9484, %v9497
          %v9553 = vadd.f32 %v9485, %v9497
          %v9554 = vadd.f32 %v9486, %v9497
          %v9555 = vadd.f32 %v9487, %v9497
          %v9556 = vadd.f32 %v9488, %v9497
          %v9557 = vadd.f32 %v9489, %v9497
          %v9558 = vadd.f32 %v9490, %v9497
          %v9559 = vadd.f32 %v9491, %v9497
          %v9560 = vadd.f32 %v9492, %v9497
          %v9561 = vadd.f32 %v9493, %v9497
          %v9562 = vadd.f32 %v9494, %v9497
          %9563 = vst [vmem:[#allocation4] sm:$0xff] %v9499
          %9564 = vst [vmem:[#allocation4 + $0x8] sm:$0xff] %v9500
          %9565 = vst [vmem:[#allocation4 + $0x10] sm:$0xff] %v9501
          %9566 = vst [vmem:[#allocation4 + $0x18] sm:$0xff] %v9502
          %9567 = vst [vmem:[#allocation4 + $0x20] sm:$0xff] %v9503
          %9568 = vst [vmem:[#allocation4 + $0x28] sm:$0xff] %v9504
          %9569 = vst [vmem:[#allocation4 + $0x30] sm:$0xff] %v9505
          %9570 = vst [vmem:[#allocation4 + $0x38] sm:$0xff] %v9506
          %9571 = vst [vmem:[#allocation4 + $0x40] sm:$0xff] %v9507
          %9572 = vst [vmem:[#allocation4 + $0x48] sm:$0xff] %v9508
          %9573 = vst [vmem:[#allocation4 + $0x50] sm:$0xff] %v9509
          %9574 = vst [vmem:[#allocation4 + $0x58] sm:$0xff] %v9510
          %9575 = vst [vmem:[#allocation4 + $0x60] sm:$0xff] %v9511
          %9576 = vst [vmem:[#allocation4 + $0x68] sm:$0xff] %v9512
          %9577 = vst [vmem:[#allocation4 + $0x70] sm:$0xff] %v9513
          %9578 = vst [vmem:[#allocation4 + $0x78] sm:$0xff] %v9514
          %9579 = vst [vmem:[#allocation4 + $0x80] sm:$0xff] %v9515
          %9580 = vst [vmem:[#allocation4 + $0x88] sm:$0xff] %v9516
          %9581 = vst [vmem:[#allocation4 + $0x90] sm:$0xff] %v9517
          %9582 = vst [vmem:[#allocation4 + $0x98] sm:$0xff] %v9518
          %9583 = vst [vmem:[#allocation4 + $0xa0] sm:$0xff] %v9519
          %9584 = vst [vmem:[#allocation4 + $0xa8] sm:$0xff] %v9520
          %9585 = vst [vmem:[#allocation4 + $0xb0] sm:$0xff] %v9521
          %9586 = vst [vmem:[#allocation4 + $0xb8] sm:$0xff] %v9522
          %9587 = vst [vmem:[#allocation4 + $0xc0] sm:$0xff] %v9523
          %9588 = vst [vmem:[#allocation4 + $0xc8] sm:$0xff] %v9524
          %9589 = vst [vmem:[#allocation4 + $0xd0] sm:$0xff] %v9525
          %9590 = vst [vmem:[#allocation4 + $0xd8] sm:$0xff] %v9526
          %9591 = vst [vmem:[#allocation4 + $0xe0] sm:$0xff] %v9527
          %9592 = vst [vmem:[#allocation4 + $0xe8] sm:$0xff] %v9528
          %9593 = vst [vmem:[#allocation4 + $0xf0] sm:$0xff] %v9529
          %9594 = vst [vmem:[#allocation4 + $0xf8] sm:$0xff] %v9530
          %9595 = vst [vmem:[#allocation4 + $0x100] sm:$0xff] %v9531
          %9596 = vst [vmem:[#allocation4 + $0x108] sm:$0xff] %v9532
          %9597 = vst [vmem:[#allocation4 + $0x110] sm:$0xff] %v9533
          %9598 = vst [vmem:[#allocation4 + $0x118] sm:$0xff] %v9534
          %9599 = vst [vmem:[#allocation4 + $0x120] sm:$0xff] %v9535
          %9600 = vst [vmem:[#allocation4 + $0x128] sm:$0xff] %v9536
          %9601 = vst [vmem:[#allocation4 + $0x130] sm:$0xff] %v9537
          %9602 = vst [vmem:[#allocation4 + $0x138] sm:$0xff] %v9538
          %9603 = vst [vmem:[#allocation4 + $0x140] sm:$0xff] %v9539
          %9604 = vst [vmem:[#allocation4 + $0x148] sm:$0xff] %v9540
          %9605 = vst [vmem:[#allocation4 + $0x150] sm:$0xff] %v9541
          %9606 = vst [vmem:[#allocation4 + $0x158] sm:$0xff] %v9542
          %9607 = vst [vmem:[#allocation4 + $0x160] sm:$0xff] %v9543
          %9608 = vst [vmem:[#allocation4 + $0x168] sm:$0xff] %v9544
          %9609 = vst [vmem:[#allocation4 + $0x170] sm:$0xff] %v9545
          %9610 = vst [vmem:[#allocation4 + $0x178] sm:$0xff] %v9546
          %9611 = vst [vmem:[#allocation4 + $0x180] sm:$0xff] %v9547
          %9612 = vst [vmem:[#allocation4 + $0x188] sm:$0xff] %v9548
          %9613 = vst [vmem:[#allocation4 + $0x190] sm:$0xff] %v9549
          %9614 = vst [vmem:[#allocation4 + $0x198] sm:$0xff] %v9550
          %9615 = vst [vmem:[#allocation4 + $0x1a0] sm:$0xff] %v9551
          %9616 = vst [vmem:[#allocation4 + $0x1a8] sm:$0xff] %v9552
          %9617 = vst [vmem:[#allocation4 + $0x1b0] sm:$0xff] %v9553
          %9618 = vst [vmem:[#allocation4 + $0x1b8] sm:$0xff] %v9554
          %9619 = vst [vmem:[#allocation4 + $0x1c0] sm:$0xff] %v9555
          %9620 = vst [vmem:[#allocation4 + $0x1c8] sm:$0xff] %v9556
          %9621 = vst [vmem:[#allocation4 + $0x1d0] sm:$0xff] %v9557
          %9622 = vst [vmem:[#allocation4 + $0x1d8] sm:$0xff] %v9558
          %9623 = vst [vmem:[#allocation4 + $0x1e0] sm:$0xff] %v9559
          %9624 = vst [vmem:[#allocation4 + $0x1e8] sm:$0xff] %v9560
          %9625 = vst [vmem:[#allocation4 + $0x1f0] sm:$0xff] %v9561
          %9626 = vst [vmem:[#allocation4 + $0x1f8] sm:$0xff] %v9562
        $region67: #{forward.9} parent=54 // pred_fallthru
          _
        // Predicated region
        $region68: #{forward.9} parent=54 // pred_check
          %p9627 = pneg %p163
        $region69: #{forward.9} parent=54 // pred_check_branch
          %9629 = sbr.rel (%p9627) target = $region71
        $region70: #{forward.9} parent=54 // pred_region
          %s9630 = smul.u32 64, %s21
          %9632 = vsyncadd [#allocation5], 0
          %s9633 = sadd.s32 %s22, %s9630
          %s9634 = smul.addr %s9633, 8
          %s9635 = scalar_lea.hbm %s4, %s9634
          %s9636 = sshll.u32 [#allocation4], 4
          %s9637 = int_to_ptr.vmem [resolvable:$true] %s9636
          %s9638 = sshll.u32 %s9635, 4
          %s9639 = int_to_ptr.hbm [resolvable:$true] %s9638
          %9644 = dma.vmem_to_hbm [thread:$0]  %s9637, 8192, %s9639, [#allocation5], 128, 128, 8
        $region71: #{forward.9} parent=54 // pred_fallthru
          _
        // Predicated region
        $region72: #{forward.9} parent=54 // pred_check
          %p9645 = pneg %p163
        $region73: #{forward.9} parent=54 // pred_check_branch
          %9647 = sbr.rel (%p9645) target = $region75
        $region74: #{forward.9} parent=54 // pred_region
          %9649 = dma.done [#allocation5], 8192
        $region75: #{forward.9} parent=54 // pred_fallthru
          _
      $region55: #{forward.9} parent=5 // pred_fallthru
        _
      %p9650 = scmp.le.s32.totalorder 2, %s11
      // Predicated region
      $region76: #{forward.9} parent=5 // pred_check
        %p9651 = pneg %p9650
      $region77: #{forward.9} parent=5 // pred_check_branch
        %9653 = sbr.rel (%p9651) target = $region79
      $region78: #{forward.9} parent=5 // pred_region
        %s9654 = ssub.s32 %s11, 2
      $region79: #{forward.9} parent=5 // pred_fallthru
        _
    $region6: #{forward.9} parent=1 // loop_footer
      %s15 = sadd.s32 1, %s11
    $region7: #{forward.9} parent=1 // loop_footer_branch
      %10 = sbr.rel target = $region3
    $region8: #{forward.9} parent=1 // loop_exit
      _
    %9655 = vsyncpa [#allocation5], 1
    %s9656 = scalar_lea.sflag [#allocation5], 1
    %9657 = vsyncpa %s9656, 1

</llo_original>
